<compile_context>
chip_gen: v7x
topology: tpu7x:2x2x1
jax: 0.10.0
libtpu: 0.0.40
codegen_flags: <defaults>
</compile_context>

<pallas_src>
import functools

import jax
import jax.numpy as jnp
from jax.experimental import pallas as pl
from jax.experimental.pallas import tpu as pltpu


def _basic_block_kernel(x_ref, w1_ref, b1_ref, w2_ref, b2_ref, out_ref, pad_ref):
    """One (batch, H-row-block) tile: conv1+bn1+relu -> conv2+bn2 -> +residual -> relu."""
    thp, wp, cp = x_ref.shape[2], x_ref.shape[3], x_ref.shape[4]
    th = thp - 2                       # output rows in this tile
    w = out_ref.shape[3]               # output cols (wp - 2)
    mxu_dtype = w1_ref.dtype

    x = x_ref[0, 0].astype(mxu_dtype)  # (TH+2, W+2, Cp), halo + zero pad done in wrapper

    # ---- conv1 (BN1 scale folded into weights) ----
    acc = jnp.zeros((th * w, cp), jnp.float32)
    for ky in range(3):
        slab = x[ky:ky + th]                                   # (TH, W+2, Cp)
        for kx in range(3):
            patch = slab[:, kx:kx + w, :].reshape(th * w, cp)  # (TH*W, Cp)
            acc = acc + jnp.dot(patch, w1_ref[ky * 3 + kx],
                                preferred_element_type=jnp.float32)
    o1 = jnp.maximum(acc + b1_ref[...], 0.0)                   # bias + ReLU, f32

    # zero-bordered scratch => conv2 needs no in-kernel concatenation pad
    pad_ref[...] = jnp.zeros_like(pad_ref)
    pad_ref[1:th + 1, 1:w + 1, :] = o1.reshape(th, w, cp).astype(pad_ref.dtype)

    # ---- conv2 (BN2 scale folded into weights) ----
    acc = jnp.zeros((th * w, cp), jnp.float32)
    for ky in range(3):
        slab = pad_ref[ky:ky + th]                             # (TH, W+2, Cp)
        for kx in range(3):
            patch = slab[:, kx:kx + w, :].reshape(th * w, cp)
            acc = acc + jnp.dot(patch, w2_ref[ky * 3 + kx],
                                preferred_element_type=jnp.float32)

    # residual add (taken from the un-cast f32 input) + final ReLU
    res = x_ref[0, 0, 1:th + 1, 1:w + 1, :].astype(jnp.float32).reshape(th * w, cp)
    o = jnp.maximum(acc + b2_ref[...] + res, 0.0)
    out_ref[0, 0] = o.reshape(th, w, cp).astype(out_ref.dtype)


def _pick_tile(h, target=16):
    """Largest divisor of h that is <= target (row-block height)."""
    t = min(h, target)
    while h % t:
        t -= 1
    return t


@functools.partial(jax.jit, static_argnames=("eps", "mxu_dtype"))
def basic_block(x, w1, g1, be1, m1, v1, w2, g2, be2, m2, v2,
                eps=1e-5, mxu_dtype=jnp.float32):
    """x: (N, Cin, H, W) NCHW; w1: (Cout, Cin, 3, 3); w2: (Cout, Cout, 3, 3) (PyTorch layout)."""
    n, cin, h, w = x.shape
    cout = w1.shape[0]
    # stride=1 / downsample=None (module defaults) => residual needs matching channels.
    assert cin == cout, "BasicBlock with downsample=None requires inplanes == planes"

    cp = max(128, ((max(cin, cout) + 127) // 128) * 128)   # lane/MXU-friendly channel pad
    th = _pick_tile(h)                                     # H row-block size
    nb = h // th
    wp = w + 2

    # NCHW -> NHWC, channel pad to Cp, spatial zero pad (H+2, W+2) once in the wrapper.
    xh = jnp.transpose(x, (0, 2, 3, 1))
    xh = jnp.pad(xh, ((0, 0), (1, 1), (1, 1), (0, cp - cin)))
    # Replicate the 1-row halo per H tile so plain Blocked specs can pipeline it.
    xb = jnp.stack([xh[:, j * th:j * th + th + 2] for j in range(nb)], axis=1)
    # xb: (N, NB, TH+2, W+2, Cp)

    # Fold inference BatchNorm into conv weights (scale over Cout) + per-channel bias.
    inv1 = g1 / jnp.sqrt(v1 + eps)
    inv2 = g2 / jnp.sqrt(v2 + eps)
    w1h = jnp.transpose(w1, (2, 3, 1, 0)) * inv1          # (3,3,Cin,Cout) HWIO, scaled
    w2h = jnp.transpose(w2, (2, 3, 1, 0)) * inv2
    w1m = jnp.pad(w1h, ((0, 0), (0, 0), (0, cp - cin), (0, cp - cout))
                  ).reshape(9, cp, cp).astype(mxu_dtype)
    w2m = jnp.pad(w2h, ((0, 0), (0, 0), (0, cp - cout), (0, cp - cout))
                  ).reshape(9, cp, cp).astype(mxu_dtype)
    b1 = jnp.pad(be1 - m1 * inv1, (0, cp - cout)).reshape(1, cp).astype(jnp.float32)
    b2 = jnp.pad(be2 - m2 * inv2, (0, cp - cout)).reshape(1, cp).astype(jnp.float32)

    out = pl.pallas_call(
        _basic_block_kernel,
        out_shape=jax.ShapeDtypeStruct((n, nb, th, w, cp), x.dtype),
        grid=(n, nb),
        in_specs=[
            pl.BlockSpec((1, 1, th + 2, wp, cp), lambda i, j: (i, j, 0, 0, 0)),
            pl.BlockSpec((9, cp, cp), lambda i, j: (0, 0, 0)),   # constant -> VMEM-resident
            pl.BlockSpec((1, cp), lambda i, j: (0, 0)),
            pl.BlockSpec((9, cp, cp), lambda i, j: (0, 0, 0)),
            pl.BlockSpec((1, cp), lambda i, j: (0, 0)),
        ],
        out_specs=pl.BlockSpec((1, 1, th, w, cp), lambda i, j: (i, j, 0, 0, 0)),
        scratch_shapes=[pltpu.VMEM((th + 2, wp, cp), mxu_dtype)],
        compiler_params=pltpu.CompilerParams(
            dimension_semantics=("parallel", "parallel"),
            vmem_limit_bytes=32 * 1024 * 1024),
    )(xb, w1m, b1, w2m, b2)

    # (N, NB, TH, W, Cp) -> (N, H, W, Cout) -> NCHW
    out = out.reshape(n, h, w, cp)[..., :cout]
    return jnp.transpose(out, (0, 3, 1, 2))


def _reference(x, w1, s1, b1, w2, s2, b2):
    """Plain-JAX NCHW reference with the same folded-BN scale/bias."""
    dn = ("NCHW", "OIHW", "NCHW")
    o = jax.lax.conv_general_dilated(x, w1, (1, 1), "SAME", dimension_numbers=dn)
    o = jnp.maximum(o * s1[None, :, None, None] + b1[None, :, None, None], 0.0)
    o = jax.lax.conv_general_dilated(o, w2, (1, 1), "SAME", dimension_numbers=dn)
    o = o * s2[None, :, None, None] + b2[None, :, None, None]
    return jnp.maximum(o + x, 0.0)


if __name__ == "__main__":
    key = jax.random.PRNGKey(0)
    ks = jax.random.split(key, 12)

    N, C, H, W = 2, 4, 16, 16       # BasicBlock(inplanes=4, planes=4), stride=1

    x = jax.random.normal(ks[0], (N, C, H, W), jnp.float32)

    w1 = jax.random.normal(ks[1], (C, C, 3, 3), jnp.float32) * 0.1
    g1 = 1.0 + 0.1 * jax.random.normal(ks[2], (C,), jnp.float32)
    be1 = 0.1 * jax.random.normal(ks[3], (C,), jnp.float32)
    m1 = 0.1 * jax.random.normal(ks[4], (C,), jnp.float32)
    v1 = jnp.abs(jax.random.normal(ks[5], (C,), jnp.float32)) + 0.5

    w2 = jax.random.normal(ks[6], (C, C, 3, 3), jnp.float32) * 0.1
    g2 = 1.0 + 0.1 * jax.random.normal(ks[7], (C,), jnp.float32)
    be2 = 0.1 * jax.random.normal(ks[8], (C,), jnp.float32)
    m2 = 0.1 * jax.random.normal(ks[9], (C,), jnp.float32)
    v2 = jnp.abs(jax.random.normal(ks[10], (C,), jnp.float32)) + 0.5

    # f32 MXU-operand path (exact semantics of the eval-mode module)
    out = basic_block(x, w1, g1, be1, m1, v1, w2, g2, be2, m2, v2)
    out = jax.block_until_ready(out)

    eps = 1e-5
    inv1 = g1 / jnp.sqrt(v1 + eps)
    inv2 = g2 / jnp.sqrt(v2 + eps)
    ref = _reference(x, w1, inv1, be1 - m1 * inv1, w2, inv2, be2 - m2 * inv2)
    assert jnp.allclose(out, ref, atol=1e-4, rtol=1e-4), (
        float(jnp.max(jnp.abs(out - ref))))

    # bf16 MXU-operand path (v6e/v7x optimization), f32 accumulation — looser tolerance
    out_bf16 = basic_block(x, w1, g1, be1, m1, v1, w2, g2, be2, m2, v2,
                           mxu_dtype=jnp.bfloat16)
    out_bf16 = jax.block_until_ready(out_bf16)
    assert jnp.allclose(out_bf16, ref, atol=1e-1, rtol=1e-1), (
        float(jnp.max(jnp.abs(out_bf16 - ref))))

    print("KERNEL_OK")
</pallas_src>

<mosaic_0001>
module attributes {stable_mosaic.version = 11 : i64} {
  func.func @_basic_block_kernel(%arg0: i32, %arg1: i32, %arg2: memref<1x1x18x18x128xf32, #tpu.memory_space<vmem>>, %arg3: memref<9x128x128xf32, #tpu.memory_space<vmem>>, %arg4: memref<1x128xf32, #tpu.memory_space<vmem>>, %arg5: memref<9x128x128xf32, #tpu.memory_space<vmem>>, %arg6: memref<1x128xf32, #tpu.memory_space<vmem>>, %arg7: memref<1x1x16x16x128xf32, #tpu.memory_space<vmem>>, %arg8: memref<18x18x128xf32, #tpu.memory_space<vmem>>) attributes {dimension_semantics = [#tpu.dimension_semantics<parallel>, #tpu.dimension_semantics<parallel>], iteration_bounds = array<i64: 2, 1>, scalar_prefetch = 0 : i64, scratch_operands = 1 : i64, tpu.core_type = #tpu.core_type<tc>, window_params = [{transform_indices = @transform_0, window_bounds = array<i64: 1, 1, 18, 18, 128>}, {pipeline_mode = #tpu.pipeline_mode<synchronous>, transform_indices = @transform_1, window_bounds = array<i64: 9, 128, 128>}, {pipeline_mode = #tpu.pipeline_mode<synchronous>, transform_indices = @transform_2, window_bounds = array<i64: 1, 128>}, {pipeline_mode = #tpu.pipeline_mode<synchronous>, transform_indices = @transform_3, window_bounds = array<i64: 9, 128, 128>}, {pipeline_mode = #tpu.pipeline_mode<synchronous>, transform_indices = @transform_4, window_bounds = array<i64: 1, 128>}, {transform_indices = @transform_5, window_bounds = array<i64: 1, 1, 16, 16, 128>}]} {
    %c0 = arith.constant 0 : index
    %c0_0 = arith.constant 0 : index
    %c0_1 = arith.constant 0 : index
    %c0_2 = arith.constant 0 : index
    %c0_3 = arith.constant 0 : index
    %0 = vector.load %arg2[%c0, %c0_0, %c0_1, %c0_2, %c0_3] : memref<1x1x18x18x128xf32, #tpu.memory_space<vmem>>, vector<1x1x18x18x128xf32>
    %1 = vector.shape_cast %0 : vector<1x1x18x18x128xf32> to vector<18x18x128xf32>
    %cst = arith.constant 0.000000e+00 : f32
    %2 = vector.broadcast %cst : f32 to vector<256x128xf32>
    %3 = vector.extract_strided_slice %1 {offsets = [0, 0, 0], sizes = [16, 18, 128], strides = [1, 1, 1]} : vector<18x18x128xf32> to vector<16x18x128xf32>
    %4 = vector.extract_strided_slice %3 {offsets = [0, 0, 0], sizes = [16, 16, 128], strides = [1, 1, 1]} : vector<16x18x128xf32> to vector<16x16x128xf32>
    %5 = vector.shape_cast %4 : vector<16x16x128xf32> to vector<256x128xf32>
    %c0_4 = arith.constant 0 : index
    %c0_5 = arith.constant 0 : index
    %c0_6 = arith.constant 0 : index
    %6 = vector.load %arg3[%c0_4, %c0_5, %c0_6] : memref<9x128x128xf32, #tpu.memory_space<vmem>>, vector<1x128x128xf32>
    %7 = vector.shape_cast %6 : vector<1x128x128xf32> to vector<128x128xf32>
    %cst_7 = arith.constant dense<0.000000e+00> : vector<256x128xf32>
    %8 = tpu.matmul %5, %7, %cst_7 {dimension_numbers = #tpu.dot_dimension_numbers<[1], [0], [0], [1], [0, 0, 1, 1], [], []>} : vector<256x128xf32>, vector<128x128xf32>, vector<256x128xf32> -> vector<256x128xf32>
    %9 = arith.addf %2, %8 : vector<256x128xf32>
    %10 = vector.extract_strided_slice %3 {offsets = [0, 1, 0], sizes = [16, 16, 128], strides = [1, 1, 1]} : vector<16x18x128xf32> to vector<16x16x128xf32>
    %11 = vector.shape_cast %10 : vector<16x16x128xf32> to vector<256x128xf32>
    %c1 = arith.constant 1 : index
    %c0_8 = arith.constant 0 : index
    %c0_9 = arith.constant 0 : index
    %12 = vector.load %arg3[%c1, %c0_8, %c0_9] : memref<9x128x128xf32, #tpu.memory_space<vmem>>, vector<1x128x128xf32>
    %13 = vector.shape_cast %12 : vector<1x128x128xf32> to vector<128x128xf32>
    %cst_10 = arith.constant dense<0.000000e+00> : vector<256x128xf32>
    %14 = tpu.matmul %11, %13, %cst_10 {dimension_numbers = #tpu.dot_dimension_numbers<[1], [0], [0], [1], [0, 0, 1, 1], [], []>} : vector<256x128xf32>, vector<128x128xf32>, vector<256x128xf32> -> vector<256x128xf32>
    %15 = arith.addf %9, %14 : vector<256x128xf32>
    %16 = vector.extract_strided_slice %3 {offsets = [0, 2, 0], sizes = [16, 16, 128], strides = [1, 1, 1]} : vector<16x18x128xf32> to vector<16x16x128xf32>
    %17 = vector.shape_cast %16 : vector<16x16x128xf32> to vector<256x128xf32>
    %c2 = arith.constant 2 : index
    %c0_11 = arith.constant 0 : index
    %c0_12 = arith.constant 0 : index
    %18 = vector.load %arg3[%c2, %c0_11, %c0_12] : memref<9x128x128xf32, #tpu.memory_space<vmem>>, vector<1x128x128xf32>
    %19 = vector.shape_cast %18 : vector<1x128x128xf32> to vector<128x128xf32>
    %cst_13 = arith.constant dense<0.000000e+00> : vector<256x128xf32>
    %20 = tpu.matmul %17, %19, %cst_13 {dimension_numbers = #tpu.dot_dimension_numbers<[1], [0], [0], [1], [0, 0, 1, 1], [], []>} : vector<256x128xf32>, vector<128x128xf32>, vector<256x128xf32> -> vector<256x128xf32>
    %21 = arith.addf %15, %20 : vector<256x128xf32>
    %22 = vector.extract_strided_slice %1 {offsets = [1, 0, 0], sizes = [16, 18, 128], strides = [1, 1, 1]} : vector<18x18x128xf32> to vector<16x18x128xf32>
    %23 = vector.extract_strided_slice %22 {offsets = [0, 0, 0], sizes = [16, 16, 128], strides = [1, 1, 1]} : vector<16x18x128xf32> to vector<16x16x128xf32>
    %24 = vector.shape_cast %23 : vector<16x16x128xf32> to vector<256x128xf32>
    %c3 = arith.constant 3 : index
    %c0_14 = arith.constant 0 : index
    %c0_15 = arith.constant 0 : index
    %25 = vector.load %arg3[%c3, %c0_14, %c0_15] : memref<9x128x128xf32, #tpu.memory_space<vmem>>, vector<1x128x128xf32>
    %26 = vector.shape_cast %25 : vector<1x128x128xf32> to vector<128x128xf32>
    %cst_16 = arith.constant dense<0.000000e+00> : vector<256x128xf32>
    %27 = tpu.matmul %24, %26, %cst_16 {dimension_numbers = #tpu.dot_dimension_numbers<[1], [0], [0], [1], [0, 0, 1, 1], [], []>} : vector<256x128xf32>, vector<128x128xf32>, vector<256x128xf32> -> vector<256x128xf32>
    %28 = arith.addf %21, %27 : vector<256x128xf32>
    %29 = vector.extract_strided_slice %22 {offsets = [0, 1, 0], sizes = [16, 16, 128], strides = [1, 1, 1]} : vector<16x18x128xf32> to vector<16x16x128xf32>
    %30 = vector.shape_cast %29 : vector<16x16x128xf32> to vector<256x128xf32>
    %c4 = arith.constant 4 : index
    %c0_17 = arith.constant 0 : index
    %c0_18 = arith.constant 0 : index
    %31 = vector.load %arg3[%c4, %c0_17, %c0_18] : memref<9x128x128xf32, #tpu.memory_space<vmem>>, vector<1x128x128xf32>
    %32 = vector.shape_cast %31 : vector<1x128x128xf32> to vector<128x128xf32>
    %cst_19 = arith.constant dense<0.000000e+00> : vector<256x128xf32>
    %33 = tpu.matmul %30, %32, %cst_19 {dimension_numbers = #tpu.dot_dimension_numbers<[1], [0], [0], [1], [0, 0, 1, 1], [], []>} : vector<256x128xf32>, vector<128x128xf32>, vector<256x128xf32> -> vector<256x128xf32>
    %34 = arith.addf %28, %33 : vector<256x128xf32>
    %35 = vector.extract_strided_slice %22 {offsets = [0, 2, 0], sizes = [16, 16, 128], strides = [1, 1, 1]} : vector<16x18x128xf32> to vector<16x16x128xf32>
    %36 = vector.shape_cast %35 : vector<16x16x128xf32> to vector<256x128xf32>
    %c5 = arith.constant 5 : index
    %c0_20 = arith.constant 0 : index
    %c0_21 = arith.constant 0 : index
    %37 = vector.load %arg3[%c5, %c0_20, %c0_21] : memref<9x128x128xf32, #tpu.memory_space<vmem>>, vector<1x128x128xf32>
    %38 = vector.shape_cast %37 : vector<1x128x128xf32> to vector<128x128xf32>
    %cst_22 = arith.constant dense<0.000000e+00> : vector<256x128xf32>
    %39 = tpu.matmul %36, %38, %cst_22 {dimension_numbers = #tpu.dot_dimension_numbers<[1], [0], [0], [1], [0, 0, 1, 1], [], []>} : vector<256x128xf32>, vector<128x128xf32>, vector<256x128xf32> -> vector<256x128xf32>
    %40 = arith.addf %34, %39 : vector<256x128xf32>
    %41 = vector.extract_strided_slice %1 {offsets = [2, 0, 0], sizes = [16, 18, 128], strides = [1, 1, 1]} : vector<18x18x128xf32> to vector<16x18x128xf32>
    %42 = vector.extract_strided_slice %41 {offsets = [0, 0, 0], sizes = [16, 16, 128], strides = [1, 1, 1]} : vector<16x18x128xf32> to vector<16x16x128xf32>
    %43 = vector.shape_cast %42 : vector<16x16x128xf32> to vector<256x128xf32>
    %c6 = arith.constant 6 : index
    %c0_23 = arith.constant 0 : index
    %c0_24 = arith.constant 0 : index
    %44 = vector.load %arg3[%c6, %c0_23, %c0_24] : memref<9x128x128xf32, #tpu.memory_space<vmem>>, vector<1x128x128xf32>
    %45 = vector.shape_cast %44 : vector<1x128x128xf32> to vector<128x128xf32>
    %cst_25 = arith.constant dense<0.000000e+00> : vector<256x128xf32>
    %46 = tpu.matmul %43, %45, %cst_25 {dimension_numbers = #tpu.dot_dimension_numbers<[1], [0], [0], [1], [0, 0, 1, 1], [], []>} : vector<256x128xf32>, vector<128x128xf32>, vector<256x128xf32> -> vector<256x128xf32>
    %47 = arith.addf %40, %46 : vector<256x128xf32>
    %48 = vector.extract_strided_slice %41 {offsets = [0, 1, 0], sizes = [16, 16, 128], strides = [1, 1, 1]} : vector<16x18x128xf32> to vector<16x16x128xf32>
    %49 = vector.shape_cast %48 : vector<16x16x128xf32> to vector<256x128xf32>
    %c7 = arith.constant 7 : index
    %c0_26 = arith.constant 0 : index
    %c0_27 = arith.constant 0 : index
    %50 = vector.load %arg3[%c7, %c0_26, %c0_27] : memref<9x128x128xf32, #tpu.memory_space<vmem>>, vector<1x128x128xf32>
    %51 = vector.shape_cast %50 : vector<1x128x128xf32> to vector<128x128xf32>
    %cst_28 = arith.constant dense<0.000000e+00> : vector<256x128xf32>
    %52 = tpu.matmul %49, %51, %cst_28 {dimension_numbers = #tpu.dot_dimension_numbers<[1], [0], [0], [1], [0, 0, 1, 1], [], []>} : vector<256x128xf32>, vector<128x128xf32>, vector<256x128xf32> -> vector<256x128xf32>
    %53 = arith.addf %47, %52 : vector<256x128xf32>
    %54 = vector.extract_strided_slice %41 {offsets = [0, 2, 0], sizes = [16, 16, 128], strides = [1, 1, 1]} : vector<16x18x128xf32> to vector<16x16x128xf32>
    %55 = vector.shape_cast %54 : vector<16x16x128xf32> to vector<256x128xf32>
    %c8 = arith.constant 8 : index
    %c0_29 = arith.constant 0 : index
    %c0_30 = arith.constant 0 : index
    %56 = vector.load %arg3[%c8, %c0_29, %c0_30] : memref<9x128x128xf32, #tpu.memory_space<vmem>>, vector<1x128x128xf32>
    %57 = vector.shape_cast %56 : vector<1x128x128xf32> to vector<128x128xf32>
    %cst_31 = arith.constant dense<0.000000e+00> : vector<256x128xf32>
    %58 = tpu.matmul %55, %57, %cst_31 {dimension_numbers = #tpu.dot_dimension_numbers<[1], [0], [0], [1], [0, 0, 1, 1], [], []>} : vector<256x128xf32>, vector<128x128xf32>, vector<256x128xf32> -> vector<256x128xf32>
    %59 = arith.addf %53, %58 : vector<256x128xf32>
    %c0_32 = arith.constant 0 : index
    %c0_33 = arith.constant 0 : index
    %60 = vector.load %arg4[%c0_32, %c0_33] : memref<1x128xf32, #tpu.memory_space<vmem>>, vector<1x128xf32>
    %61 = vector.broadcast %60 : vector<1x128xf32> to vector<256x128xf32>
    %62 = arith.addf %59, %61 : vector<256x128xf32>
    %cst_34 = arith.constant 0.000000e+00 : f32
    %63 = vector.broadcast %cst_34 : f32 to vector<256x128xf32>
    %64 = arith.maximumf %62, %63 : vector<256x128xf32>
    %cst_35 = arith.constant 0.000000e+00 : f32
    %65 = vector.broadcast %cst_35 : f32 to vector<18x18x128xf32>
    %c0_36 = arith.constant 0 : index
    %c0_37 = arith.constant 0 : index
    %c0_38 = arith.constant 0 : index
    %66 = vector.load %arg8[%c0_36, %c0_37, %c0_38] : memref<18x18x128xf32, #tpu.memory_space<vmem>>, vector<18x18x128xf32>
    tpu.vector_store %arg8[%c0_36, %c0_37, %c0_38], %65 {strides = array<i32>} : memref<18x18x128xf32, #tpu.memory_space<vmem>>, vector<18x18x128xf32>,
    %67 = vector.shape_cast %64 : vector<256x128xf32> to vector<16x16x128xf32>
    %c1_39 = arith.constant 1 : index
    %c1_40 = arith.constant 1 : index
    %c0_41 = arith.constant 0 : index
    %68 = vector.load %arg8[%c1_39, %c1_40, %c0_41] : memref<18x18x128xf32, #tpu.memory_space<vmem>>, vector<16x16x128xf32>
    tpu.vector_store %arg8[%c1_39, %c1_40, %c0_41], %67 {strides = array<i32>} : memref<18x18x128xf32, #tpu.memory_space<vmem>>, vector<16x16x128xf32>,
    %cst_42 = arith.constant 0.000000e+00 : f32
    %69 = vector.broadcast %cst_42 : f32 to vector<256x128xf32>
    %c0_43 = arith.constant 0 : index
    %c0_44 = arith.constant 0 : index
    %c0_45 = arith.constant 0 : index
    %70 = vector.load %arg8[%c0_43, %c0_44, %c0_45] : memref<18x18x128xf32, #tpu.memory_space<vmem>>, vector<16x18x128xf32>
    %71 = vector.extract_strided_slice %70 {offsets = [0, 0, 0], sizes = [16, 16, 128], strides = [1, 1, 1]} : vector<16x18x128xf32> to vector<16x16x128xf32>
    %72 = vector.shape_cast %71 : vector<16x16x128xf32> to vector<256x128xf32>
    %c0_46 = arith.constant 0 : index
    %c0_47 = arith.constant 0 : index
    %c0_48 = arith.constant 0 : index
    %73 = vector.load %arg5[%c0_46, %c0_47, %c0_48] : memref<9x128x128xf32, #tpu.memory_space<vmem>>, vector<1x128x128xf32>
    %74 = vector.shape_cast %73 : vector<1x128x128xf32> to vector<128x128xf32>
    %cst_49 = arith.constant dense<0.000000e+00> : vector<256x128xf32>
    %75 = tpu.matmul %72, %74, %cst_49 {dimension_numbers = #tpu.dot_dimension_numbers<[1], [0], [0], [1], [0, 0, 1, 1], [], []>} : vector<256x128xf32>, vector<128x128xf32>, vector<256x128xf32> -> vector<256x128xf32>
    %76 = arith.addf %69, %75 : vector<256x128xf32>
    %77 = vector.extract_strided_slice %70 {offsets = [0, 1, 0], sizes = [16, 16, 128], strides = [1, 1, 1]} : vector<16x18x128xf32> to vector<16x16x128xf32>
    %78 = vector.shape_cast %77 : vector<16x16x128xf32> to vector<256x128xf32>
    %c1_50 = arith.constant 1 : index
    %c0_51 = arith.constant 0 : index
    %c0_52 = arith.constant 0 : index
    %79 = vector.load %arg5[%c1_50, %c0_51, %c0_52] : memref<9x128x128xf32, #tpu.memory_space<vmem>>, vector<1x128x128xf32>
    %80 = vector.shape_cast %79 : vector<1x128x128xf32> to vector<128x128xf32>
    %cst_53 = arith.constant dense<0.000000e+00> : vector<256x128xf32>
    %81 = tpu.matmul %78, %80, %cst_53 {dimension_numbers = #tpu.dot_dimension_numbers<[1], [0], [0], [1], [0, 0, 1, 1], [], []>} : vector<256x128xf32>, vector<128x128xf32>, vector<256x128xf32> -> vector<256x128xf32>
    %82 = arith.addf %76, %81 : vector<256x128xf32>
    %83 = vector.extract_strided_slice %70 {offsets = [0, 2, 0], sizes = [16, 16, 128], strides = [1, 1, 1]} : vector<16x18x128xf32> to vector<16x16x128xf32>
    %84 = vector.shape_cast %83 : vector<16x16x128xf32> to vector<256x128xf32>
    %c2_54 = arith.constant 2 : index
    %c0_55 = arith.constant 0 : index
    %c0_56 = arith.constant 0 : index
    %85 = vector.load %arg5[%c2_54, %c0_55, %c0_56] : memref<9x128x128xf32, #tpu.memory_space<vmem>>, vector<1x128x128xf32>
    %86 = vector.shape_cast %85 : vector<1x128x128xf32> to vector<128x128xf32>
    %cst_57 = arith.constant dense<0.000000e+00> : vector<256x128xf32>
    %87 = tpu.matmul %84, %86, %cst_57 {dimension_numbers = #tpu.dot_dimension_numbers<[1], [0], [0], [1], [0, 0, 1, 1], [], []>} : vector<256x128xf32>, vector<128x128xf32>, vector<256x128xf32> -> vector<256x128xf32>
    %88 = arith.addf %82, %87 : vector<256x128xf32>
    %c1_58 = arith.constant 1 : index
    %c0_59 = arith.constant 0 : index
    %c0_60 = arith.constant 0 : index
    %89 = vector.load %arg8[%c1_58, %c0_59, %c0_60] : memref<18x18x128xf32, #tpu.memory_space<vmem>>, vector<16x18x128xf32>
    %90 = vector.extract_strided_slice %89 {offsets = [0, 0, 0], sizes = [16, 16, 128], strides = [1, 1, 1]} : vector<16x18x128xf32> to vector<16x16x128xf32>
    %91 = vector.shape_cast %90 : vector<16x16x128xf32> to vector<256x128xf32>
    %c3_61 = arith.constant 3 : index
    %c0_62 = arith.constant 0 : index
    %c0_63 = arith.constant 0 : index
    %92 = vector.load %arg5[%c3_61, %c0_62, %c0_63] : memref<9x128x128xf32, #tpu.memory_space<vmem>>, vector<1x128x128xf32>
    %93 = vector.shape_cast %92 : vector<1x128x128xf32> to vector<128x128xf32>
    %cst_64 = arith.constant dense<0.000000e+00> : vector<256x128xf32>
    %94 = tpu.matmul %91, %93, %cst_64 {dimension_numbers = #tpu.dot_dimension_numbers<[1], [0], [0], [1], [0, 0, 1, 1], [], []>} : vector<256x128xf32>, vector<128x128xf32>, vector<256x128xf32> -> vector<256x128xf32>
    %95 = arith.addf %88, %94 : vector<256x128xf32>
    %96 = vector.extract_strided_slice %89 {offsets = [0, 1, 0], sizes = [16, 16, 128], strides = [1, 1, 1]} : vector<16x18x128xf32> to vector<16x16x128xf32>
    %97 = vector.shape_cast %96 : vector<16x16x128xf32> to vector<256x128xf32>
    %c4_65 = arith.constant 4 : index
    %c0_66 = arith.constant 0 : index
    %c0_67 = arith.constant 0 : index
    %98 = vector.load %arg5[%c4_65, %c0_66, %c0_67] : memref<9x128x128xf32, #tpu.memory_space<vmem>>, vector<1x128x128xf32>
    %99 = vector.shape_cast %98 : vector<1x128x128xf32> to vector<128x128xf32>
    %cst_68 = arith.constant dense<0.000000e+00> : vector<256x128xf32>
    %100 = tpu.matmul %97, %99, %cst_68 {dimension_numbers = #tpu.dot_dimension_numbers<[1], [0], [0], [1], [0, 0, 1, 1], [], []>} : vector<256x128xf32>, vector<128x128xf32>, vector<256x128xf32> -> vector<256x128xf32>
    %101 = arith.addf %95, %100 : vector<256x128xf32>
    %102 = vector.extract_strided_slice %89 {offsets = [0, 2, 0], sizes = [16, 16, 128], strides = [1, 1, 1]} : vector<16x18x128xf32> to vector<16x16x128xf32>
    %103 = vector.shape_cast %102 : vector<16x16x128xf32> to vector<256x128xf32>
    %c5_69 = arith.constant 5 : index
    %c0_70 = arith.constant 0 : index
    %c0_71 = arith.constant 0 : index
    %104 = vector.load %arg5[%c5_69, %c0_70, %c0_71] : memref<9x128x128xf32, #tpu.memory_space<vmem>>, vector<1x128x128xf32>
    %105 = vector.shape_cast %104 : vector<1x128x128xf32> to vector<128x128xf32>
    %cst_72 = arith.constant dense<0.000000e+00> : vector<256x128xf32>
    %106 = tpu.matmul %103, %105, %cst_72 {dimension_numbers = #tpu.dot_dimension_numbers<[1], [0], [0], [1], [0, 0, 1, 1], [], []>} : vector<256x128xf32>, vector<128x128xf32>, vector<256x128xf32> -> vector<256x128xf32>
    %107 = arith.addf %101, %106 : vector<256x128xf32>
    %c2_73 = arith.constant 2 : index
    %c0_74 = arith.constant 0 : index
    %c0_75 = arith.constant 0 : index
    %108 = vector.load %arg8[%c2_73, %c0_74, %c0_75] : memref<18x18x128xf32, #tpu.memory_space<vmem>>, vector<16x18x128xf32>
    %109 = vector.extract_strided_slice %108 {offsets = [0, 0, 0], sizes = [16, 16, 128], strides = [1, 1, 1]} : vector<16x18x128xf32> to vector<16x16x128xf32>
    %110 = vector.shape_cast %109 : vector<16x16x128xf32> to vector<256x128xf32>
    %c6_76 = arith.constant 6 : index
    %c0_77 = arith.constant 0 : index
    %c0_78 = arith.constant 0 : index
    %111 = vector.load %arg5[%c6_76, %c0_77, %c0_78] : memref<9x128x128xf32, #tpu.memory_space<vmem>>, vector<1x128x128xf32>
    %112 = vector.shape_cast %111 : vector<1x128x128xf32> to vector<128x128xf32>
    %cst_79 = arith.constant dense<0.000000e+00> : vector<256x128xf32>
    %113 = tpu.matmul %110, %112, %cst_79 {dimension_numbers = #tpu.dot_dimension_numbers<[1], [0], [0], [1], [0, 0, 1, 1], [], []>} : vector<256x128xf32>, vector<128x128xf32>, vector<256x128xf32> -> vector<256x128xf32>
    %114 = arith.addf %107, %113 : vector<256x128xf32>
    %115 = vector.extract_strided_slice %108 {offsets = [0, 1, 0], sizes = [16, 16, 128], strides = [1, 1, 1]} : vector<16x18x128xf32> to vector<16x16x128xf32>
    %116 = vector.shape_cast %115 : vector<16x16x128xf32> to vector<256x128xf32>
    %c7_80 = arith.constant 7 : index
    %c0_81 = arith.constant 0 : index
    %c0_82 = arith.constant 0 : index
    %117 = vector.load %arg5[%c7_80, %c0_81, %c0_82] : memref<9x128x128xf32, #tpu.memory_space<vmem>>, vector<1x128x128xf32>
    %118 = vector.shape_cast %117 : vector<1x128x128xf32> to vector<128x128xf32>
    %cst_83 = arith.constant dense<0.000000e+00> : vector<256x128xf32>
    %119 = tpu.matmul %116, %118, %cst_83 {dimension_numbers = #tpu.dot_dimension_numbers<[1], [0], [0], [1], [0, 0, 1, 1], [], []>} : vector<256x128xf32>, vector<128x128xf32>, vector<256x128xf32> -> vector<256x128xf32>
    %120 = arith.addf %114, %119 : vector<256x128xf32>
    %121 = vector.extract_strided_slice %108 {offsets = [0, 2, 0], sizes = [16, 16, 128], strides = [1, 1, 1]} : vector<16x18x128xf32> to vector<16x16x128xf32>
    %122 = vector.shape_cast %121 : vector<16x16x128xf32> to vector<256x128xf32>
    %c8_84 = arith.constant 8 : index
    %c0_85 = arith.constant 0 : index
    %c0_86 = arith.constant 0 : index
    %123 = vector.load %arg5[%c8_84, %c0_85, %c0_86] : memref<9x128x128xf32, #tpu.memory_space<vmem>>, vector<1x128x128xf32>
    %124 = vector.shape_cast %123 : vector<1x128x128xf32> to vector<128x128xf32>
    %cst_87 = arith.constant dense<0.000000e+00> : vector<256x128xf32>
    %125 = tpu.matmul %122, %124, %cst_87 {dimension_numbers = #tpu.dot_dimension_numbers<[1], [0], [0], [1], [0, 0, 1, 1], [], []>} : vector<256x128xf32>, vector<128x128xf32>, vector<256x128xf32> -> vector<256x128xf32>
    %126 = arith.addf %120, %125 : vector<256x128xf32>
    %c0_88 = arith.constant 0 : index
    %c0_89 = arith.constant 0 : index
    %c1_90 = arith.constant 1 : index
    %c1_91 = arith.constant 1 : index
    %c0_92 = arith.constant 0 : index
    %127 = vector.load %arg2[%c0_88, %c0_89, %c1_90, %c1_91, %c0_92] : memref<1x1x18x18x128xf32, #tpu.memory_space<vmem>>, vector<1x1x16x16x128xf32>
    %128 = vector.shape_cast %127 : vector<1x1x16x16x128xf32> to vector<16x16x128xf32>
    %129 = vector.shape_cast %128 : vector<16x16x128xf32> to vector<256x128xf32>
    %c0_93 = arith.constant 0 : index
    %c0_94 = arith.constant 0 : index
    %130 = vector.load %arg6[%c0_93, %c0_94] : memref<1x128xf32, #tpu.memory_space<vmem>>, vector<1x128xf32>
    %131 = vector.broadcast %130 : vector<1x128xf32> to vector<256x128xf32>
    %132 = arith.addf %126, %131 : vector<256x128xf32>
    %133 = arith.addf %132, %129 : vector<256x128xf32>
    %cst_95 = arith.constant 0.000000e+00 : f32
    %134 = vector.broadcast %cst_95 : f32 to vector<256x128xf32>
    %135 = arith.maximumf %133, %134 : vector<256x128xf32>
    %136 = vector.shape_cast %135 : vector<256x128xf32> to vector<16x16x128xf32>
    %c0_96 = arith.constant 0 : index
    %c0_97 = arith.constant 0 : index
    %c0_98 = arith.constant 0 : index
    %c0_99 = arith.constant 0 : index
    %c0_100 = arith.constant 0 : index
    %137 = vector.load %arg7[%c0_96, %c0_97, %c0_98, %c0_99, %c0_100] : memref<1x1x16x16x128xf32, #tpu.memory_space<vmem>>, vector<1x1x16x16x128xf32>
    %138 = vector.shape_cast %137 : vector<1x1x16x16x128xf32> to vector<16x16x128xf32>
    %139 = vector.shape_cast %136 : vector<16x16x128xf32> to vector<1x1x16x16x128xf32>
    tpu.vector_store %arg7[%c0_96, %c0_97, %c0_98, %c0_99, %c0_100], %139 {strides = array<i32>} : memref<1x1x16x16x128xf32, #tpu.memory_space<vmem>>, vector<1x1x16x16x128xf32>,
    return
  }
  func.func @transform_0(%arg0: i32, %arg1: i32) -> (i32, i32, i32, i32, i32) {
    %c0_i32 = arith.constant 0 : i32
    %c0_i32_0 = arith.constant 0 : i32
    %c0_i32_1 = arith.constant 0 : i32
    %c0_i32_2 = arith.constant 0 : i32
    return %arg0, %arg1, %c0_i32, %c0_i32_0, %c0_i32_1 : i32, i32, i32, i32, i32
  }
  func.func @transform_1(%arg0: i32, %arg1: i32) -> (i32, i32, i32) {
    %c0_i32 = arith.constant 0 : i32
    %c0_i32_0 = arith.constant 0 : i32
    %c0_i32_1 = arith.constant 0 : i32
    %c0_i32_2 = arith.constant 0 : i32
    return %c0_i32, %c0_i32_0, %c0_i32_1 : i32, i32, i32
  }
  func.func @transform_2(%arg0: i32, %arg1: i32) -> (i32, i32) {
    %c0_i32 = arith.constant 0 : i32
    %c0_i32_0 = arith.constant 0 : i32
    %c0_i32_1 = arith.constant 0 : i32
    return %c0_i32, %c0_i32_0 : i32, i32
  }
  func.func @transform_3(%arg0: i32, %arg1: i32) -> (i32, i32, i32) {
    %c0_i32 = arith.constant 0 : i32
    %c0_i32_0 = arith.constant 0 : i32
    %c0_i32_1 = arith.constant 0 : i32
    %c0_i32_2 = arith.constant 0 : i32
    return %c0_i32, %c0_i32_0, %c0_i32_1 : i32, i32, i32
  }
  func.func @transform_4(%arg0: i32, %arg1: i32) -> (i32, i32) {
    %c0_i32 = arith.constant 0 : i32
    %c0_i32_0 = arith.constant 0 : i32
    %c0_i32_1 = arith.constant 0 : i32
    return %c0_i32, %c0_i32_0 : i32, i32
  }
  func.func @transform_5(%arg0: i32, %arg1: i32) -> (i32, i32, i32, i32, i32) {
    %c0_i32 = arith.constant 0 : i32
    %c0_i32_0 = arith.constant 0 : i32
    %c0_i32_1 = arith.constant 0 : i32
    %c0_i32_2 = arith.constant 0 : i32
    return %arg0, %arg1, %c0_i32, %c0_i32_0, %c0_i32_1 : i32, i32, i32, i32, i32
  }
}

</mosaic_0001>

<llo_original>
// kernel: basic_block.1
$region0: #{basic_block.1}
  #allocation0 [shape = 'u32[]', space=smem, size = 0x4, offset = 0x4, fixed_abs, tag = 'smem constant byte address 0x4 - core index']
  #allocation1 [shape = 'u32[144,128]{1,0:T(1,128)}', space=vmem, size = 0x12000, scoped, tag = 'internal scratch']
  #allocation2 [shape = 'f32[18,18,128]{2,1,0:T(8,128)}', space=vmem, size = 0x36000, scoped, tag = 'scratch operand']
  %s0 = inlined_call_operand.vmem [shape: f32[2,1,18,18,128], index: 0, kind: input, shape index: {}]
  %s1 = inlined_call_operand.vmem [shape: f32[9,128,128], index: 1, kind: input, shape index: {}]
  %s2 = inlined_call_operand.vmem [shape: f32[1,128], index: 2, kind: input, shape index: {}]
  %s3 = inlined_call_operand.vmem [shape: f32[9,128,128], index: 3, kind: input, shape index: {}]
  %s4 = inlined_call_operand.vmem [shape: f32[1,128], index: 4, kind: input, shape index: {}]
  %s5 = inlined_call_operand.vmem [shape: f32[2,1,16,16,128], index: 5, kind: output, shape index: {}]
  %s6 = sld [smem:[#allocation0]]
  $region53: #{basic_block.1} parent=0
    _
  %s8 = ssub.s32 1, %s6
  %s9 = scalar_select 0, %s8, %s6
  loop: start=0, step=1, limit=4
  $region2: #{basic_block.1} parent=0 // loop_pre_header
    _
  $region3: #{basic_block.1} parent=0 // loop_header
    %s11 = sphi 0, %s15
    %p12 = scmp.ge.s32.totalorder %s11, 4
    %s18 = sphi 0, %s30
    %s19 = sphi 0, %s26
    %s20 = sphi 0, %s18
    %s21 = sphi 0, %s19
    %s22 = sphi 0, %s20
    %s23 = sphi 0, %s21
    %s35 = sphi 0, %s37
    %s38 = sphi 0, %s35
    %s39 = sphi 0, %s38
    %s55 = sphi 0, %s39
    %s59 = sphi 0, %s59
    %s61 = sphi 0, %s59
    %s62 = sphi 0, %s61
    %s76 = sphi 0, %s62
    %s80 = sphi 0, %s80
    %s82 = sphi 0, %s80
    %s83 = sphi 0, %s82
    %s97 = sphi 0, %s83
    %s101 = sphi 0, %s101
    %s103 = sphi 0, %s101
    %s104 = sphi 0, %s103
    %s118 = sphi 0, %s104
    %s122 = sphi 0, %s122
    %s124 = sphi 0, %s122
    %s125 = sphi 0, %s124
    %s139 = sphi 0, %s125
    %s147 = sphi 0, %s149
    %s150 = sphi 0, %s147
    %s151 = sphi 0, %s150
    %s167 = sphi 0, %s151
  $region4: #{basic_block.1} parent=0 // loop_header_branch
    %14 = sbr.rel (%p12) target = $region8
  $region5: #{basic_block.1} parent=0 // loop_body
    %s16 = ssub.s32 %s11, 1
    %s17 = ssub.s32 %s11, 2
    %s24 = sadd.s32 1, %s19
    %p25 = scmp.ge.s32.totalorder %s24, 1
    %s26 = scalar_select %p25, 0, %s24
    %s27 = sadd.s32 1, %s18
    %s28 = scalar_select %p25, %s27, %s18
    %p29 = scmp.ge.s32.totalorder %s28, 2
    %s30 = scalar_select %p29, 0, %s28
    %s31 = ssub.s32 %s18, %s30
    %s32 = ssub.s32 %s19, %s26
    %s33 = sor.u32 %s31, %s32
    %p34 = scmp.eq.s32.totalorder %s33, 0
    %s36 = sadd.s32 %s35, 1
    %s37 = scalar_select %p34, %s35, %s36
    %p40 = pneg %p34
    %p41 = scmp.eq.s32.totalorder %s11, 1
    %p42 = por %p40, %p41
    %p43 = scmp.ne.s32.totalorder %s35, %s38
    %p44 = scmp.eq.s32.totalorder %s11, 0
    %p45 = por %p43, %p44
    %p46 = scmp.ne.s32.totalorder %s35, %s38
    %p47 = scmp.eq.s32.totalorder %s16, 1
    %p48 = por %p46, %p47
    %p49 = scmp.ne.s32.totalorder %s38, %s39
    %p50 = scmp.eq.s32.totalorder %s16, 0
    %p51 = por %p49, %p50
    %p52 = scmp.ne.s32.totalorder %s38, %s39
    %p53 = scmp.eq.s32.totalorder %s17, 1
    %p54 = por %p52, %p53
    %p56 = scmp.ne.s32.totalorder %s39, %s55
    %p57 = scmp.eq.s32.totalorder %s17, 0
    %p58 = por %p56, %p57
    %s60 = sadd.s32 %s59, 1
    %p63 = scmp.eq.s32.totalorder %s11, 1
    %p64 = scmp.ne.s32.totalorder %s59, %s61
    %p65 = scmp.eq.s32.totalorder %s11, 0
    %p66 = por %p64, %p65
    %p67 = scmp.ne.s32.totalorder %s59, %s61
    %p68 = scmp.eq.s32.totalorder %s16, 1
    %p69 = por %p67, %p68
    %p70 = scmp.ne.s32.totalorder %s61, %s62
    %p71 = scmp.eq.s32.totalorder %s16, 0
    %p72 = por %p70, %p71
    %p73 = scmp.ne.s32.totalorder %s61, %s62
    %p74 = scmp.eq.s32.totalorder %s17, 1
    %p75 = por %p73, %p74
    %p77 = scmp.ne.s32.totalorder %s62, %s76
    %p78 = scmp.eq.s32.totalorder %s17, 0
    %p79 = por %p77, %p78
    %s81 = sadd.s32 %s80, 1
    %p84 = scmp.eq.s32.totalorder %s11, 1
    %p85 = scmp.ne.s32.totalorder %s80, %s82
    %p86 = scmp.eq.s32.totalorder %s11, 0
    %p87 = por %p85, %p86
    %p88 = scmp.ne.s32.totalorder %s80, %s82
    %p89 = scmp.eq.s32.totalorder %s16, 1
    %p90 = por %p88, %p89
    %p91 = scmp.ne.s32.totalorder %s82, %s83
    %p92 = scmp.eq.s32.totalorder %s16, 0
    %p93 = por %p91, %p92
    %p94 = scmp.ne.s32.totalorder %s82, %s83
    %p95 = scmp.eq.s32.totalorder %s17, 1
    %p96 = por %p94, %p95
    %p98 = scmp.ne.s32.totalorder %s83, %s97
    %p99 = scmp.eq.s32.totalorder %s17, 0
    %p100 = por %p98, %p99
    %s102 = sadd.s32 %s101, 1
    %p105 = scmp.eq.s32.totalorder %s11, 1
    %p106 = scmp.ne.s32.totalorder %s101, %s103
    %p107 = scmp.eq.s32.totalorder %s11, 0
    %p108 = por %p106, %p107
    %p109 = scmp.ne.s32.totalorder %s101, %s103
    %p110 = scmp.eq.s32.totalorder %s16, 1
    %p111 = por %p109, %p110
    %p112 = scmp.ne.s32.totalorder %s103, %s104
    %p113 = scmp.eq.s32.totalorder %s16, 0
    %p114 = por %p112, %p113
    %p115 = scmp.ne.s32.totalorder %s103, %s104
    %p116 = scmp.eq.s32.totalorder %s17, 1
    %p117 = por %p115, %p116
    %p119 = scmp.ne.s32.totalorder %s104, %s118
    %p120 = scmp.eq.s32.totalorder %s17, 0
    %p121 = por %p119, %p120
    %s123 = sadd.s32 %s122, 1
    %p126 = scmp.eq.s32.totalorder %s11, 1
    %p127 = scmp.ne.s32.totalorder %s122, %s124
    %p128 = scmp.eq.s32.totalorder %s11, 0
    %p129 = por %p127, %p128
    %p130 = scmp.ne.s32.totalorder %s122, %s124
    %p131 = scmp.eq.s32.totalorder %s16, 1
    %p132 = por %p130, %p131
    %p133 = scmp.ne.s32.totalorder %s124, %s125
    %p134 = scmp.eq.s32.totalorder %s16, 0
    %p135 = por %p133, %p134
    %p136 = scmp.ne.s32.totalorder %s124, %s125
    %p137 = scmp.eq.s32.totalorder %s17, 1
    %p138 = por %p136, %p137
    %p140 = scmp.ne.s32.totalorder %s125, %s139
    %p141 = scmp.eq.s32.totalorder %s17, 0
    %p142 = por %p140, %p141
    %s143 = ssub.s32 %s18, %s30
    %s144 = ssub.s32 %s19, %s26
    %s145 = sor.u32 %s143, %s144
    %p146 = scmp.eq.s32.totalorder %s145, 0
    %s148 = sadd.s32 %s147, 1
    %s149 = scalar_select %p146, %s147, %s148
    %p152 = pneg %p146
    %p153 = scmp.eq.s32.totalorder %s11, 1
    %p154 = por %p152, %p153
    %p155 = scmp.ne.s32.totalorder %s147, %s150
    %p156 = scmp.eq.s32.totalorder %s11, 0
    %p157 = por %p155, %p156
    %p158 = scmp.ne.s32.totalorder %s147, %s150
    %p159 = scmp.eq.s32.totalorder %s16, 1
    %p160 = por %p158, %p159
    %p161 = scmp.ne.s32.totalorder %s150, %s151
    %p162 = scmp.eq.s32.totalorder %s16, 0
    %p163 = por %p161, %p162
    %p164 = scmp.ne.s32.totalorder %s150, %s151
    %p165 = scmp.eq.s32.totalorder %s17, 1
    %p166 = por %p164, %p165
    %p168 = scmp.ne.s32.totalorder %s151, %s167
    %p169 = scmp.eq.s32.totalorder %s17, 0
    %p170 = por %p168, %p169
    %p171 = scmp.le.s32.totalorder 1, %s11
    %p172 = scmp.lt.s32.totalorder %s11, 3
    %p173 = pnand %p171, %p172
    %p174 = pneg %p173
    // Predicated region
    $region9: #{basic_block.1} parent=5 // pred_check
      _
    $region10: #{basic_block.1} parent=5 // pred_check_branch
      %176 = sbr.rel (%p173) target = $region12
    $region11: #{basic_block.1} parent=5 // pred_region
      %s177 = ssub.s32 %s11, 1
      // Predicated region
      $region13: #{basic_block.1} parent=11 // pred_check
        %p178 = pneg %p72
      $region14: #{basic_block.1} parent=11 // pred_check_branch
        %180 = sbr.rel (%p178) target = $region16
      $region15: #{basic_block.1} parent=11 // pred_region
        _
      $region16: #{basic_block.1} parent=11 // pred_fallthru
        _
      // Predicated region
      $region17: #{basic_block.1} parent=11 // pred_check
        %p181 = pneg %p93
      $region18: #{basic_block.1} parent=11 // pred_check_branch
        %183 = sbr.rel (%p181) target = $region20
      $region19: #{basic_block.1} parent=11 // pred_region
        _
      $region20: #{basic_block.1} parent=11 // pred_fallthru
        _
      // Predicated region
      $region21: #{basic_block.1} parent=11 // pred_check
        %p184 = pneg %p114
      $region22: #{basic_block.1} parent=11 // pred_check_branch
        %186 = sbr.rel (%p184) target = $region24
      $region23: #{basic_block.1} parent=11 // pred_region
        _
      $region24: #{basic_block.1} parent=11 // pred_fallthru
        _
      // Predicated region
      $region25: #{basic_block.1} parent=11 // pred_check
        %p187 = pneg %p135
      $region26: #{basic_block.1} parent=11 // pred_check_branch
        %189 = sbr.rel (%p187) target = $region28
      $region27: #{basic_block.1} parent=11 // pred_region
        _
      $region28: #{basic_block.1} parent=11 // pred_fallthru
        _
    $region12: #{basic_block.1} parent=5 // pred_fallthru
      _
    %p190 = scmp.lt.s32.totalorder %s11, 2
    // Predicated region
    $region29: #{basic_block.1} parent=5 // pred_check
      %p191 = pneg %p190
    $region30: #{basic_block.1} parent=5 // pred_check_branch
      %193 = sbr.rel (%p191) target = $region32
    $region31: #{basic_block.1} parent=5 // pred_region
      // Predicated region
      $region33: #{basic_block.1} parent=31 // pred_check
        %p194 = pneg %p45
      $region34: #{basic_block.1} parent=31 // pred_check_branch
        %196 = sbr.rel (%p194) target = $region36
      $region35: #{basic_block.1} parent=31 // pred_region
        %p197 = scmp.lt.s32.totalorder %s18, 1
        %s198 = scalar_select %p197, %s18, 1
        %p199 = scmp.lt.s32.totalorder %s19, 0
        %s200 = scalar_select %p199, %s19, 0
        %s201 = smul.addr %s200, 54
        %s202 = smul.addr %s198, 54
        %s203 = sadd.s32 %s201, %s202
        %s204 = smul.addr %s203, 8
        %s205 = scalar_lea.vmem %s0, %s204
      $region36: #{basic_block.1} parent=31 // pred_fallthru
        _
    $region32: #{basic_block.1} parent=5 // pred_fallthru
      _
    %p206 = scmp.le.s32.totalorder 1, %s11
    %p207 = scmp.lt.s32.totalorder %s11, 3
    %p208 = pnand %p206, %p207
    %p209 = pneg %p208
    // Predicated region
    $region37: #{basic_block.1} parent=5 // pred_check
      _
    $region38: #{basic_block.1} parent=5 // pred_check_branch
      %211 = sbr.rel (%p208) target = $region40
    $region39: #{basic_block.1} parent=5 // pred_region
      %s212 = ssub.s32 %s11, 1
      %p213 = scmp.lt.s32.totalorder %s20, 1
      %s214 = scalar_select %p213, %s20, 1
      %p215 = scmp.lt.s32.totalorder %s21, 0
      %s216 = scalar_select %p215, %s21, 0
      %s217 = smul.addr %s216, 54
      %s218 = smul.addr %s214, 54
      %s219 = sadd.s32 %s217, %s218
      %s220 = smul.addr %s219, 8
      %s221 = scalar_lea.vmem %s0, %s220
      %p222 = pneg %p51
      %p223 = pneg %p48
      %p224 = pneg %p72
      %p225 = pneg %p69
      %p226 = pneg %p93
      %p227 = pneg %p90
      %p228 = pneg %p114
      %p229 = pneg %p111
      %p230 = pneg %p135
      %p231 = pneg %p132
      %p232 = pneg %p163
      %p233 = pneg %p160
      %p234 = scmp.lt.s32.totalorder %s20, 1
      %s235 = scalar_select %p234, %s20, 1
      %p236 = scmp.lt.s32.totalorder %s21, 0
      %s237 = scalar_select %p236, %s21, 0
      %s238 = smul.addr %s237, 32
      %s239 = smul.addr %s235, 32
      %s240 = sadd.s32 %s238, %s239
      %s241 = smul.addr %s240, 8
      %s242 = scalar_lea.vmem %s5, %s241
      %p243 = scmp.lt.s32.totalorder %s20, 1
      %s244 = scalar_select %p243, %s20, 1
      %p245 = scmp.lt.s32.totalorder %s21, 0
      %s246 = scalar_select %p245, %s21, 0
      %s247 = smul.addr %s246, 54
      %s248 = smul.addr %s244, 54
      %s249 = sadd.s32 %s247, %s248
      %s250 = smul.addr %s249, 8
      %s251 = scalar_lea.vmem %s0, %s250
      %p252 = scmp.lt.s32.totalorder %s20, 1
      %s253 = scalar_select %p252, %s20, 1
      %p254 = scmp.lt.s32.totalorder %s21, 0
      %s255 = scalar_select %p254, %s21, 0
      %s256 = smul.addr %s255, 32
      %s257 = smul.addr %s253, 32
      %s258 = sadd.s32 %s256, %s257
      %s259 = smul.addr %s258, 8
      %s260 = scalar_lea.vmem %s5, %s259
      %v261 = vld [vmem:[%s251] sm:$0xff]
      %v262 = vld [vmem:[%s251 + $0x8] sm:$0xff]
      %v263 = vld [vmem:[%s251 + $0x10] sm:$0x3]
      %v264 = vld [vmem:[%s251 + $0x18] sm:$0xff]
      %v265 = vld [vmem:[%s251 + $0x20] sm:$0xff]
      %v266 = vld [vmem:[%s251 + $0x28] sm:$0x3]
      %v267 = vld [vmem:[%s251 + $0x30] sm:$0xff]
      %v268 = vld [vmem:[%s251 + $0x38] sm:$0xff]
      %v269 = vld [vmem:[%s251 + $0x40] sm:$0x3]
      %v270 = vld [vmem:[%s251 + $0x48] sm:$0xff]
      %v271 = vld [vmem:[%s251 + $0x50] sm:$0xff]
      %v272 = vld [vmem:[%s251 + $0x58] sm:$0x3]
      %v273 = vld [vmem:[%s251 + $0x60] sm:$0xff]
      %v274 = vld [vmem:[%s251 + $0x68] sm:$0xff]
      %v275 = vld [vmem:[%s251 + $0x70] sm:$0x3]
      %v276 = vld [vmem:[%s251 + $0x78] sm:$0xff]
      %v277 = vld [vmem:[%s251 + $0x80] sm:$0xff]
      %v278 = vld [vmem:[%s251 + $0x88] sm:$0x3]
      %v279 = vld [vmem:[%s251 + $0x90] sm:$0xff]
      %v280 = vld [vmem:[%s251 + $0x98] sm:$0xff]
      %v281 = vld [vmem:[%s251 + $0xa0] sm:$0x3]
      %v282 = vld [vmem:[%s251 + $0xa8] sm:$0xff]
      %v283 = vld [vmem:[%s251 + $0xb0] sm:$0xff]
      %v284 = vld [vmem:[%s251 + $0xb8] sm:$0x3]
      %v285 = vld [vmem:[%s251 + $0xc0] sm:$0xff]
      %v286 = vld [vmem:[%s251 + $0xc8] sm:$0xff]
      %v287 = vld [vmem:[%s251 + $0xd0] sm:$0x3]
      %v288 = vld [vmem:[%s251 + $0xd8] sm:$0xff]
      %v289 = vld [vmem:[%s251 + $0xe0] sm:$0xff]
      %v290 = vld [vmem:[%s251 + $0xe8] sm:$0x3]
      %v291 = vld [vmem:[%s251 + $0xf0] sm:$0xff]
      %v292 = vld [vmem:[%s251 + $0xf8] sm:$0xff]
      %v293 = vld [vmem:[%s251 + $0x100] sm:$0x3]
      %v294 = vld [vmem:[%s251 + $0x108] sm:$0xff]
      %v295 = vld [vmem:[%s251 + $0x110] sm:$0xff]
      %v296 = vld [vmem:[%s251 + $0x118] sm:$0x3]
      %v297 = vld [vmem:[%s251 + $0x120] sm:$0xff]
      %v298 = vld [vmem:[%s251 + $0x128] sm:$0xff]
      %v299 = vld [vmem:[%s251 + $0x130] sm:$0x3]
      %v300 = vld [vmem:[%s251 + $0x138] sm:$0xff]
      %v301 = vld [vmem:[%s251 + $0x140] sm:$0xff]
      %v302 = vld [vmem:[%s251 + $0x148] sm:$0x3]
      %v303 = vld [vmem:[%s251 + $0x150] sm:$0xff]
      %v304 = vld [vmem:[%s251 + $0x158] sm:$0xff]
      %v305 = vld [vmem:[%s251 + $0x160] sm:$0x3]
      %v306 = vld [vmem:[%s251 + $0x168] sm:$0xff]
      %v307 = vld [vmem:[%s251 + $0x170] sm:$0xff]
      %v308 = vld [vmem:[%s251 + $0x178] sm:$0x3]
      %v309 = vld [vmem:[%s251 + $0x180] sm:$0xff]
      %v310 = vld [vmem:[%s251 + $0x188] sm:$0xff]
      %v311 = vld [vmem:[%s251 + $0x190] sm:$0x3]
      %v312 = vld [vmem:[%s251 + $0x198] sm:$0xff]
      %v313 = vld [vmem:[%s251 + $0x1a0] sm:$0xff]
      %v314 = vld [vmem:[%s251 + $0x1a8] sm:$0x3]
      %v315 = vld [vmem:[%s1] sm:$0xff]
      %v316 = vld [vmem:[%s1 + $0x8] sm:$0xff]
      %v317 = vld [vmem:[%s1 + $0x10] sm:$0xff]
      %v318 = vld [vmem:[%s1 + $0x18] sm:$0xff]
      %v319 = vld [vmem:[%s1 + $0x20] sm:$0xff]
      %v320 = vld [vmem:[%s1 + $0x28] sm:$0xff]
      %v321 = vld [vmem:[%s1 + $0x30] sm:$0xff]
      %v322 = vld [vmem:[%s1 + $0x38] sm:$0xff]
      %v323 = vld [vmem:[%s1 + $0x40] sm:$0xff]
      %v324 = vld [vmem:[%s1 + $0x48] sm:$0xff]
      %v325 = vld [vmem:[%s1 + $0x50] sm:$0xff]
      %v326 = vld [vmem:[%s1 + $0x58] sm:$0xff]
      %v327 = vld [vmem:[%s1 + $0x60] sm:$0xff]
      %v328 = vld [vmem:[%s1 + $0x68] sm:$0xff]
      %v329 = vld [vmem:[%s1 + $0x70] sm:$0xff]
      %v330 = vld [vmem:[%s1 + $0x78] sm:$0xff]
      %vm379 = vcmask 1046528
      %v380 = vrot.slane %v261, 1
      %v381 = vrot.slane %v262, 1
      %v382 = vsel %vm379, %v380, %v381
      %v383 = vrot.slane %v263, 1
      %v384 = vsel %vm379, %v381, %v383
      %v385 = vrot.slane %v264, 1
      %v386 = vrot.slane %v265, 1
      %v387 = vsel %vm379, %v385, %v386
      %v388 = vrot.slane %v266, 1
      %v389 = vsel %vm379, %v386, %v388
      %v390 = vrot.slane %v267, 1
      %v391 = vrot.slane %v268, 1
      %v392 = vsel %vm379, %v390, %v391
      %v393 = vrot.slane %v269, 1
      %v394 = vsel %vm379, %v391, %v393
      %v395 = vrot.slane %v270, 1
      %v396 = vrot.slane %v271, 1
      %v397 = vsel %vm379, %v395, %v396
      %v398 = vrot.slane %v272, 1
      %v399 = vsel %vm379, %v396, %v398
      %v400 = vrot.slane %v273, 1
      %v401 = vrot.slane %v274, 1
      %v402 = vsel %vm379, %v400, %v401
      %v403 = vrot.slane %v275, 1
      %v404 = vsel %vm379, %v401, %v403
      %v405 = vrot.slane %v276, 1
      %v406 = vrot.slane %v277, 1
      %v407 = vsel %vm379, %v405, %v406
      %v408 = vrot.slane %v278, 1
      %v409 = vsel %vm379, %v406, %v408
      %v410 = vrot.slane %v279, 1
      %v411 = vrot.slane %v280, 1
      %v412 = vsel %vm379, %v410, %v411
      %v413 = vrot.slane %v281, 1
      %v414 = vsel %vm379, %v411, %v413
      %v415 = vrot.slane %v282, 1
      %v416 = vrot.slane %v283, 1
      %v417 = vsel %vm379, %v415, %v416
      %v418 = vrot.slane %v284, 1
      %v419 = vsel %vm379, %v416, %v418
      %v420 = vrot.slane %v285, 1
      %v421 = vrot.slane %v286, 1
      %v422 = vsel %vm379, %v420, %v421
      %v423 = vrot.slane %v287, 1
      %v424 = vsel %vm379, %v421, %v423
      %v425 = vrot.slane %v288, 1
      %v426 = vrot.slane %v289, 1
      %v427 = vsel %vm379, %v425, %v426
      %v428 = vrot.slane %v290, 1
      %v429 = vsel %vm379, %v426, %v428
      %v430 = vrot.slane %v291, 1
      %v431 = vrot.slane %v292, 1
      %v432 = vsel %vm379, %v430, %v431
      %v433 = vrot.slane %v293, 1
      %v434 = vsel %vm379, %v431, %v433
      %v435 = vrot.slane %v294, 1
      %v436 = vrot.slane %v295, 1
      %v437 = vsel %vm379, %v435, %v436
      %v438 = vrot.slane %v296, 1
      %v439 = vsel %vm379, %v436, %v438
      %v440 = vrot.slane %v297, 1
      %v441 = vrot.slane %v298, 1
      %v442 = vsel %vm379, %v440, %v441
      %v443 = vrot.slane %v299, 1
      %v444 = vsel %vm379, %v441, %v443
      %v445 = vrot.slane %v300, 1
      %v446 = vrot.slane %v301, 1
      %v447 = vsel %vm379, %v445, %v446
      %v448 = vrot.slane %v302, 1
      %v449 = vsel %vm379, %v446, %v448
      %v450 = vrot.slane %v303, 1
      %v451 = vrot.slane %v304, 1
      %v452 = vsel %vm379, %v450, %v451
      %v453 = vrot.slane %v305, 1
      %v454 = vsel %vm379, %v451, %v453
      %v455 = vrot.slane %v306, 1
      %v456 = vrot.slane %v307, 1
      %v457 = vsel %vm379, %v455, %v456
      %v458 = vrot.slane %v308, 1
      %v459 = vsel %vm379, %v456, %v458
      %s492 = scalar_lea.vmem %s1, 128
      %v493 = vld [vmem:[%s492] sm:$0xff]
      %v494 = vld [vmem:[%s492 + $0x8] sm:$0xff]
      %v495 = vld [vmem:[%s492 + $0x10] sm:$0xff]
      %v496 = vld [vmem:[%s492 + $0x18] sm:$0xff]
      %v497 = vld [vmem:[%s492 + $0x20] sm:$0xff]
      %v498 = vld [vmem:[%s492 + $0x28] sm:$0xff]
      %v499 = vld [vmem:[%s492 + $0x30] sm:$0xff]
      %v500 = vld [vmem:[%s492 + $0x38] sm:$0xff]
      %v501 = vld [vmem:[%s492 + $0x40] sm:$0xff]
      %v502 = vld [vmem:[%s492 + $0x48] sm:$0xff]
      %v503 = vld [vmem:[%s492 + $0x50] sm:$0xff]
      %v504 = vld [vmem:[%s492 + $0x58] sm:$0xff]
      %v505 = vld [vmem:[%s492 + $0x60] sm:$0xff]
      %v506 = vld [vmem:[%s492 + $0x68] sm:$0xff]
      %v507 = vld [vmem:[%s492 + $0x70] sm:$0xff]
      %v508 = vld [vmem:[%s492 + $0x78] sm:$0xff]
      %509 = vmatprep.subr.mxu0 0.0
      %510 = vmatpush1.msra.mxu0 %v493
      %511 = vmatprep.subr.mxu0 0.0
      %512 = vmatpush1.msra.mxu0 %v494
      %513 = vmatprep.subr.mxu0 0.0
      %514 = vmatpush1.msra.mxu0 %v495
      %515 = vmatprep.subr.mxu0 0.0
      %516 = vmatpush1.msra.mxu0 %v496
      %517 = vmatprep.subr.mxu0 0.0
      %518 = vmatpush1.msra.mxu0 %v497
      %519 = vmatprep.subr.mxu0 0.0
      %520 = vmatpush1.msra.mxu0 %v498
      %521 = vmatprep.subr.mxu0 0.0
      %522 = vmatpush1.msra.mxu0 %v499
      %523 = vmatprep.subr.mxu0 0.0
      %524 = vmatpush1.msra.mxu0 %v500
      %525 = vmatprep.subr.mxu0 0.0
      %526 = vmatpush1.msra.mxu0 %v501
      %527 = vmatprep.subr.mxu0 0.0
      %528 = vmatpush1.msra.mxu0 %v502
      %529 = vmatprep.subr.mxu0 0.0
      %530 = vmatpush1.msra.mxu0 %v503
      %531 = vmatprep.subr.mxu0 0.0
      %532 = vmatpush1.msra.mxu0 %v504
      %533 = vmatprep.subr.mxu0 0.0
      %534 = vmatpush1.msra.mxu0 %v505
      %535 = vmatprep.subr.mxu0 0.0
      %536 = vmatpush1.msra.mxu0 %v506
      %537 = vmatprep.subr.mxu0 0.0
      %538 = vmatpush1.msra.mxu0 %v507
      %539 = vmatprep.subr.mxu0 0.0
      %540 = vmatpush1.msra.mxu0 %v508
      %541 = vmatprep.subr.mxu0 0.0
      %542 = vmatpush1.msra.mxu0 0.0
      %543 = vmatprep.subr.mxu0 0.0
      %544 = vmatpush1.msra.mxu0 0.0
      %545 = vmatprep.subr.mxu0 0.0
      %546 = vmatpush1.msra.mxu0 0.0
      %547 = vmatprep.subr.mxu0 0.0
      %548 = vmatpush1.msra.mxu0 0.0
      %549 = vmatprep.subr.mxu0 0.0
      %550 = vmatpush1.msra.mxu0 0.0
      %551 = vmatprep.subr.mxu0 0.0
      %552 = vmatpush1.msra.mxu0 0.0
      %553 = vmatprep.subr.mxu0 0.0
      %554 = vmatpush1.msra.mxu0 0.0
      %555 = vmatprep.subr.mxu0 0.0
      %556 = vmatpush1.msra.mxu0 0.0
      %557 = vmatprep.subr.mxu0 0.0
      %558 = vmatpush1.msra.mxu0 0.0
      %559 = vmatprep.subr.mxu0 0.0
      %560 = vmatpush1.msra.mxu0 0.0
      %561 = vmatprep.subr.mxu0 0.0
      %562 = vmatpush1.msra.mxu0 0.0
      %563 = vmatprep.subr.mxu0 0.0
      %564 = vmatpush1.msra.mxu0 0.0
      %565 = vmatprep.subr.mxu0 0.0
      %566 = vmatpush1.msra.mxu0 0.0
      %567 = vmatprep.subr.mxu0 0.0
      %568 = vmatpush1.msra.mxu0 0.0
      %569 = vmatprep.subr.mxu0 0.0
      %570 = vmatpush1.msra.mxu0 0.0
      %571 = vmatprep.subr.mxu0 0.0
      %572 = vmatpush1.msra.mxu0 0.0
      %573 = vmatprep.mubr.f32.mxu0 0.0
      %574 = vmatmul.mubr.f32.gmra.mrb[0].mxu0 %v382
      %v575 = vpop.f32.mrb[0].mxu0
      %v576 = vadd.f32 0.0, %v575
      %v577 = vpop.f32.mrb[0].mxu0
      %578 = vmatprep.mubr.f32.mxu0 0.0
      %579 = vmatmul.mubr.f32.gmra.mrb[0].mxu0 %v384
      %v580 = vpop.f32.mrb[0].mxu0
      %v581 = vadd.f32 0.0, %v580
      %v582 = vpop.f32.mrb[0].mxu0
      %583 = vmatprep.mubr.f32.mxu0 0.0
      %584 = vmatmul.mubr.f32.gmra.mrb[0].mxu0 %v387
      %v585 = vpop.f32.mrb[0].mxu0
      %v586 = vadd.f32 0.0, %v585
      %v587 = vpop.f32.mrb[0].mxu0
      %588 = vmatprep.mubr.f32.mxu0 0.0
      %589 = vmatmul.mubr.f32.gmra.mrb[0].mxu0 %v389
      %v590 = vpop.f32.mrb[0].mxu0
      %v591 = vadd.f32 0.0, %v590
      %v592 = vpop.f32.mrb[0].mxu0
      %593 = vmatprep.mubr.f32.mxu0 0.0
      %594 = vmatmul.mubr.f32.gmra.mrb[0].mxu0 %v392
      %v595 = vpop.f32.mrb[0].mxu0
      %v596 = vadd.f32 0.0, %v595
      %v597 = vpop.f32.mrb[0].mxu0
      %598 = vmatprep.mubr.f32.mxu0 0.0
      %599 = vmatmul.mubr.f32.gmra.mrb[0].mxu0 %v394
      %v600 = vpop.f32.mrb[0].mxu0
      %v601 = vadd.f32 0.0, %v600
      %v602 = vpop.f32.mrb[0].mxu0
      %603 = vmatprep.mubr.f32.mxu0 0.0
      %604 = vmatmul.mubr.f32.gmra.mrb[0].mxu0 %v397
      %v605 = vpop.f32.mrb[0].mxu0
      %v606 = vadd.f32 0.0, %v605
      %v607 = vpop.f32.mrb[0].mxu0
      %608 = vmatprep.mubr.f32.mxu0 0.0
      %609 = vmatmul.mubr.f32.gmra.mrb[0].mxu0 %v399
      %v610 = vpop.f32.mrb[0].mxu0
      %v611 = vadd.f32 0.0, %v610
      %v612 = vpop.f32.mrb[0].mxu0
      %613 = vmatprep.mubr.f32.mxu0 0.0
      %614 = vmatmul.mubr.f32.gmra.mrb[0].mxu0 %v402
      %v615 = vpop.f32.mrb[0].mxu0
      %v616 = vadd.f32 0.0, %v615
      %v617 = vpop.f32.mrb[0].mxu0
      %618 = vmatprep.mubr.f32.mxu0 0.0
      %619 = vmatmul.mubr.f32.gmra.mrb[0].mxu0 %v404
      %v620 = vpop.f32.mrb[0].mxu0
      %v621 = vadd.f32 0.0, %v620
      %v622 = vpop.f32.mrb[0].mxu0
      %623 = vmatprep.mubr.f32.mxu0 0.0
      %624 = vmatmul.mubr.f32.gmra.mrb[0].mxu0 %v407
      %v625 = vpop.f32.mrb[0].mxu0
      %v626 = vadd.f32 0.0, %v625
      %v627 = vpop.f32.mrb[0].mxu0
      %628 = vmatprep.mubr.f32.mxu0 0.0
      %629 = vmatmul.mubr.f32.gmra.mrb[0].mxu0 %v409
      %v630 = vpop.f32.mrb[0].mxu0
      %v631 = vadd.f32 0.0, %v630
      %v632 = vpop.f32.mrb[0].mxu0
      %633 = vmatprep.mubr.f32.mxu0 0.0
      %634 = vmatmul.mubr.f32.gmra.mrb[0].mxu0 %v412
      %v635 = vpop.f32.mrb[0].mxu0
      %v636 = vadd.f32 0.0, %v635
      %v637 = vpop.f32.mrb[0].mxu0
      %638 = vmatprep.mubr.f32.mxu0 0.0
      %639 = vmatmul.mubr.f32.gmra.mrb[0].mxu0 %v414
      %v640 = vpop.f32.mrb[0].mxu0
      %v641 = vadd.f32 0.0, %v640
      %v642 = vpop.f32.mrb[0].mxu0
      %643 = vmatprep.mubr.f32.mxu0 0.0
      %644 = vmatmul.mubr.f32.gmra.mrb[0].mxu0 %v417
      %v645 = vpop.f32.mrb[0].mxu0
      %v646 = vadd.f32 0.0, %v645
      %v647 = vpop.f32.mrb[0].mxu0
      %648 = vmatprep.mubr.f32.mxu0 0.0
      %649 = vmatmul.mubr.f32.gmra.mrb[0].mxu0 %v419
      %v650 = vpop.f32.mrb[0].mxu0
      %v651 = vadd.f32 0.0, %v650
      %v652 = vpop.f32.mrb[0].mxu0
      %653 = vmatprep.mubr.f32.mxu0 0.0
      %654 = vmatmul.mubr.f32.gmra.mrb[0].mxu0 %v422
      %v655 = vpop.f32.mrb[0].mxu0
      %v656 = vadd.f32 0.0, %v655
      %v657 = vpop.f32.mrb[0].mxu0
      %658 = vmatprep.mubr.f32.mxu0 0.0
      %659 = vmatmul.mubr.f32.gmra.mrb[0].mxu0 %v424
      %v660 = vpop.f32.mrb[0].mxu0
      %v661 = vadd.f32 0.0, %v660
      %v662 = vpop.f32.mrb[0].mxu0
      %663 = vmatprep.mubr.f32.mxu0 0.0
      %664 = vmatmul.mubr.f32.gmra.mrb[0].mxu0 %v427
      %v665 = vpop.f32.mrb[0].mxu0
      %v666 = vadd.f32 0.0, %v665
      %v667 = vpop.f32.mrb[0].mxu0
      %668 = vmatprep.mubr.f32.mxu0 0.0
      %669 = vmatmul.mubr.f32.gmra.mrb[0].mxu0 %v429
      %v670 = vpop.f32.mrb[0].mxu0
      %v671 = vadd.f32 0.0, %v670
      %v672 = vpop.f32.mrb[0].mxu0
      %673 = vmatprep.mubr.f32.mxu0 0.0
      %674 = vmatmul.mubr.f32.gmra.mrb[0].mxu0 %v432
      %v675 = vpop.f32.mrb[0].mxu0
      %v676 = vadd.f32 0.0, %v675
      %v677 = vpop.f32.mrb[0].mxu0
      %678 = vmatprep.mubr.f32.mxu0 0.0
      %679 = vmatmul.mubr.f32.gmra.mrb[0].mxu0 %v434
      %v680 = vpop.f32.mrb[0].mxu0
      %v681 = vadd.f32 0.0, %v680
      %v682 = vpop.f32.mrb[0].mxu0
      %683 = vmatprep.mubr.f32.mxu0 0.0
      %684 = vmatmul.mubr.f32.gmra.mrb[0].mxu0 %v437
      %v685 = vpop.f32.mrb[0].mxu0
      %v686 = vadd.f32 0.0, %v685
      %v687 = vpop.f32.mrb[0].mxu0
      %688 = vmatprep.mubr.f32.mxu0 0.0
      %689 = vmatmul.mubr.f32.gmra.mrb[0].mxu0 %v439
      %v690 = vpop.f32.mrb[0].mxu0
      %v691 = vadd.f32 0.0, %v690
      %v692 = vpop.f32.mrb[0].mxu0
      %693 = vmatprep.mubr.f32.mxu0 0.0
      %694 = vmatmul.mubr.f32.gmra.mrb[0].mxu0 %v442
      %v695 = vpop.f32.mrb[0].mxu0
      %v696 = vadd.f32 0.0, %v695
      %v697 = vpop.f32.mrb[0].mxu0
      %698 = vmatprep.mubr.f32.mxu0 0.0
      %699 = vmatmul.mubr.f32.gmra.mrb[0].mxu0 %v444
      %v700 = vpop.f32.mrb[0].mxu0
      %v701 = vadd.f32 0.0, %v700
      %v702 = vpop.f32.mrb[0].mxu0
      %703 = vmatprep.mubr.f32.mxu0 0.0
      %704 = vmatmul.mubr.f32.gmra.mrb[0].mxu0 %v447
      %v705 = vpop.f32.mrb[0].mxu0
      %v706 = vadd.f32 0.0, %v705
      %v707 = vpop.f32.mrb[0].mxu0
      %708 = vmatprep.mubr.f32.mxu0 0.0
      %709 = vmatmul.mubr.f32.gmra.mrb[0].mxu0 %v449
      %v710 = vpop.f32.mrb[0].mxu0
      %v711 = vadd.f32 0.0, %v710
      %v712 = vpop.f32.mrb[0].mxu0
      %713 = vmatprep.mubr.f32.mxu0 0.0
      %714 = vmatmul.mubr.f32.gmra.mrb[0].mxu0 %v452
      %v715 = vpop.f32.mrb[0].mxu0
      %v716 = vadd.f32 0.0, %v715
      %v717 = vpop.f32.mrb[0].mxu0
      %718 = vmatprep.mubr.f32.mxu0 0.0
      %719 = vmatmul.mubr.f32.gmra.mrb[0].mxu0 %v454
      %v720 = vpop.f32.mrb[0].mxu0
      %v721 = vadd.f32 0.0, %v720
      %v722 = vpop.f32.mrb[0].mxu0
      %723 = vmatprep.mubr.f32.mxu0 0.0
      %724 = vmatmul.mubr.f32.gmra.mrb[0].mxu0 %v457
      %v725 = vpop.f32.mrb[0].mxu0
      %v726 = vadd.f32 0.0, %v725
      %v727 = vpop.f32.mrb[0].mxu0
      %728 = vmatprep.mubr.f32.mxu0 0.0
      %729 = vmatmul.mubr.f32.gmra.mrb[0].mxu0 %v459
      %v730 = vpop.f32.mrb[0].mxu0
      %v731 = vadd.f32 0.0, %v730
      %v732 = vpop.f32.mrb[0].mxu0
      %733 = vdwg.mxu0
      %734 = vmatprep.subr.mxu0 0.0
      %735 = vmatpush1.msra.mxu0 %v315
      %736 = vmatprep.subr.mxu0 0.0
      %737 = vmatpush1.msra.mxu0 %v316
      %738 = vmatprep.subr.mxu0 0.0
      %739 = vmatpush1.msra.mxu0 %v317
      %740 = vmatprep.subr.mxu0 0.0
      %741 = vmatpush1.msra.mxu0 %v318
      %742 = vmatprep.subr.mxu0 0.0
      %743 = vmatpush1.msra.mxu0 %v319
      %744 = vmatprep.subr.mxu0 0.0
      %745 = vmatpush1.msra.mxu0 %v320
      %746 = vmatprep.subr.mxu0 0.0
      %747 = vmatpush1.msra.mxu0 %v321
      %748 = vmatprep.subr.mxu0 0.0
      %749 = vmatpush1.msra.mxu0 %v322
      %750 = vmatprep.subr.mxu0 0.0
      %751 = vmatpush1.msra.mxu0 %v323
      %752 = vmatprep.subr.mxu0 0.0
      %753 = vmatpush1.msra.mxu0 %v324
      %754 = vmatprep.subr.mxu0 0.0
      %755 = vmatpush1.msra.mxu0 %v325
      %756 = vmatprep.subr.mxu0 0.0
      %757 = vmatpush1.msra.mxu0 %v326
      %758 = vmatprep.subr.mxu0 0.0
      %759 = vmatpush1.msra.mxu0 %v327
      %760 = vmatprep.subr.mxu0 0.0
      %761 = vmatpush1.msra.mxu0 %v328
      %762 = vmatprep.subr.mxu0 0.0
      %763 = vmatpush1.msra.mxu0 %v329
      %764 = vmatprep.subr.mxu0 0.0
      %765 = vmatpush1.msra.mxu0 %v330
      %766 = vmatprep.subr.mxu0 0.0
      %767 = vmatpush1.msra.mxu0 0.0
      %768 = vmatprep.subr.mxu0 0.0
      %769 = vmatpush1.msra.mxu0 0.0
      %770 = vmatprep.subr.mxu0 0.0
      %771 = vmatpush1.msra.mxu0 0.0
      %772 = vmatprep.subr.mxu0 0.0
      %773 = vmatpush1.msra.mxu0 0.0
      %774 = vmatprep.subr.mxu0 0.0
      %775 = vmatpush1.msra.mxu0 0.0
      %776 = vmatprep.subr.mxu0 0.0
      %777 = vmatpush1.msra.mxu0 0.0
      %778 = vmatprep.subr.mxu0 0.0
      %779 = vmatpush1.msra.mxu0 0.0
      %780 = vmatprep.subr.mxu0 0.0
      %781 = vmatpush1.msra.mxu0 0.0
      %782 = vmatprep.subr.mxu0 0.0
      %783 = vmatpush1.msra.mxu0 0.0
      %784 = vmatprep.subr.mxu0 0.0
      %785 = vmatpush1.msra.mxu0 0.0
      %786 = vmatprep.subr.mxu0 0.0
      %787 = vmatpush1.msra.mxu0 0.0
      %788 = vmatprep.subr.mxu0 0.0
      %789 = vmatpush1.msra.mxu0 0.0
      %790 = vmatprep.subr.mxu0 0.0
      %791 = vmatpush1.msra.mxu0 0.0
      %792 = vmatprep.subr.mxu0 0.0
      %793 = vmatpush1.msra.mxu0 0.0
      %794 = vmatprep.subr.mxu0 0.0
      %795 = vmatpush1.msra.mxu0 0.0
      %796 = vmatprep.subr.mxu0 0.0
      %797 = vmatpush1.msra.mxu0 0.0
      %798 = vmatprep.mubr.f32.mxu0 0.0
      %799 = vmatmul.mubr.f32.gmra.mrb[0].mxu0 %v261
      %v800 = vpop.f32.mrb[0].mxu0
      %v801 = vadd.f32 %v576, %v800
      %v802 = vpop.f32.mrb[0].mxu0
      %803 = vmatprep.mubr.f32.mxu0 0.0
      %804 = vmatmul.mubr.f32.gmra.mrb[0].mxu0 %v262
      %v805 = vpop.f32.mrb[0].mxu0
      %v806 = vadd.f32 %v581, %v805
      %v807 = vpop.f32.mrb[0].mxu0
      %808 = vmatprep.mubr.f32.mxu0 0.0
      %809 = vmatmul.mubr.f32.gmra.mrb[0].mxu0 %v264
      %v810 = vpop.f32.mrb[0].mxu0
      %v811 = vadd.f32 %v586, %v810
      %v812 = vpop.f32.mrb[0].mxu0
      %813 = vmatprep.mubr.f32.mxu0 0.0
      %814 = vmatmul.mubr.f32.gmra.mrb[0].mxu0 %v265
      %v815 = vpop.f32.mrb[0].mxu0
      %v816 = vadd.f32 %v591, %v815
      %v817 = vpop.f32.mrb[0].mxu0
      %818 = vmatprep.mubr.f32.mxu0 0.0
      %819 = vmatmul.mubr.f32.gmra.mrb[0].mxu0 %v267
      %v820 = vpop.f32.mrb[0].mxu0
      %v821 = vadd.f32 %v596, %v820
      %v822 = vpop.f32.mrb[0].mxu0
      %823 = vmatprep.mubr.f32.mxu0 0.0
      %824 = vmatmul.mubr.f32.gmra.mrb[0].mxu0 %v268
      %v825 = vpop.f32.mrb[0].mxu0
      %v826 = vadd.f32 %v601, %v825
      %v827 = vpop.f32.mrb[0].mxu0
      %828 = vmatprep.mubr.f32.mxu0 0.0
      %829 = vmatmul.mubr.f32.gmra.mrb[0].mxu0 %v270
      %v830 = vpop.f32.mrb[0].mxu0
      %v831 = vadd.f32 %v606, %v830
      %v832 = vpop.f32.mrb[0].mxu0
      %833 = vmatprep.mubr.f32.mxu0 0.0
      %834 = vmatmul.mubr.f32.gmra.mrb[0].mxu0 %v271
      %v835 = vpop.f32.mrb[0].mxu0
      %v836 = vadd.f32 %v611, %v835
      %v837 = vpop.f32.mrb[0].mxu0
      %838 = vmatprep.mubr.f32.mxu0 0.0
      %839 = vmatmul.mubr.f32.gmra.mrb[0].mxu0 %v273
      %v840 = vpop.f32.mrb[0].mxu0
      %v841 = vadd.f32 %v616, %v840
      %v842 = vpop.f32.mrb[0].mxu0
      %843 = vmatprep.mubr.f32.mxu0 0.0
      %844 = vmatmul.mubr.f32.gmra.mrb[0].mxu0 %v274
      %v845 = vpop.f32.mrb[0].mxu0
      %v846 = vadd.f32 %v621, %v845
      %v847 = vpop.f32.mrb[0].mxu0
      %848 = vmatprep.mubr.f32.mxu0 0.0
      %849 = vmatmul.mubr.f32.gmra.mrb[0].mxu0 %v276
      %v850 = vpop.f32.mrb[0].mxu0
      %v851 = vadd.f32 %v626, %v850
      %v852 = vpop.f32.mrb[0].mxu0
      %853 = vmatprep.mubr.f32.mxu0 0.0
      %854 = vmatmul.mubr.f32.gmra.mrb[0].mxu0 %v277
      %v855 = vpop.f32.mrb[0].mxu0
      %v856 = vadd.f32 %v631, %v855
      %v857 = vpop.f32.mrb[0].mxu0
      %858 = vmatprep.mubr.f32.mxu0 0.0
      %859 = vmatmul.mubr.f32.gmra.mrb[0].mxu0 %v279
      %v860 = vpop.f32.mrb[0].mxu0
      %v861 = vadd.f32 %v636, %v860
      %v862 = vpop.f32.mrb[0].mxu0
      %863 = vmatprep.mubr.f32.mxu0 0.0
      %864 = vmatmul.mubr.f32.gmra.mrb[0].mxu0 %v280
      %v865 = vpop.f32.mrb[0].mxu0
      %v866 = vadd.f32 %v641, %v865
      %v867 = vpop.f32.mrb[0].mxu0
      %868 = vmatprep.mubr.f32.mxu0 0.0
      %869 = vmatmul.mubr.f32.gmra.mrb[0].mxu0 %v282
      %v870 = vpop.f32.mrb[0].mxu0
      %v871 = vadd.f32 %v646, %v870
      %v872 = vpop.f32.mrb[0].mxu0
      %873 = vmatprep.mubr.f32.mxu0 0.0
      %874 = vmatmul.mubr.f32.gmra.mrb[0].mxu0 %v283
      %v875 = vpop.f32.mrb[0].mxu0
      %v876 = vadd.f32 %v651, %v875
      %v877 = vpop.f32.mrb[0].mxu0
      %878 = vmatprep.mubr.f32.mxu0 0.0
      %879 = vmatmul.mubr.f32.gmra.mrb[0].mxu0 %v285
      %v880 = vpop.f32.mrb[0].mxu0
      %v881 = vadd.f32 %v656, %v880
      %v882 = vpop.f32.mrb[0].mxu0
      %883 = vmatprep.mubr.f32.mxu0 0.0
      %884 = vmatmul.mubr.f32.gmra.mrb[0].mxu0 %v286
      %v885 = vpop.f32.mrb[0].mxu0
      %v886 = vadd.f32 %v661, %v885
      %v887 = vpop.f32.mrb[0].mxu0
      %888 = vmatprep.mubr.f32.mxu0 0.0
      %889 = vmatmul.mubr.f32.gmra.mrb[0].mxu0 %v288
      %v890 = vpop.f32.mrb[0].mxu0
      %v891 = vadd.f32 %v666, %v890
      %v892 = vpop.f32.mrb[0].mxu0
      %893 = vmatprep.mubr.f32.mxu0 0.0
      %894 = vmatmul.mubr.f32.gmra.mrb[0].mxu0 %v289
      %v895 = vpop.f32.mrb[0].mxu0
      %v896 = vadd.f32 %v671, %v895
      %v897 = vpop.f32.mrb[0].mxu0
      %898 = vmatprep.mubr.f32.mxu0 0.0
      %899 = vmatmul.mubr.f32.gmra.mrb[0].mxu0 %v291
      %v900 = vpop.f32.mrb[0].mxu0
      %v901 = vadd.f32 %v676, %v900
      %v902 = vpop.f32.mrb[0].mxu0
      %903 = vmatprep.mubr.f32.mxu0 0.0
      %904 = vmatmul.mubr.f32.gmra.mrb[0].mxu0 %v292
      %v905 = vpop.f32.mrb[0].mxu0
      %v906 = vadd.f32 %v681, %v905
      %v907 = vpop.f32.mrb[0].mxu0
      %908 = vmatprep.mubr.f32.mxu0 0.0
      %909 = vmatmul.mubr.f32.gmra.mrb[0].mxu0 %v294
      %v910 = vpop.f32.mrb[0].mxu0
      %v911 = vadd.f32 %v686, %v910
      %v912 = vpop.f32.mrb[0].mxu0
      %913 = vmatprep.mubr.f32.mxu0 0.0
      %914 = vmatmul.mubr.f32.gmra.mrb[0].mxu0 %v295
      %v915 = vpop.f32.mrb[0].mxu0
      %v916 = vadd.f32 %v691, %v915
      %v917 = vpop.f32.mrb[0].mxu0
      %918 = vmatprep.mubr.f32.mxu0 0.0
      %919 = vmatmul.mubr.f32.gmra.mrb[0].mxu0 %v297
      %v920 = vpop.f32.mrb[0].mxu0
      %v921 = vadd.f32 %v696, %v920
      %v922 = vpop.f32.mrb[0].mxu0
      %923 = vmatprep.mubr.f32.mxu0 0.0
      %924 = vmatmul.mubr.f32.gmra.mrb[0].mxu0 %v298
      %v925 = vpop.f32.mrb[0].mxu0
      %v926 = vadd.f32 %v701, %v925
      %v927 = vpop.f32.mrb[0].mxu0
      %928 = vmatprep.mubr.f32.mxu0 0.0
      %929 = vmatmul.mubr.f32.gmra.mrb[0].mxu0 %v300
      %v930 = vpop.f32.mrb[0].mxu0
      %v931 = vadd.f32 %v706, %v930
      %v932 = vpop.f32.mrb[0].mxu0
      %933 = vmatprep.mubr.f32.mxu0 0.0
      %934 = vmatmul.mubr.f32.gmra.mrb[0].mxu0 %v301
      %v935 = vpop.f32.mrb[0].mxu0
      %v936 = vadd.f32 %v711, %v935
      %v937 = vpop.f32.mrb[0].mxu0
      %938 = vmatprep.mubr.f32.mxu0 0.0
      %939 = vmatmul.mubr.f32.gmra.mrb[0].mxu0 %v303
      %v940 = vpop.f32.mrb[0].mxu0
      %v941 = vadd.f32 %v716, %v940
      %v942 = vpop.f32.mrb[0].mxu0
      %943 = vmatprep.mubr.f32.mxu0 0.0
      %944 = vmatmul.mubr.f32.gmra.mrb[0].mxu0 %v304
      %v945 = vpop.f32.mrb[0].mxu0
      %v946 = vadd.f32 %v721, %v945
      %v947 = vpop.f32.mrb[0].mxu0
      %948 = vmatprep.mubr.f32.mxu0 0.0
      %949 = vmatmul.mubr.f32.gmra.mrb[0].mxu0 %v306
      %v950 = vpop.f32.mrb[0].mxu0
      %v951 = vadd.f32 %v726, %v950
      %v952 = vpop.f32.mrb[0].mxu0
      %953 = vmatprep.mubr.f32.mxu0 0.0
      %954 = vmatmul.mubr.f32.gmra.mrb[0].mxu0 %v307
      %v955 = vpop.f32.mrb[0].mxu0
      %v956 = vadd.f32 %v731, %v955
      %v957 = vpop.f32.mrb[0].mxu0
      %958 = vdwg.mxu0
      %vm959 = vcmask 1045504
      %v960 = vrot.slane %v261, 2
      %v961 = vrot.slane %v262, 2
      %v962 = vsel %vm959, %v960, %v961
      %v963 = vrot.slane %v263, 2
      %v964 = vsel %vm959, %v961, %v963
      %v965 = vrot.slane %v264, 2
      %v966 = vrot.slane %v265, 2
      %v967 = vsel %vm959, %v965, %v966
      %v968 = vrot.slane %v266, 2
      %v969 = vsel %vm959, %v966, %v968
      %v970 = vrot.slane %v267, 2
      %v971 = vrot.slane %v268, 2
      %v972 = vsel %vm959, %v970, %v971
      %v973 = vrot.slane %v269, 2
      %v974 = vsel %vm959, %v971, %v973
      %v975 = vrot.slane %v270, 2
      %v976 = vrot.slane %v271, 2
      %v977 = vsel %vm959, %v975, %v976
      %v978 = vrot.slane %v272, 2
      %v979 = vsel %vm959, %v976, %v978
      %v980 = vrot.slane %v273, 2
      %v981 = vrot.slane %v274, 2
      %v982 = vsel %vm959, %v980, %v981
      %v983 = vrot.slane %v275, 2
      %v984 = vsel %vm959, %v981, %v983
      %v985 = vrot.slane %v276, 2
      %v986 = vrot.slane %v277, 2
      %v987 = vsel %vm959, %v985, %v986
      %v988 = vrot.slane %v278, 2
      %v989 = vsel %vm959, %v986, %v988
      %v990 = vrot.slane %v279, 2
      %v991 = vrot.slane %v280, 2
      %v992 = vsel %vm959, %v990, %v991
      %v993 = vrot.slane %v281, 2
      %v994 = vsel %vm959, %v991, %v993
      %v995 = vrot.slane %v282, 2
      %v996 = vrot.slane %v283, 2
      %v997 = vsel %vm959, %v995, %v996
      %v998 = vrot.slane %v284, 2
      %v999 = vsel %vm959, %v996, %v998
      %v1000 = vrot.slane %v285, 2
      %v1001 = vrot.slane %v286, 2
      %v1002 = vsel %vm959, %v1000, %v1001
      %v1003 = vrot.slane %v287, 2
      %v1004 = vsel %vm959, %v1001, %v1003
      %v1005 = vrot.slane %v288, 2
      %v1006 = vrot.slane %v289, 2
      %v1007 = vsel %vm959, %v1005, %v1006
      %v1008 = vrot.slane %v290, 2
      %v1009 = vsel %vm959, %v1006, %v1008
      %v1010 = vrot.slane %v291, 2
      %v1011 = vrot.slane %v292, 2
      %v1012 = vsel %vm959, %v1010, %v1011
      %v1013 = vrot.slane %v293, 2
      %v1014 = vsel %vm959, %v1011, %v1013
      %v1015 = vrot.slane %v294, 2
      %v1016 = vrot.slane %v295, 2
      %v1017 = vsel %vm959, %v1015, %v1016
      %v1018 = vrot.slane %v296, 2
      %v1019 = vsel %vm959, %v1016, %v1018
      %v1020 = vrot.slane %v297, 2
      %v1021 = vrot.slane %v298, 2
      %v1022 = vsel %vm959, %v1020, %v1021
      %v1023 = vrot.slane %v299, 2
      %v1024 = vsel %vm959, %v1021, %v1023
      %v1025 = vrot.slane %v300, 2
      %v1026 = vrot.slane %v301, 2
      %v1027 = vsel %vm959, %v1025, %v1026
      %v1028 = vrot.slane %v302, 2
      %v1029 = vsel %vm959, %v1026, %v1028
      %v1030 = vrot.slane %v303, 2
      %v1031 = vrot.slane %v304, 2
      %v1032 = vsel %vm959, %v1030, %v1031
      %v1033 = vrot.slane %v305, 2
      %v1034 = vsel %vm959, %v1031, %v1033
      %v1035 = vrot.slane %v306, 2
      %v1036 = vrot.slane %v307, 2
      %v1037 = vsel %vm959, %v1035, %v1036
      %v1038 = vrot.slane %v308, 2
      %v1039 = vsel %vm959, %v1036, %v1038
      %s1072 = scalar_lea.vmem %s1, 256
      %v1073 = vld [vmem:[%s1072] sm:$0xff]
      %v1074 = vld [vmem:[%s1072 + $0x8] sm:$0xff]
      %v1075 = vld [vmem:[%s1072 + $0x10] sm:$0xff]
      %v1076 = vld [vmem:[%s1072 + $0x18] sm:$0xff]
      %v1077 = vld [vmem:[%s1072 + $0x20] sm:$0xff]
      %v1078 = vld [vmem:[%s1072 + $0x28] sm:$0xff]
      %v1079 = vld [vmem:[%s1072 + $0x30] sm:$0xff]
      %v1080 = vld [vmem:[%s1072 + $0x38] sm:$0xff]
      %v1081 = vld [vmem:[%s1072 + $0x40] sm:$0xff]
      %v1082 = vld [vmem:[%s1072 + $0x48] sm:$0xff]
      %v1083 = vld [vmem:[%s1072 + $0x50] sm:$0xff]
      %v1084 = vld [vmem:[%s1072 + $0x58] sm:$0xff]
      %v1085 = vld [vmem:[%s1072 + $0x60] sm:$0xff]
      %v1086 = vld [vmem:[%s1072 + $0x68] sm:$0xff]
      %v1087 = vld [vmem:[%s1072 + $0x70] sm:$0xff]
      %v1088 = vld [vmem:[%s1072 + $0x78] sm:$0xff]
      %1089 = vmatprep.subr.mxu0 0.0
      %1090 = vmatpush1.msra.mxu0 %v1073
      %1091 = vmatprep.subr.mxu0 0.0
      %1092 = vmatpush1.msra.mxu0 %v1074
      %1093 = vmatprep.subr.mxu0 0.0
      %1094 = vmatpush1.msra.mxu0 %v1075
      %1095 = vmatprep.subr.mxu0 0.0
      %1096 = vmatpush1.msra.mxu0 %v1076
      %1097 = vmatprep.subr.mxu0 0.0
      %1098 = vmatpush1.msra.mxu0 %v1077
      %1099 = vmatprep.subr.mxu0 0.0
      %1100 = vmatpush1.msra.mxu0 %v1078
      %1101 = vmatprep.subr.mxu0 0.0
      %1102 = vmatpush1.msra.mxu0 %v1079
      %1103 = vmatprep.subr.mxu0 0.0
      %1104 = vmatpush1.msra.mxu0 %v1080
      %1105 = vmatprep.subr.mxu0 0.0
      %1106 = vmatpush1.msra.mxu0 %v1081
      %1107 = vmatprep.subr.mxu0 0.0
      %1108 = vmatpush1.msra.mxu0 %v1082
      %1109 = vmatprep.subr.mxu0 0.0
      %1110 = vmatpush1.msra.mxu0 %v1083
      %1111 = vmatprep.subr.mxu0 0.0
      %1112 = vmatpush1.msra.mxu0 %v1084
      %1113 = vmatprep.subr.mxu0 0.0
      %1114 = vmatpush1.msra.mxu0 %v1085
      %1115 = vmatprep.subr.mxu0 0.0
      %1116 = vmatpush1.msra.mxu0 %v1086
      %1117 = vmatprep.subr.mxu0 0.0
      %1118 = vmatpush1.msra.mxu0 %v1087
      %1119 = vmatprep.subr.mxu0 0.0
      %1120 = vmatpush1.msra.mxu0 %v1088
      %1121 = vmatprep.subr.mxu0 0.0
      %1122 = vmatpush1.msra.mxu0 0.0
      %1123 = vmatprep.subr.mxu0 0.0
      %1124 = vmatpush1.msra.mxu0 0.0
      %1125 = vmatprep.subr.mxu0 0.0
      %1126 = vmatpush1.msra.mxu0 0.0
      %1127 = vmatprep.subr.mxu0 0.0
      %1128 = vmatpush1.msra.mxu0 0.0
      %1129 = vmatprep.subr.mxu0 0.0
      %1130 = vmatpush1.msra.mxu0 0.0
      %1131 = vmatprep.subr.mxu0 0.0
      %1132 = vmatpush1.msra.mxu0 0.0
      %1133 = vmatprep.subr.mxu0 0.0
      %1134 = vmatpush1.msra.mxu0 0.0
      %1135 = vmatprep.subr.mxu0 0.0
      %1136 = vmatpush1.msra.mxu0 0.0
      %1137 = vmatprep.subr.mxu0 0.0
      %1138 = vmatpush1.msra.mxu0 0.0
      %1139 = vmatprep.subr.mxu0 0.0
      %1140 = vmatpush1.msra.mxu0 0.0
      %1141 = vmatprep.subr.mxu0 0.0
      %1142 = vmatpush1.msra.mxu0 0.0
      %1143 = vmatprep.subr.mxu0 0.0
      %1144 = vmatpush1.msra.mxu0 0.0
      %1145 = vmatprep.subr.mxu0 0.0
      %1146 = vmatpush1.msra.mxu0 0.0
      %1147 = vmatprep.subr.mxu0 0.0
      %1148 = vmatpush1.msra.mxu0 0.0
      %1149 = vmatprep.subr.mxu0 0.0
      %1150 = vmatpush1.msra.mxu0 0.0
      %1151 = vmatprep.subr.mxu0 0.0
      %1152 = vmatpush1.msra.mxu0 0.0
      %1153 = vmatprep.mubr.f32.mxu0 0.0
      %1154 = vmatmul.mubr.f32.gmra.mrb[0].mxu0 %v962
      %v1155 = vpop.f32.mrb[0].mxu0
      %v1156 = vadd.f32 0.0, %v1155
      %v1157 = vpop.f32.mrb[0].mxu0
      %1158 = vmatprep.mubr.f32.mxu0 0.0
      %1159 = vmatmul.mubr.f32.gmra.mrb[0].mxu0 %v964
      %v1160 = vpop.f32.mrb[0].mxu0
      %v1161 = vadd.f32 0.0, %v1160
      %v1162 = vpop.f32.mrb[0].mxu0
      %1163 = vmatprep.mubr.f32.mxu0 0.0
      %1164 = vmatmul.mubr.f32.gmra.mrb[0].mxu0 %v967
      %v1165 = vpop.f32.mrb[0].mxu0
      %v1166 = vadd.f32 0.0, %v1165
      %v1167 = vpop.f32.mrb[0].mxu0
      %1168 = vmatprep.mubr.f32.mxu0 0.0
      %1169 = vmatmul.mubr.f32.gmra.mrb[0].mxu0 %v969
      %v1170 = vpop.f32.mrb[0].mxu0
      %v1171 = vadd.f32 0.0, %v1170
      %v1172 = vpop.f32.mrb[0].mxu0
      %1173 = vmatprep.mubr.f32.mxu0 0.0
      %1174 = vmatmul.mubr.f32.gmra.mrb[0].mxu0 %v972
      %v1175 = vpop.f32.mrb[0].mxu0
      %v1176 = vadd.f32 0.0, %v1175
      %v1177 = vpop.f32.mrb[0].mxu0
      %1178 = vmatprep.mubr.f32.mxu0 0.0
      %1179 = vmatmul.mubr.f32.gmra.mrb[0].mxu0 %v974
      %v1180 = vpop.f32.mrb[0].mxu0
      %v1181 = vadd.f32 0.0, %v1180
      %v1182 = vpop.f32.mrb[0].mxu0
      %1183 = vmatprep.mubr.f32.mxu0 0.0
      %1184 = vmatmul.mubr.f32.gmra.mrb[0].mxu0 %v977
      %v1185 = vpop.f32.mrb[0].mxu0
      %v1186 = vadd.f32 0.0, %v1185
      %v1187 = vpop.f32.mrb[0].mxu0
      %1188 = vmatprep.mubr.f32.mxu0 0.0
      %1189 = vmatmul.mubr.f32.gmra.mrb[0].mxu0 %v979
      %v1190 = vpop.f32.mrb[0].mxu0
      %v1191 = vadd.f32 0.0, %v1190
      %v1192 = vpop.f32.mrb[0].mxu0
      %1193 = vmatprep.mubr.f32.mxu0 0.0
      %1194 = vmatmul.mubr.f32.gmra.mrb[0].mxu0 %v982
      %v1195 = vpop.f32.mrb[0].mxu0
      %v1196 = vadd.f32 0.0, %v1195
      %v1197 = vpop.f32.mrb[0].mxu0
      %1198 = vmatprep.mubr.f32.mxu0 0.0
      %1199 = vmatmul.mubr.f32.gmra.mrb[0].mxu0 %v984
      %v1200 = vpop.f32.mrb[0].mxu0
      %v1201 = vadd.f32 0.0, %v1200
      %v1202 = vpop.f32.mrb[0].mxu0
      %1203 = vmatprep.mubr.f32.mxu0 0.0
      %1204 = vmatmul.mubr.f32.gmra.mrb[0].mxu0 %v987
      %v1205 = vpop.f32.mrb[0].mxu0
      %v1206 = vadd.f32 0.0, %v1205
      %v1207 = vpop.f32.mrb[0].mxu0
      %1208 = vmatprep.mubr.f32.mxu0 0.0
      %1209 = vmatmul.mubr.f32.gmra.mrb[0].mxu0 %v989
      %v1210 = vpop.f32.mrb[0].mxu0
      %v1211 = vadd.f32 0.0, %v1210
      %v1212 = vpop.f32.mrb[0].mxu0
      %1213 = vmatprep.mubr.f32.mxu0 0.0
      %1214 = vmatmul.mubr.f32.gmra.mrb[0].mxu0 %v992
      %v1215 = vpop.f32.mrb[0].mxu0
      %v1216 = vadd.f32 0.0, %v1215
      %v1217 = vpop.f32.mrb[0].mxu0
      %1218 = vmatprep.mubr.f32.mxu0 0.0
      %1219 = vmatmul.mubr.f32.gmra.mrb[0].mxu0 %v994
      %v1220 = vpop.f32.mrb[0].mxu0
      %v1221 = vadd.f32 0.0, %v1220
      %v1222 = vpop.f32.mrb[0].mxu0
      %1223 = vmatprep.mubr.f32.mxu0 0.0
      %1224 = vmatmul.mubr.f32.gmra.mrb[0].mxu0 %v997
      %v1225 = vpop.f32.mrb[0].mxu0
      %v1226 = vadd.f32 0.0, %v1225
      %v1227 = vpop.f32.mrb[0].mxu0
      %1228 = vmatprep.mubr.f32.mxu0 0.0
      %1229 = vmatmul.mubr.f32.gmra.mrb[0].mxu0 %v999
      %v1230 = vpop.f32.mrb[0].mxu0
      %v1231 = vadd.f32 0.0, %v1230
      %v1232 = vpop.f32.mrb[0].mxu0
      %1233 = vmatprep.mubr.f32.mxu0 0.0
      %1234 = vmatmul.mubr.f32.gmra.mrb[0].mxu0 %v1002
      %v1235 = vpop.f32.mrb[0].mxu0
      %v1236 = vadd.f32 0.0, %v1235
      %v1237 = vpop.f32.mrb[0].mxu0
      %1238 = vmatprep.mubr.f32.mxu0 0.0
      %1239 = vmatmul.mubr.f32.gmra.mrb[0].mxu0 %v1004
      %v1240 = vpop.f32.mrb[0].mxu0
      %v1241 = vadd.f32 0.0, %v1240
      %v1242 = vpop.f32.mrb[0].mxu0
      %1243 = vmatprep.mubr.f32.mxu0 0.0
      %1244 = vmatmul.mubr.f32.gmra.mrb[0].mxu0 %v1007
      %v1245 = vpop.f32.mrb[0].mxu0
      %v1246 = vadd.f32 0.0, %v1245
      %v1247 = vpop.f32.mrb[0].mxu0
      %1248 = vmatprep.mubr.f32.mxu0 0.0
      %1249 = vmatmul.mubr.f32.gmra.mrb[0].mxu0 %v1009
      %v1250 = vpop.f32.mrb[0].mxu0
      %v1251 = vadd.f32 0.0, %v1250
      %v1252 = vpop.f32.mrb[0].mxu0
      %1253 = vmatprep.mubr.f32.mxu0 0.0
      %1254 = vmatmul.mubr.f32.gmra.mrb[0].mxu0 %v1012
      %v1255 = vpop.f32.mrb[0].mxu0
      %v1256 = vadd.f32 0.0, %v1255
      %v1257 = vpop.f32.mrb[0].mxu0
      %1258 = vmatprep.mubr.f32.mxu0 0.0
      %1259 = vmatmul.mubr.f32.gmra.mrb[0].mxu0 %v1014
      %v1260 = vpop.f32.mrb[0].mxu0
      %v1261 = vadd.f32 0.0, %v1260
      %v1262 = vpop.f32.mrb[0].mxu0
      %1263 = vmatprep.mubr.f32.mxu0 0.0
      %1264 = vmatmul.mubr.f32.gmra.mrb[0].mxu0 %v1017
      %v1265 = vpop.f32.mrb[0].mxu0
      %v1266 = vadd.f32 0.0, %v1265
      %v1267 = vpop.f32.mrb[0].mxu0
      %1268 = vmatprep.mubr.f32.mxu0 0.0
      %1269 = vmatmul.mubr.f32.gmra.mrb[0].mxu0 %v1019
      %v1270 = vpop.f32.mrb[0].mxu0
      %v1271 = vadd.f32 0.0, %v1270
      %v1272 = vpop.f32.mrb[0].mxu0
      %1273 = vmatprep.mubr.f32.mxu0 0.0
      %1274 = vmatmul.mubr.f32.gmra.mrb[0].mxu0 %v1022
      %v1275 = vpop.f32.mrb[0].mxu0
      %v1276 = vadd.f32 0.0, %v1275
      %v1277 = vpop.f32.mrb[0].mxu0
      %1278 = vmatprep.mubr.f32.mxu0 0.0
      %1279 = vmatmul.mubr.f32.gmra.mrb[0].mxu0 %v1024
      %v1280 = vpop.f32.mrb[0].mxu0
      %v1281 = vadd.f32 0.0, %v1280
      %v1282 = vpop.f32.mrb[0].mxu0
      %1283 = vmatprep.mubr.f32.mxu0 0.0
      %1284 = vmatmul.mubr.f32.gmra.mrb[0].mxu0 %v1027
      %v1285 = vpop.f32.mrb[0].mxu0
      %v1286 = vadd.f32 0.0, %v1285
      %v1287 = vpop.f32.mrb[0].mxu0
      %1288 = vmatprep.mubr.f32.mxu0 0.0
      %1289 = vmatmul.mubr.f32.gmra.mrb[0].mxu0 %v1029
      %v1290 = vpop.f32.mrb[0].mxu0
      %v1291 = vadd.f32 0.0, %v1290
      %v1292 = vpop.f32.mrb[0].mxu0
      %1293 = vmatprep.mubr.f32.mxu0 0.0
      %1294 = vmatmul.mubr.f32.gmra.mrb[0].mxu0 %v1032
      %v1295 = vpop.f32.mrb[0].mxu0
      %v1296 = vadd.f32 0.0, %v1295
      %v1297 = vpop.f32.mrb[0].mxu0
      %1298 = vmatprep.mubr.f32.mxu0 0.0
      %1299 = vmatmul.mubr.f32.gmra.mrb[0].mxu0 %v1034
      %v1300 = vpop.f32.mrb[0].mxu0
      %v1301 = vadd.f32 0.0, %v1300
      %v1302 = vpop.f32.mrb[0].mxu0
      %1303 = vmatprep.mubr.f32.mxu0 0.0
      %1304 = vmatmul.mubr.f32.gmra.mrb[0].mxu0 %v1037
      %v1305 = vpop.f32.mrb[0].mxu0
      %v1306 = vadd.f32 0.0, %v1305
      %v1307 = vpop.f32.mrb[0].mxu0
      %1308 = vmatprep.mubr.f32.mxu0 0.0
      %1309 = vmatmul.mubr.f32.gmra.mrb[0].mxu0 %v1039
      %v1310 = vpop.f32.mrb[0].mxu0
      %v1311 = vadd.f32 0.0, %v1310
      %v1312 = vpop.f32.mrb[0].mxu0
      %1313 = vdwg.mxu0
      %v1314 = vadd.f32 %v801, %v1156
      %v1315 = vadd.f32 %v806, %v1161
      %v1316 = vadd.f32 %v811, %v1166
      %v1317 = vadd.f32 %v816, %v1171
      %v1318 = vadd.f32 %v821, %v1176
      %v1319 = vadd.f32 %v826, %v1181
      %v1320 = vadd.f32 %v831, %v1186
      %v1321 = vadd.f32 %v836, %v1191
      %v1322 = vadd.f32 %v841, %v1196
      %v1323 = vadd.f32 %v846, %v1201
      %v1324 = vadd.f32 %v851, %v1206
      %v1325 = vadd.f32 %v856, %v1211
      %v1326 = vadd.f32 %v861, %v1216
      %v1327 = vadd.f32 %v866, %v1221
      %v1328 = vadd.f32 %v871, %v1226
      %v1329 = vadd.f32 %v876, %v1231
      %v1330 = vadd.f32 %v881, %v1236
      %v1331 = vadd.f32 %v886, %v1241
      %v1332 = vadd.f32 %v891, %v1246
      %v1333 = vadd.f32 %v896, %v1251
      %v1334 = vadd.f32 %v901, %v1256
      %v1335 = vadd.f32 %v906, %v1261
      %v1336 = vadd.f32 %v911, %v1266
      %v1337 = vadd.f32 %v916, %v1271
      %v1338 = vadd.f32 %v921, %v1276
      %v1339 = vadd.f32 %v926, %v1281
      %v1340 = vadd.f32 %v931, %v1286
      %v1341 = vadd.f32 %v936, %v1291
      %v1342 = vadd.f32 %v941, %v1296
      %v1343 = vadd.f32 %v946, %v1301
      %v1344 = vadd.f32 %v951, %v1306
      %v1345 = vadd.f32 %v956, %v1311
      %s1346 = scalar_lea.vmem %s1, 384
      %v1347 = vld [vmem:[%s1346] sm:$0xff]
      %v1348 = vld [vmem:[%s1346 + $0x8] sm:$0xff]
      %v1349 = vld [vmem:[%s1346 + $0x10] sm:$0xff]
      %v1350 = vld [vmem:[%s1346 + $0x18] sm:$0xff]
      %v1351 = vld [vmem:[%s1346 + $0x20] sm:$0xff]
      %v1352 = vld [vmem:[%s1346 + $0x28] sm:$0xff]
      %v1353 = vld [vmem:[%s1346 + $0x30] sm:$0xff]
      %v1354 = vld [vmem:[%s1346 + $0x38] sm:$0xff]
      %v1355 = vld [vmem:[%s1346 + $0x40] sm:$0xff]
      %v1356 = vld [vmem:[%s1346 + $0x48] sm:$0xff]
      %v1357 = vld [vmem:[%s1346 + $0x50] sm:$0xff]
      %v1358 = vld [vmem:[%s1346 + $0x58] sm:$0xff]
      %v1359 = vld [vmem:[%s1346 + $0x60] sm:$0xff]
      %v1360 = vld [vmem:[%s1346 + $0x68] sm:$0xff]
      %v1361 = vld [vmem:[%s1346 + $0x70] sm:$0xff]
      %v1362 = vld [vmem:[%s1346 + $0x78] sm:$0xff]
      %1363 = vmatprep.subr.mxu0 0.0
      %1364 = vmatpush1.msra.mxu0 %v1347
      %1365 = vmatprep.subr.mxu0 0.0
      %1366 = vmatpush1.msra.mxu0 %v1348
      %1367 = vmatprep.subr.mxu0 0.0
      %1368 = vmatpush1.msra.mxu0 %v1349
      %1369 = vmatprep.subr.mxu0 0.0
      %1370 = vmatpush1.msra.mxu0 %v1350
      %1371 = vmatprep.subr.mxu0 0.0
      %1372 = vmatpush1.msra.mxu0 %v1351
      %1373 = vmatprep.subr.mxu0 0.0
      %1374 = vmatpush1.msra.mxu0 %v1352
      %1375 = vmatprep.subr.mxu0 0.0
      %1376 = vmatpush1.msra.mxu0 %v1353
      %1377 = vmatprep.subr.mxu0 0.0
      %1378 = vmatpush1.msra.mxu0 %v1354
      %1379 = vmatprep.subr.mxu0 0.0
      %1380 = vmatpush1.msra.mxu0 %v1355
      %1381 = vmatprep.subr.mxu0 0.0
      %1382 = vmatpush1.msra.mxu0 %v1356
      %1383 = vmatprep.subr.mxu0 0.0
      %1384 = vmatpush1.msra.mxu0 %v1357
      %1385 = vmatprep.subr.mxu0 0.0
      %1386 = vmatpush1.msra.mxu0 %v1358
      %1387 = vmatprep.subr.mxu0 0.0
      %1388 = vmatpush1.msra.mxu0 %v1359
      %1389 = vmatprep.subr.mxu0 0.0
      %1390 = vmatpush1.msra.mxu0 %v1360
      %1391 = vmatprep.subr.mxu0 0.0
      %1392 = vmatpush1.msra.mxu0 %v1361
      %1393 = vmatprep.subr.mxu0 0.0
      %1394 = vmatpush1.msra.mxu0 %v1362
      %1395 = vmatprep.subr.mxu0 0.0
      %1396 = vmatpush1.msra.mxu0 0.0
      %1397 = vmatprep.subr.mxu0 0.0
      %1398 = vmatpush1.msra.mxu0 0.0
      %1399 = vmatprep.subr.mxu0 0.0
      %1400 = vmatpush1.msra.mxu0 0.0
      %1401 = vmatprep.subr.mxu0 0.0
      %1402 = vmatpush1.msra.mxu0 0.0
      %1403 = vmatprep.subr.mxu0 0.0
      %1404 = vmatpush1.msra.mxu0 0.0
      %1405 = vmatprep.subr.mxu0 0.0
      %1406 = vmatpush1.msra.mxu0 0.0
      %1407 = vmatprep.subr.mxu0 0.0
      %1408 = vmatpush1.msra.mxu0 0.0
      %1409 = vmatprep.subr.mxu0 0.0
      %1410 = vmatpush1.msra.mxu0 0.0
      %1411 = vmatprep.subr.mxu0 0.0
      %1412 = vmatpush1.msra.mxu0 0.0
      %1413 = vmatprep.subr.mxu0 0.0
      %1414 = vmatpush1.msra.mxu0 0.0
      %1415 = vmatprep.subr.mxu0 0.0
      %1416 = vmatpush1.msra.mxu0 0.0
      %1417 = vmatprep.subr.mxu0 0.0
      %1418 = vmatpush1.msra.mxu0 0.0
      %1419 = vmatprep.subr.mxu0 0.0
      %1420 = vmatpush1.msra.mxu0 0.0
      %1421 = vmatprep.subr.mxu0 0.0
      %1422 = vmatpush1.msra.mxu0 0.0
      %1423 = vmatprep.subr.mxu0 0.0
      %1424 = vmatpush1.msra.mxu0 0.0
      %1425 = vmatprep.subr.mxu0 0.0
      %1426 = vmatpush1.msra.mxu0 0.0
      %1427 = vmatprep.mubr.f32.mxu0 0.0
      %1428 = vmatmul.mubr.f32.gmra.mrb[0].mxu0 %v264
      %v1429 = vpop.f32.mrb[0].mxu0
      %v1430 = vadd.f32 0.0, %v1429
      %v1431 = vpop.f32.mrb[0].mxu0
      %1432 = vmatprep.mubr.f32.mxu0 0.0
      %1433 = vmatmul.mubr.f32.gmra.mrb[0].mxu0 %v265
      %v1434 = vpop.f32.mrb[0].mxu0
      %v1435 = vadd.f32 0.0, %v1434
      %v1436 = vpop.f32.mrb[0].mxu0
      %1437 = vmatprep.mubr.f32.mxu0 0.0
      %1438 = vmatmul.mubr.f32.gmra.mrb[0].mxu0 %v267
      %v1439 = vpop.f32.mrb[0].mxu0
      %v1440 = vadd.f32 0.0, %v1439
      %v1441 = vpop.f32.mrb[0].mxu0
      %1442 = vmatprep.mubr.f32.mxu0 0.0
      %1443 = vmatmul.mubr.f32.gmra.mrb[0].mxu0 %v268
      %v1444 = vpop.f32.mrb[0].mxu0
      %v1445 = vadd.f32 0.0, %v1444
      %v1446 = vpop.f32.mrb[0].mxu0
      %1447 = vmatprep.mubr.f32.mxu0 0.0
      %1448 = vmatmul.mubr.f32.gmra.mrb[0].mxu0 %v270
      %v1449 = vpop.f32.mrb[0].mxu0
      %v1450 = vadd.f32 0.0, %v1449
      %v1451 = vpop.f32.mrb[0].mxu0
      %1452 = vmatprep.mubr.f32.mxu0 0.0
      %1453 = vmatmul.mubr.f32.gmra.mrb[0].mxu0 %v271
      %v1454 = vpop.f32.mrb[0].mxu0
      %v1455 = vadd.f32 0.0, %v1454
      %v1456 = vpop.f32.mrb[0].mxu0
      %1457 = vmatprep.mubr.f32.mxu0 0.0
      %1458 = vmatmul.mubr.f32.gmra.mrb[0].mxu0 %v273
      %v1459 = vpop.f32.mrb[0].mxu0
      %v1460 = vadd.f32 0.0, %v1459
      %v1461 = vpop.f32.mrb[0].mxu0
      %1462 = vmatprep.mubr.f32.mxu0 0.0
      %1463 = vmatmul.mubr.f32.gmra.mrb[0].mxu0 %v274
      %v1464 = vpop.f32.mrb[0].mxu0
      %v1465 = vadd.f32 0.0, %v1464
      %v1466 = vpop.f32.mrb[0].mxu0
      %1467 = vmatprep.mubr.f32.mxu0 0.0
      %1468 = vmatmul.mubr.f32.gmra.mrb[0].mxu0 %v276
      %v1469 = vpop.f32.mrb[0].mxu0
      %v1470 = vadd.f32 0.0, %v1469
      %v1471 = vpop.f32.mrb[0].mxu0
      %1472 = vmatprep.mubr.f32.mxu0 0.0
      %1473 = vmatmul.mubr.f32.gmra.mrb[0].mxu0 %v277
      %v1474 = vpop.f32.mrb[0].mxu0
      %v1475 = vadd.f32 0.0, %v1474
      %v1476 = vpop.f32.mrb[0].mxu0
      %1477 = vmatprep.mubr.f32.mxu0 0.0
      %1478 = vmatmul.mubr.f32.gmra.mrb[0].mxu0 %v279
      %v1479 = vpop.f32.mrb[0].mxu0
      %v1480 = vadd.f32 0.0, %v1479
      %v1481 = vpop.f32.mrb[0].mxu0
      %1482 = vmatprep.mubr.f32.mxu0 0.0
      %1483 = vmatmul.mubr.f32.gmra.mrb[0].mxu0 %v280
      %v1484 = vpop.f32.mrb[0].mxu0
      %v1485 = vadd.f32 0.0, %v1484
      %v1486 = vpop.f32.mrb[0].mxu0
      %1487 = vmatprep.mubr.f32.mxu0 0.0
      %1488 = vmatmul.mubr.f32.gmra.mrb[0].mxu0 %v282
      %v1489 = vpop.f32.mrb[0].mxu0
      %v1490 = vadd.f32 0.0, %v1489
      %v1491 = vpop.f32.mrb[0].mxu0
      %1492 = vmatprep.mubr.f32.mxu0 0.0
      %1493 = vmatmul.mubr.f32.gmra.mrb[0].mxu0 %v283
      %v1494 = vpop.f32.mrb[0].mxu0
      %v1495 = vadd.f32 0.0, %v1494
      %v1496 = vpop.f32.mrb[0].mxu0
      %1497 = vmatprep.mubr.f32.mxu0 0.0
      %1498 = vmatmul.mubr.f32.gmra.mrb[0].mxu0 %v285
      %v1499 = vpop.f32.mrb[0].mxu0
      %v1500 = vadd.f32 0.0, %v1499
      %v1501 = vpop.f32.mrb[0].mxu0
      %1502 = vmatprep.mubr.f32.mxu0 0.0
      %1503 = vmatmul.mubr.f32.gmra.mrb[0].mxu0 %v286
      %v1504 = vpop.f32.mrb[0].mxu0
      %v1505 = vadd.f32 0.0, %v1504
      %v1506 = vpop.f32.mrb[0].mxu0
      %1507 = vmatprep.mubr.f32.mxu0 0.0
      %1508 = vmatmul.mubr.f32.gmra.mrb[0].mxu0 %v288
      %v1509 = vpop.f32.mrb[0].mxu0
      %v1510 = vadd.f32 0.0, %v1509
      %v1511 = vpop.f32.mrb[0].mxu0
      %1512 = vmatprep.mubr.f32.mxu0 0.0
      %1513 = vmatmul.mubr.f32.gmra.mrb[0].mxu0 %v289
      %v1514 = vpop.f32.mrb[0].mxu0
      %v1515 = vadd.f32 0.0, %v1514
      %v1516 = vpop.f32.mrb[0].mxu0
      %1517 = vmatprep.mubr.f32.mxu0 0.0
      %1518 = vmatmul.mubr.f32.gmra.mrb[0].mxu0 %v291
      %v1519 = vpop.f32.mrb[0].mxu0
      %v1520 = vadd.f32 0.0, %v1519
      %v1521 = vpop.f32.mrb[0].mxu0
      %1522 = vmatprep.mubr.f32.mxu0 0.0
      %1523 = vmatmul.mubr.f32.gmra.mrb[0].mxu0 %v292
      %v1524 = vpop.f32.mrb[0].mxu0
      %v1525 = vadd.f32 0.0, %v1524
      %v1526 = vpop.f32.mrb[0].mxu0
      %1527 = vmatprep.mubr.f32.mxu0 0.0
      %1528 = vmatmul.mubr.f32.gmra.mrb[0].mxu0 %v294
      %v1529 = vpop.f32.mrb[0].mxu0
      %v1530 = vadd.f32 0.0, %v1529
      %v1531 = vpop.f32.mrb[0].mxu0
      %1532 = vmatprep.mubr.f32.mxu0 0.0
      %1533 = vmatmul.mubr.f32.gmra.mrb[0].mxu0 %v295
      %v1534 = vpop.f32.mrb[0].mxu0
      %v1535 = vadd.f32 0.0, %v1534
      %v1536 = vpop.f32.mrb[0].mxu0
      %1537 = vmatprep.mubr.f32.mxu0 0.0
      %1538 = vmatmul.mubr.f32.gmra.mrb[0].mxu0 %v297
      %v1539 = vpop.f32.mrb[0].mxu0
      %v1540 = vadd.f32 0.0, %v1539
      %v1541 = vpop.f32.mrb[0].mxu0
      %1542 = vmatprep.mubr.f32.mxu0 0.0
      %1543 = vmatmul.mubr.f32.gmra.mrb[0].mxu0 %v298
      %v1544 = vpop.f32.mrb[0].mxu0
      %v1545 = vadd.f32 0.0, %v1544
      %v1546 = vpop.f32.mrb[0].mxu0
      %1547 = vmatprep.mubr.f32.mxu0 0.0
      %1548 = vmatmul.mubr.f32.gmra.mrb[0].mxu0 %v300
      %v1549 = vpop.f32.mrb[0].mxu0
      %v1550 = vadd.f32 0.0, %v1549
      %v1551 = vpop.f32.mrb[0].mxu0
      %1552 = vmatprep.mubr.f32.mxu0 0.0
      %1553 = vmatmul.mubr.f32.gmra.mrb[0].mxu0 %v301
      %v1554 = vpop.f32.mrb[0].mxu0
      %v1555 = vadd.f32 0.0, %v1554
      %v1556 = vpop.f32.mrb[0].mxu0
      %1557 = vmatprep.mubr.f32.mxu0 0.0
      %1558 = vmatmul.mubr.f32.gmra.mrb[0].mxu0 %v303
      %v1559 = vpop.f32.mrb[0].mxu0
      %v1560 = vadd.f32 0.0, %v1559
      %v1561 = vpop.f32.mrb[0].mxu0
      %1562 = vmatprep.mubr.f32.mxu0 0.0
      %1563 = vmatmul.mubr.f32.gmra.mrb[0].mxu0 %v304
      %v1564 = vpop.f32.mrb[0].mxu0
      %v1565 = vadd.f32 0.0, %v1564
      %v1566 = vpop.f32.mrb[0].mxu0
      %1567 = vmatprep.mubr.f32.mxu0 0.0
      %1568 = vmatmul.mubr.f32.gmra.mrb[0].mxu0 %v306
      %v1569 = vpop.f32.mrb[0].mxu0
      %v1570 = vadd.f32 0.0, %v1569
      %v1571 = vpop.f32.mrb[0].mxu0
      %1572 = vmatprep.mubr.f32.mxu0 0.0
      %1573 = vmatmul.mubr.f32.gmra.mrb[0].mxu0 %v307
      %v1574 = vpop.f32.mrb[0].mxu0
      %v1575 = vadd.f32 0.0, %v1574
      %v1576 = vpop.f32.mrb[0].mxu0
      %1577 = vmatprep.mubr.f32.mxu0 0.0
      %1578 = vmatmul.mubr.f32.gmra.mrb[0].mxu0 %v309
      %v1579 = vpop.f32.mrb[0].mxu0
      %v1580 = vadd.f32 0.0, %v1579
      %v1581 = vpop.f32.mrb[0].mxu0
      %1582 = vmatprep.mubr.f32.mxu0 0.0
      %1583 = vmatmul.mubr.f32.gmra.mrb[0].mxu0 %v310
      %v1584 = vpop.f32.mrb[0].mxu0
      %v1585 = vadd.f32 0.0, %v1584
      %v1586 = vpop.f32.mrb[0].mxu0
      %1587 = vdwg.mxu0
      %v1588 = vadd.f32 %v1314, %v1430
      %v1589 = vadd.f32 %v1315, %v1435
      %v1590 = vadd.f32 %v1316, %v1440
      %v1591 = vadd.f32 %v1317, %v1445
      %v1592 = vadd.f32 %v1318, %v1450
      %v1593 = vadd.f32 %v1319, %v1455
      %v1594 = vadd.f32 %v1320, %v1460
      %v1595 = vadd.f32 %v1321, %v1465
      %v1596 = vadd.f32 %v1322, %v1470
      %v1597 = vadd.f32 %v1323, %v1475
      %v1598 = vadd.f32 %v1324, %v1480
      %v1599 = vadd.f32 %v1325, %v1485
      %v1600 = vadd.f32 %v1326, %v1490
      %v1601 = vadd.f32 %v1327, %v1495
      %v1602 = vadd.f32 %v1328, %v1500
      %v1603 = vadd.f32 %v1329, %v1505
      %v1604 = vadd.f32 %v1330, %v1510
      %v1605 = vadd.f32 %v1331, %v1515
      %v1606 = vadd.f32 %v1332, %v1520
      %v1607 = vadd.f32 %v1333, %v1525
      %v1608 = vadd.f32 %v1334, %v1530
      %v1609 = vadd.f32 %v1335, %v1535
      %v1610 = vadd.f32 %v1336, %v1540
      %v1611 = vadd.f32 %v1337, %v1545
      %v1612 = vadd.f32 %v1338, %v1550
      %v1613 = vadd.f32 %v1339, %v1555
      %v1614 = vadd.f32 %v1340, %v1560
      %v1615 = vadd.f32 %v1341, %v1565
      %v1616 = vadd.f32 %v1342, %v1570
      %v1617 = vadd.f32 %v1343, %v1575
      %v1618 = vadd.f32 %v1344, %v1580
      %v1619 = vadd.f32 %v1345, %v1585
      %v1623 = vrot.slane %v309, 1
      %v1624 = vrot.slane %v310, 1
      %v1625 = vsel %vm379, %v1623, %v1624
      %v1626 = vrot.slane %v311, 1
      %v1627 = vsel %vm379, %v1624, %v1626
      %s1630 = scalar_lea.vmem %s1, 512
      %v1631 = vld [vmem:[%s1630] sm:$0xff]
      %v1632 = vld [vmem:[%s1630 + $0x8] sm:$0xff]
      %v1633 = vld [vmem:[%s1630 + $0x10] sm:$0xff]
      %v1634 = vld [vmem:[%s1630 + $0x18] sm:$0xff]
      %v1635 = vld [vmem:[%s1630 + $0x20] sm:$0xff]
      %v1636 = vld [vmem:[%s1630 + $0x28] sm:$0xff]
      %v1637 = vld [vmem:[%s1630 + $0x30] sm:$0xff]
      %v1638 = vld [vmem:[%s1630 + $0x38] sm:$0xff]
      %v1639 = vld [vmem:[%s1630 + $0x40] sm:$0xff]
      %v1640 = vld [vmem:[%s1630 + $0x48] sm:$0xff]
      %v1641 = vld [vmem:[%s1630 + $0x50] sm:$0xff]
      %v1642 = vld [vmem:[%s1630 + $0x58] sm:$0xff]
      %v1643 = vld [vmem:[%s1630 + $0x60] sm:$0xff]
      %v1644 = vld [vmem:[%s1630 + $0x68] sm:$0xff]
      %v1645 = vld [vmem:[%s1630 + $0x70] sm:$0xff]
      %v1646 = vld [vmem:[%s1630 + $0x78] sm:$0xff]
      %1647 = vmatprep.subr.mxu0 0.0
      %1648 = vmatpush1.msra.mxu0 %v1631
      %1649 = vmatprep.subr.mxu0 0.0
      %1650 = vmatpush1.msra.mxu0 %v1632
      %1651 = vmatprep.subr.mxu0 0.0
      %1652 = vmatpush1.msra.mxu0 %v1633
      %1653 = vmatprep.subr.mxu0 0.0
      %1654 = vmatpush1.msra.mxu0 %v1634
      %1655 = vmatprep.subr.mxu0 0.0
      %1656 = vmatpush1.msra.mxu0 %v1635
      %1657 = vmatprep.subr.mxu0 0.0
      %1658 = vmatpush1.msra.mxu0 %v1636
      %1659 = vmatprep.subr.mxu0 0.0
      %1660 = vmatpush1.msra.mxu0 %v1637
      %1661 = vmatprep.subr.mxu0 0.0
      %1662 = vmatpush1.msra.mxu0 %v1638
      %1663 = vmatprep.subr.mxu0 0.0
      %1664 = vmatpush1.msra.mxu0 %v1639
      %1665 = vmatprep.subr.mxu0 0.0
      %1666 = vmatpush1.msra.mxu0 %v1640
      %1667 = vmatprep.subr.mxu0 0.0
      %1668 = vmatpush1.msra.mxu0 %v1641
      %1669 = vmatprep.subr.mxu0 0.0
      %1670 = vmatpush1.msra.mxu0 %v1642
      %1671 = vmatprep.subr.mxu0 0.0
      %1672 = vmatpush1.msra.mxu0 %v1643
      %1673 = vmatprep.subr.mxu0 0.0
      %1674 = vmatpush1.msra.mxu0 %v1644
      %1675 = vmatprep.subr.mxu0 0.0
      %1676 = vmatpush1.msra.mxu0 %v1645
      %1677 = vmatprep.subr.mxu0 0.0
      %1678 = vmatpush1.msra.mxu0 %v1646
      %1679 = vmatprep.subr.mxu0 0.0
      %1680 = vmatpush1.msra.mxu0 0.0
      %1681 = vmatprep.subr.mxu0 0.0
      %1682 = vmatpush1.msra.mxu0 0.0
      %1683 = vmatprep.subr.mxu0 0.0
      %1684 = vmatpush1.msra.mxu0 0.0
      %1685 = vmatprep.subr.mxu0 0.0
      %1686 = vmatpush1.msra.mxu0 0.0
      %1687 = vmatprep.subr.mxu0 0.0
      %1688 = vmatpush1.msra.mxu0 0.0
      %1689 = vmatprep.subr.mxu0 0.0
      %1690 = vmatpush1.msra.mxu0 0.0
      %1691 = vmatprep.subr.mxu0 0.0
      %1692 = vmatpush1.msra.mxu0 0.0
      %1693 = vmatprep.subr.mxu0 0.0
      %1694 = vmatpush1.msra.mxu0 0.0
      %1695 = vmatprep.subr.mxu0 0.0
      %1696 = vmatpush1.msra.mxu0 0.0
      %1697 = vmatprep.subr.mxu0 0.0
      %1698 = vmatpush1.msra.mxu0 0.0
      %1699 = vmatprep.subr.mxu0 0.0
      %1700 = vmatpush1.msra.mxu0 0.0
      %1701 = vmatprep.subr.mxu0 0.0
      %1702 = vmatpush1.msra.mxu0 0.0
      %1703 = vmatprep.subr.mxu0 0.0
      %1704 = vmatpush1.msra.mxu0 0.0
      %1705 = vmatprep.subr.mxu0 0.0
      %1706 = vmatpush1.msra.mxu0 0.0
      %1707 = vmatprep.subr.mxu0 0.0
      %1708 = vmatpush1.msra.mxu0 0.0
      %1709 = vmatprep.subr.mxu0 0.0
      %1710 = vmatpush1.msra.mxu0 0.0
      %1711 = vmatprep.mubr.f32.mxu0 0.0
      %1712 = vmatmul.mubr.f32.gmra.mrb[0].mxu0 %v387
      %v1713 = vpop.f32.mrb[0].mxu0
      %v1714 = vadd.f32 0.0, %v1713
      %v1715 = vpop.f32.mrb[0].mxu0
      %1716 = vmatprep.mubr.f32.mxu0 0.0
      %1717 = vmatmul.mubr.f32.gmra.mrb[0].mxu0 %v389
      %v1718 = vpop.f32.mrb[0].mxu0
      %v1719 = vadd.f32 0.0, %v1718
      %v1720 = vpop.f32.mrb[0].mxu0
      %1721 = vmatprep.mubr.f32.mxu0 0.0
      %1722 = vmatmul.mubr.f32.gmra.mrb[0].mxu0 %v392
      %v1723 = vpop.f32.mrb[0].mxu0
      %v1724 = vadd.f32 0.0, %v1723
      %v1725 = vpop.f32.mrb[0].mxu0
      %1726 = vmatprep.mubr.f32.mxu0 0.0
      %1727 = vmatmul.mubr.f32.gmra.mrb[0].mxu0 %v394
      %v1728 = vpop.f32.mrb[0].mxu0
      %v1729 = vadd.f32 0.0, %v1728
      %v1730 = vpop.f32.mrb[0].mxu0
      %1731 = vmatprep.mubr.f32.mxu0 0.0
      %1732 = vmatmul.mubr.f32.gmra.mrb[0].mxu0 %v397
      %v1733 = vpop.f32.mrb[0].mxu0
      %v1734 = vadd.f32 0.0, %v1733
      %v1735 = vpop.f32.mrb[0].mxu0
      %1736 = vmatprep.mubr.f32.mxu0 0.0
      %1737 = vmatmul.mubr.f32.gmra.mrb[0].mxu0 %v399
      %v1738 = vpop.f32.mrb[0].mxu0
      %v1739 = vadd.f32 0.0, %v1738
      %v1740 = vpop.f32.mrb[0].mxu0
      %1741 = vmatprep.mubr.f32.mxu0 0.0
      %1742 = vmatmul.mubr.f32.gmra.mrb[0].mxu0 %v402
      %v1743 = vpop.f32.mrb[0].mxu0
      %v1744 = vadd.f32 0.0, %v1743
      %v1745 = vpop.f32.mrb[0].mxu0
      %1746 = vmatprep.mubr.f32.mxu0 0.0
      %1747 = vmatmul.mubr.f32.gmra.mrb[0].mxu0 %v404
      %v1748 = vpop.f32.mrb[0].mxu0
      %v1749 = vadd.f32 0.0, %v1748
      %v1750 = vpop.f32.mrb[0].mxu0
      %1751 = vmatprep.mubr.f32.mxu0 0.0
      %1752 = vmatmul.mubr.f32.gmra.mrb[0].mxu0 %v407
      %v1753 = vpop.f32.mrb[0].mxu0
      %v1754 = vadd.f32 0.0, %v1753
      %v1755 = vpop.f32.mrb[0].mxu0
      %1756 = vmatprep.mubr.f32.mxu0 0.0
      %1757 = vmatmul.mubr.f32.gmra.mrb[0].mxu0 %v409
      %v1758 = vpop.f32.mrb[0].mxu0
      %v1759 = vadd.f32 0.0, %v1758
      %v1760 = vpop.f32.mrb[0].mxu0
      %1761 = vmatprep.mubr.f32.mxu0 0.0
      %1762 = vmatmul.mubr.f32.gmra.mrb[0].mxu0 %v412
      %v1763 = vpop.f32.mrb[0].mxu0
      %v1764 = vadd.f32 0.0, %v1763
      %v1765 = vpop.f32.mrb[0].mxu0
      %1766 = vmatprep.mubr.f32.mxu0 0.0
      %1767 = vmatmul.mubr.f32.gmra.mrb[0].mxu0 %v414
      %v1768 = vpop.f32.mrb[0].mxu0
      %v1769 = vadd.f32 0.0, %v1768
      %v1770 = vpop.f32.mrb[0].mxu0
      %1771 = vmatprep.mubr.f32.mxu0 0.0
      %1772 = vmatmul.mubr.f32.gmra.mrb[0].mxu0 %v417
      %v1773 = vpop.f32.mrb[0].mxu0
      %v1774 = vadd.f32 0.0, %v1773
      %v1775 = vpop.f32.mrb[0].mxu0
      %1776 = vmatprep.mubr.f32.mxu0 0.0
      %1777 = vmatmul.mubr.f32.gmra.mrb[0].mxu0 %v419
      %v1778 = vpop.f32.mrb[0].mxu0
      %v1779 = vadd.f32 0.0, %v1778
      %v1780 = vpop.f32.mrb[0].mxu0
      %1781 = vmatprep.mubr.f32.mxu0 0.0
      %1782 = vmatmul.mubr.f32.gmra.mrb[0].mxu0 %v422
      %v1783 = vpop.f32.mrb[0].mxu0
      %v1784 = vadd.f32 0.0, %v1783
      %v1785 = vpop.f32.mrb[0].mxu0
      %1786 = vmatprep.mubr.f32.mxu0 0.0
      %1787 = vmatmul.mubr.f32.gmra.mrb[0].mxu0 %v424
      %v1788 = vpop.f32.mrb[0].mxu0
      %v1789 = vadd.f32 0.0, %v1788
      %v1790 = vpop.f32.mrb[0].mxu0
      %1791 = vmatprep.mubr.f32.mxu0 0.0
      %1792 = vmatmul.mubr.f32.gmra.mrb[0].mxu0 %v427
      %v1793 = vpop.f32.mrb[0].mxu0
      %v1794 = vadd.f32 0.0, %v1793
      %v1795 = vpop.f32.mrb[0].mxu0
      %1796 = vmatprep.mubr.f32.mxu0 0.0
      %1797 = vmatmul.mubr.f32.gmra.mrb[0].mxu0 %v429
      %v1798 = vpop.f32.mrb[0].mxu0
      %v1799 = vadd.f32 0.0, %v1798
      %v1800 = vpop.f32.mrb[0].mxu0
      %1801 = vmatprep.mubr.f32.mxu0 0.0
      %1802 = vmatmul.mubr.f32.gmra.mrb[0].mxu0 %v432
      %v1803 = vpop.f32.mrb[0].mxu0
      %v1804 = vadd.f32 0.0, %v1803
      %v1805 = vpop.f32.mrb[0].mxu0
      %1806 = vmatprep.mubr.f32.mxu0 0.0
      %1807 = vmatmul.mubr.f32.gmra.mrb[0].mxu0 %v434
      %v1808 = vpop.f32.mrb[0].mxu0
      %v1809 = vadd.f32 0.0, %v1808
      %v1810 = vpop.f32.mrb[0].mxu0
      %1811 = vmatprep.mubr.f32.mxu0 0.0
      %1812 = vmatmul.mubr.f32.gmra.mrb[0].mxu0 %v437
      %v1813 = vpop.f32.mrb[0].mxu0
      %v1814 = vadd.f32 0.0, %v1813
      %v1815 = vpop.f32.mrb[0].mxu0
      %1816 = vmatprep.mubr.f32.mxu0 0.0
      %1817 = vmatmul.mubr.f32.gmra.mrb[0].mxu0 %v439
      %v1818 = vpop.f32.mrb[0].mxu0
      %v1819 = vadd.f32 0.0, %v1818
      %v1820 = vpop.f32.mrb[0].mxu0
      %1821 = vmatprep.mubr.f32.mxu0 0.0
      %1822 = vmatmul.mubr.f32.gmra.mrb[0].mxu0 %v442
      %v1823 = vpop.f32.mrb[0].mxu0
      %v1824 = vadd.f32 0.0, %v1823
      %v1825 = vpop.f32.mrb[0].mxu0
      %1826 = vmatprep.mubr.f32.mxu0 0.0
      %1827 = vmatmul.mubr.f32.gmra.mrb[0].mxu0 %v444
      %v1828 = vpop.f32.mrb[0].mxu0
      %v1829 = vadd.f32 0.0, %v1828
      %v1830 = vpop.f32.mrb[0].mxu0
      %1831 = vmatprep.mubr.f32.mxu0 0.0
      %1832 = vmatmul.mubr.f32.gmra.mrb[0].mxu0 %v447
      %v1833 = vpop.f32.mrb[0].mxu0
      %v1834 = vadd.f32 0.0, %v1833
      %v1835 = vpop.f32.mrb[0].mxu0
      %1836 = vmatprep.mubr.f32.mxu0 0.0
      %1837 = vmatmul.mubr.f32.gmra.mrb[0].mxu0 %v449
      %v1838 = vpop.f32.mrb[0].mxu0
      %v1839 = vadd.f32 0.0, %v1838
      %v1840 = vpop.f32.mrb[0].mxu0
      %1841 = vmatprep.mubr.f32.mxu0 0.0
      %1842 = vmatmul.mubr.f32.gmra.mrb[0].mxu0 %v452
      %v1843 = vpop.f32.mrb[0].mxu0
      %v1844 = vadd.f32 0.0, %v1843
      %v1845 = vpop.f32.mrb[0].mxu0
      %1846 = vmatprep.mubr.f32.mxu0 0.0
      %1847 = vmatmul.mubr.f32.gmra.mrb[0].mxu0 %v454
      %v1848 = vpop.f32.mrb[0].mxu0
      %v1849 = vadd.f32 0.0, %v1848
      %v1850 = vpop.f32.mrb[0].mxu0
      %1851 = vmatprep.mubr.f32.mxu0 0.0
      %1852 = vmatmul.mubr.f32.gmra.mrb[0].mxu0 %v457
      %v1853 = vpop.f32.mrb[0].mxu0
      %v1854 = vadd.f32 0.0, %v1853
      %v1855 = vpop.f32.mrb[0].mxu0
      %1856 = vmatprep.mubr.f32.mxu0 0.0
      %1857 = vmatmul.mubr.f32.gmra.mrb[0].mxu0 %v459
      %v1858 = vpop.f32.mrb[0].mxu0
      %v1859 = vadd.f32 0.0, %v1858
      %v1860 = vpop.f32.mrb[0].mxu0
      %1861 = vmatprep.mubr.f32.mxu0 0.0
      %1862 = vmatmul.mubr.f32.gmra.mrb[0].mxu0 %v1625
      %v1863 = vpop.f32.mrb[0].mxu0
      %v1864 = vadd.f32 0.0, %v1863
      %v1865 = vpop.f32.mrb[0].mxu0
      %1866 = vmatprep.mubr.f32.mxu0 0.0
      %1867 = vmatmul.mubr.f32.gmra.mrb[0].mxu0 %v1627
      %v1868 = vpop.f32.mrb[0].mxu0
      %v1869 = vadd.f32 0.0, %v1868
      %v1870 = vpop.f32.mrb[0].mxu0
      %1871 = vdwg.mxu0
      %v1872 = vadd.f32 %v1588, %v1714
      %v1873 = vadd.f32 %v1589, %v1719
      %v1874 = vadd.f32 %v1590, %v1724
      %v1875 = vadd.f32 %v1591, %v1729
      %v1876 = vadd.f32 %v1592, %v1734
      %v1877 = vadd.f32 %v1593, %v1739
      %v1878 = vadd.f32 %v1594, %v1744
      %v1879 = vadd.f32 %v1595, %v1749
      %v1880 = vadd.f32 %v1596, %v1754
      %v1881 = vadd.f32 %v1597, %v1759
      %v1882 = vadd.f32 %v1598, %v1764
      %v1883 = vadd.f32 %v1599, %v1769
      %v1884 = vadd.f32 %v1600, %v1774
      %v1885 = vadd.f32 %v1601, %v1779
      %v1886 = vadd.f32 %v1602, %v1784
      %v1887 = vadd.f32 %v1603, %v1789
      %v1888 = vadd.f32 %v1604, %v1794
      %v1889 = vadd.f32 %v1605, %v1799
      %v1890 = vadd.f32 %v1606, %v1804
      %v1891 = vadd.f32 %v1607, %v1809
      %v1892 = vadd.f32 %v1608, %v1814
      %v1893 = vadd.f32 %v1609, %v1819
      %v1894 = vadd.f32 %v1610, %v1824
      %v1895 = vadd.f32 %v1611, %v1829
      %v1896 = vadd.f32 %v1612, %v1834
      %v1897 = vadd.f32 %v1613, %v1839
      %v1898 = vadd.f32 %v1614, %v1844
      %v1899 = vadd.f32 %v1615, %v1849
      %v1900 = vadd.f32 %v1616, %v1854
      %v1901 = vadd.f32 %v1617, %v1859
      %v1902 = vadd.f32 %v1618, %v1864
      %v1903 = vadd.f32 %v1619, %v1869
      %v1904 = vrot.slane %v309, 2
      %v1905 = vrot.slane %v310, 2
      %v1906 = vsel %vm959, %v1904, %v1905
      %v1907 = vrot.slane %v311, 2
      %v1908 = vsel %vm959, %v1905, %v1907
      %s1911 = scalar_lea.vmem %s1, 640
      %v1912 = vld [vmem:[%s1911] sm:$0xff]
      %v1913 = vld [vmem:[%s1911 + $0x8] sm:$0xff]
      %v1914 = vld [vmem:[%s1911 + $0x10] sm:$0xff]
      %v1915 = vld [vmem:[%s1911 + $0x18] sm:$0xff]
      %v1916 = vld [vmem:[%s1911 + $0x20] sm:$0xff]
      %v1917 = vld [vmem:[%s1911 + $0x28] sm:$0xff]
      %v1918 = vld [vmem:[%s1911 + $0x30] sm:$0xff]
      %v1919 = vld [vmem:[%s1911 + $0x38] sm:$0xff]
      %v1920 = vld [vmem:[%s1911 + $0x40] sm:$0xff]
      %v1921 = vld [vmem:[%s1911 + $0x48] sm:$0xff]
      %v1922 = vld [vmem:[%s1911 + $0x50] sm:$0xff]
      %v1923 = vld [vmem:[%s1911 + $0x58] sm:$0xff]
      %v1924 = vld [vmem:[%s1911 + $0x60] sm:$0xff]
      %v1925 = vld [vmem:[%s1911 + $0x68] sm:$0xff]
      %v1926 = vld [vmem:[%s1911 + $0x70] sm:$0xff]
      %v1927 = vld [vmem:[%s1911 + $0x78] sm:$0xff]
      %1928 = vmatprep.subr.mxu0 0.0
      %1929 = vmatpush1.msra.mxu0 %v1912
      %1930 = vmatprep.subr.mxu0 0.0
      %1931 = vmatpush1.msra.mxu0 %v1913
      %1932 = vmatprep.subr.mxu0 0.0
      %1933 = vmatpush1.msra.mxu0 %v1914
      %1934 = vmatprep.subr.mxu0 0.0
      %1935 = vmatpush1.msra.mxu0 %v1915
      %1936 = vmatprep.subr.mxu0 0.0
      %1937 = vmatpush1.msra.mxu0 %v1916
      %1938 = vmatprep.subr.mxu0 0.0
      %1939 = vmatpush1.msra.mxu0 %v1917
      %1940 = vmatprep.subr.mxu0 0.0
      %1941 = vmatpush1.msra.mxu0 %v1918
      %1942 = vmatprep.subr.mxu0 0.0
      %1943 = vmatpush1.msra.mxu0 %v1919
      %1944 = vmatprep.subr.mxu0 0.0
      %1945 = vmatpush1.msra.mxu0 %v1920
      %1946 = vmatprep.subr.mxu0 0.0
      %1947 = vmatpush1.msra.mxu0 %v1921
      %1948 = vmatprep.subr.mxu0 0.0
      %1949 = vmatpush1.msra.mxu0 %v1922
      %1950 = vmatprep.subr.mxu0 0.0
      %1951 = vmatpush1.msra.mxu0 %v1923
      %1952 = vmatprep.subr.mxu0 0.0
      %1953 = vmatpush1.msra.mxu0 %v1924
      %1954 = vmatprep.subr.mxu0 0.0
      %1955 = vmatpush1.msra.mxu0 %v1925
      %1956 = vmatprep.subr.mxu0 0.0
      %1957 = vmatpush1.msra.mxu0 %v1926
      %1958 = vmatprep.subr.mxu0 0.0
      %1959 = vmatpush1.msra.mxu0 %v1927
      %1960 = vmatprep.subr.mxu0 0.0
      %1961 = vmatpush1.msra.mxu0 0.0
      %1962 = vmatprep.subr.mxu0 0.0
      %1963 = vmatpush1.msra.mxu0 0.0
      %1964 = vmatprep.subr.mxu0 0.0
      %1965 = vmatpush1.msra.mxu0 0.0
      %1966 = vmatprep.subr.mxu0 0.0
      %1967 = vmatpush1.msra.mxu0 0.0
      %1968 = vmatprep.subr.mxu0 0.0
      %1969 = vmatpush1.msra.mxu0 0.0
      %1970 = vmatprep.subr.mxu0 0.0
      %1971 = vmatpush1.msra.mxu0 0.0
      %1972 = vmatprep.subr.mxu0 0.0
      %1973 = vmatpush1.msra.mxu0 0.0
      %1974 = vmatprep.subr.mxu0 0.0
      %1975 = vmatpush1.msra.mxu0 0.0
      %1976 = vmatprep.subr.mxu0 0.0
      %1977 = vmatpush1.msra.mxu0 0.0
      %1978 = vmatprep.subr.mxu0 0.0
      %1979 = vmatpush1.msra.mxu0 0.0
      %1980 = vmatprep.subr.mxu0 0.0
      %1981 = vmatpush1.msra.mxu0 0.0
      %1982 = vmatprep.subr.mxu0 0.0
      %1983 = vmatpush1.msra.mxu0 0.0
      %1984 = vmatprep.subr.mxu0 0.0
      %1985 = vmatpush1.msra.mxu0 0.0
      %1986 = vmatprep.subr.mxu0 0.0
      %1987 = vmatpush1.msra.mxu0 0.0
      %1988 = vmatprep.subr.mxu0 0.0
      %1989 = vmatpush1.msra.mxu0 0.0
      %1990 = vmatprep.subr.mxu0 0.0
      %1991 = vmatpush1.msra.mxu0 0.0
      %1992 = vmatprep.mubr.f32.mxu0 0.0
      %1993 = vmatmul.mubr.f32.gmra.mrb[0].mxu0 %v967
      %v1994 = vpop.f32.mrb[0].mxu0
      %v1995 = vadd.f32 0.0, %v1994
      %v1996 = vpop.f32.mrb[0].mxu0
      %1997 = vmatprep.mubr.f32.mxu0 0.0
      %1998 = vmatmul.mubr.f32.gmra.mrb[0].mxu0 %v969
      %v1999 = vpop.f32.mrb[0].mxu0
      %v2000 = vadd.f32 0.0, %v1999
      %v2001 = vpop.f32.mrb[0].mxu0
      %2002 = vmatprep.mubr.f32.mxu0 0.0
      %2003 = vmatmul.mubr.f32.gmra.mrb[0].mxu0 %v972
      %v2004 = vpop.f32.mrb[0].mxu0
      %v2005 = vadd.f32 0.0, %v2004
      %v2006 = vpop.f32.mrb[0].mxu0
      %2007 = vmatprep.mubr.f32.mxu0 0.0
      %2008 = vmatmul.mubr.f32.gmra.mrb[0].mxu0 %v974
      %v2009 = vpop.f32.mrb[0].mxu0
      %v2010 = vadd.f32 0.0, %v2009
      %v2011 = vpop.f32.mrb[0].mxu0
      %2012 = vmatprep.mubr.f32.mxu0 0.0
      %2013 = vmatmul.mubr.f32.gmra.mrb[0].mxu0 %v977
      %v2014 = vpop.f32.mrb[0].mxu0
      %v2015 = vadd.f32 0.0, %v2014
      %v2016 = vpop.f32.mrb[0].mxu0
      %2017 = vmatprep.mubr.f32.mxu0 0.0
      %2018 = vmatmul.mubr.f32.gmra.mrb[0].mxu0 %v979
      %v2019 = vpop.f32.mrb[0].mxu0
      %v2020 = vadd.f32 0.0, %v2019
      %v2021 = vpop.f32.mrb[0].mxu0
      %2022 = vmatprep.mubr.f32.mxu0 0.0
      %2023 = vmatmul.mubr.f32.gmra.mrb[0].mxu0 %v982
      %v2024 = vpop.f32.mrb[0].mxu0
      %v2025 = vadd.f32 0.0, %v2024
      %v2026 = vpop.f32.mrb[0].mxu0
      %2027 = vmatprep.mubr.f32.mxu0 0.0
      %2028 = vmatmul.mubr.f32.gmra.mrb[0].mxu0 %v984
      %v2029 = vpop.f32.mrb[0].mxu0
      %v2030 = vadd.f32 0.0, %v2029
      %v2031 = vpop.f32.mrb[0].mxu0
      %2032 = vmatprep.mubr.f32.mxu0 0.0
      %2033 = vmatmul.mubr.f32.gmra.mrb[0].mxu0 %v987
      %v2034 = vpop.f32.mrb[0].mxu0
      %v2035 = vadd.f32 0.0, %v2034
      %v2036 = vpop.f32.mrb[0].mxu0
      %2037 = vmatprep.mubr.f32.mxu0 0.0
      %2038 = vmatmul.mubr.f32.gmra.mrb[0].mxu0 %v989
      %v2039 = vpop.f32.mrb[0].mxu0
      %v2040 = vadd.f32 0.0, %v2039
      %v2041 = vpop.f32.mrb[0].mxu0
      %2042 = vmatprep.mubr.f32.mxu0 0.0
      %2043 = vmatmul.mubr.f32.gmra.mrb[0].mxu0 %v992
      %v2044 = vpop.f32.mrb[0].mxu0
      %v2045 = vadd.f32 0.0, %v2044
      %v2046 = vpop.f32.mrb[0].mxu0
      %2047 = vmatprep.mubr.f32.mxu0 0.0
      %2048 = vmatmul.mubr.f32.gmra.mrb[0].mxu0 %v994
      %v2049 = vpop.f32.mrb[0].mxu0
      %v2050 = vadd.f32 0.0, %v2049
      %v2051 = vpop.f32.mrb[0].mxu0
      %2052 = vmatprep.mubr.f32.mxu0 0.0
      %2053 = vmatmul.mubr.f32.gmra.mrb[0].mxu0 %v997
      %v2054 = vpop.f32.mrb[0].mxu0
      %v2055 = vadd.f32 0.0, %v2054
      %v2056 = vpop.f32.mrb[0].mxu0
      %2057 = vmatprep.mubr.f32.mxu0 0.0
      %2058 = vmatmul.mubr.f32.gmra.mrb[0].mxu0 %v999
      %v2059 = vpop.f32.mrb[0].mxu0
      %v2060 = vadd.f32 0.0, %v2059
      %v2061 = vpop.f32.mrb[0].mxu0
      %2062 = vmatprep.mubr.f32.mxu0 0.0
      %2063 = vmatmul.mubr.f32.gmra.mrb[0].mxu0 %v1002
      %v2064 = vpop.f32.mrb[0].mxu0
      %v2065 = vadd.f32 0.0, %v2064
      %v2066 = vpop.f32.mrb[0].mxu0
      %2067 = vmatprep.mubr.f32.mxu0 0.0
      %2068 = vmatmul.mubr.f32.gmra.mrb[0].mxu0 %v1004
      %v2069 = vpop.f32.mrb[0].mxu0
      %v2070 = vadd.f32 0.0, %v2069
      %v2071 = vpop.f32.mrb[0].mxu0
      %2072 = vmatprep.mubr.f32.mxu0 0.0
      %2073 = vmatmul.mubr.f32.gmra.mrb[0].mxu0 %v1007
      %v2074 = vpop.f32.mrb[0].mxu0
      %v2075 = vadd.f32 0.0, %v2074
      %v2076 = vpop.f32.mrb[0].mxu0
      %2077 = vmatprep.mubr.f32.mxu0 0.0
      %2078 = vmatmul.mubr.f32.gmra.mrb[0].mxu0 %v1009
      %v2079 = vpop.f32.mrb[0].mxu0
      %v2080 = vadd.f32 0.0, %v2079
      %v2081 = vpop.f32.mrb[0].mxu0
      %2082 = vmatprep.mubr.f32.mxu0 0.0
      %2083 = vmatmul.mubr.f32.gmra.mrb[0].mxu0 %v1012
      %v2084 = vpop.f32.mrb[0].mxu0
      %v2085 = vadd.f32 0.0, %v2084
      %v2086 = vpop.f32.mrb[0].mxu0
      %2087 = vmatprep.mubr.f32.mxu0 0.0
      %2088 = vmatmul.mubr.f32.gmra.mrb[0].mxu0 %v1014
      %v2089 = vpop.f32.mrb[0].mxu0
      %v2090 = vadd.f32 0.0, %v2089
      %v2091 = vpop.f32.mrb[0].mxu0
      %2092 = vmatprep.mubr.f32.mxu0 0.0
      %2093 = vmatmul.mubr.f32.gmra.mrb[0].mxu0 %v1017
      %v2094 = vpop.f32.mrb[0].mxu0
      %v2095 = vadd.f32 0.0, %v2094
      %v2096 = vpop.f32.mrb[0].mxu0
      %2097 = vmatprep.mubr.f32.mxu0 0.0
      %2098 = vmatmul.mubr.f32.gmra.mrb[0].mxu0 %v1019
      %v2099 = vpop.f32.mrb[0].mxu0
      %v2100 = vadd.f32 0.0, %v2099
      %v2101 = vpop.f32.mrb[0].mxu0
      %2102 = vmatprep.mubr.f32.mxu0 0.0
      %2103 = vmatmul.mubr.f32.gmra.mrb[0].mxu0 %v1022
      %v2104 = vpop.f32.mrb[0].mxu0
      %v2105 = vadd.f32 0.0, %v2104
      %v2106 = vpop.f32.mrb[0].mxu0
      %2107 = vmatprep.mubr.f32.mxu0 0.0
      %2108 = vmatmul.mubr.f32.gmra.mrb[0].mxu0 %v1024
      %v2109 = vpop.f32.mrb[0].mxu0
      %v2110 = vadd.f32 0.0, %v2109
      %v2111 = vpop.f32.mrb[0].mxu0
      %2112 = vmatprep.mubr.f32.mxu0 0.0
      %2113 = vmatmul.mubr.f32.gmra.mrb[0].mxu0 %v1027
      %v2114 = vpop.f32.mrb[0].mxu0
      %v2115 = vadd.f32 0.0, %v2114
      %v2116 = vpop.f32.mrb[0].mxu0
      %2117 = vmatprep.mubr.f32.mxu0 0.0
      %2118 = vmatmul.mubr.f32.gmra.mrb[0].mxu0 %v1029
      %v2119 = vpop.f32.mrb[0].mxu0
      %v2120 = vadd.f32 0.0, %v2119
      %v2121 = vpop.f32.mrb[0].mxu0
      %2122 = vmatprep.mubr.f32.mxu0 0.0
      %2123 = vmatmul.mubr.f32.gmra.mrb[0].mxu0 %v1032
      %v2124 = vpop.f32.mrb[0].mxu0
      %v2125 = vadd.f32 0.0, %v2124
      %v2126 = vpop.f32.mrb[0].mxu0
      %2127 = vmatprep.mubr.f32.mxu0 0.0
      %2128 = vmatmul.mubr.f32.gmra.mrb[0].mxu0 %v1034
      %v2129 = vpop.f32.mrb[0].mxu0
      %v2130 = vadd.f32 0.0, %v2129
      %v2131 = vpop.f32.mrb[0].mxu0
      %2132 = vmatprep.mubr.f32.mxu0 0.0
      %2133 = vmatmul.mubr.f32.gmra.mrb[0].mxu0 %v1037
      %v2134 = vpop.f32.mrb[0].mxu0
      %v2135 = vadd.f32 0.0, %v2134
      %v2136 = vpop.f32.mrb[0].mxu0
      %2137 = vmatprep.mubr.f32.mxu0 0.0
      %2138 = vmatmul.mubr.f32.gmra.mrb[0].mxu0 %v1039
      %v2139 = vpop.f32.mrb[0].mxu0
      %v2140 = vadd.f32 0.0, %v2139
      %v2141 = vpop.f32.mrb[0].mxu0
      %2142 = vmatprep.mubr.f32.mxu0 0.0
      %2143 = vmatmul.mubr.f32.gmra.mrb[0].mxu0 %v1906
      %v2144 = vpop.f32.mrb[0].mxu0
      %v2145 = vadd.f32 0.0, %v2144
      %v2146 = vpop.f32.mrb[0].mxu0
      %2147 = vmatprep.mubr.f32.mxu0 0.0
      %2148 = vmatmul.mubr.f32.gmra.mrb[0].mxu0 %v1908
      %v2149 = vpop.f32.mrb[0].mxu0
      %v2150 = vadd.f32 0.0, %v2149
      %v2151 = vpop.f32.mrb[0].mxu0
      %2152 = vdwg.mxu0
      %v2153 = vadd.f32 %v1872, %v1995
      %v2154 = vadd.f32 %v1873, %v2000
      %v2155 = vadd.f32 %v1874, %v2005
      %v2156 = vadd.f32 %v1875, %v2010
      %v2157 = vadd.f32 %v1876, %v2015
      %v2158 = vadd.f32 %v1877, %v2020
      %v2159 = vadd.f32 %v1878, %v2025
      %v2160 = vadd.f32 %v1879, %v2030
      %v2161 = vadd.f32 %v1880, %v2035
      %v2162 = vadd.f32 %v1881, %v2040
      %v2163 = vadd.f32 %v1882, %v2045
      %v2164 = vadd.f32 %v1883, %v2050
      %v2165 = vadd.f32 %v1884, %v2055
      %v2166 = vadd.f32 %v1885, %v2060
      %v2167 = vadd.f32 %v1886, %v2065
      %v2168 = vadd.f32 %v1887, %v2070
      %v2169 = vadd.f32 %v1888, %v2075
      %v2170 = vadd.f32 %v1889, %v2080
      %v2171 = vadd.f32 %v1890, %v2085
      %v2172 = vadd.f32 %v1891, %v2090
      %v2173 = vadd.f32 %v1892, %v2095
      %v2174 = vadd.f32 %v1893, %v2100
      %v2175 = vadd.f32 %v1894, %v2105
      %v2176 = vadd.f32 %v1895, %v2110
      %v2177 = vadd.f32 %v1896, %v2115
      %v2178 = vadd.f32 %v1897, %v2120
      %v2179 = vadd.f32 %v1898, %v2125
      %v2180 = vadd.f32 %v1899, %v2130
      %v2181 = vadd.f32 %v1900, %v2135
      %v2182 = vadd.f32 %v1901, %v2140
      %v2183 = vadd.f32 %v1902, %v2145
      %v2184 = vadd.f32 %v1903, %v2150
      %s2185 = scalar_lea.vmem %s1, 768
      %v2186 = vld [vmem:[%s2185] sm:$0xff]
      %v2187 = vld [vmem:[%s2185 + $0x8] sm:$0xff]
      %v2188 = vld [vmem:[%s2185 + $0x10] sm:$0xff]
      %v2189 = vld [vmem:[%s2185 + $0x18] sm:$0xff]
      %v2190 = vld [vmem:[%s2185 + $0x20] sm:$0xff]
      %v2191 = vld [vmem:[%s2185 + $0x28] sm:$0xff]
      %v2192 = vld [vmem:[%s2185 + $0x30] sm:$0xff]
      %v2193 = vld [vmem:[%s2185 + $0x38] sm:$0xff]
      %v2194 = vld [vmem:[%s2185 + $0x40] sm:$0xff]
      %v2195 = vld [vmem:[%s2185 + $0x48] sm:$0xff]
      %v2196 = vld [vmem:[%s2185 + $0x50] sm:$0xff]
      %v2197 = vld [vmem:[%s2185 + $0x58] sm:$0xff]
      %v2198 = vld [vmem:[%s2185 + $0x60] sm:$0xff]
      %v2199 = vld [vmem:[%s2185 + $0x68] sm:$0xff]
      %v2200 = vld [vmem:[%s2185 + $0x70] sm:$0xff]
      %v2201 = vld [vmem:[%s2185 + $0x78] sm:$0xff]
      %2202 = vmatprep.subr.mxu0 0.0
      %2203 = vmatpush1.msra.mxu0 %v2186
      %2204 = vmatprep.subr.mxu0 0.0
      %2205 = vmatpush1.msra.mxu0 %v2187
      %2206 = vmatprep.subr.mxu0 0.0
      %2207 = vmatpush1.msra.mxu0 %v2188
      %2208 = vmatprep.subr.mxu0 0.0
      %2209 = vmatpush1.msra.mxu0 %v2189
      %2210 = vmatprep.subr.mxu0 0.0
      %2211 = vmatpush1.msra.mxu0 %v2190
      %2212 = vmatprep.subr.mxu0 0.0
      %2213 = vmatpush1.msra.mxu0 %v2191
      %2214 = vmatprep.subr.mxu0 0.0
      %2215 = vmatpush1.msra.mxu0 %v2192
      %2216 = vmatprep.subr.mxu0 0.0
      %2217 = vmatpush1.msra.mxu0 %v2193
      %2218 = vmatprep.subr.mxu0 0.0
      %2219 = vmatpush1.msra.mxu0 %v2194
      %2220 = vmatprep.subr.mxu0 0.0
      %2221 = vmatpush1.msra.mxu0 %v2195
      %2222 = vmatprep.subr.mxu0 0.0
      %2223 = vmatpush1.msra.mxu0 %v2196
      %2224 = vmatprep.subr.mxu0 0.0
      %2225 = vmatpush1.msra.mxu0 %v2197
      %2226 = vmatprep.subr.mxu0 0.0
      %2227 = vmatpush1.msra.mxu0 %v2198
      %2228 = vmatprep.subr.mxu0 0.0
      %2229 = vmatpush1.msra.mxu0 %v2199
      %2230 = vmatprep.subr.mxu0 0.0
      %2231 = vmatpush1.msra.mxu0 %v2200
      %2232 = vmatprep.subr.mxu0 0.0
      %2233 = vmatpush1.msra.mxu0 %v2201
      %2234 = vmatprep.subr.mxu0 0.0
      %2235 = vmatpush1.msra.mxu0 0.0
      %2236 = vmatprep.subr.mxu0 0.0
      %2237 = vmatpush1.msra.mxu0 0.0
      %2238 = vmatprep.subr.mxu0 0.0
      %2239 = vmatpush1.msra.mxu0 0.0
      %2240 = vmatprep.subr.mxu0 0.0
      %2241 = vmatpush1.msra.mxu0 0.0
      %2242 = vmatprep.subr.mxu0 0.0
      %2243 = vmatpush1.msra.mxu0 0.0
      %2244 = vmatprep.subr.mxu0 0.0
      %2245 = vmatpush1.msra.mxu0 0.0
      %2246 = vmatprep.subr.mxu0 0.0
      %2247 = vmatpush1.msra.mxu0 0.0
      %2248 = vmatprep.subr.mxu0 0.0
      %2249 = vmatpush1.msra.mxu0 0.0
      %2250 = vmatprep.subr.mxu0 0.0
      %2251 = vmatpush1.msra.mxu0 0.0
      %2252 = vmatprep.subr.mxu0 0.0
      %2253 = vmatpush1.msra.mxu0 0.0
      %2254 = vmatprep.subr.mxu0 0.0
      %2255 = vmatpush1.msra.mxu0 0.0
      %2256 = vmatprep.subr.mxu0 0.0
      %2257 = vmatpush1.msra.mxu0 0.0
      %2258 = vmatprep.subr.mxu0 0.0
      %2259 = vmatpush1.msra.mxu0 0.0
      %2260 = vmatprep.subr.mxu0 0.0
      %2261 = vmatpush1.msra.mxu0 0.0
      %2262 = vmatprep.subr.mxu0 0.0
      %2263 = vmatpush1.msra.mxu0 0.0
      %2264 = vmatprep.subr.mxu0 0.0
      %2265 = vmatpush1.msra.mxu0 0.0
      %2266 = vmatprep.mubr.f32.mxu0 0.0
      %2267 = vmatmul.mubr.f32.gmra.mrb[0].mxu0 %v267
      %v2268 = vpop.f32.mrb[0].mxu0
      %v2269 = vadd.f32 0.0, %v2268
      %v2270 = vpop.f32.mrb[0].mxu0
      %2271 = vmatprep.mubr.f32.mxu0 0.0
      %2272 = vmatmul.mubr.f32.gmra.mrb[0].mxu0 %v268
      %v2273 = vpop.f32.mrb[0].mxu0
      %v2274 = vadd.f32 0.0, %v2273
      %v2275 = vpop.f32.mrb[0].mxu0
      %2276 = vmatprep.mubr.f32.mxu0 0.0
      %2277 = vmatmul.mubr.f32.gmra.mrb[0].mxu0 %v270
      %v2278 = vpop.f32.mrb[0].mxu0
      %v2279 = vadd.f32 0.0, %v2278
      %v2280 = vpop.f32.mrb[0].mxu0
      %2281 = vmatprep.mubr.f32.mxu0 0.0
      %2282 = vmatmul.mubr.f32.gmra.mrb[0].mxu0 %v271
      %v2283 = vpop.f32.mrb[0].mxu0
      %v2284 = vadd.f32 0.0, %v2283
      %v2285 = vpop.f32.mrb[0].mxu0
      %2286 = vmatprep.mubr.f32.mxu0 0.0
      %2287 = vmatmul.mubr.f32.gmra.mrb[0].mxu0 %v273
      %v2288 = vpop.f32.mrb[0].mxu0
      %v2289 = vadd.f32 0.0, %v2288
      %v2290 = vpop.f32.mrb[0].mxu0
      %2291 = vmatprep.mubr.f32.mxu0 0.0
      %2292 = vmatmul.mubr.f32.gmra.mrb[0].mxu0 %v274
      %v2293 = vpop.f32.mrb[0].mxu0
      %v2294 = vadd.f32 0.0, %v2293
      %v2295 = vpop.f32.mrb[0].mxu0
      %2296 = vmatprep.mubr.f32.mxu0 0.0
      %2297 = vmatmul.mubr.f32.gmra.mrb[0].mxu0 %v276
      %v2298 = vpop.f32.mrb[0].mxu0
      %v2299 = vadd.f32 0.0, %v2298
      %v2300 = vpop.f32.mrb[0].mxu0
      %2301 = vmatprep.mubr.f32.mxu0 0.0
      %2302 = vmatmul.mubr.f32.gmra.mrb[0].mxu0 %v277
      %v2303 = vpop.f32.mrb[0].mxu0
      %v2304 = vadd.f32 0.0, %v2303
      %v2305 = vpop.f32.mrb[0].mxu0
      %2306 = vmatprep.mubr.f32.mxu0 0.0
      %2307 = vmatmul.mubr.f32.gmra.mrb[0].mxu0 %v279
      %v2308 = vpop.f32.mrb[0].mxu0
      %v2309 = vadd.f32 0.0, %v2308
      %v2310 = vpop.f32.mrb[0].mxu0
      %2311 = vmatprep.mubr.f32.mxu0 0.0
      %2312 = vmatmul.mubr.f32.gmra.mrb[0].mxu0 %v280
      %v2313 = vpop.f32.mrb[0].mxu0
      %v2314 = vadd.f32 0.0, %v2313
      %v2315 = vpop.f32.mrb[0].mxu0
      %2316 = vmatprep.mubr.f32.mxu0 0.0
      %2317 = vmatmul.mubr.f32.gmra.mrb[0].mxu0 %v282
      %v2318 = vpop.f32.mrb[0].mxu0
      %v2319 = vadd.f32 0.0, %v2318
      %v2320 = vpop.f32.mrb[0].mxu0
      %2321 = vmatprep.mubr.f32.mxu0 0.0
      %2322 = vmatmul.mubr.f32.gmra.mrb[0].mxu0 %v283
      %v2323 = vpop.f32.mrb[0].mxu0
      %v2324 = vadd.f32 0.0, %v2323
      %v2325 = vpop.f32.mrb[0].mxu0
      %2326 = vmatprep.mubr.f32.mxu0 0.0
      %2327 = vmatmul.mubr.f32.gmra.mrb[0].mxu0 %v285
      %v2328 = vpop.f32.mrb[0].mxu0
      %v2329 = vadd.f32 0.0, %v2328
      %v2330 = vpop.f32.mrb[0].mxu0
      %2331 = vmatprep.mubr.f32.mxu0 0.0
      %2332 = vmatmul.mubr.f32.gmra.mrb[0].mxu0 %v286
      %v2333 = vpop.f32.mrb[0].mxu0
      %v2334 = vadd.f32 0.0, %v2333
      %v2335 = vpop.f32.mrb[0].mxu0
      %2336 = vmatprep.mubr.f32.mxu0 0.0
      %2337 = vmatmul.mubr.f32.gmra.mrb[0].mxu0 %v288
      %v2338 = vpop.f32.mrb[0].mxu0
      %v2339 = vadd.f32 0.0, %v2338
      %v2340 = vpop.f32.mrb[0].mxu0
      %2341 = vmatprep.mubr.f32.mxu0 0.0
      %2342 = vmatmul.mubr.f32.gmra.mrb[0].mxu0 %v289
      %v2343 = vpop.f32.mrb[0].mxu0
      %v2344 = vadd.f32 0.0, %v2343
      %v2345 = vpop.f32.mrb[0].mxu0
      %2346 = vmatprep.mubr.f32.mxu0 0.0
      %2347 = vmatmul.mubr.f32.gmra.mrb[0].mxu0 %v291
      %v2348 = vpop.f32.mrb[0].mxu0
      %v2349 = vadd.f32 0.0, %v2348
      %v2350 = vpop.f32.mrb[0].mxu0
      %2351 = vmatprep.mubr.f32.mxu0 0.0
      %2352 = vmatmul.mubr.f32.gmra.mrb[0].mxu0 %v292
      %v2353 = vpop.f32.mrb[0].mxu0
      %v2354 = vadd.f32 0.0, %v2353
      %v2355 = vpop.f32.mrb[0].mxu0
      %2356 = vmatprep.mubr.f32.mxu0 0.0
      %2357 = vmatmul.mubr.f32.gmra.mrb[0].mxu0 %v294
      %v2358 = vpop.f32.mrb[0].mxu0
      %v2359 = vadd.f32 0.0, %v2358
      %v2360 = vpop.f32.mrb[0].mxu0
      %2361 = vmatprep.mubr.f32.mxu0 0.0
      %2362 = vmatmul.mubr.f32.gmra.mrb[0].mxu0 %v295
      %v2363 = vpop.f32.mrb[0].mxu0
      %v2364 = vadd.f32 0.0, %v2363
      %v2365 = vpop.f32.mrb[0].mxu0
      %2366 = vmatprep.mubr.f32.mxu0 0.0
      %2367 = vmatmul.mubr.f32.gmra.mrb[0].mxu0 %v297
      %v2368 = vpop.f32.mrb[0].mxu0
      %v2369 = vadd.f32 0.0, %v2368
      %v2370 = vpop.f32.mrb[0].mxu0
      %2371 = vmatprep.mubr.f32.mxu0 0.0
      %2372 = vmatmul.mubr.f32.gmra.mrb[0].mxu0 %v298
      %v2373 = vpop.f32.mrb[0].mxu0
      %v2374 = vadd.f32 0.0, %v2373
      %v2375 = vpop.f32.mrb[0].mxu0
      %2376 = vmatprep.mubr.f32.mxu0 0.0
      %2377 = vmatmul.mubr.f32.gmra.mrb[0].mxu0 %v300
      %v2378 = vpop.f32.mrb[0].mxu0
      %v2379 = vadd.f32 0.0, %v2378
      %v2380 = vpop.f32.mrb[0].mxu0
      %2381 = vmatprep.mubr.f32.mxu0 0.0
      %2382 = vmatmul.mubr.f32.gmra.mrb[0].mxu0 %v301
      %v2383 = vpop.f32.mrb[0].mxu0
      %v2384 = vadd.f32 0.0, %v2383
      %v2385 = vpop.f32.mrb[0].mxu0
      %2386 = vmatprep.mubr.f32.mxu0 0.0
      %2387 = vmatmul.mubr.f32.gmra.mrb[0].mxu0 %v303
      %v2388 = vpop.f32.mrb[0].mxu0
      %v2389 = vadd.f32 0.0, %v2388
      %v2390 = vpop.f32.mrb[0].mxu0
      %2391 = vmatprep.mubr.f32.mxu0 0.0
      %2392 = vmatmul.mubr.f32.gmra.mrb[0].mxu0 %v304
      %v2393 = vpop.f32.mrb[0].mxu0
      %v2394 = vadd.f32 0.0, %v2393
      %v2395 = vpop.f32.mrb[0].mxu0
      %2396 = vmatprep.mubr.f32.mxu0 0.0
      %2397 = vmatmul.mubr.f32.gmra.mrb[0].mxu0 %v306
      %v2398 = vpop.f32.mrb[0].mxu0
      %v2399 = vadd.f32 0.0, %v2398
      %v2400 = vpop.f32.mrb[0].mxu0
      %2401 = vmatprep.mubr.f32.mxu0 0.0
      %2402 = vmatmul.mubr.f32.gmra.mrb[0].mxu0 %v307
      %v2403 = vpop.f32.mrb[0].mxu0
      %v2404 = vadd.f32 0.0, %v2403
      %v2405 = vpop.f32.mrb[0].mxu0
      %2406 = vmatprep.mubr.f32.mxu0 0.0
      %2407 = vmatmul.mubr.f32.gmra.mrb[0].mxu0 %v309
      %v2408 = vpop.f32.mrb[0].mxu0
      %v2409 = vadd.f32 0.0, %v2408
      %v2410 = vpop.f32.mrb[0].mxu0
      %2411 = vmatprep.mubr.f32.mxu0 0.0
      %2412 = vmatmul.mubr.f32.gmra.mrb[0].mxu0 %v310
      %v2413 = vpop.f32.mrb[0].mxu0
      %v2414 = vadd.f32 0.0, %v2413
      %v2415 = vpop.f32.mrb[0].mxu0
      %2416 = vmatprep.mubr.f32.mxu0 0.0
      %2417 = vmatmul.mubr.f32.gmra.mrb[0].mxu0 %v312
      %v2418 = vpop.f32.mrb[0].mxu0
      %v2419 = vadd.f32 0.0, %v2418
      %v2420 = vpop.f32.mrb[0].mxu0
      %2421 = vmatprep.mubr.f32.mxu0 0.0
      %2422 = vmatmul.mubr.f32.gmra.mrb[0].mxu0 %v313
      %v2423 = vpop.f32.mrb[0].mxu0
      %v2424 = vadd.f32 0.0, %v2423
      %v2425 = vpop.f32.mrb[0].mxu0
      %2426 = vdwg.mxu0
      %v2427 = vadd.f32 %v2153, %v2269
      %v2428 = vadd.f32 %v2154, %v2274
      %v2429 = vadd.f32 %v2155, %v2279
      %v2430 = vadd.f32 %v2156, %v2284
      %v2431 = vadd.f32 %v2157, %v2289
      %v2432 = vadd.f32 %v2158, %v2294
      %v2433 = vadd.f32 %v2159, %v2299
      %v2434 = vadd.f32 %v2160, %v2304
      %v2435 = vadd.f32 %v2161, %v2309
      %v2436 = vadd.f32 %v2162, %v2314
      %v2437 = vadd.f32 %v2163, %v2319
      %v2438 = vadd.f32 %v2164, %v2324
      %v2439 = vadd.f32 %v2165, %v2329
      %v2440 = vadd.f32 %v2166, %v2334
      %v2441 = vadd.f32 %v2167, %v2339
      %v2442 = vadd.f32 %v2168, %v2344
      %v2443 = vadd.f32 %v2169, %v2349
      %v2444 = vadd.f32 %v2170, %v2354
      %v2445 = vadd.f32 %v2171, %v2359
      %v2446 = vadd.f32 %v2172, %v2364
      %v2447 = vadd.f32 %v2173, %v2369
      %v2448 = vadd.f32 %v2174, %v2374
      %v2449 = vadd.f32 %v2175, %v2379
      %v2450 = vadd.f32 %v2176, %v2384
      %v2451 = vadd.f32 %v2177, %v2389
      %v2452 = vadd.f32 %v2178, %v2394
      %v2453 = vadd.f32 %v2179, %v2399
      %v2454 = vadd.f32 %v2180, %v2404
      %v2455 = vadd.f32 %v2181, %v2409
      %v2456 = vadd.f32 %v2182, %v2414
      %v2457 = vadd.f32 %v2183, %v2419
      %v2458 = vadd.f32 %v2184, %v2424
      %v2462 = vrot.slane %v312, 1
      %v2463 = vrot.slane %v313, 1
      %v2464 = vsel %vm379, %v2462, %v2463
      %v2465 = vrot.slane %v314, 1
      %v2466 = vsel %vm379, %v2463, %v2465
      %s2469 = scalar_lea.vmem %s1, 896
      %v2470 = vld [vmem:[%s2469] sm:$0xff]
      %v2471 = vld [vmem:[%s2469 + $0x8] sm:$0xff]
      %v2472 = vld [vmem:[%s2469 + $0x10] sm:$0xff]
      %v2473 = vld [vmem:[%s2469 + $0x18] sm:$0xff]
      %v2474 = vld [vmem:[%s2469 + $0x20] sm:$0xff]
      %v2475 = vld [vmem:[%s2469 + $0x28] sm:$0xff]
      %v2476 = vld [vmem:[%s2469 + $0x30] sm:$0xff]
      %v2477 = vld [vmem:[%s2469 + $0x38] sm:$0xff]
      %v2478 = vld [vmem:[%s2469 + $0x40] sm:$0xff]
      %v2479 = vld [vmem:[%s2469 + $0x48] sm:$0xff]
      %v2480 = vld [vmem:[%s2469 + $0x50] sm:$0xff]
      %v2481 = vld [vmem:[%s2469 + $0x58] sm:$0xff]
      %v2482 = vld [vmem:[%s2469 + $0x60] sm:$0xff]
      %v2483 = vld [vmem:[%s2469 + $0x68] sm:$0xff]
      %v2484 = vld [vmem:[%s2469 + $0x70] sm:$0xff]
      %v2485 = vld [vmem:[%s2469 + $0x78] sm:$0xff]
      %2486 = vmatprep.subr.mxu0 0.0
      %2487 = vmatpush1.msra.mxu0 %v2470
      %2488 = vmatprep.subr.mxu0 0.0
      %2489 = vmatpush1.msra.mxu0 %v2471
      %2490 = vmatprep.subr.mxu0 0.0
      %2491 = vmatpush1.msra.mxu0 %v2472
      %2492 = vmatprep.subr.mxu0 0.0
      %2493 = vmatpush1.msra.mxu0 %v2473
      %2494 = vmatprep.subr.mxu0 0.0
      %2495 = vmatpush1.msra.mxu0 %v2474
      %2496 = vmatprep.subr.mxu0 0.0
      %2497 = vmatpush1.msra.mxu0 %v2475
      %2498 = vmatprep.subr.mxu0 0.0
      %2499 = vmatpush1.msra.mxu0 %v2476
      %2500 = vmatprep.subr.mxu0 0.0
      %2501 = vmatpush1.msra.mxu0 %v2477
      %2502 = vmatprep.subr.mxu0 0.0
      %2503 = vmatpush1.msra.mxu0 %v2478
      %2504 = vmatprep.subr.mxu0 0.0
      %2505 = vmatpush1.msra.mxu0 %v2479
      %2506 = vmatprep.subr.mxu0 0.0
      %2507 = vmatpush1.msra.mxu0 %v2480
      %2508 = vmatprep.subr.mxu0 0.0
      %2509 = vmatpush1.msra.mxu0 %v2481
      %2510 = vmatprep.subr.mxu0 0.0
      %2511 = vmatpush1.msra.mxu0 %v2482
      %2512 = vmatprep.subr.mxu0 0.0
      %2513 = vmatpush1.msra.mxu0 %v2483
      %2514 = vmatprep.subr.mxu0 0.0
      %2515 = vmatpush1.msra.mxu0 %v2484
      %2516 = vmatprep.subr.mxu0 0.0
      %2517 = vmatpush1.msra.mxu0 %v2485
      %2518 = vmatprep.subr.mxu0 0.0
      %2519 = vmatpush1.msra.mxu0 0.0
      %2520 = vmatprep.subr.mxu0 0.0
      %2521 = vmatpush1.msra.mxu0 0.0
      %2522 = vmatprep.subr.mxu0 0.0
      %2523 = vmatpush1.msra.mxu0 0.0
      %2524 = vmatprep.subr.mxu0 0.0
      %2525 = vmatpush1.msra.mxu0 0.0
      %2526 = vmatprep.subr.mxu0 0.0
      %2527 = vmatpush1.msra.mxu0 0.0
      %2528 = vmatprep.subr.mxu0 0.0
      %2529 = vmatpush1.msra.mxu0 0.0
      %2530 = vmatprep.subr.mxu0 0.0
      %2531 = vmatpush1.msra.mxu0 0.0
      %2532 = vmatprep.subr.mxu0 0.0
      %2533 = vmatpush1.msra.mxu0 0.0
      %2534 = vmatprep.subr.mxu0 0.0
      %2535 = vmatpush1.msra.mxu0 0.0
      %2536 = vmatprep.subr.mxu0 0.0
      %2537 = vmatpush1.msra.mxu0 0.0
      %2538 = vmatprep.subr.mxu0 0.0
      %2539 = vmatpush1.msra.mxu0 0.0
      %2540 = vmatprep.subr.mxu0 0.0
      %2541 = vmatpush1.msra.mxu0 0.0
      %2542 = vmatprep.subr.mxu0 0.0
      %2543 = vmatpush1.msra.mxu0 0.0
      %2544 = vmatprep.subr.mxu0 0.0
      %2545 = vmatpush1.msra.mxu0 0.0
      %2546 = vmatprep.subr.mxu0 0.0
      %2547 = vmatpush1.msra.mxu0 0.0
      %2548 = vmatprep.subr.mxu0 0.0
      %2549 = vmatpush1.msra.mxu0 0.0
      %2550 = vmatprep.mubr.f32.mxu0 0.0
      %2551 = vmatmul.mubr.f32.gmra.mrb[0].mxu0 %v392
      %v2552 = vpop.f32.mrb[0].mxu0
      %v2553 = vadd.f32 0.0, %v2552
      %v2554 = vpop.f32.mrb[0].mxu0
      %2555 = vmatprep.mubr.f32.mxu0 0.0
      %2556 = vmatmul.mubr.f32.gmra.mrb[0].mxu0 %v394
      %v2557 = vpop.f32.mrb[0].mxu0
      %v2558 = vadd.f32 0.0, %v2557
      %v2559 = vpop.f32.mrb[0].mxu0
      %2560 = vmatprep.mubr.f32.mxu0 0.0
      %2561 = vmatmul.mubr.f32.gmra.mrb[0].mxu0 %v397
      %v2562 = vpop.f32.mrb[0].mxu0
      %v2563 = vadd.f32 0.0, %v2562
      %v2564 = vpop.f32.mrb[0].mxu0
      %2565 = vmatprep.mubr.f32.mxu0 0.0
      %2566 = vmatmul.mubr.f32.gmra.mrb[0].mxu0 %v399
      %v2567 = vpop.f32.mrb[0].mxu0
      %v2568 = vadd.f32 0.0, %v2567
      %v2569 = vpop.f32.mrb[0].mxu0
      %2570 = vmatprep.mubr.f32.mxu0 0.0
      %2571 = vmatmul.mubr.f32.gmra.mrb[0].mxu0 %v402
      %v2572 = vpop.f32.mrb[0].mxu0
      %v2573 = vadd.f32 0.0, %v2572
      %v2574 = vpop.f32.mrb[0].mxu0
      %2575 = vmatprep.mubr.f32.mxu0 0.0
      %2576 = vmatmul.mubr.f32.gmra.mrb[0].mxu0 %v404
      %v2577 = vpop.f32.mrb[0].mxu0
      %v2578 = vadd.f32 0.0, %v2577
      %v2579 = vpop.f32.mrb[0].mxu0
      %2580 = vmatprep.mubr.f32.mxu0 0.0
      %2581 = vmatmul.mubr.f32.gmra.mrb[0].mxu0 %v407
      %v2582 = vpop.f32.mrb[0].mxu0
      %v2583 = vadd.f32 0.0, %v2582
      %v2584 = vpop.f32.mrb[0].mxu0
      %2585 = vmatprep.mubr.f32.mxu0 0.0
      %2586 = vmatmul.mubr.f32.gmra.mrb[0].mxu0 %v409
      %v2587 = vpop.f32.mrb[0].mxu0
      %v2588 = vadd.f32 0.0, %v2587
      %v2589 = vpop.f32.mrb[0].mxu0
      %2590 = vmatprep.mubr.f32.mxu0 0.0
      %2591 = vmatmul.mubr.f32.gmra.mrb[0].mxu0 %v412
      %v2592 = vpop.f32.mrb[0].mxu0
      %v2593 = vadd.f32 0.0, %v2592
      %v2594 = vpop.f32.mrb[0].mxu0
      %2595 = vmatprep.mubr.f32.mxu0 0.0
      %2596 = vmatmul.mubr.f32.gmra.mrb[0].mxu0 %v414
      %v2597 = vpop.f32.mrb[0].mxu0
      %v2598 = vadd.f32 0.0, %v2597
      %v2599 = vpop.f32.mrb[0].mxu0
      %2600 = vmatprep.mubr.f32.mxu0 0.0
      %2601 = vmatmul.mubr.f32.gmra.mrb[0].mxu0 %v417
      %v2602 = vpop.f32.mrb[0].mxu0
      %v2603 = vadd.f32 0.0, %v2602
      %v2604 = vpop.f32.mrb[0].mxu0
      %2605 = vmatprep.mubr.f32.mxu0 0.0
      %2606 = vmatmul.mubr.f32.gmra.mrb[0].mxu0 %v419
      %v2607 = vpop.f32.mrb[0].mxu0
      %v2608 = vadd.f32 0.0, %v2607
      %v2609 = vpop.f32.mrb[0].mxu0
      %2610 = vmatprep.mubr.f32.mxu0 0.0
      %2611 = vmatmul.mubr.f32.gmra.mrb[0].mxu0 %v422
      %v2612 = vpop.f32.mrb[0].mxu0
      %v2613 = vadd.f32 0.0, %v2612
      %v2614 = vpop.f32.mrb[0].mxu0
      %2615 = vmatprep.mubr.f32.mxu0 0.0
      %2616 = vmatmul.mubr.f32.gmra.mrb[0].mxu0 %v424
      %v2617 = vpop.f32.mrb[0].mxu0
      %v2618 = vadd.f32 0.0, %v2617
      %v2619 = vpop.f32.mrb[0].mxu0
      %2620 = vmatprep.mubr.f32.mxu0 0.0
      %2621 = vmatmul.mubr.f32.gmra.mrb[0].mxu0 %v427
      %v2622 = vpop.f32.mrb[0].mxu0
      %v2623 = vadd.f32 0.0, %v2622
      %v2624 = vpop.f32.mrb[0].mxu0
      %2625 = vmatprep.mubr.f32.mxu0 0.0
      %2626 = vmatmul.mubr.f32.gmra.mrb[0].mxu0 %v429
      %v2627 = vpop.f32.mrb[0].mxu0
      %v2628 = vadd.f32 0.0, %v2627
      %v2629 = vpop.f32.mrb[0].mxu0
      %2630 = vmatprep.mubr.f32.mxu0 0.0
      %2631 = vmatmul.mubr.f32.gmra.mrb[0].mxu0 %v432
      %v2632 = vpop.f32.mrb[0].mxu0
      %v2633 = vadd.f32 0.0, %v2632
      %v2634 = vpop.f32.mrb[0].mxu0
      %2635 = vmatprep.mubr.f32.mxu0 0.0
      %2636 = vmatmul.mubr.f32.gmra.mrb[0].mxu0 %v434
      %v2637 = vpop.f32.mrb[0].mxu0
      %v2638 = vadd.f32 0.0, %v2637
      %v2639 = vpop.f32.mrb[0].mxu0
      %2640 = vmatprep.mubr.f32.mxu0 0.0
      %2641 = vmatmul.mubr.f32.gmra.mrb[0].mxu0 %v437
      %v2642 = vpop.f32.mrb[0].mxu0
      %v2643 = vadd.f32 0.0, %v2642
      %v2644 = vpop.f32.mrb[0].mxu0
      %2645 = vmatprep.mubr.f32.mxu0 0.0
      %2646 = vmatmul.mubr.f32.gmra.mrb[0].mxu0 %v439
      %v2647 = vpop.f32.mrb[0].mxu0
      %v2648 = vadd.f32 0.0, %v2647
      %v2649 = vpop.f32.mrb[0].mxu0
      %2650 = vmatprep.mubr.f32.mxu0 0.0
      %2651 = vmatmul.mubr.f32.gmra.mrb[0].mxu0 %v442
      %v2652 = vpop.f32.mrb[0].mxu0
      %v2653 = vadd.f32 0.0, %v2652
      %v2654 = vpop.f32.mrb[0].mxu0
      %2655 = vmatprep.mubr.f32.mxu0 0.0
      %2656 = vmatmul.mubr.f32.gmra.mrb[0].mxu0 %v444
      %v2657 = vpop.f32.mrb[0].mxu0
      %v2658 = vadd.f32 0.0, %v2657
      %v2659 = vpop.f32.mrb[0].mxu0
      %2660 = vmatprep.mubr.f32.mxu0 0.0
      %2661 = vmatmul.mubr.f32.gmra.mrb[0].mxu0 %v447
      %v2662 = vpop.f32.mrb[0].mxu0
      %v2663 = vadd.f32 0.0, %v2662
      %v2664 = vpop.f32.mrb[0].mxu0
      %2665 = vmatprep.mubr.f32.mxu0 0.0
      %2666 = vmatmul.mubr.f32.gmra.mrb[0].mxu0 %v449
      %v2667 = vpop.f32.mrb[0].mxu0
      %v2668 = vadd.f32 0.0, %v2667
      %v2669 = vpop.f32.mrb[0].mxu0
      %2670 = vmatprep.mubr.f32.mxu0 0.0
      %2671 = vmatmul.mubr.f32.gmra.mrb[0].mxu0 %v452
      %v2672 = vpop.f32.mrb[0].mxu0
      %v2673 = vadd.f32 0.0, %v2672
      %v2674 = vpop.f32.mrb[0].mxu0
      %2675 = vmatprep.mubr.f32.mxu0 0.0
      %2676 = vmatmul.mubr.f32.gmra.mrb[0].mxu0 %v454
      %v2677 = vpop.f32.mrb[0].mxu0
      %v2678 = vadd.f32 0.0, %v2677
      %v2679 = vpop.f32.mrb[0].mxu0
      %2680 = vmatprep.mubr.f32.mxu0 0.0
      %2681 = vmatmul.mubr.f32.gmra.mrb[0].mxu0 %v457
      %v2682 = vpop.f32.mrb[0].mxu0
      %v2683 = vadd.f32 0.0, %v2682
      %v2684 = vpop.f32.mrb[0].mxu0
      %2685 = vmatprep.mubr.f32.mxu0 0.0
      %2686 = vmatmul.mubr.f32.gmra.mrb[0].mxu0 %v459
      %v2687 = vpop.f32.mrb[0].mxu0
      %v2688 = vadd.f32 0.0, %v2687
      %v2689 = vpop.f32.mrb[0].mxu0
      %2690 = vmatprep.mubr.f32.mxu0 0.0
      %2691 = vmatmul.mubr.f32.gmra.mrb[0].mxu0 %v1625
      %v2692 = vpop.f32.mrb[0].mxu0
      %v2693 = vadd.f32 0.0, %v2692
      %v2694 = vpop.f32.mrb[0].mxu0
      %2695 = vmatprep.mubr.f32.mxu0 0.0
      %2696 = vmatmul.mubr.f32.gmra.mrb[0].mxu0 %v1627
      %v2697 = vpop.f32.mrb[0].mxu0
      %v2698 = vadd.f32 0.0, %v2697
      %v2699 = vpop.f32.mrb[0].mxu0
      %2700 = vmatprep.mubr.f32.mxu0 0.0
      %2701 = vmatmul.mubr.f32.gmra.mrb[0].mxu0 %v2464
      %v2702 = vpop.f32.mrb[0].mxu0
      %v2703 = vadd.f32 0.0, %v2702
      %v2704 = vpop.f32.mrb[0].mxu0
      %2705 = vmatprep.mubr.f32.mxu0 0.0
      %2706 = vmatmul.mubr.f32.gmra.mrb[0].mxu0 %v2466
      %v2707 = vpop.f32.mrb[0].mxu0
      %v2708 = vadd.f32 0.0, %v2707
      %v2709 = vpop.f32.mrb[0].mxu0
      %2710 = vdwg.mxu0
      %v2711 = vadd.f32 %v2427, %v2553
      %v2712 = vadd.f32 %v2428, %v2558
      %v2713 = vadd.f32 %v2429, %v2563
      %v2714 = vadd.f32 %v2430, %v2568
      %v2715 = vadd.f32 %v2431, %v2573
      %v2716 = vadd.f32 %v2432, %v2578
      %v2717 = vadd.f32 %v2433, %v2583
      %v2718 = vadd.f32 %v2434, %v2588
      %v2719 = vadd.f32 %v2435, %v2593
      %v2720 = vadd.f32 %v2436, %v2598
      %v2721 = vadd.f32 %v2437, %v2603
      %v2722 = vadd.f32 %v2438, %v2608
      %v2723 = vadd.f32 %v2439, %v2613
      %v2724 = vadd.f32 %v2440, %v2618
      %v2725 = vadd.f32 %v2441, %v2623
      %v2726 = vadd.f32 %v2442, %v2628
      %v2727 = vadd.f32 %v2443, %v2633
      %v2728 = vadd.f32 %v2444, %v2638
      %v2729 = vadd.f32 %v2445, %v2643
      %v2730 = vadd.f32 %v2446, %v2648
      %v2731 = vadd.f32 %v2447, %v2653
      %v2732 = vadd.f32 %v2448, %v2658
      %v2733 = vadd.f32 %v2449, %v2663
      %v2734 = vadd.f32 %v2450, %v2668
      %v2735 = vadd.f32 %v2451, %v2673
      %v2736 = vadd.f32 %v2452, %v2678
      %v2737 = vadd.f32 %v2453, %v2683
      %v2738 = vadd.f32 %v2454, %v2688
      %v2739 = vadd.f32 %v2455, %v2693
      %v2740 = vadd.f32 %v2456, %v2698
      %v2741 = vadd.f32 %v2457, %v2703
      %v2742 = vadd.f32 %v2458, %v2708
      %v2743 = vrot.slane %v312, 2
      %v2744 = vrot.slane %v313, 2
      %v2745 = vsel %vm959, %v2743, %v2744
      %v2746 = vrot.slane %v314, 2
      %v2747 = vsel %vm959, %v2744, %v2746
      %s2750 = scalar_lea.vmem %s1, 1024
      %v2751 = vld [vmem:[%s2750] sm:$0xff]
      %v2752 = vld [vmem:[%s2750 + $0x8] sm:$0xff]
      %v2753 = vld [vmem:[%s2750 + $0x10] sm:$0xff]
      %v2754 = vld [vmem:[%s2750 + $0x18] sm:$0xff]
      %v2755 = vld [vmem:[%s2750 + $0x20] sm:$0xff]
      %v2756 = vld [vmem:[%s2750 + $0x28] sm:$0xff]
      %v2757 = vld [vmem:[%s2750 + $0x30] sm:$0xff]
      %v2758 = vld [vmem:[%s2750 + $0x38] sm:$0xff]
      %v2759 = vld [vmem:[%s2750 + $0x40] sm:$0xff]
      %v2760 = vld [vmem:[%s2750 + $0x48] sm:$0xff]
      %v2761 = vld [vmem:[%s2750 + $0x50] sm:$0xff]
      %v2762 = vld [vmem:[%s2750 + $0x58] sm:$0xff]
      %v2763 = vld [vmem:[%s2750 + $0x60] sm:$0xff]
      %v2764 = vld [vmem:[%s2750 + $0x68] sm:$0xff]
      %v2765 = vld [vmem:[%s2750 + $0x70] sm:$0xff]
      %v2766 = vld [vmem:[%s2750 + $0x78] sm:$0xff]
      %2767 = vmatprep.subr.mxu0 0.0
      %2768 = vmatpush1.msra.mxu0 %v2751
      %2769 = vmatprep.subr.mxu0 0.0
      %2770 = vmatpush1.msra.mxu0 %v2752
      %2771 = vmatprep.subr.mxu0 0.0
      %2772 = vmatpush1.msra.mxu0 %v2753
      %2773 = vmatprep.subr.mxu0 0.0
      %2774 = vmatpush1.msra.mxu0 %v2754
      %2775 = vmatprep.subr.mxu0 0.0
      %2776 = vmatpush1.msra.mxu0 %v2755
      %2777 = vmatprep.subr.mxu0 0.0
      %2778 = vmatpush1.msra.mxu0 %v2756
      %2779 = vmatprep.subr.mxu0 0.0
      %2780 = vmatpush1.msra.mxu0 %v2757
      %2781 = vmatprep.subr.mxu0 0.0
      %2782 = vmatpush1.msra.mxu0 %v2758
      %2783 = vmatprep.subr.mxu0 0.0
      %2784 = vmatpush1.msra.mxu0 %v2759
      %2785 = vmatprep.subr.mxu0 0.0
      %2786 = vmatpush1.msra.mxu0 %v2760
      %2787 = vmatprep.subr.mxu0 0.0
      %2788 = vmatpush1.msra.mxu0 %v2761
      %2789 = vmatprep.subr.mxu0 0.0
      %2790 = vmatpush1.msra.mxu0 %v2762
      %2791 = vmatprep.subr.mxu0 0.0
      %2792 = vmatpush1.msra.mxu0 %v2763
      %2793 = vmatprep.subr.mxu0 0.0
      %2794 = vmatpush1.msra.mxu0 %v2764
      %2795 = vmatprep.subr.mxu0 0.0
      %2796 = vmatpush1.msra.mxu0 %v2765
      %2797 = vmatprep.subr.mxu0 0.0
      %2798 = vmatpush1.msra.mxu0 %v2766
      %2799 = vmatprep.subr.mxu0 0.0
      %2800 = vmatpush1.msra.mxu0 0.0
      %2801 = vmatprep.subr.mxu0 0.0
      %2802 = vmatpush1.msra.mxu0 0.0
      %2803 = vmatprep.subr.mxu0 0.0
      %2804 = vmatpush1.msra.mxu0 0.0
      %2805 = vmatprep.subr.mxu0 0.0
      %2806 = vmatpush1.msra.mxu0 0.0
      %2807 = vmatprep.subr.mxu0 0.0
      %2808 = vmatpush1.msra.mxu0 0.0
      %2809 = vmatprep.subr.mxu0 0.0
      %2810 = vmatpush1.msra.mxu0 0.0
      %2811 = vmatprep.subr.mxu0 0.0
      %2812 = vmatpush1.msra.mxu0 0.0
      %2813 = vmatprep.subr.mxu0 0.0
      %2814 = vmatpush1.msra.mxu0 0.0
      %2815 = vmatprep.subr.mxu0 0.0
      %2816 = vmatpush1.msra.mxu0 0.0
      %2817 = vmatprep.subr.mxu0 0.0
      %2818 = vmatpush1.msra.mxu0 0.0
      %2819 = vmatprep.subr.mxu0 0.0
      %2820 = vmatpush1.msra.mxu0 0.0
      %2821 = vmatprep.subr.mxu0 0.0
      %2822 = vmatpush1.msra.mxu0 0.0
      %2823 = vmatprep.subr.mxu0 0.0
      %2824 = vmatpush1.msra.mxu0 0.0
      %2825 = vmatprep.subr.mxu0 0.0
      %2826 = vmatpush1.msra.mxu0 0.0
      %2827 = vmatprep.subr.mxu0 0.0
      %2828 = vmatpush1.msra.mxu0 0.0
      %2829 = vmatprep.subr.mxu0 0.0
      %2830 = vmatpush1.msra.mxu0 0.0
      %2831 = vmatprep.mubr.f32.mxu0 0.0
      %2832 = vmatmul.mubr.f32.gmra.mrb[0].mxu0 %v972
      %v2833 = vpop.f32.mrb[0].mxu0
      %v2834 = vadd.f32 0.0, %v2833
      %v2835 = vpop.f32.mrb[0].mxu0
      %2836 = vmatprep.mubr.f32.mxu0 0.0
      %2837 = vmatmul.mubr.f32.gmra.mrb[0].mxu0 %v974
      %v2838 = vpop.f32.mrb[0].mxu0
      %v2839 = vadd.f32 0.0, %v2838
      %v2840 = vpop.f32.mrb[0].mxu0
      %2841 = vmatprep.mubr.f32.mxu0 0.0
      %2842 = vmatmul.mubr.f32.gmra.mrb[0].mxu0 %v977
      %v2843 = vpop.f32.mrb[0].mxu0
      %v2844 = vadd.f32 0.0, %v2843
      %v2845 = vpop.f32.mrb[0].mxu0
      %2846 = vmatprep.mubr.f32.mxu0 0.0
      %2847 = vmatmul.mubr.f32.gmra.mrb[0].mxu0 %v979
      %v2848 = vpop.f32.mrb[0].mxu0
      %v2849 = vadd.f32 0.0, %v2848
      %v2850 = vpop.f32.mrb[0].mxu0
      %2851 = vmatprep.mubr.f32.mxu0 0.0
      %2852 = vmatmul.mubr.f32.gmra.mrb[0].mxu0 %v982
      %v2853 = vpop.f32.mrb[0].mxu0
      %v2854 = vadd.f32 0.0, %v2853
      %v2855 = vpop.f32.mrb[0].mxu0
      %2856 = vmatprep.mubr.f32.mxu0 0.0
      %2857 = vmatmul.mubr.f32.gmra.mrb[0].mxu0 %v984
      %v2858 = vpop.f32.mrb[0].mxu0
      %v2859 = vadd.f32 0.0, %v2858
      %v2860 = vpop.f32.mrb[0].mxu0
      %2861 = vmatprep.mubr.f32.mxu0 0.0
      %2862 = vmatmul.mubr.f32.gmra.mrb[0].mxu0 %v987
      %v2863 = vpop.f32.mrb[0].mxu0
      %v2864 = vadd.f32 0.0, %v2863
      %v2865 = vpop.f32.mrb[0].mxu0
      %2866 = vmatprep.mubr.f32.mxu0 0.0
      %2867 = vmatmul.mubr.f32.gmra.mrb[0].mxu0 %v989
      %v2868 = vpop.f32.mrb[0].mxu0
      %v2869 = vadd.f32 0.0, %v2868
      %v2870 = vpop.f32.mrb[0].mxu0
      %2871 = vmatprep.mubr.f32.mxu0 0.0
      %2872 = vmatmul.mubr.f32.gmra.mrb[0].mxu0 %v992
      %v2873 = vpop.f32.mrb[0].mxu0
      %v2874 = vadd.f32 0.0, %v2873
      %v2875 = vpop.f32.mrb[0].mxu0
      %2876 = vmatprep.mubr.f32.mxu0 0.0
      %2877 = vmatmul.mubr.f32.gmra.mrb[0].mxu0 %v994
      %v2878 = vpop.f32.mrb[0].mxu0
      %v2879 = vadd.f32 0.0, %v2878
      %v2880 = vpop.f32.mrb[0].mxu0
      %2881 = vmatprep.mubr.f32.mxu0 0.0
      %2882 = vmatmul.mubr.f32.gmra.mrb[0].mxu0 %v997
      %v2883 = vpop.f32.mrb[0].mxu0
      %v2884 = vadd.f32 0.0, %v2883
      %v2885 = vpop.f32.mrb[0].mxu0
      %2886 = vmatprep.mubr.f32.mxu0 0.0
      %2887 = vmatmul.mubr.f32.gmra.mrb[0].mxu0 %v999
      %v2888 = vpop.f32.mrb[0].mxu0
      %v2889 = vadd.f32 0.0, %v2888
      %v2890 = vpop.f32.mrb[0].mxu0
      %2891 = vmatprep.mubr.f32.mxu0 0.0
      %2892 = vmatmul.mubr.f32.gmra.mrb[0].mxu0 %v1002
      %v2893 = vpop.f32.mrb[0].mxu0
      %v2894 = vadd.f32 0.0, %v2893
      %v2895 = vpop.f32.mrb[0].mxu0
      %2896 = vmatprep.mubr.f32.mxu0 0.0
      %2897 = vmatmul.mubr.f32.gmra.mrb[0].mxu0 %v1004
      %v2898 = vpop.f32.mrb[0].mxu0
      %v2899 = vadd.f32 0.0, %v2898
      %v2900 = vpop.f32.mrb[0].mxu0
      %2901 = vmatprep.mubr.f32.mxu0 0.0
      %2902 = vmatmul.mubr.f32.gmra.mrb[0].mxu0 %v1007
      %v2903 = vpop.f32.mrb[0].mxu0
      %v2904 = vadd.f32 0.0, %v2903
      %v2905 = vpop.f32.mrb[0].mxu0
      %2906 = vmatprep.mubr.f32.mxu0 0.0
      %2907 = vmatmul.mubr.f32.gmra.mrb[0].mxu0 %v1009
      %v2908 = vpop.f32.mrb[0].mxu0
      %v2909 = vadd.f32 0.0, %v2908
      %v2910 = vpop.f32.mrb[0].mxu0
      %2911 = vmatprep.mubr.f32.mxu0 0.0
      %2912 = vmatmul.mubr.f32.gmra.mrb[0].mxu0 %v1012
      %v2913 = vpop.f32.mrb[0].mxu0
      %v2914 = vadd.f32 0.0, %v2913
      %v2915 = vpop.f32.mrb[0].mxu0
      %2916 = vmatprep.mubr.f32.mxu0 0.0
      %2917 = vmatmul.mubr.f32.gmra.mrb[0].mxu0 %v1014
      %v2918 = vpop.f32.mrb[0].mxu0
      %v2919 = vadd.f32 0.0, %v2918
      %v2920 = vpop.f32.mrb[0].mxu0
      %2921 = vmatprep.mubr.f32.mxu0 0.0
      %2922 = vmatmul.mubr.f32.gmra.mrb[0].mxu0 %v1017
      %v2923 = vpop.f32.mrb[0].mxu0
      %v2924 = vadd.f32 0.0, %v2923
      %v2925 = vpop.f32.mrb[0].mxu0
      %2926 = vmatprep.mubr.f32.mxu0 0.0
      %2927 = vmatmul.mubr.f32.gmra.mrb[0].mxu0 %v1019
      %v2928 = vpop.f32.mrb[0].mxu0
      %v2929 = vadd.f32 0.0, %v2928
      %v2930 = vpop.f32.mrb[0].mxu0
      %2931 = vmatprep.mubr.f32.mxu0 0.0
      %2932 = vmatmul.mubr.f32.gmra.mrb[0].mxu0 %v1022
      %v2933 = vpop.f32.mrb[0].mxu0
      %v2934 = vadd.f32 0.0, %v2933
      %v2935 = vpop.f32.mrb[0].mxu0
      %2936 = vmatprep.mubr.f32.mxu0 0.0
      %2937 = vmatmul.mubr.f32.gmra.mrb[0].mxu0 %v1024
      %v2938 = vpop.f32.mrb[0].mxu0
      %v2939 = vadd.f32 0.0, %v2938
      %v2940 = vpop.f32.mrb[0].mxu0
      %2941 = vmatprep.mubr.f32.mxu0 0.0
      %2942 = vmatmul.mubr.f32.gmra.mrb[0].mxu0 %v1027
      %v2943 = vpop.f32.mrb[0].mxu0
      %v2944 = vadd.f32 0.0, %v2943
      %v2945 = vpop.f32.mrb[0].mxu0
      %2946 = vmatprep.mubr.f32.mxu0 0.0
      %2947 = vmatmul.mubr.f32.gmra.mrb[0].mxu0 %v1029
      %v2948 = vpop.f32.mrb[0].mxu0
      %v2949 = vadd.f32 0.0, %v2948
      %v2950 = vpop.f32.mrb[0].mxu0
      %2951 = vmatprep.mubr.f32.mxu0 0.0
      %2952 = vmatmul.mubr.f32.gmra.mrb[0].mxu0 %v1032
      %v2953 = vpop.f32.mrb[0].mxu0
      %v2954 = vadd.f32 0.0, %v2953
      %v2955 = vpop.f32.mrb[0].mxu0
      %2956 = vmatprep.mubr.f32.mxu0 0.0
      %2957 = vmatmul.mubr.f32.gmra.mrb[0].mxu0 %v1034
      %v2958 = vpop.f32.mrb[0].mxu0
      %v2959 = vadd.f32 0.0, %v2958
      %v2960 = vpop.f32.mrb[0].mxu0
      %2961 = vmatprep.mubr.f32.mxu0 0.0
      %2962 = vmatmul.mubr.f32.gmra.mrb[0].mxu0 %v1037
      %v2963 = vpop.f32.mrb[0].mxu0
      %v2964 = vadd.f32 0.0, %v2963
      %v2965 = vpop.f32.mrb[0].mxu0
      %2966 = vmatprep.mubr.f32.mxu0 0.0
      %2967 = vmatmul.mubr.f32.gmra.mrb[0].mxu0 %v1039
      %v2968 = vpop.f32.mrb[0].mxu0
      %v2969 = vadd.f32 0.0, %v2968
      %v2970 = vpop.f32.mrb[0].mxu0
      %2971 = vmatprep.mubr.f32.mxu0 0.0
      %2972 = vmatmul.mubr.f32.gmra.mrb[0].mxu0 %v1906
      %v2973 = vpop.f32.mrb[0].mxu0
      %v2974 = vadd.f32 0.0, %v2973
      %v2975 = vpop.f32.mrb[0].mxu0
      %2976 = vmatprep.mubr.f32.mxu0 0.0
      %2977 = vmatmul.mubr.f32.gmra.mrb[0].mxu0 %v1908
      %v2978 = vpop.f32.mrb[0].mxu0
      %v2979 = vadd.f32 0.0, %v2978
      %v2980 = vpop.f32.mrb[0].mxu0
      %2981 = vmatprep.mubr.f32.mxu0 0.0
      %2982 = vmatmul.mubr.f32.gmra.mrb[0].mxu0 %v2745
      %v2983 = vpop.f32.mrb[0].mxu0
      %v2984 = vadd.f32 0.0, %v2983
      %v2985 = vpop.f32.mrb[0].mxu0
      %2986 = vmatprep.mubr.f32.mxu0 0.0
      %2987 = vmatmul.mubr.f32.gmra.mrb[0].mxu0 %v2747
      %v2988 = vpop.f32.mrb[0].mxu0
      %v2989 = vadd.f32 0.0, %v2988
      %v2990 = vpop.f32.mrb[0].mxu0
      %2991 = vdwg.mxu0
      %v2992 = vadd.f32 %v2711, %v2834
      %v2993 = vadd.f32 %v2712, %v2839
      %v2994 = vadd.f32 %v2713, %v2844
      %v2995 = vadd.f32 %v2714, %v2849
      %v2996 = vadd.f32 %v2715, %v2854
      %v2997 = vadd.f32 %v2716, %v2859
      %v2998 = vadd.f32 %v2717, %v2864
      %v2999 = vadd.f32 %v2718, %v2869
      %v3000 = vadd.f32 %v2719, %v2874
      %v3001 = vadd.f32 %v2720, %v2879
      %v3002 = vadd.f32 %v2721, %v2884
      %v3003 = vadd.f32 %v2722, %v2889
      %v3004 = vadd.f32 %v2723, %v2894
      %v3005 = vadd.f32 %v2724, %v2899
      %v3006 = vadd.f32 %v2725, %v2904
      %v3007 = vadd.f32 %v2726, %v2909
      %v3008 = vadd.f32 %v2727, %v2914
      %v3009 = vadd.f32 %v2728, %v2919
      %v3010 = vadd.f32 %v2729, %v2924
      %v3011 = vadd.f32 %v2730, %v2929
      %v3012 = vadd.f32 %v2731, %v2934
      %v3013 = vadd.f32 %v2732, %v2939
      %v3014 = vadd.f32 %v2733, %v2944
      %v3015 = vadd.f32 %v2734, %v2949
      %v3016 = vadd.f32 %v2735, %v2954
      %v3017 = vadd.f32 %v2736, %v2959
      %v3018 = vadd.f32 %v2737, %v2964
      %v3019 = vadd.f32 %v2738, %v2969
      %v3020 = vadd.f32 %v2739, %v2974
      %v3021 = vadd.f32 %v2740, %v2979
      %v3022 = vadd.f32 %v2741, %v2984
      %v3023 = vadd.f32 %v2742, %v2989
      %v3024 = vld [vmem:[%s2] sm:$0x1]
      %v3026 = vlaneseq
      %v3027 = vshrl.u32 %v3026, 7
      %v3028 = vsub.s32 0, %v3027
      %v3029 = vrot.slane %v3024, %v3028
      %v3031 = vadd.f32 %v2992, %v3029
      %v3032 = vadd.f32 %v2993, %v3029
      %v3033 = vadd.f32 %v2994, %v3029
      %v3034 = vadd.f32 %v2995, %v3029
      %v3035 = vadd.f32 %v2996, %v3029
      %v3036 = vadd.f32 %v2997, %v3029
      %v3037 = vadd.f32 %v2998, %v3029
      %v3038 = vadd.f32 %v2999, %v3029
      %v3039 = vadd.f32 %v3000, %v3029
      %v3040 = vadd.f32 %v3001, %v3029
      %v3041 = vadd.f32 %v3002, %v3029
      %v3042 = vadd.f32 %v3003, %v3029
      %v3043 = vadd.f32 %v3004, %v3029
      %v3044 = vadd.f32 %v3005, %v3029
      %v3045 = vadd.f32 %v3006, %v3029
      %v3046 = vadd.f32 %v3007, %v3029
      %v3047 = vadd.f32 %v3008, %v3029
      %v3048 = vadd.f32 %v3009, %v3029
      %v3049 = vadd.f32 %v3010, %v3029
      %v3050 = vadd.f32 %v3011, %v3029
      %v3051 = vadd.f32 %v3012, %v3029
      %v3052 = vadd.f32 %v3013, %v3029
      %v3053 = vadd.f32 %v3014, %v3029
      %v3054 = vadd.f32 %v3015, %v3029
      %v3055 = vadd.f32 %v3016, %v3029
      %v3056 = vadd.f32 %v3017, %v3029
      %v3057 = vadd.f32 %v3018, %v3029
      %v3058 = vadd.f32 %v3019, %v3029
      %v3059 = vadd.f32 %v3020, %v3029
      %v3060 = vadd.f32 %v3021, %v3029
      %v3061 = vadd.f32 %v3022, %v3029
      %v3062 = vadd.f32 %v3023, %v3029
      %v3063 = vmax.f32 %v3031, 0.0
      %v3064 = vmax.f32 %v3032, 0.0
      %v3065 = vmax.f32 %v3033, 0.0
      %v3066 = vmax.f32 %v3034, 0.0
      %v3067 = vmax.f32 %v3035, 0.0
      %v3068 = vmax.f32 %v3036, 0.0
      %v3069 = vmax.f32 %v3037, 0.0
      %v3070 = vmax.f32 %v3038, 0.0
      %v3071 = vmax.f32 %v3039, 0.0
      %v3072 = vmax.f32 %v3040, 0.0
      %v3073 = vmax.f32 %v3041, 0.0
      %v3074 = vmax.f32 %v3042, 0.0
      %v3075 = vmax.f32 %v3043, 0.0
      %v3076 = vmax.f32 %v3044, 0.0
      %v3077 = vmax.f32 %v3045, 0.0
      %v3078 = vmax.f32 %v3046, 0.0
      %v3079 = vmax.f32 %v3047, 0.0
      %v3080 = vmax.f32 %v3048, 0.0
      %v3081 = vmax.f32 %v3049, 0.0
      %v3082 = vmax.f32 %v3050, 0.0
      %v3083 = vmax.f32 %v3051, 0.0
      %v3084 = vmax.f32 %v3052, 0.0
      %v3085 = vmax.f32 %v3053, 0.0
      %v3086 = vmax.f32 %v3054, 0.0
      %v3087 = vmax.f32 %v3055, 0.0
      %v3088 = vmax.f32 %v3056, 0.0
      %v3089 = vmax.f32 %v3057, 0.0
      %v3090 = vmax.f32 %v3058, 0.0
      %v3091 = vmax.f32 %v3059, 0.0
      %v3092 = vmax.f32 %v3060, 0.0
      %v3093 = vmax.f32 %v3061, 0.0
      %v3094 = vmax.f32 %v3062, 0.0
      %3095 = vst [vmem:[#allocation2] sm:$0xff] 0.0
      %3096 = vst [vmem:[#allocation2 + $0x8] sm:$0xff] 0.0
      %3097 = vst [vmem:[#allocation2 + $0x10] sm:$0x3] 0.0
      %3098 = vst [vmem:[#allocation2 + $0x18] sm:$0xff] 0.0
      %3099 = vst [vmem:[#allocation2 + $0x20] sm:$0xff] 0.0
      %3100 = vst [vmem:[#allocation2 + $0x28] sm:$0x3] 0.0
      %3101 = vst [vmem:[#allocation2 + $0x30] sm:$0xff] 0.0
      %3102 = vst [vmem:[#allocation2 + $0x38] sm:$0xff] 0.0
      %3103 = vst [vmem:[#allocation2 + $0x40] sm:$0x3] 0.0
      %3104 = vst [vmem:[#allocation2 + $0x48] sm:$0xff] 0.0
      %3105 = vst [vmem:[#allocation2 + $0x50] sm:$0xff] 0.0
      %3106 = vst [vmem:[#allocation2 + $0x58] sm:$0x3] 0.0
      %3107 = vst [vmem:[#allocation2 + $0x60] sm:$0xff] 0.0
      %3108 = vst [vmem:[#allocation2 + $0x68] sm:$0xff] 0.0
      %3109 = vst [vmem:[#allocation2 + $0x70] sm:$0x3] 0.0
      %3110 = vst [vmem:[#allocation2 + $0x78] sm:$0xff] 0.0
      %3111 = vst [vmem:[#allocation2 + $0x80] sm:$0xff] 0.0
      %3112 = vst [vmem:[#allocation2 + $0x88] sm:$0x3] 0.0
      %3113 = vst [vmem:[#allocation2 + $0x90] sm:$0xff] 0.0
      %3114 = vst [vmem:[#allocation2 + $0x98] sm:$0xff] 0.0
      %3115 = vst [vmem:[#allocation2 + $0xa0] sm:$0x3] 0.0
      %3116 = vst [vmem:[#allocation2 + $0xa8] sm:$0xff] 0.0
      %3117 = vst [vmem:[#allocation2 + $0xb0] sm:$0xff] 0.0
      %3118 = vst [vmem:[#allocation2 + $0xb8] sm:$0x3] 0.0
      %3119 = vst [vmem:[#allocation2 + $0xc0] sm:$0xff] 0.0
      %3120 = vst [vmem:[#allocation2 + $0xc8] sm:$0xff] 0.0
      %3121 = vst [vmem:[#allocation2 + $0xd0] sm:$0x3] 0.0
      %3122 = vst [vmem:[#allocation2 + $0xd8] sm:$0xff] 0.0
      %3123 = vst [vmem:[#allocation2 + $0xe0] sm:$0xff] 0.0
      %3124 = vst [vmem:[#allocation2 + $0xe8] sm:$0x3] 0.0
      %3125 = vst [vmem:[#allocation2 + $0xf0] sm:$0xff] 0.0
      %3126 = vst [vmem:[#allocation2 + $0xf8] sm:$0xff] 0.0
      %3127 = vst [vmem:[#allocation2 + $0x100] sm:$0x3] 0.0
      %3128 = vst [vmem:[#allocation2 + $0x108] sm:$0xff] 0.0
      %3129 = vst [vmem:[#allocation2 + $0x110] sm:$0xff] 0.0
      %3130 = vst [vmem:[#allocation2 + $0x118] sm:$0x3] 0.0
      %3131 = vst [vmem:[#allocation2 + $0x120] sm:$0xff] 0.0
      %3132 = vst [vmem:[#allocation2 + $0x128] sm:$0xff] 0.0
      %3133 = vst [vmem:[#allocation2 + $0x130] sm:$0x3] 0.0
      %3134 = vst [vmem:[#allocation2 + $0x138] sm:$0xff] 0.0
      %3135 = vst [vmem:[#allocation2 + $0x140] sm:$0xff] 0.0
      %3136 = vst [vmem:[#allocation2 + $0x148] sm:$0x3] 0.0
      %3137 = vst [vmem:[#allocation2 + $0x150] sm:$0xff] 0.0
      %3138 = vst [vmem:[#allocation2 + $0x158] sm:$0xff] 0.0
      %3139 = vst [vmem:[#allocation2 + $0x160] sm:$0x3] 0.0
      %3140 = vst [vmem:[#allocation2 + $0x168] sm:$0xff] 0.0
      %3141 = vst [vmem:[#allocation2 + $0x170] sm:$0xff] 0.0
      %3142 = vst [vmem:[#allocation2 + $0x178] sm:$0x3] 0.0
      %3143 = vst [vmem:[#allocation2 + $0x180] sm:$0xff] 0.0
      %3144 = vst [vmem:[#allocation2 + $0x188] sm:$0xff] 0.0
      %3145 = vst [vmem:[#allocation2 + $0x190] sm:$0x3] 0.0
      %3146 = vst [vmem:[#allocation2 + $0x198] sm:$0xff] 0.0
      %3147 = vst [vmem:[#allocation2 + $0x1a0] sm:$0xff] 0.0
      %3148 = vst [vmem:[#allocation2 + $0x1a8] sm:$0x3] 0.0
      %s3149 = scalar_lea.vmem [#allocation2], 24
      %3150 = vst [vmem:[%s3149 + $0x1] sm:$0xff] %v3063
      %3151 = vst [vmem:[%s3149 + $0x9] sm:$0xff] %v3064
      %3152 = vst [vmem:[%s3149 + $0x19] sm:$0xff] %v3065
      %3153 = vst [vmem:[%s3149 + $0x21] sm:$0xff] %v3066
      %3154 = vst [vmem:[%s3149 + $0x31] sm:$0xff] %v3067
      %3155 = vst [vmem:[%s3149 + $0x39] sm:$0xff] %v3068
      %3156 = vst [vmem:[%s3149 + $0x49] sm:$0xff] %v3069
      %3157 = vst [vmem:[%s3149 + $0x51] sm:$0xff] %v3070
      %3158 = vst [vmem:[%s3149 + $0x61] sm:$0xff] %v3071
      %3159 = vst [vmem:[%s3149 + $0x69] sm:$0xff] %v3072
      %3160 = vst [vmem:[%s3149 + $0x79] sm:$0xff] %v3073
      %3161 = vst [vmem:[%s3149 + $0x81] sm:$0xff] %v3074
      %3162 = vst [vmem:[%s3149 + $0x91] sm:$0xff] %v3075
      %3163 = vst [vmem:[%s3149 + $0x99] sm:$0xff] %v3076
      %3164 = vst [vmem:[%s3149 + $0xa9] sm:$0xff] %v3077
      %3165 = vst [vmem:[%s3149 + $0xb1] sm:$0xff] %v3078
      %3166 = vst [vmem:[%s3149 + $0xc1] sm:$0xff] %v3079
      %3167 = vst [vmem:[%s3149 + $0xc9] sm:$0xff] %v3080
      %3168 = vst [vmem:[%s3149 + $0xd9] sm:$0xff] %v3081
      %3169 = vst [vmem:[%s3149 + $0xe1] sm:$0xff] %v3082
      %3170 = vst [vmem:[%s3149 + $0xf1] sm:$0xff] %v3083
      %3171 = vst [vmem:[%s3149 + $0xf9] sm:$0xff] %v3084
      %3172 = vst [vmem:[%s3149 + $0x109] sm:$0xff] %v3085
      %3173 = vst [vmem:[%s3149 + $0x111] sm:$0xff] %v3086
      %3174 = vst [vmem:[%s3149 + $0x121] sm:$0xff] %v3087
      %3175 = vst [vmem:[%s3149 + $0x129] sm:$0xff] %v3088
      %3176 = vst [vmem:[%s3149 + $0x139] sm:$0xff] %v3089
      %3177 = vst [vmem:[%s3149 + $0x141] sm:$0xff] %v3090
      %3178 = vst [vmem:[%s3149 + $0x151] sm:$0xff] %v3091
      %3179 = vst [vmem:[%s3149 + $0x159] sm:$0xff] %v3092
      %3180 = vst [vmem:[%s3149 + $0x169] sm:$0xff] %v3093
      %3181 = vst [vmem:[%s3149 + $0x171] sm:$0xff] %v3094
      %v3182 = vld [vmem:[#allocation2] sm:$0xff]
      %v3183 = vld [vmem:[#allocation2 + $0x8] sm:$0xff]
      %v3184 = vld [vmem:[#allocation2 + $0x10] sm:$0x3]
      %v3185 = vld [vmem:[#allocation2 + $0x18] sm:$0xff]
      %v3186 = vld [vmem:[#allocation2 + $0x20] sm:$0xff]
      %v3187 = vld [vmem:[#allocation2 + $0x28] sm:$0x3]
      %v3188 = vld [vmem:[#allocation2 + $0x30] sm:$0xff]
      %v3189 = vld [vmem:[#allocation2 + $0x38] sm:$0xff]
      %v3190 = vld [vmem:[#allocation2 + $0x40] sm:$0x3]
      %v3191 = vld [vmem:[#allocation2 + $0x48] sm:$0xff]
      %v3192 = vld [vmem:[#allocation2 + $0x50] sm:$0xff]
      %v3193 = vld [vmem:[#allocation2 + $0x58] sm:$0x3]
      %v3194 = vld [vmem:[#allocation2 + $0x60] sm:$0xff]
      %v3195 = vld [vmem:[#allocation2 + $0x68] sm:$0xff]
      %v3196 = vld [vmem:[#allocation2 + $0x70] sm:$0x3]
      %v3197 = vld [vmem:[#allocation2 + $0x78] sm:$0xff]
      %v3198 = vld [vmem:[#allocation2 + $0x80] sm:$0xff]
      %v3199 = vld [vmem:[#allocation2 + $0x88] sm:$0x3]
      %v3200 = vld [vmem:[#allocation2 + $0x90] sm:$0xff]
      %v3201 = vld [vmem:[#allocation2 + $0x98] sm:$0xff]
      %v3202 = vld [vmem:[#allocation2 + $0xa0] sm:$0x3]
      %v3203 = vld [vmem:[#allocation2 + $0xa8] sm:$0xff]
      %v3204 = vld [vmem:[#allocation2 + $0xb0] sm:$0xff]
      %v3205 = vld [vmem:[#allocation2 + $0xb8] sm:$0x3]
      %v3206 = vld [vmem:[#allocation2 + $0xc0] sm:$0xff]
      %v3207 = vld [vmem:[#allocation2 + $0xc8] sm:$0xff]
      %v3208 = vld [vmem:[#allocation2 + $0xd0] sm:$0x3]
      %v3209 = vld [vmem:[#allocation2 + $0xd8] sm:$0xff]
      %v3210 = vld [vmem:[#allocation2 + $0xe0] sm:$0xff]
      %v3211 = vld [vmem:[#allocation2 + $0xe8] sm:$0x3]
      %v3212 = vld [vmem:[#allocation2 + $0xf0] sm:$0xff]
      %v3213 = vld [vmem:[#allocation2 + $0xf8] sm:$0xff]
      %v3214 = vld [vmem:[#allocation2 + $0x100] sm:$0x3]
      %v3215 = vld [vmem:[#allocation2 + $0x108] sm:$0xff]
      %v3216 = vld [vmem:[#allocation2 + $0x110] sm:$0xff]
      %v3217 = vld [vmem:[#allocation2 + $0x118] sm:$0x3]
      %v3218 = vld [vmem:[#allocation2 + $0x120] sm:$0xff]
      %v3219 = vld [vmem:[#allocation2 + $0x128] sm:$0xff]
      %v3220 = vld [vmem:[#allocation2 + $0x130] sm:$0x3]
      %v3221 = vld [vmem:[#allocation2 + $0x138] sm:$0xff]
      %v3222 = vld [vmem:[#allocation2 + $0x140] sm:$0xff]
      %v3223 = vld [vmem:[#allocation2 + $0x148] sm:$0x3]
      %v3224 = vld [vmem:[#allocation2 + $0x150] sm:$0xff]
      %v3225 = vld [vmem:[#allocation2 + $0x158] sm:$0xff]
      %v3226 = vld [vmem:[#allocation2 + $0x160] sm:$0x3]
      %v3227 = vld [vmem:[#allocation2 + $0x168] sm:$0xff]
      %v3228 = vld [vmem:[#allocation2 + $0x170] sm:$0xff]
      %v3229 = vld [vmem:[#allocation2 + $0x178] sm:$0x3]
      %v3230 = vld [vmem:[%s3] sm:$0xff]
      %v3231 = vld [vmem:[%s3 + $0x8] sm:$0xff]
      %v3232 = vld [vmem:[%s3 + $0x10] sm:$0xff]
      %v3233 = vld [vmem:[%s3 + $0x18] sm:$0xff]
      %v3234 = vld [vmem:[%s3 + $0x20] sm:$0xff]
      %v3235 = vld [vmem:[%s3 + $0x28] sm:$0xff]
      %v3236 = vld [vmem:[%s3 + $0x30] sm:$0xff]
      %v3237 = vld [vmem:[%s3 + $0x38] sm:$0xff]
      %v3238 = vld [vmem:[%s3 + $0x40] sm:$0xff]
      %v3239 = vld [vmem:[%s3 + $0x48] sm:$0xff]
      %v3240 = vld [vmem:[%s3 + $0x50] sm:$0xff]
      %v3241 = vld [vmem:[%s3 + $0x58] sm:$0xff]
      %v3242 = vld [vmem:[%s3 + $0x60] sm:$0xff]
      %v3243 = vld [vmem:[%s3 + $0x68] sm:$0xff]
      %v3244 = vld [vmem:[%s3 + $0x70] sm:$0xff]
      %v3245 = vld [vmem:[%s3 + $0x78] sm:$0xff]
      %v3294 = vrot.slane %v3182, 1
      %v3295 = vrot.slane %v3183, 1
      %v3296 = vsel %vm379, %v3294, %v3295
      %v3297 = vrot.slane %v3184, 1
      %v3298 = vsel %vm379, %v3295, %v3297
      %v3299 = vrot.slane %v3185, 1
      %v3300 = vrot.slane %v3186, 1
      %v3301 = vsel %vm379, %v3299, %v3300
      %v3302 = vrot.slane %v3187, 1
      %v3303 = vsel %vm379, %v3300, %v3302
      %v3304 = vrot.slane %v3188, 1
      %v3305 = vrot.slane %v3189, 1
      %v3306 = vsel %vm379, %v3304, %v3305
      %v3307 = vrot.slane %v3190, 1
      %v3308 = vsel %vm379, %v3305, %v3307
      %v3309 = vrot.slane %v3191, 1
      %v3310 = vrot.slane %v3192, 1
      %v3311 = vsel %vm379, %v3309, %v3310
      %v3312 = vrot.slane %v3193, 1
      %v3313 = vsel %vm379, %v3310, %v3312
      %v3314 = vrot.slane %v3194, 1
      %v3315 = vrot.slane %v3195, 1
      %v3316 = vsel %vm379, %v3314, %v3315
      %v3317 = vrot.slane %v3196, 1
      %v3318 = vsel %vm379, %v3315, %v3317
      %v3319 = vrot.slane %v3197, 1
      %v3320 = vrot.slane %v3198, 1
      %v3321 = vsel %vm379, %v3319, %v3320
      %v3322 = vrot.slane %v3199, 1
      %v3323 = vsel %vm379, %v3320, %v3322
      %v3324 = vrot.slane %v3200, 1
      %v3325 = vrot.slane %v3201, 1
      %v3326 = vsel %vm379, %v3324, %v3325
      %v3327 = vrot.slane %v3202, 1
      %v3328 = vsel %vm379, %v3325, %v3327
      %v3329 = vrot.slane %v3203, 1
      %v3330 = vrot.slane %v3204, 1
      %v3331 = vsel %vm379, %v3329, %v3330
      %v3332 = vrot.slane %v3205, 1
      %v3333 = vsel %vm379, %v3330, %v3332
      %v3334 = vrot.slane %v3206, 1
      %v3335 = vrot.slane %v3207, 1
      %v3336 = vsel %vm379, %v3334, %v3335
      %v3337 = vrot.slane %v3208, 1
      %v3338 = vsel %vm379, %v3335, %v3337
      %v3339 = vrot.slane %v3209, 1
      %v3340 = vrot.slane %v3210, 1
      %v3341 = vsel %vm379, %v3339, %v3340
      %v3342 = vrot.slane %v3211, 1
      %v3343 = vsel %vm379, %v3340, %v3342
      %v3344 = vrot.slane %v3212, 1
      %v3345 = vrot.slane %v3213, 1
      %v3346 = vsel %vm379, %v3344, %v3345
      %v3347 = vrot.slane %v3214, 1
      %v3348 = vsel %vm379, %v3345, %v3347
      %v3349 = vrot.slane %v3215, 1
      %v3350 = vrot.slane %v3216, 1
      %v3351 = vsel %vm379, %v3349, %v3350
      %v3352 = vrot.slane %v3217, 1
      %v3353 = vsel %vm379, %v3350, %v3352
      %v3354 = vrot.slane %v3218, 1
      %v3355 = vrot.slane %v3219, 1
      %v3356 = vsel %vm379, %v3354, %v3355
      %v3357 = vrot.slane %v3220, 1
      %v3358 = vsel %vm379, %v3355, %v3357
      %v3359 = vrot.slane %v3221, 1
      %v3360 = vrot.slane %v3222, 1
      %v3361 = vsel %vm379, %v3359, %v3360
      %v3362 = vrot.slane %v3223, 1
      %v3363 = vsel %vm379, %v3360, %v3362
      %v3364 = vrot.slane %v3224, 1
      %v3365 = vrot.slane %v3225, 1
      %v3366 = vsel %vm379, %v3364, %v3365
      %v3367 = vrot.slane %v3226, 1
      %v3368 = vsel %vm379, %v3365, %v3367
      %v3369 = vrot.slane %v3227, 1
      %v3370 = vrot.slane %v3228, 1
      %v3371 = vsel %vm379, %v3369, %v3370
      %v3372 = vrot.slane %v3229, 1
      %v3373 = vsel %vm379, %v3370, %v3372
      %s3406 = scalar_lea.vmem %s3, 128
      %v3407 = vld [vmem:[%s3406] sm:$0xff]
      %v3408 = vld [vmem:[%s3406 + $0x8] sm:$0xff]
      %v3409 = vld [vmem:[%s3406 + $0x10] sm:$0xff]
      %v3410 = vld [vmem:[%s3406 + $0x18] sm:$0xff]
      %v3411 = vld [vmem:[%s3406 + $0x20] sm:$0xff]
      %v3412 = vld [vmem:[%s3406 + $0x28] sm:$0xff]
      %v3413 = vld [vmem:[%s3406 + $0x30] sm:$0xff]
      %v3414 = vld [vmem:[%s3406 + $0x38] sm:$0xff]
      %v3415 = vld [vmem:[%s3406 + $0x40] sm:$0xff]
      %v3416 = vld [vmem:[%s3406 + $0x48] sm:$0xff]
      %v3417 = vld [vmem:[%s3406 + $0x50] sm:$0xff]
      %v3418 = vld [vmem:[%s3406 + $0x58] sm:$0xff]
      %v3419 = vld [vmem:[%s3406 + $0x60] sm:$0xff]
      %v3420 = vld [vmem:[%s3406 + $0x68] sm:$0xff]
      %v3421 = vld [vmem:[%s3406 + $0x70] sm:$0xff]
      %v3422 = vld [vmem:[%s3406 + $0x78] sm:$0xff]
      %3423 = vmatprep.subr.mxu0 0.0
      %3424 = vmatpush1.msra.mxu0 %v3407
      %3425 = vmatprep.subr.mxu0 0.0
      %3426 = vmatpush1.msra.mxu0 %v3408
      %3427 = vmatprep.subr.mxu0 0.0
      %3428 = vmatpush1.msra.mxu0 %v3409
      %3429 = vmatprep.subr.mxu0 0.0
      %3430 = vmatpush1.msra.mxu0 %v3410
      %3431 = vmatprep.subr.mxu0 0.0
      %3432 = vmatpush1.msra.mxu0 %v3411
      %3433 = vmatprep.subr.mxu0 0.0
      %3434 = vmatpush1.msra.mxu0 %v3412
      %3435 = vmatprep.subr.mxu0 0.0
      %3436 = vmatpush1.msra.mxu0 %v3413
      %3437 = vmatprep.subr.mxu0 0.0
      %3438 = vmatpush1.msra.mxu0 %v3414
      %3439 = vmatprep.subr.mxu0 0.0
      %3440 = vmatpush1.msra.mxu0 %v3415
      %3441 = vmatprep.subr.mxu0 0.0
      %3442 = vmatpush1.msra.mxu0 %v3416
      %3443 = vmatprep.subr.mxu0 0.0
      %3444 = vmatpush1.msra.mxu0 %v3417
      %3445 = vmatprep.subr.mxu0 0.0
      %3446 = vmatpush1.msra.mxu0 %v3418
      %3447 = vmatprep.subr.mxu0 0.0
      %3448 = vmatpush1.msra.mxu0 %v3419
      %3449 = vmatprep.subr.mxu0 0.0
      %3450 = vmatpush1.msra.mxu0 %v3420
      %3451 = vmatprep.subr.mxu0 0.0
      %3452 = vmatpush1.msra.mxu0 %v3421
      %3453 = vmatprep.subr.mxu0 0.0
      %3454 = vmatpush1.msra.mxu0 %v3422
      %3455 = vmatprep.subr.mxu0 0.0
      %3456 = vmatpush1.msra.mxu0 0.0
      %3457 = vmatprep.subr.mxu0 0.0
      %3458 = vmatpush1.msra.mxu0 0.0
      %3459 = vmatprep.subr.mxu0 0.0
      %3460 = vmatpush1.msra.mxu0 0.0
      %3461 = vmatprep.subr.mxu0 0.0
      %3462 = vmatpush1.msra.mxu0 0.0
      %3463 = vmatprep.subr.mxu0 0.0
      %3464 = vmatpush1.msra.mxu0 0.0
      %3465 = vmatprep.subr.mxu0 0.0
      %3466 = vmatpush1.msra.mxu0 0.0
      %3467 = vmatprep.subr.mxu0 0.0
      %3468 = vmatpush1.msra.mxu0 0.0
      %3469 = vmatprep.subr.mxu0 0.0
      %3470 = vmatpush1.msra.mxu0 0.0
      %3471 = vmatprep.subr.mxu0 0.0
      %3472 = vmatpush1.msra.mxu0 0.0
      %3473 = vmatprep.subr.mxu0 0.0
      %3474 = vmatpush1.msra.mxu0 0.0
      %3475 = vmatprep.subr.mxu0 0.0
      %3476 = vmatpush1.msra.mxu0 0.0
      %3477 = vmatprep.subr.mxu0 0.0
      %3478 = vmatpush1.msra.mxu0 0.0
      %3479 = vmatprep.subr.mxu0 0.0
      %3480 = vmatpush1.msra.mxu0 0.0
      %3481 = vmatprep.subr.mxu0 0.0
      %3482 = vmatpush1.msra.mxu0 0.0
      %3483 = vmatprep.subr.mxu0 0.0
      %3484 = vmatpush1.msra.mxu0 0.0
      %3485 = vmatprep.subr.mxu0 0.0
      %3486 = vmatpush1.msra.mxu0 0.0
      %3487 = vmatprep.mubr.f32.mxu0 0.0
      %3488 = vmatmul.mubr.f32.gmra.mrb[0].mxu0 %v3296
      %v3489 = vpop.f32.mrb[0].mxu0
      %v3490 = vadd.f32 0.0, %v3489
      %v3491 = vpop.f32.mrb[0].mxu0
      %3492 = vmatprep.mubr.f32.mxu0 0.0
      %3493 = vmatmul.mubr.f32.gmra.mrb[0].mxu0 %v3298
      %v3494 = vpop.f32.mrb[0].mxu0
      %v3495 = vadd.f32 0.0, %v3494
      %v3496 = vpop.f32.mrb[0].mxu0
      %3497 = vmatprep.mubr.f32.mxu0 0.0
      %3498 = vmatmul.mubr.f32.gmra.mrb[0].mxu0 %v3301
      %v3499 = vpop.f32.mrb[0].mxu0
      %v3500 = vadd.f32 0.0, %v3499
      %v3501 = vpop.f32.mrb[0].mxu0
      %3502 = vmatprep.mubr.f32.mxu0 0.0
      %3503 = vmatmul.mubr.f32.gmra.mrb[0].mxu0 %v3303
      %v3504 = vpop.f32.mrb[0].mxu0
      %v3505 = vadd.f32 0.0, %v3504
      %v3506 = vpop.f32.mrb[0].mxu0
      %3507 = vmatprep.mubr.f32.mxu0 0.0
      %3508 = vmatmul.mubr.f32.gmra.mrb[0].mxu0 %v3306
      %v3509 = vpop.f32.mrb[0].mxu0
      %v3510 = vadd.f32 0.0, %v3509
      %v3511 = vpop.f32.mrb[0].mxu0
      %3512 = vmatprep.mubr.f32.mxu0 0.0
      %3513 = vmatmul.mubr.f32.gmra.mrb[0].mxu0 %v3308
      %v3514 = vpop.f32.mrb[0].mxu0
      %v3515 = vadd.f32 0.0, %v3514
      %v3516 = vpop.f32.mrb[0].mxu0
      %3517 = vmatprep.mubr.f32.mxu0 0.0
      %3518 = vmatmul.mubr.f32.gmra.mrb[0].mxu0 %v3311
      %v3519 = vpop.f32.mrb[0].mxu0
      %v3520 = vadd.f32 0.0, %v3519
      %v3521 = vpop.f32.mrb[0].mxu0
      %3522 = vmatprep.mubr.f32.mxu0 0.0
      %3523 = vmatmul.mubr.f32.gmra.mrb[0].mxu0 %v3313
      %v3524 = vpop.f32.mrb[0].mxu0
      %v3525 = vadd.f32 0.0, %v3524
      %v3526 = vpop.f32.mrb[0].mxu0
      %3527 = vmatprep.mubr.f32.mxu0 0.0
      %3528 = vmatmul.mubr.f32.gmra.mrb[0].mxu0 %v3316
      %v3529 = vpop.f32.mrb[0].mxu0
      %v3530 = vadd.f32 0.0, %v3529
      %v3531 = vpop.f32.mrb[0].mxu0
      %3532 = vmatprep.mubr.f32.mxu0 0.0
      %3533 = vmatmul.mubr.f32.gmra.mrb[0].mxu0 %v3318
      %v3534 = vpop.f32.mrb[0].mxu0
      %v3535 = vadd.f32 0.0, %v3534
      %v3536 = vpop.f32.mrb[0].mxu0
      %3537 = vmatprep.mubr.f32.mxu0 0.0
      %3538 = vmatmul.mubr.f32.gmra.mrb[0].mxu0 %v3321
      %v3539 = vpop.f32.mrb[0].mxu0
      %v3540 = vadd.f32 0.0, %v3539
      %v3541 = vpop.f32.mrb[0].mxu0
      %3542 = vmatprep.mubr.f32.mxu0 0.0
      %3543 = vmatmul.mubr.f32.gmra.mrb[0].mxu0 %v3323
      %v3544 = vpop.f32.mrb[0].mxu0
      %v3545 = vadd.f32 0.0, %v3544
      %v3546 = vpop.f32.mrb[0].mxu0
      %3547 = vmatprep.mubr.f32.mxu0 0.0
      %3548 = vmatmul.mubr.f32.gmra.mrb[0].mxu0 %v3326
      %v3549 = vpop.f32.mrb[0].mxu0
      %v3550 = vadd.f32 0.0, %v3549
      %v3551 = vpop.f32.mrb[0].mxu0
      %3552 = vmatprep.mubr.f32.mxu0 0.0
      %3553 = vmatmul.mubr.f32.gmra.mrb[0].mxu0 %v3328
      %v3554 = vpop.f32.mrb[0].mxu0
      %v3555 = vadd.f32 0.0, %v3554
      %v3556 = vpop.f32.mrb[0].mxu0
      %3557 = vmatprep.mubr.f32.mxu0 0.0
      %3558 = vmatmul.mubr.f32.gmra.mrb[0].mxu0 %v3331
      %v3559 = vpop.f32.mrb[0].mxu0
      %v3560 = vadd.f32 0.0, %v3559
      %v3561 = vpop.f32.mrb[0].mxu0
      %3562 = vmatprep.mubr.f32.mxu0 0.0
      %3563 = vmatmul.mubr.f32.gmra.mrb[0].mxu0 %v3333
      %v3564 = vpop.f32.mrb[0].mxu0
      %v3565 = vadd.f32 0.0, %v3564
      %v3566 = vpop.f32.mrb[0].mxu0
      %3567 = vmatprep.mubr.f32.mxu0 0.0
      %3568 = vmatmul.mubr.f32.gmra.mrb[0].mxu0 %v3336
      %v3569 = vpop.f32.mrb[0].mxu0
      %v3570 = vadd.f32 0.0, %v3569
      %v3571 = vpop.f32.mrb[0].mxu0
      %3572 = vmatprep.mubr.f32.mxu0 0.0
      %3573 = vmatmul.mubr.f32.gmra.mrb[0].mxu0 %v3338
      %v3574 = vpop.f32.mrb[0].mxu0
      %v3575 = vadd.f32 0.0, %v3574
      %v3576 = vpop.f32.mrb[0].mxu0
      %3577 = vmatprep.mubr.f32.mxu0 0.0
      %3578 = vmatmul.mubr.f32.gmra.mrb[0].mxu0 %v3341
      %v3579 = vpop.f32.mrb[0].mxu0
      %v3580 = vadd.f32 0.0, %v3579
      %v3581 = vpop.f32.mrb[0].mxu0
      %3582 = vmatprep.mubr.f32.mxu0 0.0
      %3583 = vmatmul.mubr.f32.gmra.mrb[0].mxu0 %v3343
      %v3584 = vpop.f32.mrb[0].mxu0
      %v3585 = vadd.f32 0.0, %v3584
      %v3586 = vpop.f32.mrb[0].mxu0
      %3587 = vmatprep.mubr.f32.mxu0 0.0
      %3588 = vmatmul.mubr.f32.gmra.mrb[0].mxu0 %v3346
      %v3589 = vpop.f32.mrb[0].mxu0
      %v3590 = vadd.f32 0.0, %v3589
      %v3591 = vpop.f32.mrb[0].mxu0
      %3592 = vmatprep.mubr.f32.mxu0 0.0
      %3593 = vmatmul.mubr.f32.gmra.mrb[0].mxu0 %v3348
      %v3594 = vpop.f32.mrb[0].mxu0
      %v3595 = vadd.f32 0.0, %v3594
      %v3596 = vpop.f32.mrb[0].mxu0
      %3597 = vmatprep.mubr.f32.mxu0 0.0
      %3598 = vmatmul.mubr.f32.gmra.mrb[0].mxu0 %v3351
      %v3599 = vpop.f32.mrb[0].mxu0
      %v3600 = vadd.f32 0.0, %v3599
      %v3601 = vpop.f32.mrb[0].mxu0
      %3602 = vmatprep.mubr.f32.mxu0 0.0
      %3603 = vmatmul.mubr.f32.gmra.mrb[0].mxu0 %v3353
      %v3604 = vpop.f32.mrb[0].mxu0
      %v3605 = vadd.f32 0.0, %v3604
      %v3606 = vpop.f32.mrb[0].mxu0
      %3607 = vmatprep.mubr.f32.mxu0 0.0
      %3608 = vmatmul.mubr.f32.gmra.mrb[0].mxu0 %v3356
      %v3609 = vpop.f32.mrb[0].mxu0
      %v3610 = vadd.f32 0.0, %v3609
      %v3611 = vpop.f32.mrb[0].mxu0
      %3612 = vmatprep.mubr.f32.mxu0 0.0
      %3613 = vmatmul.mubr.f32.gmra.mrb[0].mxu0 %v3358
      %v3614 = vpop.f32.mrb[0].mxu0
      %v3615 = vadd.f32 0.0, %v3614
      %v3616 = vpop.f32.mrb[0].mxu0
      %3617 = vmatprep.mubr.f32.mxu0 0.0
      %3618 = vmatmul.mubr.f32.gmra.mrb[0].mxu0 %v3361
      %v3619 = vpop.f32.mrb[0].mxu0
      %v3620 = vadd.f32 0.0, %v3619
      %v3621 = vpop.f32.mrb[0].mxu0
      %3622 = vmatprep.mubr.f32.mxu0 0.0
      %3623 = vmatmul.mubr.f32.gmra.mrb[0].mxu0 %v3363
      %v3624 = vpop.f32.mrb[0].mxu0
      %v3625 = vadd.f32 0.0, %v3624
      %v3626 = vpop.f32.mrb[0].mxu0
      %3627 = vmatprep.mubr.f32.mxu0 0.0
      %3628 = vmatmul.mubr.f32.gmra.mrb[0].mxu0 %v3366
      %v3629 = vpop.f32.mrb[0].mxu0
      %v3630 = vadd.f32 0.0, %v3629
      %v3631 = vpop.f32.mrb[0].mxu0
      %3632 = vmatprep.mubr.f32.mxu0 0.0
      %3633 = vmatmul.mubr.f32.gmra.mrb[0].mxu0 %v3368
      %v3634 = vpop.f32.mrb[0].mxu0
      %v3635 = vadd.f32 0.0, %v3634
      %v3636 = vpop.f32.mrb[0].mxu0
      %3637 = vmatprep.mubr.f32.mxu0 0.0
      %3638 = vmatmul.mubr.f32.gmra.mrb[0].mxu0 %v3371
      %v3639 = vpop.f32.mrb[0].mxu0
      %v3640 = vadd.f32 0.0, %v3639
      %v3641 = vpop.f32.mrb[0].mxu0
      %3642 = vmatprep.mubr.f32.mxu0 0.0
      %3643 = vmatmul.mubr.f32.gmra.mrb[0].mxu0 %v3373
      %v3644 = vpop.f32.mrb[0].mxu0
      %v3645 = vadd.f32 0.0, %v3644
      %v3646 = vpop.f32.mrb[0].mxu0
      %3647 = vdwg.mxu0
      %3648 = vmatprep.subr.mxu0 0.0
      %3649 = vmatpush1.msra.mxu0 %v3230
      %3650 = vmatprep.subr.mxu0 0.0
      %3651 = vmatpush1.msra.mxu0 %v3231
      %3652 = vmatprep.subr.mxu0 0.0
      %3653 = vmatpush1.msra.mxu0 %v3232
      %3654 = vmatprep.subr.mxu0 0.0
      %3655 = vmatpush1.msra.mxu0 %v3233
      %3656 = vmatprep.subr.mxu0 0.0
      %3657 = vmatpush1.msra.mxu0 %v3234
      %3658 = vmatprep.subr.mxu0 0.0
      %3659 = vmatpush1.msra.mxu0 %v3235
      %3660 = vmatprep.subr.mxu0 0.0
      %3661 = vmatpush1.msra.mxu0 %v3236
      %3662 = vmatprep.subr.mxu0 0.0
      %3663 = vmatpush1.msra.mxu0 %v3237
      %3664 = vmatprep.subr.mxu0 0.0
      %3665 = vmatpush1.msra.mxu0 %v3238
      %3666 = vmatprep.subr.mxu0 0.0
      %3667 = vmatpush1.msra.mxu0 %v3239
      %3668 = vmatprep.subr.mxu0 0.0
      %3669 = vmatpush1.msra.mxu0 %v3240
      %3670 = vmatprep.subr.mxu0 0.0
      %3671 = vmatpush1.msra.mxu0 %v3241
      %3672 = vmatprep.subr.mxu0 0.0
      %3673 = vmatpush1.msra.mxu0 %v3242
      %3674 = vmatprep.subr.mxu0 0.0
      %3675 = vmatpush1.msra.mxu0 %v3243
      %3676 = vmatprep.subr.mxu0 0.0
      %3677 = vmatpush1.msra.mxu0 %v3244
      %3678 = vmatprep.subr.mxu0 0.0
      %3679 = vmatpush1.msra.mxu0 %v3245
      %3680 = vmatprep.subr.mxu0 0.0
      %3681 = vmatpush1.msra.mxu0 0.0
      %3682 = vmatprep.subr.mxu0 0.0
      %3683 = vmatpush1.msra.mxu0 0.0
      %3684 = vmatprep.subr.mxu0 0.0
      %3685 = vmatpush1.msra.mxu0 0.0
      %3686 = vmatprep.subr.mxu0 0.0
      %3687 = vmatpush1.msra.mxu0 0.0
      %3688 = vmatprep.subr.mxu0 0.0
      %3689 = vmatpush1.msra.mxu0 0.0
      %3690 = vmatprep.subr.mxu0 0.0
      %3691 = vmatpush1.msra.mxu0 0.0
      %3692 = vmatprep.subr.mxu0 0.0
      %3693 = vmatpush1.msra.mxu0 0.0
      %3694 = vmatprep.subr.mxu0 0.0
      %3695 = vmatpush1.msra.mxu0 0.0
      %3696 = vmatprep.subr.mxu0 0.0
      %3697 = vmatpush1.msra.mxu0 0.0
      %3698 = vmatprep.subr.mxu0 0.0
      %3699 = vmatpush1.msra.mxu0 0.0
      %3700 = vmatprep.subr.mxu0 0.0
      %3701 = vmatpush1.msra.mxu0 0.0
      %3702 = vmatprep.subr.mxu0 0.0
      %3703 = vmatpush1.msra.mxu0 0.0
      %3704 = vmatprep.subr.mxu0 0.0
      %3705 = vmatpush1.msra.mxu0 0.0
      %3706 = vmatprep.subr.mxu0 0.0
      %3707 = vmatpush1.msra.mxu0 0.0
      %3708 = vmatprep.subr.mxu0 0.0
      %3709 = vmatpush1.msra.mxu0 0.0
      %3710 = vmatprep.subr.mxu0 0.0
      %3711 = vmatpush1.msra.mxu0 0.0
      %3712 = vmatprep.mubr.f32.mxu0 0.0
      %3713 = vmatmul.mubr.f32.gmra.mrb[0].mxu0 %v3182
      %v3714 = vpop.f32.mrb[0].mxu0
      %v3715 = vadd.f32 %v3490, %v3714
      %v3716 = vpop.f32.mrb[0].mxu0
      %3717 = vmatprep.mubr.f32.mxu0 0.0
      %3718 = vmatmul.mubr.f32.gmra.mrb[0].mxu0 %v3183
      %v3719 = vpop.f32.mrb[0].mxu0
      %v3720 = vadd.f32 %v3495, %v3719
      %v3721 = vpop.f32.mrb[0].mxu0
      %3722 = vmatprep.mubr.f32.mxu0 0.0
      %3723 = vmatmul.mubr.f32.gmra.mrb[0].mxu0 %v3185
      %v3724 = vpop.f32.mrb[0].mxu0
      %v3725 = vadd.f32 %v3500, %v3724
      %v3726 = vpop.f32.mrb[0].mxu0
      %3727 = vmatprep.mubr.f32.mxu0 0.0
      %3728 = vmatmul.mubr.f32.gmra.mrb[0].mxu0 %v3186
      %v3729 = vpop.f32.mrb[0].mxu0
      %v3730 = vadd.f32 %v3505, %v3729
      %v3731 = vpop.f32.mrb[0].mxu0
      %3732 = vmatprep.mubr.f32.mxu0 0.0
      %3733 = vmatmul.mubr.f32.gmra.mrb[0].mxu0 %v3188
      %v3734 = vpop.f32.mrb[0].mxu0
      %v3735 = vadd.f32 %v3510, %v3734
      %v3736 = vpop.f32.mrb[0].mxu0
      %3737 = vmatprep.mubr.f32.mxu0 0.0
      %3738 = vmatmul.mubr.f32.gmra.mrb[0].mxu0 %v3189
      %v3739 = vpop.f32.mrb[0].mxu0
      %v3740 = vadd.f32 %v3515, %v3739
      %v3741 = vpop.f32.mrb[0].mxu0
      %3742 = vmatprep.mubr.f32.mxu0 0.0
      %3743 = vmatmul.mubr.f32.gmra.mrb[0].mxu0 %v3191
      %v3744 = vpop.f32.mrb[0].mxu0
      %v3745 = vadd.f32 %v3520, %v3744
      %v3746 = vpop.f32.mrb[0].mxu0
      %3747 = vmatprep.mubr.f32.mxu0 0.0
      %3748 = vmatmul.mubr.f32.gmra.mrb[0].mxu0 %v3192
      %v3749 = vpop.f32.mrb[0].mxu0
      %v3750 = vadd.f32 %v3525, %v3749
      %v3751 = vpop.f32.mrb[0].mxu0
      %3752 = vmatprep.mubr.f32.mxu0 0.0
      %3753 = vmatmul.mubr.f32.gmra.mrb[0].mxu0 %v3194
      %v3754 = vpop.f32.mrb[0].mxu0
      %v3755 = vadd.f32 %v3530, %v3754
      %v3756 = vpop.f32.mrb[0].mxu0
      %3757 = vmatprep.mubr.f32.mxu0 0.0
      %3758 = vmatmul.mubr.f32.gmra.mrb[0].mxu0 %v3195
      %v3759 = vpop.f32.mrb[0].mxu0
      %v3760 = vadd.f32 %v3535, %v3759
      %v3761 = vpop.f32.mrb[0].mxu0
      %3762 = vmatprep.mubr.f32.mxu0 0.0
      %3763 = vmatmul.mubr.f32.gmra.mrb[0].mxu0 %v3197
      %v3764 = vpop.f32.mrb[0].mxu0
      %v3765 = vadd.f32 %v3540, %v3764
      %v3766 = vpop.f32.mrb[0].mxu0
      %3767 = vmatprep.mubr.f32.mxu0 0.0
      %3768 = vmatmul.mubr.f32.gmra.mrb[0].mxu0 %v3198
      %v3769 = vpop.f32.mrb[0].mxu0
      %v3770 = vadd.f32 %v3545, %v3769
      %v3771 = vpop.f32.mrb[0].mxu0
      %3772 = vmatprep.mubr.f32.mxu0 0.0
      %3773 = vmatmul.mubr.f32.gmra.mrb[0].mxu0 %v3200
      %v3774 = vpop.f32.mrb[0].mxu0
      %v3775 = vadd.f32 %v3550, %v3774
      %v3776 = vpop.f32.mrb[0].mxu0
      %3777 = vmatprep.mubr.f32.mxu0 0.0
      %3778 = vmatmul.mubr.f32.gmra.mrb[0].mxu0 %v3201
      %v3779 = vpop.f32.mrb[0].mxu0
      %v3780 = vadd.f32 %v3555, %v3779
      %v3781 = vpop.f32.mrb[0].mxu0
      %3782 = vmatprep.mubr.f32.mxu0 0.0
      %3783 = vmatmul.mubr.f32.gmra.mrb[0].mxu0 %v3203
      %v3784 = vpop.f32.mrb[0].mxu0
      %v3785 = vadd.f32 %v3560, %v3784
      %v3786 = vpop.f32.mrb[0].mxu0
      %3787 = vmatprep.mubr.f32.mxu0 0.0
      %3788 = vmatmul.mubr.f32.gmra.mrb[0].mxu0 %v3204
      %v3789 = vpop.f32.mrb[0].mxu0
      %v3790 = vadd.f32 %v3565, %v3789
      %v3791 = vpop.f32.mrb[0].mxu0
      %3792 = vmatprep.mubr.f32.mxu0 0.0
      %3793 = vmatmul.mubr.f32.gmra.mrb[0].mxu0 %v3206
      %v3794 = vpop.f32.mrb[0].mxu0
      %v3795 = vadd.f32 %v3570, %v3794
      %v3796 = vpop.f32.mrb[0].mxu0
      %3797 = vmatprep.mubr.f32.mxu0 0.0
      %3798 = vmatmul.mubr.f32.gmra.mrb[0].mxu0 %v3207
      %v3799 = vpop.f32.mrb[0].mxu0
      %v3800 = vadd.f32 %v3575, %v3799
      %v3801 = vpop.f32.mrb[0].mxu0
      %3802 = vmatprep.mubr.f32.mxu0 0.0
      %3803 = vmatmul.mubr.f32.gmra.mrb[0].mxu0 %v3209
      %v3804 = vpop.f32.mrb[0].mxu0
      %v3805 = vadd.f32 %v3580, %v3804
      %v3806 = vpop.f32.mrb[0].mxu0
      %3807 = vmatprep.mubr.f32.mxu0 0.0
      %3808 = vmatmul.mubr.f32.gmra.mrb[0].mxu0 %v3210
      %v3809 = vpop.f32.mrb[0].mxu0
      %v3810 = vadd.f32 %v3585, %v3809
      %v3811 = vpop.f32.mrb[0].mxu0
      %3812 = vmatprep.mubr.f32.mxu0 0.0
      %3813 = vmatmul.mubr.f32.gmra.mrb[0].mxu0 %v3212
      %v3814 = vpop.f32.mrb[0].mxu0
      %v3815 = vadd.f32 %v3590, %v3814
      %v3816 = vpop.f32.mrb[0].mxu0
      %3817 = vmatprep.mubr.f32.mxu0 0.0
      %3818 = vmatmul.mubr.f32.gmra.mrb[0].mxu0 %v3213
      %v3819 = vpop.f32.mrb[0].mxu0
      %v3820 = vadd.f32 %v3595, %v3819
      %v3821 = vpop.f32.mrb[0].mxu0
      %3822 = vmatprep.mubr.f32.mxu0 0.0
      %3823 = vmatmul.mubr.f32.gmra.mrb[0].mxu0 %v3215
      %v3824 = vpop.f32.mrb[0].mxu0
      %v3825 = vadd.f32 %v3600, %v3824
      %v3826 = vpop.f32.mrb[0].mxu0
      %3827 = vmatprep.mubr.f32.mxu0 0.0
      %3828 = vmatmul.mubr.f32.gmra.mrb[0].mxu0 %v3216
      %v3829 = vpop.f32.mrb[0].mxu0
      %v3830 = vadd.f32 %v3605, %v3829
      %v3831 = vpop.f32.mrb[0].mxu0
      %3832 = vmatprep.mubr.f32.mxu0 0.0
      %3833 = vmatmul.mubr.f32.gmra.mrb[0].mxu0 %v3218
      %v3834 = vpop.f32.mrb[0].mxu0
      %v3835 = vadd.f32 %v3610, %v3834
      %v3836 = vpop.f32.mrb[0].mxu0
      %3837 = vmatprep.mubr.f32.mxu0 0.0
      %3838 = vmatmul.mubr.f32.gmra.mrb[0].mxu0 %v3219
      %v3839 = vpop.f32.mrb[0].mxu0
      %v3840 = vadd.f32 %v3615, %v3839
      %v3841 = vpop.f32.mrb[0].mxu0
      %3842 = vmatprep.mubr.f32.mxu0 0.0
      %3843 = vmatmul.mubr.f32.gmra.mrb[0].mxu0 %v3221
      %v3844 = vpop.f32.mrb[0].mxu0
      %v3845 = vadd.f32 %v3620, %v3844
      %v3846 = vpop.f32.mrb[0].mxu0
      %3847 = vmatprep.mubr.f32.mxu0 0.0
      %3848 = vmatmul.mubr.f32.gmra.mrb[0].mxu0 %v3222
      %v3849 = vpop.f32.mrb[0].mxu0
      %v3850 = vadd.f32 %v3625, %v3849
      %v3851 = vpop.f32.mrb[0].mxu0
      %3852 = vmatprep.mubr.f32.mxu0 0.0
      %3853 = vmatmul.mubr.f32.gmra.mrb[0].mxu0 %v3224
      %v3854 = vpop.f32.mrb[0].mxu0
      %v3855 = vadd.f32 %v3630, %v3854
      %v3856 = vpop.f32.mrb[0].mxu0
      %3857 = vmatprep.mubr.f32.mxu0 0.0
      %3858 = vmatmul.mubr.f32.gmra.mrb[0].mxu0 %v3225
      %v3859 = vpop.f32.mrb[0].mxu0
      %v3860 = vadd.f32 %v3635, %v3859
      %v3861 = vpop.f32.mrb[0].mxu0
      %3862 = vmatprep.mubr.f32.mxu0 0.0
      %3863 = vmatmul.mubr.f32.gmra.mrb[0].mxu0 %v3227
      %v3864 = vpop.f32.mrb[0].mxu0
      %v3865 = vadd.f32 %v3640, %v3864
      %v3866 = vpop.f32.mrb[0].mxu0
      %3867 = vmatprep.mubr.f32.mxu0 0.0
      %3868 = vmatmul.mubr.f32.gmra.mrb[0].mxu0 %v3228
      %v3869 = vpop.f32.mrb[0].mxu0
      %v3870 = vadd.f32 %v3645, %v3869
      %v3871 = vpop.f32.mrb[0].mxu0
      %3872 = vdwg.mxu0
      %v3873 = vrot.slane %v3182, 2
      %v3874 = vrot.slane %v3183, 2
      %v3875 = vsel %vm959, %v3873, %v3874
      %v3876 = vrot.slane %v3184, 2
      %v3877 = vsel %vm959, %v3874, %v3876
      %v3878 = vrot.slane %v3185, 2
      %v3879 = vrot.slane %v3186, 2
      %v3880 = vsel %vm959, %v3878, %v3879
      %v3881 = vrot.slane %v3187, 2
      %v3882 = vsel %vm959, %v3879, %v3881
      %v3883 = vrot.slane %v3188, 2
      %v3884 = vrot.slane %v3189, 2
      %v3885 = vsel %vm959, %v3883, %v3884
      %v3886 = vrot.slane %v3190, 2
      %v3887 = vsel %vm959, %v3884, %v3886
      %v3888 = vrot.slane %v3191, 2
      %v3889 = vrot.slane %v3192, 2
      %v3890 = vsel %vm959, %v3888, %v3889
      %v3891 = vrot.slane %v3193, 2
      %v3892 = vsel %vm959, %v3889, %v3891
      %v3893 = vrot.slane %v3194, 2
      %v3894 = vrot.slane %v3195, 2
      %v3895 = vsel %vm959, %v3893, %v3894
      %v3896 = vrot.slane %v3196, 2
      %v3897 = vsel %vm959, %v3894, %v3896
      %v3898 = vrot.slane %v3197, 2
      %v3899 = vrot.slane %v3198, 2
      %v3900 = vsel %vm959, %v3898, %v3899
      %v3901 = vrot.slane %v3199, 2
      %v3902 = vsel %vm959, %v3899, %v3901
      %v3903 = vrot.slane %v3200, 2
      %v3904 = vrot.slane %v3201, 2
      %v3905 = vsel %vm959, %v3903, %v3904
      %v3906 = vrot.slane %v3202, 2
      %v3907 = vsel %vm959, %v3904, %v3906
      %v3908 = vrot.slane %v3203, 2
      %v3909 = vrot.slane %v3204, 2
      %v3910 = vsel %vm959, %v3908, %v3909
      %v3911 = vrot.slane %v3205, 2
      %v3912 = vsel %vm959, %v3909, %v3911
      %v3913 = vrot.slane %v3206, 2
      %v3914 = vrot.slane %v3207, 2
      %v3915 = vsel %vm959, %v3913, %v3914
      %v3916 = vrot.slane %v3208, 2
      %v3917 = vsel %vm959, %v3914, %v3916
      %v3918 = vrot.slane %v3209, 2
      %v3919 = vrot.slane %v3210, 2
      %v3920 = vsel %vm959, %v3918, %v3919
      %v3921 = vrot.slane %v3211, 2
      %v3922 = vsel %vm959, %v3919, %v3921
      %v3923 = vrot.slane %v3212, 2
      %v3924 = vrot.slane %v3213, 2
      %v3925 = vsel %vm959, %v3923, %v3924
      %v3926 = vrot.slane %v3214, 2
      %v3927 = vsel %vm959, %v3924, %v3926
      %v3928 = vrot.slane %v3215, 2
      %v3929 = vrot.slane %v3216, 2
      %v3930 = vsel %vm959, %v3928, %v3929
      %v3931 = vrot.slane %v3217, 2
      %v3932 = vsel %vm959, %v3929, %v3931
      %v3933 = vrot.slane %v3218, 2
      %v3934 = vrot.slane %v3219, 2
      %v3935 = vsel %vm959, %v3933, %v3934
      %v3936 = vrot.slane %v3220, 2
      %v3937 = vsel %vm959, %v3934, %v3936
      %v3938 = vrot.slane %v3221, 2
      %v3939 = vrot.slane %v3222, 2
      %v3940 = vsel %vm959, %v3938, %v3939
      %v3941 = vrot.slane %v3223, 2
      %v3942 = vsel %vm959, %v3939, %v3941
      %v3943 = vrot.slane %v3224, 2
      %v3944 = vrot.slane %v3225, 2
      %v3945 = vsel %vm959, %v3943, %v3944
      %v3946 = vrot.slane %v3226, 2
      %v3947 = vsel %vm959, %v3944, %v3946
      %v3948 = vrot.slane %v3227, 2
      %v3949 = vrot.slane %v3228, 2
      %v3950 = vsel %vm959, %v3948, %v3949
      %v3951 = vrot.slane %v3229, 2
      %v3952 = vsel %vm959, %v3949, %v3951
      %s3985 = scalar_lea.vmem %s3, 256
      %v3986 = vld [vmem:[%s3985] sm:$0xff]
      %v3987 = vld [vmem:[%s3985 + $0x8] sm:$0xff]
      %v3988 = vld [vmem:[%s3985 + $0x10] sm:$0xff]
      %v3989 = vld [vmem:[%s3985 + $0x18] sm:$0xff]
      %v3990 = vld [vmem:[%s3985 + $0x20] sm:$0xff]
      %v3991 = vld [vmem:[%s3985 + $0x28] sm:$0xff]
      %v3992 = vld [vmem:[%s3985 + $0x30] sm:$0xff]
      %v3993 = vld [vmem:[%s3985 + $0x38] sm:$0xff]
      %v3994 = vld [vmem:[%s3985 + $0x40] sm:$0xff]
      %v3995 = vld [vmem:[%s3985 + $0x48] sm:$0xff]
      %v3996 = vld [vmem:[%s3985 + $0x50] sm:$0xff]
      %v3997 = vld [vmem:[%s3985 + $0x58] sm:$0xff]
      %v3998 = vld [vmem:[%s3985 + $0x60] sm:$0xff]
      %v3999 = vld [vmem:[%s3985 + $0x68] sm:$0xff]
      %v4000 = vld [vmem:[%s3985 + $0x70] sm:$0xff]
      %v4001 = vld [vmem:[%s3985 + $0x78] sm:$0xff]
      %4002 = vmatprep.subr.mxu0 0.0
      %4003 = vmatpush1.msra.mxu0 %v3986
      %4004 = vmatprep.subr.mxu0 0.0
      %4005 = vmatpush1.msra.mxu0 %v3987
      %4006 = vmatprep.subr.mxu0 0.0
      %4007 = vmatpush1.msra.mxu0 %v3988
      %4008 = vmatprep.subr.mxu0 0.0
      %4009 = vmatpush1.msra.mxu0 %v3989
      %4010 = vmatprep.subr.mxu0 0.0
      %4011 = vmatpush1.msra.mxu0 %v3990
      %4012 = vmatprep.subr.mxu0 0.0
      %4013 = vmatpush1.msra.mxu0 %v3991
      %4014 = vmatprep.subr.mxu0 0.0
      %4015 = vmatpush1.msra.mxu0 %v3992
      %4016 = vmatprep.subr.mxu0 0.0
      %4017 = vmatpush1.msra.mxu0 %v3993
      %4018 = vmatprep.subr.mxu0 0.0
      %4019 = vmatpush1.msra.mxu0 %v3994
      %4020 = vmatprep.subr.mxu0 0.0
      %4021 = vmatpush1.msra.mxu0 %v3995
      %4022 = vmatprep.subr.mxu0 0.0
      %4023 = vmatpush1.msra.mxu0 %v3996
      %4024 = vmatprep.subr.mxu0 0.0
      %4025 = vmatpush1.msra.mxu0 %v3997
      %4026 = vmatprep.subr.mxu0 0.0
      %4027 = vmatpush1.msra.mxu0 %v3998
      %4028 = vmatprep.subr.mxu0 0.0
      %4029 = vmatpush1.msra.mxu0 %v3999
      %4030 = vmatprep.subr.mxu0 0.0
      %4031 = vmatpush1.msra.mxu0 %v4000
      %4032 = vmatprep.subr.mxu0 0.0
      %4033 = vmatpush1.msra.mxu0 %v4001
      %4034 = vmatprep.subr.mxu0 0.0
      %4035 = vmatpush1.msra.mxu0 0.0
      %4036 = vmatprep.subr.mxu0 0.0
      %4037 = vmatpush1.msra.mxu0 0.0
      %4038 = vmatprep.subr.mxu0 0.0
      %4039 = vmatpush1.msra.mxu0 0.0
      %4040 = vmatprep.subr.mxu0 0.0
      %4041 = vmatpush1.msra.mxu0 0.0
      %4042 = vmatprep.subr.mxu0 0.0
      %4043 = vmatpush1.msra.mxu0 0.0
      %4044 = vmatprep.subr.mxu0 0.0
      %4045 = vmatpush1.msra.mxu0 0.0
      %4046 = vmatprep.subr.mxu0 0.0
      %4047 = vmatpush1.msra.mxu0 0.0
      %4048 = vmatprep.subr.mxu0 0.0
      %4049 = vmatpush1.msra.mxu0 0.0
      %4050 = vmatprep.subr.mxu0 0.0
      %4051 = vmatpush1.msra.mxu0 0.0
      %4052 = vmatprep.subr.mxu0 0.0
      %4053 = vmatpush1.msra.mxu0 0.0
      %4054 = vmatprep.subr.mxu0 0.0
      %4055 = vmatpush1.msra.mxu0 0.0
      %4056 = vmatprep.subr.mxu0 0.0
      %4057 = vmatpush1.msra.mxu0 0.0
      %4058 = vmatprep.subr.mxu0 0.0
      %4059 = vmatpush1.msra.mxu0 0.0
      %4060 = vmatprep.subr.mxu0 0.0
      %4061 = vmatpush1.msra.mxu0 0.0
      %4062 = vmatprep.subr.mxu0 0.0
      %4063 = vmatpush1.msra.mxu0 0.0
      %4064 = vmatprep.subr.mxu0 0.0
      %4065 = vmatpush1.msra.mxu0 0.0
      %4066 = vmatprep.mubr.f32.mxu0 0.0
      %4067 = vmatmul.mubr.f32.gmra.mrb[0].mxu0 %v3875
      %v4068 = vpop.f32.mrb[0].mxu0
      %v4069 = vadd.f32 0.0, %v4068
      %v4070 = vpop.f32.mrb[0].mxu0
      %4071 = vmatprep.mubr.f32.mxu0 0.0
      %4072 = vmatmul.mubr.f32.gmra.mrb[0].mxu0 %v3877
      %v4073 = vpop.f32.mrb[0].mxu0
      %v4074 = vadd.f32 0.0, %v4073
      %v4075 = vpop.f32.mrb[0].mxu0
      %4076 = vmatprep.mubr.f32.mxu0 0.0
      %4077 = vmatmul.mubr.f32.gmra.mrb[0].mxu0 %v3880
      %v4078 = vpop.f32.mrb[0].mxu0
      %v4079 = vadd.f32 0.0, %v4078
      %v4080 = vpop.f32.mrb[0].mxu0
      %4081 = vmatprep.mubr.f32.mxu0 0.0
      %4082 = vmatmul.mubr.f32.gmra.mrb[0].mxu0 %v3882
      %v4083 = vpop.f32.mrb[0].mxu0
      %v4084 = vadd.f32 0.0, %v4083
      %v4085 = vpop.f32.mrb[0].mxu0
      %4086 = vmatprep.mubr.f32.mxu0 0.0
      %4087 = vmatmul.mubr.f32.gmra.mrb[0].mxu0 %v3885
      %v4088 = vpop.f32.mrb[0].mxu0
      %v4089 = vadd.f32 0.0, %v4088
      %v4090 = vpop.f32.mrb[0].mxu0
      %4091 = vmatprep.mubr.f32.mxu0 0.0
      %4092 = vmatmul.mubr.f32.gmra.mrb[0].mxu0 %v3887
      %v4093 = vpop.f32.mrb[0].mxu0
      %v4094 = vadd.f32 0.0, %v4093
      %v4095 = vpop.f32.mrb[0].mxu0
      %4096 = vmatprep.mubr.f32.mxu0 0.0
      %4097 = vmatmul.mubr.f32.gmra.mrb[0].mxu0 %v3890
      %v4098 = vpop.f32.mrb[0].mxu0
      %v4099 = vadd.f32 0.0, %v4098
      %v4100 = vpop.f32.mrb[0].mxu0
      %4101 = vmatprep.mubr.f32.mxu0 0.0
      %4102 = vmatmul.mubr.f32.gmra.mrb[0].mxu0 %v3892
      %v4103 = vpop.f32.mrb[0].mxu0
      %v4104 = vadd.f32 0.0, %v4103
      %v4105 = vpop.f32.mrb[0].mxu0
      %4106 = vmatprep.mubr.f32.mxu0 0.0
      %4107 = vmatmul.mubr.f32.gmra.mrb[0].mxu0 %v3895
      %v4108 = vpop.f32.mrb[0].mxu0
      %v4109 = vadd.f32 0.0, %v4108
      %v4110 = vpop.f32.mrb[0].mxu0
      %4111 = vmatprep.mubr.f32.mxu0 0.0
      %4112 = vmatmul.mubr.f32.gmra.mrb[0].mxu0 %v3897
      %v4113 = vpop.f32.mrb[0].mxu0
      %v4114 = vadd.f32 0.0, %v4113
      %v4115 = vpop.f32.mrb[0].mxu0
      %4116 = vmatprep.mubr.f32.mxu0 0.0
      %4117 = vmatmul.mubr.f32.gmra.mrb[0].mxu0 %v3900
      %v4118 = vpop.f32.mrb[0].mxu0
      %v4119 = vadd.f32 0.0, %v4118
      %v4120 = vpop.f32.mrb[0].mxu0
      %4121 = vmatprep.mubr.f32.mxu0 0.0
      %4122 = vmatmul.mubr.f32.gmra.mrb[0].mxu0 %v3902
      %v4123 = vpop.f32.mrb[0].mxu0
      %v4124 = vadd.f32 0.0, %v4123
      %v4125 = vpop.f32.mrb[0].mxu0
      %4126 = vmatprep.mubr.f32.mxu0 0.0
      %4127 = vmatmul.mubr.f32.gmra.mrb[0].mxu0 %v3905
      %v4128 = vpop.f32.mrb[0].mxu0
      %v4129 = vadd.f32 0.0, %v4128
      %v4130 = vpop.f32.mrb[0].mxu0
      %4131 = vmatprep.mubr.f32.mxu0 0.0
      %4132 = vmatmul.mubr.f32.gmra.mrb[0].mxu0 %v3907
      %v4133 = vpop.f32.mrb[0].mxu0
      %v4134 = vadd.f32 0.0, %v4133
      %v4135 = vpop.f32.mrb[0].mxu0
      %4136 = vmatprep.mubr.f32.mxu0 0.0
      %4137 = vmatmul.mubr.f32.gmra.mrb[0].mxu0 %v3910
      %v4138 = vpop.f32.mrb[0].mxu0
      %v4139 = vadd.f32 0.0, %v4138
      %v4140 = vpop.f32.mrb[0].mxu0
      %4141 = vmatprep.mubr.f32.mxu0 0.0
      %4142 = vmatmul.mubr.f32.gmra.mrb[0].mxu0 %v3912
      %v4143 = vpop.f32.mrb[0].mxu0
      %v4144 = vadd.f32 0.0, %v4143
      %v4145 = vpop.f32.mrb[0].mxu0
      %4146 = vmatprep.mubr.f32.mxu0 0.0
      %4147 = vmatmul.mubr.f32.gmra.mrb[0].mxu0 %v3915
      %v4148 = vpop.f32.mrb[0].mxu0
      %v4149 = vadd.f32 0.0, %v4148
      %v4150 = vpop.f32.mrb[0].mxu0
      %4151 = vmatprep.mubr.f32.mxu0 0.0
      %4152 = vmatmul.mubr.f32.gmra.mrb[0].mxu0 %v3917
      %v4153 = vpop.f32.mrb[0].mxu0
      %v4154 = vadd.f32 0.0, %v4153
      %v4155 = vpop.f32.mrb[0].mxu0
      %4156 = vmatprep.mubr.f32.mxu0 0.0
      %4157 = vmatmul.mubr.f32.gmra.mrb[0].mxu0 %v3920
      %v4158 = vpop.f32.mrb[0].mxu0
      %v4159 = vadd.f32 0.0, %v4158
      %v4160 = vpop.f32.mrb[0].mxu0
      %4161 = vmatprep.mubr.f32.mxu0 0.0
      %4162 = vmatmul.mubr.f32.gmra.mrb[0].mxu0 %v3922
      %v4163 = vpop.f32.mrb[0].mxu0
      %v4164 = vadd.f32 0.0, %v4163
      %v4165 = vpop.f32.mrb[0].mxu0
      %4166 = vmatprep.mubr.f32.mxu0 0.0
      %4167 = vmatmul.mubr.f32.gmra.mrb[0].mxu0 %v3925
      %v4168 = vpop.f32.mrb[0].mxu0
      %v4169 = vadd.f32 0.0, %v4168
      %v4170 = vpop.f32.mrb[0].mxu0
      %4171 = vmatprep.mubr.f32.mxu0 0.0
      %4172 = vmatmul.mubr.f32.gmra.mrb[0].mxu0 %v3927
      %v4173 = vpop.f32.mrb[0].mxu0
      %v4174 = vadd.f32 0.0, %v4173
      %v4175 = vpop.f32.mrb[0].mxu0
      %4176 = vmatprep.mubr.f32.mxu0 0.0
      %4177 = vmatmul.mubr.f32.gmra.mrb[0].mxu0 %v3930
      %v4178 = vpop.f32.mrb[0].mxu0
      %v4179 = vadd.f32 0.0, %v4178
      %v4180 = vpop.f32.mrb[0].mxu0
      %4181 = vmatprep.mubr.f32.mxu0 0.0
      %4182 = vmatmul.mubr.f32.gmra.mrb[0].mxu0 %v3932
      %v4183 = vpop.f32.mrb[0].mxu0
      %v4184 = vadd.f32 0.0, %v4183
      %v4185 = vpop.f32.mrb[0].mxu0
      %4186 = vmatprep.mubr.f32.mxu0 0.0
      %4187 = vmatmul.mubr.f32.gmra.mrb[0].mxu0 %v3935
      %v4188 = vpop.f32.mrb[0].mxu0
      %v4189 = vadd.f32 0.0, %v4188
      %v4190 = vpop.f32.mrb[0].mxu0
      %4191 = vmatprep.mubr.f32.mxu0 0.0
      %4192 = vmatmul.mubr.f32.gmra.mrb[0].mxu0 %v3937
      %v4193 = vpop.f32.mrb[0].mxu0
      %v4194 = vadd.f32 0.0, %v4193
      %v4195 = vpop.f32.mrb[0].mxu0
      %4196 = vmatprep.mubr.f32.mxu0 0.0
      %4197 = vmatmul.mubr.f32.gmra.mrb[0].mxu0 %v3940
      %v4198 = vpop.f32.mrb[0].mxu0
      %v4199 = vadd.f32 0.0, %v4198
      %v4200 = vpop.f32.mrb[0].mxu0
      %4201 = vmatprep.mubr.f32.mxu0 0.0
      %4202 = vmatmul.mubr.f32.gmra.mrb[0].mxu0 %v3942
      %v4203 = vpop.f32.mrb[0].mxu0
      %v4204 = vadd.f32 0.0, %v4203
      %v4205 = vpop.f32.mrb[0].mxu0
      %4206 = vmatprep.mubr.f32.mxu0 0.0
      %4207 = vmatmul.mubr.f32.gmra.mrb[0].mxu0 %v3945
      %v4208 = vpop.f32.mrb[0].mxu0
      %v4209 = vadd.f32 0.0, %v4208
      %v4210 = vpop.f32.mrb[0].mxu0
      %4211 = vmatprep.mubr.f32.mxu0 0.0
      %4212 = vmatmul.mubr.f32.gmra.mrb[0].mxu0 %v3947
      %v4213 = vpop.f32.mrb[0].mxu0
      %v4214 = vadd.f32 0.0, %v4213
      %v4215 = vpop.f32.mrb[0].mxu0
      %4216 = vmatprep.mubr.f32.mxu0 0.0
      %4217 = vmatmul.mubr.f32.gmra.mrb[0].mxu0 %v3950
      %v4218 = vpop.f32.mrb[0].mxu0
      %v4219 = vadd.f32 0.0, %v4218
      %v4220 = vpop.f32.mrb[0].mxu0
      %4221 = vmatprep.mubr.f32.mxu0 0.0
      %4222 = vmatmul.mubr.f32.gmra.mrb[0].mxu0 %v3952
      %v4223 = vpop.f32.mrb[0].mxu0
      %v4224 = vadd.f32 0.0, %v4223
      %v4225 = vpop.f32.mrb[0].mxu0
      %4226 = vdwg.mxu0
      %v4227 = vadd.f32 %v3715, %v4069
      %v4228 = vadd.f32 %v3720, %v4074
      %v4229 = vadd.f32 %v3725, %v4079
      %v4230 = vadd.f32 %v3730, %v4084
      %v4231 = vadd.f32 %v3735, %v4089
      %v4232 = vadd.f32 %v3740, %v4094
      %v4233 = vadd.f32 %v3745, %v4099
      %v4234 = vadd.f32 %v3750, %v4104
      %v4235 = vadd.f32 %v3755, %v4109
      %v4236 = vadd.f32 %v3760, %v4114
      %v4237 = vadd.f32 %v3765, %v4119
      %v4238 = vadd.f32 %v3770, %v4124
      %v4239 = vadd.f32 %v3775, %v4129
      %v4240 = vadd.f32 %v3780, %v4134
      %v4241 = vadd.f32 %v3785, %v4139
      %v4242 = vadd.f32 %v3790, %v4144
      %v4243 = vadd.f32 %v3795, %v4149
      %v4244 = vadd.f32 %v3800, %v4154
      %v4245 = vadd.f32 %v3805, %v4159
      %v4246 = vadd.f32 %v3810, %v4164
      %v4247 = vadd.f32 %v3815, %v4169
      %v4248 = vadd.f32 %v3820, %v4174
      %v4249 = vadd.f32 %v3825, %v4179
      %v4250 = vadd.f32 %v3830, %v4184
      %v4251 = vadd.f32 %v3835, %v4189
      %v4252 = vadd.f32 %v3840, %v4194
      %v4253 = vadd.f32 %v3845, %v4199
      %v4254 = vadd.f32 %v3850, %v4204
      %v4255 = vadd.f32 %v3855, %v4209
      %v4256 = vadd.f32 %v3860, %v4214
      %v4257 = vadd.f32 %v3865, %v4219
      %v4258 = vadd.f32 %v3870, %v4224
      %v4259 = vld [vmem:[%s3149] sm:$0xff]
      %v4260 = vld [vmem:[%s3149 + $0x8] sm:$0xff]
      %v4261 = vld [vmem:[%s3149 + $0x10] sm:$0x3]
      %v4262 = vld [vmem:[%s3149 + $0x18] sm:$0xff]
      %v4263 = vld [vmem:[%s3149 + $0x20] sm:$0xff]
      %v4264 = vld [vmem:[%s3149 + $0x28] sm:$0x3]
      %v4265 = vld [vmem:[%s3149 + $0x30] sm:$0xff]
      %v4266 = vld [vmem:[%s3149 + $0x38] sm:$0xff]
      %v4267 = vld [vmem:[%s3149 + $0x40] sm:$0x3]
      %v4268 = vld [vmem:[%s3149 + $0x48] sm:$0xff]
      %v4269 = vld [vmem:[%s3149 + $0x50] sm:$0xff]
      %v4270 = vld [vmem:[%s3149 + $0x58] sm:$0x3]
      %v4271 = vld [vmem:[%s3149 + $0x60] sm:$0xff]
      %v4272 = vld [vmem:[%s3149 + $0x68] sm:$0xff]
      %v4273 = vld [vmem:[%s3149 + $0x70] sm:$0x3]
      %v4274 = vld [vmem:[%s3149 + $0x78] sm:$0xff]
      %v4275 = vld [vmem:[%s3149 + $0x80] sm:$0xff]
      %v4276 = vld [vmem:[%s3149 + $0x88] sm:$0x3]
      %v4277 = vld [vmem:[%s3149 + $0x90] sm:$0xff]
      %v4278 = vld [vmem:[%s3149 + $0x98] sm:$0xff]
      %v4279 = vld [vmem:[%s3149 + $0xa0] sm:$0x3]
      %v4280 = vld [vmem:[%s3149 + $0xa8] sm:$0xff]
      %v4281 = vld [vmem:[%s3149 + $0xb0] sm:$0xff]
      %v4282 = vld [vmem:[%s3149 + $0xb8] sm:$0x3]
      %v4283 = vld [vmem:[%s3149 + $0xc0] sm:$0xff]
      %v4284 = vld [vmem:[%s3149 + $0xc8] sm:$0xff]
      %v4285 = vld [vmem:[%s3149 + $0xd0] sm:$0x3]
      %v4286 = vld [vmem:[%s3149 + $0xd8] sm:$0xff]
      %v4287 = vld [vmem:[%s3149 + $0xe0] sm:$0xff]
      %v4288 = vld [vmem:[%s3149 + $0xe8] sm:$0x3]
      %v4289 = vld [vmem:[%s3149 + $0xf0] sm:$0xff]
      %v4290 = vld [vmem:[%s3149 + $0xf8] sm:$0xff]
      %v4291 = vld [vmem:[%s3149 + $0x100] sm:$0x3]
      %v4292 = vld [vmem:[%s3149 + $0x108] sm:$0xff]
      %v4293 = vld [vmem:[%s3149 + $0x110] sm:$0xff]
      %v4294 = vld [vmem:[%s3149 + $0x118] sm:$0x3]
      %v4295 = vld [vmem:[%s3149 + $0x120] sm:$0xff]
      %v4296 = vld [vmem:[%s3149 + $0x128] sm:$0xff]
      %v4297 = vld [vmem:[%s3149 + $0x130] sm:$0x3]
      %v4298 = vld [vmem:[%s3149 + $0x138] sm:$0xff]
      %v4299 = vld [vmem:[%s3149 + $0x140] sm:$0xff]
      %v4300 = vld [vmem:[%s3149 + $0x148] sm:$0x3]
      %v4301 = vld [vmem:[%s3149 + $0x150] sm:$0xff]
      %v4302 = vld [vmem:[%s3149 + $0x158] sm:$0xff]
      %v4303 = vld [vmem:[%s3149 + $0x160] sm:$0x3]
      %v4304 = vld [vmem:[%s3149 + $0x168] sm:$0xff]
      %v4305 = vld [vmem:[%s3149 + $0x170] sm:$0xff]
      %v4306 = vld [vmem:[%s3149 + $0x178] sm:$0x3]
      %s4307 = scalar_lea.vmem %s3, 384
      %v4308 = vld [vmem:[%s4307] sm:$0xff]
      %v4309 = vld [vmem:[%s4307 + $0x8] sm:$0xff]
      %v4310 = vld [vmem:[%s4307 + $0x10] sm:$0xff]
      %v4311 = vld [vmem:[%s4307 + $0x18] sm:$0xff]
      %v4312 = vld [vmem:[%s4307 + $0x20] sm:$0xff]
      %v4313 = vld [vmem:[%s4307 + $0x28] sm:$0xff]
      %v4314 = vld [vmem:[%s4307 + $0x30] sm:$0xff]
      %v4315 = vld [vmem:[%s4307 + $0x38] sm:$0xff]
      %v4316 = vld [vmem:[%s4307 + $0x40] sm:$0xff]
      %v4317 = vld [vmem:[%s4307 + $0x48] sm:$0xff]
      %v4318 = vld [vmem:[%s4307 + $0x50] sm:$0xff]
      %v4319 = vld [vmem:[%s4307 + $0x58] sm:$0xff]
      %v4320 = vld [vmem:[%s4307 + $0x60] sm:$0xff]
      %v4321 = vld [vmem:[%s4307 + $0x68] sm:$0xff]
      %v4322 = vld [vmem:[%s4307 + $0x70] sm:$0xff]
      %v4323 = vld [vmem:[%s4307 + $0x78] sm:$0xff]
      %4324 = vmatprep.subr.mxu0 0.0
      %4325 = vmatpush1.msra.mxu0 %v4308
      %4326 = vmatprep.subr.mxu0 0.0
      %4327 = vmatpush1.msra.mxu0 %v4309
      %4328 = vmatprep.subr.mxu0 0.0
      %4329 = vmatpush1.msra.mxu0 %v4310
      %4330 = vmatprep.subr.mxu0 0.0
      %4331 = vmatpush1.msra.mxu0 %v4311
      %4332 = vmatprep.subr.mxu0 0.0
      %4333 = vmatpush1.msra.mxu0 %v4312
      %4334 = vmatprep.subr.mxu0 0.0
      %4335 = vmatpush1.msra.mxu0 %v4313
      %4336 = vmatprep.subr.mxu0 0.0
      %4337 = vmatpush1.msra.mxu0 %v4314
      %4338 = vmatprep.subr.mxu0 0.0
      %4339 = vmatpush1.msra.mxu0 %v4315
      %4340 = vmatprep.subr.mxu0 0.0
      %4341 = vmatpush1.msra.mxu0 %v4316
      %4342 = vmatprep.subr.mxu0 0.0
      %4343 = vmatpush1.msra.mxu0 %v4317
      %4344 = vmatprep.subr.mxu0 0.0
      %4345 = vmatpush1.msra.mxu0 %v4318
      %4346 = vmatprep.subr.mxu0 0.0
      %4347 = vmatpush1.msra.mxu0 %v4319
      %4348 = vmatprep.subr.mxu0 0.0
      %4349 = vmatpush1.msra.mxu0 %v4320
      %4350 = vmatprep.subr.mxu0 0.0
      %4351 = vmatpush1.msra.mxu0 %v4321
      %4352 = vmatprep.subr.mxu0 0.0
      %4353 = vmatpush1.msra.mxu0 %v4322
      %4354 = vmatprep.subr.mxu0 0.0
      %4355 = vmatpush1.msra.mxu0 %v4323
      %4356 = vmatprep.subr.mxu0 0.0
      %4357 = vmatpush1.msra.mxu0 0.0
      %4358 = vmatprep.subr.mxu0 0.0
      %4359 = vmatpush1.msra.mxu0 0.0
      %4360 = vmatprep.subr.mxu0 0.0
      %4361 = vmatpush1.msra.mxu0 0.0
      %4362 = vmatprep.subr.mxu0 0.0
      %4363 = vmatpush1.msra.mxu0 0.0
      %4364 = vmatprep.subr.mxu0 0.0
      %4365 = vmatpush1.msra.mxu0 0.0
      %4366 = vmatprep.subr.mxu0 0.0
      %4367 = vmatpush1.msra.mxu0 0.0
      %4368 = vmatprep.subr.mxu0 0.0
      %4369 = vmatpush1.msra.mxu0 0.0
      %4370 = vmatprep.subr.mxu0 0.0
      %4371 = vmatpush1.msra.mxu0 0.0
      %4372 = vmatprep.subr.mxu0 0.0
      %4373 = vmatpush1.msra.mxu0 0.0
      %4374 = vmatprep.subr.mxu0 0.0
      %4375 = vmatpush1.msra.mxu0 0.0
      %4376 = vmatprep.subr.mxu0 0.0
      %4377 = vmatpush1.msra.mxu0 0.0
      %4378 = vmatprep.subr.mxu0 0.0
      %4379 = vmatpush1.msra.mxu0 0.0
      %4380 = vmatprep.subr.mxu0 0.0
      %4381 = vmatpush1.msra.mxu0 0.0
      %4382 = vmatprep.subr.mxu0 0.0
      %4383 = vmatpush1.msra.mxu0 0.0
      %4384 = vmatprep.subr.mxu0 0.0
      %4385 = vmatpush1.msra.mxu0 0.0
      %4386 = vmatprep.subr.mxu0 0.0
      %4387 = vmatpush1.msra.mxu0 0.0
      %4388 = vmatprep.mubr.f32.mxu0 0.0
      %4389 = vmatmul.mubr.f32.gmra.mrb[0].mxu0 %v4259
      %v4390 = vpop.f32.mrb[0].mxu0
      %v4391 = vadd.f32 0.0, %v4390
      %v4392 = vpop.f32.mrb[0].mxu0
      %4393 = vmatprep.mubr.f32.mxu0 0.0
      %4394 = vmatmul.mubr.f32.gmra.mrb[0].mxu0 %v4260
      %v4395 = vpop.f32.mrb[0].mxu0
      %v4396 = vadd.f32 0.0, %v4395
      %v4397 = vpop.f32.mrb[0].mxu0
      %4398 = vmatprep.mubr.f32.mxu0 0.0
      %4399 = vmatmul.mubr.f32.gmra.mrb[0].mxu0 %v4262
      %v4400 = vpop.f32.mrb[0].mxu0
      %v4401 = vadd.f32 0.0, %v4400
      %v4402 = vpop.f32.mrb[0].mxu0
      %4403 = vmatprep.mubr.f32.mxu0 0.0
      %4404 = vmatmul.mubr.f32.gmra.mrb[0].mxu0 %v4263
      %v4405 = vpop.f32.mrb[0].mxu0
      %v4406 = vadd.f32 0.0, %v4405
      %v4407 = vpop.f32.mrb[0].mxu0
      %4408 = vmatprep.mubr.f32.mxu0 0.0
      %4409 = vmatmul.mubr.f32.gmra.mrb[0].mxu0 %v4265
      %v4410 = vpop.f32.mrb[0].mxu0
      %v4411 = vadd.f32 0.0, %v4410
      %v4412 = vpop.f32.mrb[0].mxu0
      %4413 = vmatprep.mubr.f32.mxu0 0.0
      %4414 = vmatmul.mubr.f32.gmra.mrb[0].mxu0 %v4266
      %v4415 = vpop.f32.mrb[0].mxu0
      %v4416 = vadd.f32 0.0, %v4415
      %v4417 = vpop.f32.mrb[0].mxu0
      %4418 = vmatprep.mubr.f32.mxu0 0.0
      %4419 = vmatmul.mubr.f32.gmra.mrb[0].mxu0 %v4268
      %v4420 = vpop.f32.mrb[0].mxu0
      %v4421 = vadd.f32 0.0, %v4420
      %v4422 = vpop.f32.mrb[0].mxu0
      %4423 = vmatprep.mubr.f32.mxu0 0.0
      %4424 = vmatmul.mubr.f32.gmra.mrb[0].mxu0 %v4269
      %v4425 = vpop.f32.mrb[0].mxu0
      %v4426 = vadd.f32 0.0, %v4425
      %v4427 = vpop.f32.mrb[0].mxu0
      %4428 = vmatprep.mubr.f32.mxu0 0.0
      %4429 = vmatmul.mubr.f32.gmra.mrb[0].mxu0 %v4271
      %v4430 = vpop.f32.mrb[0].mxu0
      %v4431 = vadd.f32 0.0, %v4430
      %v4432 = vpop.f32.mrb[0].mxu0
      %4433 = vmatprep.mubr.f32.mxu0 0.0
      %4434 = vmatmul.mubr.f32.gmra.mrb[0].mxu0 %v4272
      %v4435 = vpop.f32.mrb[0].mxu0
      %v4436 = vadd.f32 0.0, %v4435
      %v4437 = vpop.f32.mrb[0].mxu0
      %4438 = vmatprep.mubr.f32.mxu0 0.0
      %4439 = vmatmul.mubr.f32.gmra.mrb[0].mxu0 %v4274
      %v4440 = vpop.f32.mrb[0].mxu0
      %v4441 = vadd.f32 0.0, %v4440
      %v4442 = vpop.f32.mrb[0].mxu0
      %4443 = vmatprep.mubr.f32.mxu0 0.0
      %4444 = vmatmul.mubr.f32.gmra.mrb[0].mxu0 %v4275
      %v4445 = vpop.f32.mrb[0].mxu0
      %v4446 = vadd.f32 0.0, %v4445
      %v4447 = vpop.f32.mrb[0].mxu0
      %4448 = vmatprep.mubr.f32.mxu0 0.0
      %4449 = vmatmul.mubr.f32.gmra.mrb[0].mxu0 %v4277
      %v4450 = vpop.f32.mrb[0].mxu0
      %v4451 = vadd.f32 0.0, %v4450
      %v4452 = vpop.f32.mrb[0].mxu0
      %4453 = vmatprep.mubr.f32.mxu0 0.0
      %4454 = vmatmul.mubr.f32.gmra.mrb[0].mxu0 %v4278
      %v4455 = vpop.f32.mrb[0].mxu0
      %v4456 = vadd.f32 0.0, %v4455
      %v4457 = vpop.f32.mrb[0].mxu0
      %4458 = vmatprep.mubr.f32.mxu0 0.0
      %4459 = vmatmul.mubr.f32.gmra.mrb[0].mxu0 %v4280
      %v4460 = vpop.f32.mrb[0].mxu0
      %v4461 = vadd.f32 0.0, %v4460
      %v4462 = vpop.f32.mrb[0].mxu0
      %4463 = vmatprep.mubr.f32.mxu0 0.0
      %4464 = vmatmul.mubr.f32.gmra.mrb[0].mxu0 %v4281
      %v4465 = vpop.f32.mrb[0].mxu0
      %v4466 = vadd.f32 0.0, %v4465
      %v4467 = vpop.f32.mrb[0].mxu0
      %4468 = vmatprep.mubr.f32.mxu0 0.0
      %4469 = vmatmul.mubr.f32.gmra.mrb[0].mxu0 %v4283
      %v4470 = vpop.f32.mrb[0].mxu0
      %v4471 = vadd.f32 0.0, %v4470
      %v4472 = vpop.f32.mrb[0].mxu0
      %4473 = vmatprep.mubr.f32.mxu0 0.0
      %4474 = vmatmul.mubr.f32.gmra.mrb[0].mxu0 %v4284
      %v4475 = vpop.f32.mrb[0].mxu0
      %v4476 = vadd.f32 0.0, %v4475
      %v4477 = vpop.f32.mrb[0].mxu0
      %4478 = vmatprep.mubr.f32.mxu0 0.0
      %4479 = vmatmul.mubr.f32.gmra.mrb[0].mxu0 %v4286
      %v4480 = vpop.f32.mrb[0].mxu0
      %v4481 = vadd.f32 0.0, %v4480
      %v4482 = vpop.f32.mrb[0].mxu0
      %4483 = vmatprep.mubr.f32.mxu0 0.0
      %4484 = vmatmul.mubr.f32.gmra.mrb[0].mxu0 %v4287
      %v4485 = vpop.f32.mrb[0].mxu0
      %v4486 = vadd.f32 0.0, %v4485
      %v4487 = vpop.f32.mrb[0].mxu0
      %4488 = vmatprep.mubr.f32.mxu0 0.0
      %4489 = vmatmul.mubr.f32.gmra.mrb[0].mxu0 %v4289
      %v4490 = vpop.f32.mrb[0].mxu0
      %v4491 = vadd.f32 0.0, %v4490
      %v4492 = vpop.f32.mrb[0].mxu0
      %4493 = vmatprep.mubr.f32.mxu0 0.0
      %4494 = vmatmul.mubr.f32.gmra.mrb[0].mxu0 %v4290
      %v4495 = vpop.f32.mrb[0].mxu0
      %v4496 = vadd.f32 0.0, %v4495
      %v4497 = vpop.f32.mrb[0].mxu0
      %4498 = vmatprep.mubr.f32.mxu0 0.0
      %4499 = vmatmul.mubr.f32.gmra.mrb[0].mxu0 %v4292
      %v4500 = vpop.f32.mrb[0].mxu0
      %v4501 = vadd.f32 0.0, %v4500
      %v4502 = vpop.f32.mrb[0].mxu0
      %4503 = vmatprep.mubr.f32.mxu0 0.0
      %4504 = vmatmul.mubr.f32.gmra.mrb[0].mxu0 %v4293
      %v4505 = vpop.f32.mrb[0].mxu0
      %v4506 = vadd.f32 0.0, %v4505
      %v4507 = vpop.f32.mrb[0].mxu0
      %4508 = vmatprep.mubr.f32.mxu0 0.0
      %4509 = vmatmul.mubr.f32.gmra.mrb[0].mxu0 %v4295
      %v4510 = vpop.f32.mrb[0].mxu0
      %v4511 = vadd.f32 0.0, %v4510
      %v4512 = vpop.f32.mrb[0].mxu0
      %4513 = vmatprep.mubr.f32.mxu0 0.0
      %4514 = vmatmul.mubr.f32.gmra.mrb[0].mxu0 %v4296
      %v4515 = vpop.f32.mrb[0].mxu0
      %v4516 = vadd.f32 0.0, %v4515
      %v4517 = vpop.f32.mrb[0].mxu0
      %4518 = vmatprep.mubr.f32.mxu0 0.0
      %4519 = vmatmul.mubr.f32.gmra.mrb[0].mxu0 %v4298
      %v4520 = vpop.f32.mrb[0].mxu0
      %v4521 = vadd.f32 0.0, %v4520
      %v4522 = vpop.f32.mrb[0].mxu0
      %4523 = vmatprep.mubr.f32.mxu0 0.0
      %4524 = vmatmul.mubr.f32.gmra.mrb[0].mxu0 %v4299
      %v4525 = vpop.f32.mrb[0].mxu0
      %v4526 = vadd.f32 0.0, %v4525
      %v4527 = vpop.f32.mrb[0].mxu0
      %4528 = vmatprep.mubr.f32.mxu0 0.0
      %4529 = vmatmul.mubr.f32.gmra.mrb[0].mxu0 %v4301
      %v4530 = vpop.f32.mrb[0].mxu0
      %v4531 = vadd.f32 0.0, %v4530
      %v4532 = vpop.f32.mrb[0].mxu0
      %4533 = vmatprep.mubr.f32.mxu0 0.0
      %4534 = vmatmul.mubr.f32.gmra.mrb[0].mxu0 %v4302
      %v4535 = vpop.f32.mrb[0].mxu0
      %v4536 = vadd.f32 0.0, %v4535
      %v4537 = vpop.f32.mrb[0].mxu0
      %4538 = vmatprep.mubr.f32.mxu0 0.0
      %4539 = vmatmul.mubr.f32.gmra.mrb[0].mxu0 %v4304
      %v4540 = vpop.f32.mrb[0].mxu0
      %v4541 = vadd.f32 0.0, %v4540
      %v4542 = vpop.f32.mrb[0].mxu0
      %4543 = vmatprep.mubr.f32.mxu0 0.0
      %4544 = vmatmul.mubr.f32.gmra.mrb[0].mxu0 %v4305
      %v4545 = vpop.f32.mrb[0].mxu0
      %v4546 = vadd.f32 0.0, %v4545
      %v4547 = vpop.f32.mrb[0].mxu0
      %4548 = vdwg.mxu0
      %v4549 = vadd.f32 %v4227, %v4391
      %v4550 = vadd.f32 %v4228, %v4396
      %v4551 = vadd.f32 %v4229, %v4401
      %v4552 = vadd.f32 %v4230, %v4406
      %v4553 = vadd.f32 %v4231, %v4411
      %v4554 = vadd.f32 %v4232, %v4416
      %v4555 = vadd.f32 %v4233, %v4421
      %v4556 = vadd.f32 %v4234, %v4426
      %v4557 = vadd.f32 %v4235, %v4431
      %v4558 = vadd.f32 %v4236, %v4436
      %v4559 = vadd.f32 %v4237, %v4441
      %v4560 = vadd.f32 %v4238, %v4446
      %v4561 = vadd.f32 %v4239, %v4451
      %v4562 = vadd.f32 %v4240, %v4456
      %v4563 = vadd.f32 %v4241, %v4461
      %v4564 = vadd.f32 %v4242, %v4466
      %v4565 = vadd.f32 %v4243, %v4471
      %v4566 = vadd.f32 %v4244, %v4476
      %v4567 = vadd.f32 %v4245, %v4481
      %v4568 = vadd.f32 %v4246, %v4486
      %v4569 = vadd.f32 %v4247, %v4491
      %v4570 = vadd.f32 %v4248, %v4496
      %v4571 = vadd.f32 %v4249, %v4501
      %v4572 = vadd.f32 %v4250, %v4506
      %v4573 = vadd.f32 %v4251, %v4511
      %v4574 = vadd.f32 %v4252, %v4516
      %v4575 = vadd.f32 %v4253, %v4521
      %v4576 = vadd.f32 %v4254, %v4526
      %v4577 = vadd.f32 %v4255, %v4531
      %v4578 = vadd.f32 %v4256, %v4536
      %v4579 = vadd.f32 %v4257, %v4541
      %v4580 = vadd.f32 %v4258, %v4546
      %v4629 = vrot.slane %v4259, 1
      %v4630 = vrot.slane %v4260, 1
      %v4631 = vsel %vm379, %v4629, %v4630
      %v4632 = vrot.slane %v4261, 1
      %v4633 = vsel %vm379, %v4630, %v4632
      %v4634 = vrot.slane %v4262, 1
      %v4635 = vrot.slane %v4263, 1
      %v4636 = vsel %vm379, %v4634, %v4635
      %v4637 = vrot.slane %v4264, 1
      %v4638 = vsel %vm379, %v4635, %v4637
      %v4639 = vrot.slane %v4265, 1
      %v4640 = vrot.slane %v4266, 1
      %v4641 = vsel %vm379, %v4639, %v4640
      %v4642 = vrot.slane %v4267, 1
      %v4643 = vsel %vm379, %v4640, %v4642
      %v4644 = vrot.slane %v4268, 1
      %v4645 = vrot.slane %v4269, 1
      %v4646 = vsel %vm379, %v4644, %v4645
      %v4647 = vrot.slane %v4270, 1
      %v4648 = vsel %vm379, %v4645, %v4647
      %v4649 = vrot.slane %v4271, 1
      %v4650 = vrot.slane %v4272, 1
      %v4651 = vsel %vm379, %v4649, %v4650
      %v4652 = vrot.slane %v4273, 1
      %v4653 = vsel %vm379, %v4650, %v4652
      %v4654 = vrot.slane %v4274, 1
      %v4655 = vrot.slane %v4275, 1
      %v4656 = vsel %vm379, %v4654, %v4655
      %v4657 = vrot.slane %v4276, 1
      %v4658 = vsel %vm379, %v4655, %v4657
      %v4659 = vrot.slane %v4277, 1
      %v4660 = vrot.slane %v4278, 1
      %v4661 = vsel %vm379, %v4659, %v4660
      %v4662 = vrot.slane %v4279, 1
      %v4663 = vsel %vm379, %v4660, %v4662
      %v4664 = vrot.slane %v4280, 1
      %v4665 = vrot.slane %v4281, 1
      %v4666 = vsel %vm379, %v4664, %v4665
      %v4667 = vrot.slane %v4282, 1
      %v4668 = vsel %vm379, %v4665, %v4667
      %v4669 = vrot.slane %v4283, 1
      %v4670 = vrot.slane %v4284, 1
      %v4671 = vsel %vm379, %v4669, %v4670
      %v4672 = vrot.slane %v4285, 1
      %v4673 = vsel %vm379, %v4670, %v4672
      %v4674 = vrot.slane %v4286, 1
      %v4675 = vrot.slane %v4287, 1
      %v4676 = vsel %vm379, %v4674, %v4675
      %v4677 = vrot.slane %v4288, 1
      %v4678 = vsel %vm379, %v4675, %v4677
      %v4679 = vrot.slane %v4289, 1
      %v4680 = vrot.slane %v4290, 1
      %v4681 = vsel %vm379, %v4679, %v4680
      %v4682 = vrot.slane %v4291, 1
      %v4683 = vsel %vm379, %v4680, %v4682
      %v4684 = vrot.slane %v4292, 1
      %v4685 = vrot.slane %v4293, 1
      %v4686 = vsel %vm379, %v4684, %v4685
      %v4687 = vrot.slane %v4294, 1
      %v4688 = vsel %vm379, %v4685, %v4687
      %v4689 = vrot.slane %v4295, 1
      %v4690 = vrot.slane %v4296, 1
      %v4691 = vsel %vm379, %v4689, %v4690
      %v4692 = vrot.slane %v4297, 1
      %v4693 = vsel %vm379, %v4690, %v4692
      %v4694 = vrot.slane %v4298, 1
      %v4695 = vrot.slane %v4299, 1
      %v4696 = vsel %vm379, %v4694, %v4695
      %v4697 = vrot.slane %v4300, 1
      %v4698 = vsel %vm379, %v4695, %v4697
      %v4699 = vrot.slane %v4301, 1
      %v4700 = vrot.slane %v4302, 1
      %v4701 = vsel %vm379, %v4699, %v4700
      %v4702 = vrot.slane %v4303, 1
      %v4703 = vsel %vm379, %v4700, %v4702
      %v4704 = vrot.slane %v4304, 1
      %v4705 = vrot.slane %v4305, 1
      %v4706 = vsel %vm379, %v4704, %v4705
      %v4707 = vrot.slane %v4306, 1
      %v4708 = vsel %vm379, %v4705, %v4707
      %s4741 = scalar_lea.vmem %s3, 512
      %v4742 = vld [vmem:[%s4741] sm:$0xff]
      %v4743 = vld [vmem:[%s4741 + $0x8] sm:$0xff]
      %v4744 = vld [vmem:[%s4741 + $0x10] sm:$0xff]
      %v4745 = vld [vmem:[%s4741 + $0x18] sm:$0xff]
      %v4746 = vld [vmem:[%s4741 + $0x20] sm:$0xff]
      %v4747 = vld [vmem:[%s4741 + $0x28] sm:$0xff]
      %v4748 = vld [vmem:[%s4741 + $0x30] sm:$0xff]
      %v4749 = vld [vmem:[%s4741 + $0x38] sm:$0xff]
      %v4750 = vld [vmem:[%s4741 + $0x40] sm:$0xff]
      %v4751 = vld [vmem:[%s4741 + $0x48] sm:$0xff]
      %v4752 = vld [vmem:[%s4741 + $0x50] sm:$0xff]
      %v4753 = vld [vmem:[%s4741 + $0x58] sm:$0xff]
      %v4754 = vld [vmem:[%s4741 + $0x60] sm:$0xff]
      %v4755 = vld [vmem:[%s4741 + $0x68] sm:$0xff]
      %v4756 = vld [vmem:[%s4741 + $0x70] sm:$0xff]
      %v4757 = vld [vmem:[%s4741 + $0x78] sm:$0xff]
      %4758 = vmatprep.subr.mxu0 0.0
      %4759 = vmatpush1.msra.mxu0 %v4742
      %4760 = vmatprep.subr.mxu0 0.0
      %4761 = vmatpush1.msra.mxu0 %v4743
      %4762 = vmatprep.subr.mxu0 0.0
      %4763 = vmatpush1.msra.mxu0 %v4744
      %4764 = vmatprep.subr.mxu0 0.0
      %4765 = vmatpush1.msra.mxu0 %v4745
      %4766 = vmatprep.subr.mxu0 0.0
      %4767 = vmatpush1.msra.mxu0 %v4746
      %4768 = vmatprep.subr.mxu0 0.0
      %4769 = vmatpush1.msra.mxu0 %v4747
      %4770 = vmatprep.subr.mxu0 0.0
      %4771 = vmatpush1.msra.mxu0 %v4748
      %4772 = vmatprep.subr.mxu0 0.0
      %4773 = vmatpush1.msra.mxu0 %v4749
      %4774 = vmatprep.subr.mxu0 0.0
      %4775 = vmatpush1.msra.mxu0 %v4750
      %4776 = vmatprep.subr.mxu0 0.0
      %4777 = vmatpush1.msra.mxu0 %v4751
      %4778 = vmatprep.subr.mxu0 0.0
      %4779 = vmatpush1.msra.mxu0 %v4752
      %4780 = vmatprep.subr.mxu0 0.0
      %4781 = vmatpush1.msra.mxu0 %v4753
      %4782 = vmatprep.subr.mxu0 0.0
      %4783 = vmatpush1.msra.mxu0 %v4754
      %4784 = vmatprep.subr.mxu0 0.0
      %4785 = vmatpush1.msra.mxu0 %v4755
      %4786 = vmatprep.subr.mxu0 0.0
      %4787 = vmatpush1.msra.mxu0 %v4756
      %4788 = vmatprep.subr.mxu0 0.0
      %4789 = vmatpush1.msra.mxu0 %v4757
      %4790 = vmatprep.subr.mxu0 0.0
      %4791 = vmatpush1.msra.mxu0 0.0
      %4792 = vmatprep.subr.mxu0 0.0
      %4793 = vmatpush1.msra.mxu0 0.0
      %4794 = vmatprep.subr.mxu0 0.0
      %4795 = vmatpush1.msra.mxu0 0.0
      %4796 = vmatprep.subr.mxu0 0.0
      %4797 = vmatpush1.msra.mxu0 0.0
      %4798 = vmatprep.subr.mxu0 0.0
      %4799 = vmatpush1.msra.mxu0 0.0
      %4800 = vmatprep.subr.mxu0 0.0
      %4801 = vmatpush1.msra.mxu0 0.0
      %4802 = vmatprep.subr.mxu0 0.0
      %4803 = vmatpush1.msra.mxu0 0.0
      %4804 = vmatprep.subr.mxu0 0.0
      %4805 = vmatpush1.msra.mxu0 0.0
      %4806 = vmatprep.subr.mxu0 0.0
      %4807 = vmatpush1.msra.mxu0 0.0
      %4808 = vmatprep.subr.mxu0 0.0
      %4809 = vmatpush1.msra.mxu0 0.0
      %4810 = vmatprep.subr.mxu0 0.0
      %4811 = vmatpush1.msra.mxu0 0.0
      %4812 = vmatprep.subr.mxu0 0.0
      %4813 = vmatpush1.msra.mxu0 0.0
      %4814 = vmatprep.subr.mxu0 0.0
      %4815 = vmatpush1.msra.mxu0 0.0
      %4816 = vmatprep.subr.mxu0 0.0
      %4817 = vmatpush1.msra.mxu0 0.0
      %4818 = vmatprep.subr.mxu0 0.0
      %4819 = vmatpush1.msra.mxu0 0.0
      %4820 = vmatprep.subr.mxu0 0.0
      %4821 = vmatpush1.msra.mxu0 0.0
      %4822 = vmatprep.mubr.f32.mxu0 0.0
      %4823 = vmatmul.mubr.f32.gmra.mrb[0].mxu0 %v4631
      %v4824 = vpop.f32.mrb[0].mxu0
      %v4825 = vadd.f32 0.0, %v4824
      %v4826 = vpop.f32.mrb[0].mxu0
      %4827 = vmatprep.mubr.f32.mxu0 0.0
      %4828 = vmatmul.mubr.f32.gmra.mrb[0].mxu0 %v4633
      %v4829 = vpop.f32.mrb[0].mxu0
      %v4830 = vadd.f32 0.0, %v4829
      %v4831 = vpop.f32.mrb[0].mxu0
      %4832 = vmatprep.mubr.f32.mxu0 0.0
      %4833 = vmatmul.mubr.f32.gmra.mrb[0].mxu0 %v4636
      %v4834 = vpop.f32.mrb[0].mxu0
      %v4835 = vadd.f32 0.0, %v4834
      %v4836 = vpop.f32.mrb[0].mxu0
      %4837 = vmatprep.mubr.f32.mxu0 0.0
      %4838 = vmatmul.mubr.f32.gmra.mrb[0].mxu0 %v4638
      %v4839 = vpop.f32.mrb[0].mxu0
      %v4840 = vadd.f32 0.0, %v4839
      %v4841 = vpop.f32.mrb[0].mxu0
      %4842 = vmatprep.mubr.f32.mxu0 0.0
      %4843 = vmatmul.mubr.f32.gmra.mrb[0].mxu0 %v4641
      %v4844 = vpop.f32.mrb[0].mxu0
      %v4845 = vadd.f32 0.0, %v4844
      %v4846 = vpop.f32.mrb[0].mxu0
      %4847 = vmatprep.mubr.f32.mxu0 0.0
      %4848 = vmatmul.mubr.f32.gmra.mrb[0].mxu0 %v4643
      %v4849 = vpop.f32.mrb[0].mxu0
      %v4850 = vadd.f32 0.0, %v4849
      %v4851 = vpop.f32.mrb[0].mxu0
      %4852 = vmatprep.mubr.f32.mxu0 0.0
      %4853 = vmatmul.mubr.f32.gmra.mrb[0].mxu0 %v4646
      %v4854 = vpop.f32.mrb[0].mxu0
      %v4855 = vadd.f32 0.0, %v4854
      %v4856 = vpop.f32.mrb[0].mxu0
      %4857 = vmatprep.mubr.f32.mxu0 0.0
      %4858 = vmatmul.mubr.f32.gmra.mrb[0].mxu0 %v4648
      %v4859 = vpop.f32.mrb[0].mxu0
      %v4860 = vadd.f32 0.0, %v4859
      %v4861 = vpop.f32.mrb[0].mxu0
      %4862 = vmatprep.mubr.f32.mxu0 0.0
      %4863 = vmatmul.mubr.f32.gmra.mrb[0].mxu0 %v4651
      %v4864 = vpop.f32.mrb[0].mxu0
      %v4865 = vadd.f32 0.0, %v4864
      %v4866 = vpop.f32.mrb[0].mxu0
      %4867 = vmatprep.mubr.f32.mxu0 0.0
      %4868 = vmatmul.mubr.f32.gmra.mrb[0].mxu0 %v4653
      %v4869 = vpop.f32.mrb[0].mxu0
      %v4870 = vadd.f32 0.0, %v4869
      %v4871 = vpop.f32.mrb[0].mxu0
      %4872 = vmatprep.mubr.f32.mxu0 0.0
      %4873 = vmatmul.mubr.f32.gmra.mrb[0].mxu0 %v4656
      %v4874 = vpop.f32.mrb[0].mxu0
      %v4875 = vadd.f32 0.0, %v4874
      %v4876 = vpop.f32.mrb[0].mxu0
      %4877 = vmatprep.mubr.f32.mxu0 0.0
      %4878 = vmatmul.mubr.f32.gmra.mrb[0].mxu0 %v4658
      %v4879 = vpop.f32.mrb[0].mxu0
      %v4880 = vadd.f32 0.0, %v4879
      %v4881 = vpop.f32.mrb[0].mxu0
      %4882 = vmatprep.mubr.f32.mxu0 0.0
      %4883 = vmatmul.mubr.f32.gmra.mrb[0].mxu0 %v4661
      %v4884 = vpop.f32.mrb[0].mxu0
      %v4885 = vadd.f32 0.0, %v4884
      %v4886 = vpop.f32.mrb[0].mxu0
      %4887 = vmatprep.mubr.f32.mxu0 0.0
      %4888 = vmatmul.mubr.f32.gmra.mrb[0].mxu0 %v4663
      %v4889 = vpop.f32.mrb[0].mxu0
      %v4890 = vadd.f32 0.0, %v4889
      %v4891 = vpop.f32.mrb[0].mxu0
      %4892 = vmatprep.mubr.f32.mxu0 0.0
      %4893 = vmatmul.mubr.f32.gmra.mrb[0].mxu0 %v4666
      %v4894 = vpop.f32.mrb[0].mxu0
      %v4895 = vadd.f32 0.0, %v4894
      %v4896 = vpop.f32.mrb[0].mxu0
      %4897 = vmatprep.mubr.f32.mxu0 0.0
      %4898 = vmatmul.mubr.f32.gmra.mrb[0].mxu0 %v4668
      %v4899 = vpop.f32.mrb[0].mxu0
      %v4900 = vadd.f32 0.0, %v4899
      %v4901 = vpop.f32.mrb[0].mxu0
      %4902 = vmatprep.mubr.f32.mxu0 0.0
      %4903 = vmatmul.mubr.f32.gmra.mrb[0].mxu0 %v4671
      %v4904 = vpop.f32.mrb[0].mxu0
      %v4905 = vadd.f32 0.0, %v4904
      %v4906 = vpop.f32.mrb[0].mxu0
      %4907 = vmatprep.mubr.f32.mxu0 0.0
      %4908 = vmatmul.mubr.f32.gmra.mrb[0].mxu0 %v4673
      %v4909 = vpop.f32.mrb[0].mxu0
      %v4910 = vadd.f32 0.0, %v4909
      %v4911 = vpop.f32.mrb[0].mxu0
      %4912 = vmatprep.mubr.f32.mxu0 0.0
      %4913 = vmatmul.mubr.f32.gmra.mrb[0].mxu0 %v4676
      %v4914 = vpop.f32.mrb[0].mxu0
      %v4915 = vadd.f32 0.0, %v4914
      %v4916 = vpop.f32.mrb[0].mxu0
      %4917 = vmatprep.mubr.f32.mxu0 0.0
      %4918 = vmatmul.mubr.f32.gmra.mrb[0].mxu0 %v4678
      %v4919 = vpop.f32.mrb[0].mxu0
      %v4920 = vadd.f32 0.0, %v4919
      %v4921 = vpop.f32.mrb[0].mxu0
      %4922 = vmatprep.mubr.f32.mxu0 0.0
      %4923 = vmatmul.mubr.f32.gmra.mrb[0].mxu0 %v4681
      %v4924 = vpop.f32.mrb[0].mxu0
      %v4925 = vadd.f32 0.0, %v4924
      %v4926 = vpop.f32.mrb[0].mxu0
      %4927 = vmatprep.mubr.f32.mxu0 0.0
      %4928 = vmatmul.mubr.f32.gmra.mrb[0].mxu0 %v4683
      %v4929 = vpop.f32.mrb[0].mxu0
      %v4930 = vadd.f32 0.0, %v4929
      %v4931 = vpop.f32.mrb[0].mxu0
      %4932 = vmatprep.mubr.f32.mxu0 0.0
      %4933 = vmatmul.mubr.f32.gmra.mrb[0].mxu0 %v4686
      %v4934 = vpop.f32.mrb[0].mxu0
      %v4935 = vadd.f32 0.0, %v4934
      %v4936 = vpop.f32.mrb[0].mxu0
      %4937 = vmatprep.mubr.f32.mxu0 0.0
      %4938 = vmatmul.mubr.f32.gmra.mrb[0].mxu0 %v4688
      %v4939 = vpop.f32.mrb[0].mxu0
      %v4940 = vadd.f32 0.0, %v4939
      %v4941 = vpop.f32.mrb[0].mxu0
      %4942 = vmatprep.mubr.f32.mxu0 0.0
      %4943 = vmatmul.mubr.f32.gmra.mrb[0].mxu0 %v4691
      %v4944 = vpop.f32.mrb[0].mxu0
      %v4945 = vadd.f32 0.0, %v4944
      %v4946 = vpop.f32.mrb[0].mxu0
      %4947 = vmatprep.mubr.f32.mxu0 0.0
      %4948 = vmatmul.mubr.f32.gmra.mrb[0].mxu0 %v4693
      %v4949 = vpop.f32.mrb[0].mxu0
      %v4950 = vadd.f32 0.0, %v4949
      %v4951 = vpop.f32.mrb[0].mxu0
      %4952 = vmatprep.mubr.f32.mxu0 0.0
      %4953 = vmatmul.mubr.f32.gmra.mrb[0].mxu0 %v4696
      %v4954 = vpop.f32.mrb[0].mxu0
      %v4955 = vadd.f32 0.0, %v4954
      %v4956 = vpop.f32.mrb[0].mxu0
      %4957 = vmatprep.mubr.f32.mxu0 0.0
      %4958 = vmatmul.mubr.f32.gmra.mrb[0].mxu0 %v4698
      %v4959 = vpop.f32.mrb[0].mxu0
      %v4960 = vadd.f32 0.0, %v4959
      %v4961 = vpop.f32.mrb[0].mxu0
      %4962 = vmatprep.mubr.f32.mxu0 0.0
      %4963 = vmatmul.mubr.f32.gmra.mrb[0].mxu0 %v4701
      %v4964 = vpop.f32.mrb[0].mxu0
      %v4965 = vadd.f32 0.0, %v4964
      %v4966 = vpop.f32.mrb[0].mxu0
      %4967 = vmatprep.mubr.f32.mxu0 0.0
      %4968 = vmatmul.mubr.f32.gmra.mrb[0].mxu0 %v4703
      %v4969 = vpop.f32.mrb[0].mxu0
      %v4970 = vadd.f32 0.0, %v4969
      %v4971 = vpop.f32.mrb[0].mxu0
      %4972 = vmatprep.mubr.f32.mxu0 0.0
      %4973 = vmatmul.mubr.f32.gmra.mrb[0].mxu0 %v4706
      %v4974 = vpop.f32.mrb[0].mxu0
      %v4975 = vadd.f32 0.0, %v4974
      %v4976 = vpop.f32.mrb[0].mxu0
      %4977 = vmatprep.mubr.f32.mxu0 0.0
      %4978 = vmatmul.mubr.f32.gmra.mrb[0].mxu0 %v4708
      %v4979 = vpop.f32.mrb[0].mxu0
      %v4980 = vadd.f32 0.0, %v4979
      %v4981 = vpop.f32.mrb[0].mxu0
      %4982 = vdwg.mxu0
      %v4983 = vadd.f32 %v4549, %v4825
      %v4984 = vadd.f32 %v4550, %v4830
      %v4985 = vadd.f32 %v4551, %v4835
      %v4986 = vadd.f32 %v4552, %v4840
      %v4987 = vadd.f32 %v4553, %v4845
      %v4988 = vadd.f32 %v4554, %v4850
      %v4989 = vadd.f32 %v4555, %v4855
      %v4990 = vadd.f32 %v4556, %v4860
      %v4991 = vadd.f32 %v4557, %v4865
      %v4992 = vadd.f32 %v4558, %v4870
      %v4993 = vadd.f32 %v4559, %v4875
      %v4994 = vadd.f32 %v4560, %v4880
      %v4995 = vadd.f32 %v4561, %v4885
      %v4996 = vadd.f32 %v4562, %v4890
      %v4997 = vadd.f32 %v4563, %v4895
      %v4998 = vadd.f32 %v4564, %v4900
      %v4999 = vadd.f32 %v4565, %v4905
      %v5000 = vadd.f32 %v4566, %v4910
      %v5001 = vadd.f32 %v4567, %v4915
      %v5002 = vadd.f32 %v4568, %v4920
      %v5003 = vadd.f32 %v4569, %v4925
      %v5004 = vadd.f32 %v4570, %v4930
      %v5005 = vadd.f32 %v4571, %v4935
      %v5006 = vadd.f32 %v4572, %v4940
      %v5007 = vadd.f32 %v4573, %v4945
      %v5008 = vadd.f32 %v4574, %v4950
      %v5009 = vadd.f32 %v4575, %v4955
      %v5010 = vadd.f32 %v4576, %v4960
      %v5011 = vadd.f32 %v4577, %v4965
      %v5012 = vadd.f32 %v4578, %v4970
      %v5013 = vadd.f32 %v4579, %v4975
      %v5014 = vadd.f32 %v4580, %v4980
      %v5015 = vrot.slane %v4259, 2
      %v5016 = vrot.slane %v4260, 2
      %v5017 = vsel %vm959, %v5015, %v5016
      %v5018 = vrot.slane %v4261, 2
      %v5019 = vsel %vm959, %v5016, %v5018
      %v5020 = vrot.slane %v4262, 2
      %v5021 = vrot.slane %v4263, 2
      %v5022 = vsel %vm959, %v5020, %v5021
      %v5023 = vrot.slane %v4264, 2
      %v5024 = vsel %vm959, %v5021, %v5023
      %v5025 = vrot.slane %v4265, 2
      %v5026 = vrot.slane %v4266, 2
      %v5027 = vsel %vm959, %v5025, %v5026
      %v5028 = vrot.slane %v4267, 2
      %v5029 = vsel %vm959, %v5026, %v5028
      %v5030 = vrot.slane %v4268, 2
      %v5031 = vrot.slane %v4269, 2
      %v5032 = vsel %vm959, %v5030, %v5031
      %v5033 = vrot.slane %v4270, 2
      %v5034 = vsel %vm959, %v5031, %v5033
      %v5035 = vrot.slane %v4271, 2
      %v5036 = vrot.slane %v4272, 2
      %v5037 = vsel %vm959, %v5035, %v5036
      %v5038 = vrot.slane %v4273, 2
      %v5039 = vsel %vm959, %v5036, %v5038
      %v5040 = vrot.slane %v4274, 2
      %v5041 = vrot.slane %v4275, 2
      %v5042 = vsel %vm959, %v5040, %v5041
      %v5043 = vrot.slane %v4276, 2
      %v5044 = vsel %vm959, %v5041, %v5043
      %v5045 = vrot.slane %v4277, 2
      %v5046 = vrot.slane %v4278, 2
      %v5047 = vsel %vm959, %v5045, %v5046
      %v5048 = vrot.slane %v4279, 2
      %v5049 = vsel %vm959, %v5046, %v5048
      %v5050 = vrot.slane %v4280, 2
      %v5051 = vrot.slane %v4281, 2
      %v5052 = vsel %vm959, %v5050, %v5051
      %v5053 = vrot.slane %v4282, 2
      %v5054 = vsel %vm959, %v5051, %v5053
      %v5055 = vrot.slane %v4283, 2
      %v5056 = vrot.slane %v4284, 2
      %v5057 = vsel %vm959, %v5055, %v5056
      %v5058 = vrot.slane %v4285, 2
      %v5059 = vsel %vm959, %v5056, %v5058
      %v5060 = vrot.slane %v4286, 2
      %v5061 = vrot.slane %v4287, 2
      %v5062 = vsel %vm959, %v5060, %v5061
      %v5063 = vrot.slane %v4288, 2
      %v5064 = vsel %vm959, %v5061, %v5063
      %v5065 = vrot.slane %v4289, 2
      %v5066 = vrot.slane %v4290, 2
      %v5067 = vsel %vm959, %v5065, %v5066
      %v5068 = vrot.slane %v4291, 2
      %v5069 = vsel %vm959, %v5066, %v5068
      %v5070 = vrot.slane %v4292, 2
      %v5071 = vrot.slane %v4293, 2
      %v5072 = vsel %vm959, %v5070, %v5071
      %v5073 = vrot.slane %v4294, 2
      %v5074 = vsel %vm959, %v5071, %v5073
      %v5075 = vrot.slane %v4295, 2
      %v5076 = vrot.slane %v4296, 2
      %v5077 = vsel %vm959, %v5075, %v5076
      %v5078 = vrot.slane %v4297, 2
      %v5079 = vsel %vm959, %v5076, %v5078
      %v5080 = vrot.slane %v4298, 2
      %v5081 = vrot.slane %v4299, 2
      %v5082 = vsel %vm959, %v5080, %v5081
      %v5083 = vrot.slane %v4300, 2
      %v5084 = vsel %vm959, %v5081, %v5083
      %v5085 = vrot.slane %v4301, 2
      %v5086 = vrot.slane %v4302, 2
      %v5087 = vsel %vm959, %v5085, %v5086
      %v5088 = vrot.slane %v4303, 2
      %v5089 = vsel %vm959, %v5086, %v5088
      %v5090 = vrot.slane %v4304, 2
      %v5091 = vrot.slane %v4305, 2
      %v5092 = vsel %vm959, %v5090, %v5091
      %v5093 = vrot.slane %v4306, 2
      %v5094 = vsel %vm959, %v5091, %v5093
      %s5127 = scalar_lea.vmem %s3, 640
      %v5128 = vld [vmem:[%s5127] sm:$0xff]
      %v5129 = vld [vmem:[%s5127 + $0x8] sm:$0xff]
      %v5130 = vld [vmem:[%s5127 + $0x10] sm:$0xff]
      %v5131 = vld [vmem:[%s5127 + $0x18] sm:$0xff]
      %v5132 = vld [vmem:[%s5127 + $0x20] sm:$0xff]
      %v5133 = vld [vmem:[%s5127 + $0x28] sm:$0xff]
      %v5134 = vld [vmem:[%s5127 + $0x30] sm:$0xff]
      %v5135 = vld [vmem:[%s5127 + $0x38] sm:$0xff]
      %v5136 = vld [vmem:[%s5127 + $0x40] sm:$0xff]
      %v5137 = vld [vmem:[%s5127 + $0x48] sm:$0xff]
      %v5138 = vld [vmem:[%s5127 + $0x50] sm:$0xff]
      %v5139 = vld [vmem:[%s5127 + $0x58] sm:$0xff]
      %v5140 = vld [vmem:[%s5127 + $0x60] sm:$0xff]
      %v5141 = vld [vmem:[%s5127 + $0x68] sm:$0xff]
      %v5142 = vld [vmem:[%s5127 + $0x70] sm:$0xff]
      %v5143 = vld [vmem:[%s5127 + $0x78] sm:$0xff]
      %5144 = vmatprep.subr.mxu0 0.0
      %5145 = vmatpush1.msra.mxu0 %v5128
      %5146 = vmatprep.subr.mxu0 0.0
      %5147 = vmatpush1.msra.mxu0 %v5129
      %5148 = vmatprep.subr.mxu0 0.0
      %5149 = vmatpush1.msra.mxu0 %v5130
      %5150 = vmatprep.subr.mxu0 0.0
      %5151 = vmatpush1.msra.mxu0 %v5131
      %5152 = vmatprep.subr.mxu0 0.0
      %5153 = vmatpush1.msra.mxu0 %v5132
      %5154 = vmatprep.subr.mxu0 0.0
      %5155 = vmatpush1.msra.mxu0 %v5133
      %5156 = vmatprep.subr.mxu0 0.0
      %5157 = vmatpush1.msra.mxu0 %v5134
      %5158 = vmatprep.subr.mxu0 0.0
      %5159 = vmatpush1.msra.mxu0 %v5135
      %5160 = vmatprep.subr.mxu0 0.0
      %5161 = vmatpush1.msra.mxu0 %v5136
      %5162 = vmatprep.subr.mxu0 0.0
      %5163 = vmatpush1.msra.mxu0 %v5137
      %5164 = vmatprep.subr.mxu0 0.0
      %5165 = vmatpush1.msra.mxu0 %v5138
      %5166 = vmatprep.subr.mxu0 0.0
      %5167 = vmatpush1.msra.mxu0 %v5139
      %5168 = vmatprep.subr.mxu0 0.0
      %5169 = vmatpush1.msra.mxu0 %v5140
      %5170 = vmatprep.subr.mxu0 0.0
      %5171 = vmatpush1.msra.mxu0 %v5141
      %5172 = vmatprep.subr.mxu0 0.0
      %5173 = vmatpush1.msra.mxu0 %v5142
      %5174 = vmatprep.subr.mxu0 0.0
      %5175 = vmatpush1.msra.mxu0 %v5143
      %5176 = vmatprep.subr.mxu0 0.0
      %5177 = vmatpush1.msra.mxu0 0.0
      %5178 = vmatprep.subr.mxu0 0.0
      %5179 = vmatpush1.msra.mxu0 0.0
      %5180 = vmatprep.subr.mxu0 0.0
      %5181 = vmatpush1.msra.mxu0 0.0
      %5182 = vmatprep.subr.mxu0 0.0
      %5183 = vmatpush1.msra.mxu0 0.0
      %5184 = vmatprep.subr.mxu0 0.0
      %5185 = vmatpush1.msra.mxu0 0.0
      %5186 = vmatprep.subr.mxu0 0.0
      %5187 = vmatpush1.msra.mxu0 0.0
      %5188 = vmatprep.subr.mxu0 0.0
      %5189 = vmatpush1.msra.mxu0 0.0
      %5190 = vmatprep.subr.mxu0 0.0
      %5191 = vmatpush1.msra.mxu0 0.0
      %5192 = vmatprep.subr.mxu0 0.0
      %5193 = vmatpush1.msra.mxu0 0.0
      %5194 = vmatprep.subr.mxu0 0.0
      %5195 = vmatpush1.msra.mxu0 0.0
      %5196 = vmatprep.subr.mxu0 0.0
      %5197 = vmatpush1.msra.mxu0 0.0
      %5198 = vmatprep.subr.mxu0 0.0
      %5199 = vmatpush1.msra.mxu0 0.0
      %5200 = vmatprep.subr.mxu0 0.0
      %5201 = vmatpush1.msra.mxu0 0.0
      %5202 = vmatprep.subr.mxu0 0.0
      %5203 = vmatpush1.msra.mxu0 0.0
      %5204 = vmatprep.subr.mxu0 0.0
      %5205 = vmatpush1.msra.mxu0 0.0
      %5206 = vmatprep.subr.mxu0 0.0
      %5207 = vmatpush1.msra.mxu0 0.0
      %5208 = vmatprep.mubr.f32.mxu0 0.0
      %5209 = vmatmul.mubr.f32.gmra.mrb[0].mxu0 %v5017
      %v5210 = vpop.f32.mrb[0].mxu0
      %v5211 = vadd.f32 0.0, %v5210
      %v5212 = vpop.f32.mrb[0].mxu0
      %5213 = vmatprep.mubr.f32.mxu0 0.0
      %5214 = vmatmul.mubr.f32.gmra.mrb[0].mxu0 %v5019
      %v5215 = vpop.f32.mrb[0].mxu0
      %v5216 = vadd.f32 0.0, %v5215
      %v5217 = vpop.f32.mrb[0].mxu0
      %5218 = vmatprep.mubr.f32.mxu0 0.0
      %5219 = vmatmul.mubr.f32.gmra.mrb[0].mxu0 %v5022
      %v5220 = vpop.f32.mrb[0].mxu0
      %v5221 = vadd.f32 0.0, %v5220
      %v5222 = vpop.f32.mrb[0].mxu0
      %5223 = vmatprep.mubr.f32.mxu0 0.0
      %5224 = vmatmul.mubr.f32.gmra.mrb[0].mxu0 %v5024
      %v5225 = vpop.f32.mrb[0].mxu0
      %v5226 = vadd.f32 0.0, %v5225
      %v5227 = vpop.f32.mrb[0].mxu0
      %5228 = vmatprep.mubr.f32.mxu0 0.0
      %5229 = vmatmul.mubr.f32.gmra.mrb[0].mxu0 %v5027
      %v5230 = vpop.f32.mrb[0].mxu0
      %v5231 = vadd.f32 0.0, %v5230
      %v5232 = vpop.f32.mrb[0].mxu0
      %5233 = vmatprep.mubr.f32.mxu0 0.0
      %5234 = vmatmul.mubr.f32.gmra.mrb[0].mxu0 %v5029
      %v5235 = vpop.f32.mrb[0].mxu0
      %v5236 = vadd.f32 0.0, %v5235
      %v5237 = vpop.f32.mrb[0].mxu0
      %5238 = vmatprep.mubr.f32.mxu0 0.0
      %5239 = vmatmul.mubr.f32.gmra.mrb[0].mxu0 %v5032
      %v5240 = vpop.f32.mrb[0].mxu0
      %v5241 = vadd.f32 0.0, %v5240
      %v5242 = vpop.f32.mrb[0].mxu0
      %5243 = vmatprep.mubr.f32.mxu0 0.0
      %5244 = vmatmul.mubr.f32.gmra.mrb[0].mxu0 %v5034
      %v5245 = vpop.f32.mrb[0].mxu0
      %v5246 = vadd.f32 0.0, %v5245
      %v5247 = vpop.f32.mrb[0].mxu0
      %5248 = vmatprep.mubr.f32.mxu0 0.0
      %5249 = vmatmul.mubr.f32.gmra.mrb[0].mxu0 %v5037
      %v5250 = vpop.f32.mrb[0].mxu0
      %v5251 = vadd.f32 0.0, %v5250
      %v5252 = vpop.f32.mrb[0].mxu0
      %5253 = vmatprep.mubr.f32.mxu0 0.0
      %5254 = vmatmul.mubr.f32.gmra.mrb[0].mxu0 %v5039
      %v5255 = vpop.f32.mrb[0].mxu0
      %v5256 = vadd.f32 0.0, %v5255
      %v5257 = vpop.f32.mrb[0].mxu0
      %5258 = vmatprep.mubr.f32.mxu0 0.0
      %5259 = vmatmul.mubr.f32.gmra.mrb[0].mxu0 %v5042
      %v5260 = vpop.f32.mrb[0].mxu0
      %v5261 = vadd.f32 0.0, %v5260
      %v5262 = vpop.f32.mrb[0].mxu0
      %5263 = vmatprep.mubr.f32.mxu0 0.0
      %5264 = vmatmul.mubr.f32.gmra.mrb[0].mxu0 %v5044
      %v5265 = vpop.f32.mrb[0].mxu0
      %v5266 = vadd.f32 0.0, %v5265
      %v5267 = vpop.f32.mrb[0].mxu0
      %5268 = vmatprep.mubr.f32.mxu0 0.0
      %5269 = vmatmul.mubr.f32.gmra.mrb[0].mxu0 %v5047
      %v5270 = vpop.f32.mrb[0].mxu0
      %v5271 = vadd.f32 0.0, %v5270
      %v5272 = vpop.f32.mrb[0].mxu0
      %5273 = vmatprep.mubr.f32.mxu0 0.0
      %5274 = vmatmul.mubr.f32.gmra.mrb[0].mxu0 %v5049
      %v5275 = vpop.f32.mrb[0].mxu0
      %v5276 = vadd.f32 0.0, %v5275
      %v5277 = vpop.f32.mrb[0].mxu0
      %5278 = vmatprep.mubr.f32.mxu0 0.0
      %5279 = vmatmul.mubr.f32.gmra.mrb[0].mxu0 %v5052
      %v5280 = vpop.f32.mrb[0].mxu0
      %v5281 = vadd.f32 0.0, %v5280
      %v5282 = vpop.f32.mrb[0].mxu0
      %5283 = vmatprep.mubr.f32.mxu0 0.0
      %5284 = vmatmul.mubr.f32.gmra.mrb[0].mxu0 %v5054
      %v5285 = vpop.f32.mrb[0].mxu0
      %v5286 = vadd.f32 0.0, %v5285
      %v5287 = vpop.f32.mrb[0].mxu0
      %5288 = vmatprep.mubr.f32.mxu0 0.0
      %5289 = vmatmul.mubr.f32.gmra.mrb[0].mxu0 %v5057
      %v5290 = vpop.f32.mrb[0].mxu0
      %v5291 = vadd.f32 0.0, %v5290
      %v5292 = vpop.f32.mrb[0].mxu0
      %5293 = vmatprep.mubr.f32.mxu0 0.0
      %5294 = vmatmul.mubr.f32.gmra.mrb[0].mxu0 %v5059
      %v5295 = vpop.f32.mrb[0].mxu0
      %v5296 = vadd.f32 0.0, %v5295
      %v5297 = vpop.f32.mrb[0].mxu0
      %5298 = vmatprep.mubr.f32.mxu0 0.0
      %5299 = vmatmul.mubr.f32.gmra.mrb[0].mxu0 %v5062
      %v5300 = vpop.f32.mrb[0].mxu0
      %v5301 = vadd.f32 0.0, %v5300
      %v5302 = vpop.f32.mrb[0].mxu0
      %5303 = vmatprep.mubr.f32.mxu0 0.0
      %5304 = vmatmul.mubr.f32.gmra.mrb[0].mxu0 %v5064
      %v5305 = vpop.f32.mrb[0].mxu0
      %v5306 = vadd.f32 0.0, %v5305
      %v5307 = vpop.f32.mrb[0].mxu0
      %5308 = vmatprep.mubr.f32.mxu0 0.0
      %5309 = vmatmul.mubr.f32.gmra.mrb[0].mxu0 %v5067
      %v5310 = vpop.f32.mrb[0].mxu0
      %v5311 = vadd.f32 0.0, %v5310
      %v5312 = vpop.f32.mrb[0].mxu0
      %5313 = vmatprep.mubr.f32.mxu0 0.0
      %5314 = vmatmul.mubr.f32.gmra.mrb[0].mxu0 %v5069
      %v5315 = vpop.f32.mrb[0].mxu0
      %v5316 = vadd.f32 0.0, %v5315
      %v5317 = vpop.f32.mrb[0].mxu0
      %5318 = vmatprep.mubr.f32.mxu0 0.0
      %5319 = vmatmul.mubr.f32.gmra.mrb[0].mxu0 %v5072
      %v5320 = vpop.f32.mrb[0].mxu0
      %v5321 = vadd.f32 0.0, %v5320
      %v5322 = vpop.f32.mrb[0].mxu0
      %5323 = vmatprep.mubr.f32.mxu0 0.0
      %5324 = vmatmul.mubr.f32.gmra.mrb[0].mxu0 %v5074
      %v5325 = vpop.f32.mrb[0].mxu0
      %v5326 = vadd.f32 0.0, %v5325
      %v5327 = vpop.f32.mrb[0].mxu0
      %5328 = vmatprep.mubr.f32.mxu0 0.0
      %5329 = vmatmul.mubr.f32.gmra.mrb[0].mxu0 %v5077
      %v5330 = vpop.f32.mrb[0].mxu0
      %v5331 = vadd.f32 0.0, %v5330
      %v5332 = vpop.f32.mrb[0].mxu0
      %5333 = vmatprep.mubr.f32.mxu0 0.0
      %5334 = vmatmul.mubr.f32.gmra.mrb[0].mxu0 %v5079
      %v5335 = vpop.f32.mrb[0].mxu0
      %v5336 = vadd.f32 0.0, %v5335
      %v5337 = vpop.f32.mrb[0].mxu0
      %5338 = vmatprep.mubr.f32.mxu0 0.0
      %5339 = vmatmul.mubr.f32.gmra.mrb[0].mxu0 %v5082
      %v5340 = vpop.f32.mrb[0].mxu0
      %v5341 = vadd.f32 0.0, %v5340
      %v5342 = vpop.f32.mrb[0].mxu0
      %5343 = vmatprep.mubr.f32.mxu0 0.0
      %5344 = vmatmul.mubr.f32.gmra.mrb[0].mxu0 %v5084
      %v5345 = vpop.f32.mrb[0].mxu0
      %v5346 = vadd.f32 0.0, %v5345
      %v5347 = vpop.f32.mrb[0].mxu0
      %5348 = vmatprep.mubr.f32.mxu0 0.0
      %5349 = vmatmul.mubr.f32.gmra.mrb[0].mxu0 %v5087
      %v5350 = vpop.f32.mrb[0].mxu0
      %v5351 = vadd.f32 0.0, %v5350
      %v5352 = vpop.f32.mrb[0].mxu0
      %5353 = vmatprep.mubr.f32.mxu0 0.0
      %5354 = vmatmul.mubr.f32.gmra.mrb[0].mxu0 %v5089
      %v5355 = vpop.f32.mrb[0].mxu0
      %v5356 = vadd.f32 0.0, %v5355
      %v5357 = vpop.f32.mrb[0].mxu0
      %5358 = vmatprep.mubr.f32.mxu0 0.0
      %5359 = vmatmul.mubr.f32.gmra.mrb[0].mxu0 %v5092
      %v5360 = vpop.f32.mrb[0].mxu0
      %v5361 = vadd.f32 0.0, %v5360
      %v5362 = vpop.f32.mrb[0].mxu0
      %5363 = vmatprep.mubr.f32.mxu0 0.0
      %5364 = vmatmul.mubr.f32.gmra.mrb[0].mxu0 %v5094
      %v5365 = vpop.f32.mrb[0].mxu0
      %v5366 = vadd.f32 0.0, %v5365
      %v5367 = vpop.f32.mrb[0].mxu0
      %5368 = vdwg.mxu0
      %v5369 = vadd.f32 %v4983, %v5211
      %v5370 = vadd.f32 %v4984, %v5216
      %v5371 = vadd.f32 %v4985, %v5221
      %v5372 = vadd.f32 %v4986, %v5226
      %v5373 = vadd.f32 %v4987, %v5231
      %v5374 = vadd.f32 %v4988, %v5236
      %v5375 = vadd.f32 %v4989, %v5241
      %v5376 = vadd.f32 %v4990, %v5246
      %v5377 = vadd.f32 %v4991, %v5251
      %v5378 = vadd.f32 %v4992, %v5256
      %v5379 = vadd.f32 %v4993, %v5261
      %v5380 = vadd.f32 %v4994, %v5266
      %v5381 = vadd.f32 %v4995, %v5271
      %v5382 = vadd.f32 %v4996, %v5276
      %v5383 = vadd.f32 %v4997, %v5281
      %v5384 = vadd.f32 %v4998, %v5286
      %v5385 = vadd.f32 %v4999, %v5291
      %v5386 = vadd.f32 %v5000, %v5296
      %v5387 = vadd.f32 %v5001, %v5301
      %v5388 = vadd.f32 %v5002, %v5306
      %v5389 = vadd.f32 %v5003, %v5311
      %v5390 = vadd.f32 %v5004, %v5316
      %v5391 = vadd.f32 %v5005, %v5321
      %v5392 = vadd.f32 %v5006, %v5326
      %v5393 = vadd.f32 %v5007, %v5331
      %v5394 = vadd.f32 %v5008, %v5336
      %v5395 = vadd.f32 %v5009, %v5341
      %v5396 = vadd.f32 %v5010, %v5346
      %v5397 = vadd.f32 %v5011, %v5351
      %v5398 = vadd.f32 %v5012, %v5356
      %v5399 = vadd.f32 %v5013, %v5361
      %v5400 = vadd.f32 %v5014, %v5366
      %s5401 = scalar_lea.vmem [#allocation2], 48
      %v5402 = vld [vmem:[%s5401] sm:$0xff]
      %v5403 = vld [vmem:[%s5401 + $0x8] sm:$0xff]
      %v5404 = vld [vmem:[%s5401 + $0x10] sm:$0x3]
      %v5405 = vld [vmem:[%s5401 + $0x18] sm:$0xff]
      %v5406 = vld [vmem:[%s5401 + $0x20] sm:$0xff]
      %v5407 = vld [vmem:[%s5401 + $0x28] sm:$0x3]
      %v5408 = vld [vmem:[%s5401 + $0x30] sm:$0xff]
      %v5409 = vld [vmem:[%s5401 + $0x38] sm:$0xff]
      %v5410 = vld [vmem:[%s5401 + $0x40] sm:$0x3]
      %v5411 = vld [vmem:[%s5401 + $0x48] sm:$0xff]
      %v5412 = vld [vmem:[%s5401 + $0x50] sm:$0xff]
      %v5413 = vld [vmem:[%s5401 + $0x58] sm:$0x3]
      %v5414 = vld [vmem:[%s5401 + $0x60] sm:$0xff]
      %v5415 = vld [vmem:[%s5401 + $0x68] sm:$0xff]
      %v5416 = vld [vmem:[%s5401 + $0x70] sm:$0x3]
      %v5417 = vld [vmem:[%s5401 + $0x78] sm:$0xff]
      %v5418 = vld [vmem:[%s5401 + $0x80] sm:$0xff]
      %v5419 = vld [vmem:[%s5401 + $0x88] sm:$0x3]
      %v5420 = vld [vmem:[%s5401 + $0x90] sm:$0xff]
      %v5421 = vld [vmem:[%s5401 + $0x98] sm:$0xff]
      %v5422 = vld [vmem:[%s5401 + $0xa0] sm:$0x3]
      %v5423 = vld [vmem:[%s5401 + $0xa8] sm:$0xff]
      %v5424 = vld [vmem:[%s5401 + $0xb0] sm:$0xff]
      %v5425 = vld [vmem:[%s5401 + $0xb8] sm:$0x3]
      %v5426 = vld [vmem:[%s5401 + $0xc0] sm:$0xff]
      %v5427 = vld [vmem:[%s5401 + $0xc8] sm:$0xff]
      %v5428 = vld [vmem:[%s5401 + $0xd0] sm:$0x3]
      %v5429 = vld [vmem:[%s5401 + $0xd8] sm:$0xff]
      %v5430 = vld [vmem:[%s5401 + $0xe0] sm:$0xff]
      %v5431 = vld [vmem:[%s5401 + $0xe8] sm:$0x3]
      %v5432 = vld [vmem:[%s5401 + $0xf0] sm:$0xff]
      %v5433 = vld [vmem:[%s5401 + $0xf8] sm:$0xff]
      %v5434 = vld [vmem:[%s5401 + $0x100] sm:$0x3]
      %v5435 = vld [vmem:[%s5401 + $0x108] sm:$0xff]
      %v5436 = vld [vmem:[%s5401 + $0x110] sm:$0xff]
      %v5437 = vld [vmem:[%s5401 + $0x118] sm:$0x3]
      %v5438 = vld [vmem:[%s5401 + $0x120] sm:$0xff]
      %v5439 = vld [vmem:[%s5401 + $0x128] sm:$0xff]
      %v5440 = vld [vmem:[%s5401 + $0x130] sm:$0x3]
      %v5441 = vld [vmem:[%s5401 + $0x138] sm:$0xff]
      %v5442 = vld [vmem:[%s5401 + $0x140] sm:$0xff]
      %v5443 = vld [vmem:[%s5401 + $0x148] sm:$0x3]
      %v5444 = vld [vmem:[%s5401 + $0x150] sm:$0xff]
      %v5445 = vld [vmem:[%s5401 + $0x158] sm:$0xff]
      %v5446 = vld [vmem:[%s5401 + $0x160] sm:$0x3]
      %v5447 = vld [vmem:[%s5401 + $0x168] sm:$0xff]
      %v5448 = vld [vmem:[%s5401 + $0x170] sm:$0xff]
      %v5449 = vld [vmem:[%s5401 + $0x178] sm:$0x3]
      %s5450 = scalar_lea.vmem %s3, 768
      %v5451 = vld [vmem:[%s5450] sm:$0xff]
      %v5452 = vld [vmem:[%s5450 + $0x8] sm:$0xff]
      %v5453 = vld [vmem:[%s5450 + $0x10] sm:$0xff]
      %v5454 = vld [vmem:[%s5450 + $0x18] sm:$0xff]
      %v5455 = vld [vmem:[%s5450 + $0x20] sm:$0xff]
      %v5456 = vld [vmem:[%s5450 + $0x28] sm:$0xff]
      %v5457 = vld [vmem:[%s5450 + $0x30] sm:$0xff]
      %v5458 = vld [vmem:[%s5450 + $0x38] sm:$0xff]
      %v5459 = vld [vmem:[%s5450 + $0x40] sm:$0xff]
      %v5460 = vld [vmem:[%s5450 + $0x48] sm:$0xff]
      %v5461 = vld [vmem:[%s5450 + $0x50] sm:$0xff]
      %v5462 = vld [vmem:[%s5450 + $0x58] sm:$0xff]
      %v5463 = vld [vmem:[%s5450 + $0x60] sm:$0xff]
      %v5464 = vld [vmem:[%s5450 + $0x68] sm:$0xff]
      %v5465 = vld [vmem:[%s5450 + $0x70] sm:$0xff]
      %v5466 = vld [vmem:[%s5450 + $0x78] sm:$0xff]
      %5467 = vmatprep.subr.mxu0 0.0
      %5468 = vmatpush1.msra.mxu0 %v5451
      %5469 = vmatprep.subr.mxu0 0.0
      %5470 = vmatpush1.msra.mxu0 %v5452
      %5471 = vmatprep.subr.mxu0 0.0
      %5472 = vmatpush1.msra.mxu0 %v5453
      %5473 = vmatprep.subr.mxu0 0.0
      %5474 = vmatpush1.msra.mxu0 %v5454
      %5475 = vmatprep.subr.mxu0 0.0
      %5476 = vmatpush1.msra.mxu0 %v5455
      %5477 = vmatprep.subr.mxu0 0.0
      %5478 = vmatpush1.msra.mxu0 %v5456
      %5479 = vmatprep.subr.mxu0 0.0
      %5480 = vmatpush1.msra.mxu0 %v5457
      %5481 = vmatprep.subr.mxu0 0.0
      %5482 = vmatpush1.msra.mxu0 %v5458
      %5483 = vmatprep.subr.mxu0 0.0
      %5484 = vmatpush1.msra.mxu0 %v5459
      %5485 = vmatprep.subr.mxu0 0.0
      %5486 = vmatpush1.msra.mxu0 %v5460
      %5487 = vmatprep.subr.mxu0 0.0
      %5488 = vmatpush1.msra.mxu0 %v5461
      %5489 = vmatprep.subr.mxu0 0.0
      %5490 = vmatpush1.msra.mxu0 %v5462
      %5491 = vmatprep.subr.mxu0 0.0
      %5492 = vmatpush1.msra.mxu0 %v5463
      %5493 = vmatprep.subr.mxu0 0.0
      %5494 = vmatpush1.msra.mxu0 %v5464
      %5495 = vmatprep.subr.mxu0 0.0
      %5496 = vmatpush1.msra.mxu0 %v5465
      %5497 = vmatprep.subr.mxu0 0.0
      %5498 = vmatpush1.msra.mxu0 %v5466
      %5499 = vmatprep.subr.mxu0 0.0
      %5500 = vmatpush1.msra.mxu0 0.0
      %5501 = vmatprep.subr.mxu0 0.0
      %5502 = vmatpush1.msra.mxu0 0.0
      %5503 = vmatprep.subr.mxu0 0.0
      %5504 = vmatpush1.msra.mxu0 0.0
      %5505 = vmatprep.subr.mxu0 0.0
      %5506 = vmatpush1.msra.mxu0 0.0
      %5507 = vmatprep.subr.mxu0 0.0
      %5508 = vmatpush1.msra.mxu0 0.0
      %5509 = vmatprep.subr.mxu0 0.0
      %5510 = vmatpush1.msra.mxu0 0.0
      %5511 = vmatprep.subr.mxu0 0.0
      %5512 = vmatpush1.msra.mxu0 0.0
      %5513 = vmatprep.subr.mxu0 0.0
      %5514 = vmatpush1.msra.mxu0 0.0
      %5515 = vmatprep.subr.mxu0 0.0
      %5516 = vmatpush1.msra.mxu0 0.0
      %5517 = vmatprep.subr.mxu0 0.0
      %5518 = vmatpush1.msra.mxu0 0.0
      %5519 = vmatprep.subr.mxu0 0.0
      %5520 = vmatpush1.msra.mxu0 0.0
      %5521 = vmatprep.subr.mxu0 0.0
      %5522 = vmatpush1.msra.mxu0 0.0
      %5523 = vmatprep.subr.mxu0 0.0
      %5524 = vmatpush1.msra.mxu0 0.0
      %5525 = vmatprep.subr.mxu0 0.0
      %5526 = vmatpush1.msra.mxu0 0.0
      %5527 = vmatprep.subr.mxu0 0.0
      %5528 = vmatpush1.msra.mxu0 0.0
      %5529 = vmatprep.subr.mxu0 0.0
      %5530 = vmatpush1.msra.mxu0 0.0
      %5531 = vmatprep.mubr.f32.mxu0 0.0
      %5532 = vmatmul.mubr.f32.gmra.mrb[0].mxu0 %v5402
      %v5533 = vpop.f32.mrb[0].mxu0
      %v5534 = vadd.f32 0.0, %v5533
      %v5535 = vpop.f32.mrb[0].mxu0
      %5536 = vmatprep.mubr.f32.mxu0 0.0
      %5537 = vmatmul.mubr.f32.gmra.mrb[0].mxu0 %v5403
      %v5538 = vpop.f32.mrb[0].mxu0
      %v5539 = vadd.f32 0.0, %v5538
      %v5540 = vpop.f32.mrb[0].mxu0
      %5541 = vmatprep.mubr.f32.mxu0 0.0
      %5542 = vmatmul.mubr.f32.gmra.mrb[0].mxu0 %v5405
      %v5543 = vpop.f32.mrb[0].mxu0
      %v5544 = vadd.f32 0.0, %v5543
      %v5545 = vpop.f32.mrb[0].mxu0
      %5546 = vmatprep.mubr.f32.mxu0 0.0
      %5547 = vmatmul.mubr.f32.gmra.mrb[0].mxu0 %v5406
      %v5548 = vpop.f32.mrb[0].mxu0
      %v5549 = vadd.f32 0.0, %v5548
      %v5550 = vpop.f32.mrb[0].mxu0
      %5551 = vmatprep.mubr.f32.mxu0 0.0
      %5552 = vmatmul.mubr.f32.gmra.mrb[0].mxu0 %v5408
      %v5553 = vpop.f32.mrb[0].mxu0
      %v5554 = vadd.f32 0.0, %v5553
      %v5555 = vpop.f32.mrb[0].mxu0
      %5556 = vmatprep.mubr.f32.mxu0 0.0
      %5557 = vmatmul.mubr.f32.gmra.mrb[0].mxu0 %v5409
      %v5558 = vpop.f32.mrb[0].mxu0
      %v5559 = vadd.f32 0.0, %v5558
      %v5560 = vpop.f32.mrb[0].mxu0
      %5561 = vmatprep.mubr.f32.mxu0 0.0
      %5562 = vmatmul.mubr.f32.gmra.mrb[0].mxu0 %v5411
      %v5563 = vpop.f32.mrb[0].mxu0
      %v5564 = vadd.f32 0.0, %v5563
      %v5565 = vpop.f32.mrb[0].mxu0
      %5566 = vmatprep.mubr.f32.mxu0 0.0
      %5567 = vmatmul.mubr.f32.gmra.mrb[0].mxu0 %v5412
      %v5568 = vpop.f32.mrb[0].mxu0
      %v5569 = vadd.f32 0.0, %v5568
      %v5570 = vpop.f32.mrb[0].mxu0
      %5571 = vmatprep.mubr.f32.mxu0 0.0
      %5572 = vmatmul.mubr.f32.gmra.mrb[0].mxu0 %v5414
      %v5573 = vpop.f32.mrb[0].mxu0
      %v5574 = vadd.f32 0.0, %v5573
      %v5575 = vpop.f32.mrb[0].mxu0
      %5576 = vmatprep.mubr.f32.mxu0 0.0
      %5577 = vmatmul.mubr.f32.gmra.mrb[0].mxu0 %v5415
      %v5578 = vpop.f32.mrb[0].mxu0
      %v5579 = vadd.f32 0.0, %v5578
      %v5580 = vpop.f32.mrb[0].mxu0
      %5581 = vmatprep.mubr.f32.mxu0 0.0
      %5582 = vmatmul.mubr.f32.gmra.mrb[0].mxu0 %v5417
      %v5583 = vpop.f32.mrb[0].mxu0
      %v5584 = vadd.f32 0.0, %v5583
      %v5585 = vpop.f32.mrb[0].mxu0
      %5586 = vmatprep.mubr.f32.mxu0 0.0
      %5587 = vmatmul.mubr.f32.gmra.mrb[0].mxu0 %v5418
      %v5588 = vpop.f32.mrb[0].mxu0
      %v5589 = vadd.f32 0.0, %v5588
      %v5590 = vpop.f32.mrb[0].mxu0
      %5591 = vmatprep.mubr.f32.mxu0 0.0
      %5592 = vmatmul.mubr.f32.gmra.mrb[0].mxu0 %v5420
      %v5593 = vpop.f32.mrb[0].mxu0
      %v5594 = vadd.f32 0.0, %v5593
      %v5595 = vpop.f32.mrb[0].mxu0
      %5596 = vmatprep.mubr.f32.mxu0 0.0
      %5597 = vmatmul.mubr.f32.gmra.mrb[0].mxu0 %v5421
      %v5598 = vpop.f32.mrb[0].mxu0
      %v5599 = vadd.f32 0.0, %v5598
      %v5600 = vpop.f32.mrb[0].mxu0
      %5601 = vmatprep.mubr.f32.mxu0 0.0
      %5602 = vmatmul.mubr.f32.gmra.mrb[0].mxu0 %v5423
      %v5603 = vpop.f32.mrb[0].mxu0
      %v5604 = vadd.f32 0.0, %v5603
      %v5605 = vpop.f32.mrb[0].mxu0
      %5606 = vmatprep.mubr.f32.mxu0 0.0
      %5607 = vmatmul.mubr.f32.gmra.mrb[0].mxu0 %v5424
      %v5608 = vpop.f32.mrb[0].mxu0
      %v5609 = vadd.f32 0.0, %v5608
      %v5610 = vpop.f32.mrb[0].mxu0
      %5611 = vmatprep.mubr.f32.mxu0 0.0
      %5612 = vmatmul.mubr.f32.gmra.mrb[0].mxu0 %v5426
      %v5613 = vpop.f32.mrb[0].mxu0
      %v5614 = vadd.f32 0.0, %v5613
      %v5615 = vpop.f32.mrb[0].mxu0
      %5616 = vmatprep.mubr.f32.mxu0 0.0
      %5617 = vmatmul.mubr.f32.gmra.mrb[0].mxu0 %v5427
      %v5618 = vpop.f32.mrb[0].mxu0
      %v5619 = vadd.f32 0.0, %v5618
      %v5620 = vpop.f32.mrb[0].mxu0
      %5621 = vmatprep.mubr.f32.mxu0 0.0
      %5622 = vmatmul.mubr.f32.gmra.mrb[0].mxu0 %v5429
      %v5623 = vpop.f32.mrb[0].mxu0
      %v5624 = vadd.f32 0.0, %v5623
      %v5625 = vpop.f32.mrb[0].mxu0
      %5626 = vmatprep.mubr.f32.mxu0 0.0
      %5627 = vmatmul.mubr.f32.gmra.mrb[0].mxu0 %v5430
      %v5628 = vpop.f32.mrb[0].mxu0
      %v5629 = vadd.f32 0.0, %v5628
      %v5630 = vpop.f32.mrb[0].mxu0
      %5631 = vmatprep.mubr.f32.mxu0 0.0
      %5632 = vmatmul.mubr.f32.gmra.mrb[0].mxu0 %v5432
      %v5633 = vpop.f32.mrb[0].mxu0
      %v5634 = vadd.f32 0.0, %v5633
      %v5635 = vpop.f32.mrb[0].mxu0
      %5636 = vmatprep.mubr.f32.mxu0 0.0
      %5637 = vmatmul.mubr.f32.gmra.mrb[0].mxu0 %v5433
      %v5638 = vpop.f32.mrb[0].mxu0
      %v5639 = vadd.f32 0.0, %v5638
      %v5640 = vpop.f32.mrb[0].mxu0
      %5641 = vmatprep.mubr.f32.mxu0 0.0
      %5642 = vmatmul.mubr.f32.gmra.mrb[0].mxu0 %v5435
      %v5643 = vpop.f32.mrb[0].mxu0
      %v5644 = vadd.f32 0.0, %v5643
      %v5645 = vpop.f32.mrb[0].mxu0
      %5646 = vmatprep.mubr.f32.mxu0 0.0
      %5647 = vmatmul.mubr.f32.gmra.mrb[0].mxu0 %v5436
      %v5648 = vpop.f32.mrb[0].mxu0
      %v5649 = vadd.f32 0.0, %v5648
      %v5650 = vpop.f32.mrb[0].mxu0
      %5651 = vmatprep.mubr.f32.mxu0 0.0
      %5652 = vmatmul.mubr.f32.gmra.mrb[0].mxu0 %v5438
      %v5653 = vpop.f32.mrb[0].mxu0
      %v5654 = vadd.f32 0.0, %v5653
      %v5655 = vpop.f32.mrb[0].mxu0
      %5656 = vmatprep.mubr.f32.mxu0 0.0
      %5657 = vmatmul.mubr.f32.gmra.mrb[0].mxu0 %v5439
      %v5658 = vpop.f32.mrb[0].mxu0
      %v5659 = vadd.f32 0.0, %v5658
      %v5660 = vpop.f32.mrb[0].mxu0
      %5661 = vmatprep.mubr.f32.mxu0 0.0
      %5662 = vmatmul.mubr.f32.gmra.mrb[0].mxu0 %v5441
      %v5663 = vpop.f32.mrb[0].mxu0
      %v5664 = vadd.f32 0.0, %v5663
      %v5665 = vpop.f32.mrb[0].mxu0
      %5666 = vmatprep.mubr.f32.mxu0 0.0
      %5667 = vmatmul.mubr.f32.gmra.mrb[0].mxu0 %v5442
      %v5668 = vpop.f32.mrb[0].mxu0
      %v5669 = vadd.f32 0.0, %v5668
      %v5670 = vpop.f32.mrb[0].mxu0
      %5671 = vmatprep.mubr.f32.mxu0 0.0
      %5672 = vmatmul.mubr.f32.gmra.mrb[0].mxu0 %v5444
      %v5673 = vpop.f32.mrb[0].mxu0
      %v5674 = vadd.f32 0.0, %v5673
      %v5675 = vpop.f32.mrb[0].mxu0
      %5676 = vmatprep.mubr.f32.mxu0 0.0
      %5677 = vmatmul.mubr.f32.gmra.mrb[0].mxu0 %v5445
      %v5678 = vpop.f32.mrb[0].mxu0
      %v5679 = vadd.f32 0.0, %v5678
      %v5680 = vpop.f32.mrb[0].mxu0
      %5681 = vmatprep.mubr.f32.mxu0 0.0
      %5682 = vmatmul.mubr.f32.gmra.mrb[0].mxu0 %v5447
      %v5683 = vpop.f32.mrb[0].mxu0
      %v5684 = vadd.f32 0.0, %v5683
      %v5685 = vpop.f32.mrb[0].mxu0
      %5686 = vmatprep.mubr.f32.mxu0 0.0
      %5687 = vmatmul.mubr.f32.gmra.mrb[0].mxu0 %v5448
      %v5688 = vpop.f32.mrb[0].mxu0
      %v5689 = vadd.f32 0.0, %v5688
      %v5690 = vpop.f32.mrb[0].mxu0
      %5691 = vdwg.mxu0
      %v5692 = vadd.f32 %v5369, %v5534
      %v5693 = vadd.f32 %v5370, %v5539
      %v5694 = vadd.f32 %v5371, %v5544
      %v5695 = vadd.f32 %v5372, %v5549
      %v5696 = vadd.f32 %v5373, %v5554
      %v5697 = vadd.f32 %v5374, %v5559
      %v5698 = vadd.f32 %v5375, %v5564
      %v5699 = vadd.f32 %v5376, %v5569
      %v5700 = vadd.f32 %v5377, %v5574
      %v5701 = vadd.f32 %v5378, %v5579
      %v5702 = vadd.f32 %v5379, %v5584
      %v5703 = vadd.f32 %v5380, %v5589
      %v5704 = vadd.f32 %v5381, %v5594
      %v5705 = vadd.f32 %v5382, %v5599
      %v5706 = vadd.f32 %v5383, %v5604
      %v5707 = vadd.f32 %v5384, %v5609
      %v5708 = vadd.f32 %v5385, %v5614
      %v5709 = vadd.f32 %v5386, %v5619
      %v5710 = vadd.f32 %v5387, %v5624
      %v5711 = vadd.f32 %v5388, %v5629
      %v5712 = vadd.f32 %v5389, %v5634
      %v5713 = vadd.f32 %v5390, %v5639
      %v5714 = vadd.f32 %v5391, %v5644
      %v5715 = vadd.f32 %v5392, %v5649
      %v5716 = vadd.f32 %v5393, %v5654
      %v5717 = vadd.f32 %v5394, %v5659
      %v5718 = vadd.f32 %v5395, %v5664
      %v5719 = vadd.f32 %v5396, %v5669
      %v5720 = vadd.f32 %v5397, %v5674
      %v5721 = vadd.f32 %v5398, %v5679
      %v5722 = vadd.f32 %v5399, %v5684
      %v5723 = vadd.f32 %v5400, %v5689
      %v5772 = vrot.slane %v5402, 1
      %v5773 = vrot.slane %v5403, 1
      %v5774 = vsel %vm379, %v5772, %v5773
      %v5775 = vrot.slane %v5404, 1
      %v5776 = vsel %vm379, %v5773, %v5775
      %v5777 = vrot.slane %v5405, 1
      %v5778 = vrot.slane %v5406, 1
      %v5779 = vsel %vm379, %v5777, %v5778
      %v5780 = vrot.slane %v5407, 1
      %v5781 = vsel %vm379, %v5778, %v5780
      %v5782 = vrot.slane %v5408, 1
      %v5783 = vrot.slane %v5409, 1
      %v5784 = vsel %vm379, %v5782, %v5783
      %v5785 = vrot.slane %v5410, 1
      %v5786 = vsel %vm379, %v5783, %v5785
      %v5787 = vrot.slane %v5411, 1
      %v5788 = vrot.slane %v5412, 1
      %v5789 = vsel %vm379, %v5787, %v5788
      %v5790 = vrot.slane %v5413, 1
      %v5791 = vsel %vm379, %v5788, %v5790
      %v5792 = vrot.slane %v5414, 1
      %v5793 = vrot.slane %v5415, 1
      %v5794 = vsel %vm379, %v5792, %v5793
      %v5795 = vrot.slane %v5416, 1
      %v5796 = vsel %vm379, %v5793, %v5795
      %v5797 = vrot.slane %v5417, 1
      %v5798 = vrot.slane %v5418, 1
      %v5799 = vsel %vm379, %v5797, %v5798
      %v5800 = vrot.slane %v5419, 1
      %v5801 = vsel %vm379, %v5798, %v5800
      %v5802 = vrot.slane %v5420, 1
      %v5803 = vrot.slane %v5421, 1
      %v5804 = vsel %vm379, %v5802, %v5803
      %v5805 = vrot.slane %v5422, 1
      %v5806 = vsel %vm379, %v5803, %v5805
      %v5807 = vrot.slane %v5423, 1
      %v5808 = vrot.slane %v5424, 1
      %v5809 = vsel %vm379, %v5807, %v5808
      %v5810 = vrot.slane %v5425, 1
      %v5811 = vsel %vm379, %v5808, %v5810
      %v5812 = vrot.slane %v5426, 1
      %v5813 = vrot.slane %v5427, 1
      %v5814 = vsel %vm379, %v5812, %v5813
      %v5815 = vrot.slane %v5428, 1
      %v5816 = vsel %vm379, %v5813, %v5815
      %v5817 = vrot.slane %v5429, 1
      %v5818 = vrot.slane %v5430, 1
      %v5819 = vsel %vm379, %v5817, %v5818
      %v5820 = vrot.slane %v5431, 1
      %v5821 = vsel %vm379, %v5818, %v5820
      %v5822 = vrot.slane %v5432, 1
      %v5823 = vrot.slane %v5433, 1
      %v5824 = vsel %vm379, %v5822, %v5823
      %v5825 = vrot.slane %v5434, 1
      %v5826 = vsel %vm379, %v5823, %v5825
      %v5827 = vrot.slane %v5435, 1
      %v5828 = vrot.slane %v5436, 1
      %v5829 = vsel %vm379, %v5827, %v5828
      %v5830 = vrot.slane %v5437, 1
      %v5831 = vsel %vm379, %v5828, %v5830
      %v5832 = vrot.slane %v5438, 1
      %v5833 = vrot.slane %v5439, 1
      %v5834 = vsel %vm379, %v5832, %v5833
      %v5835 = vrot.slane %v5440, 1
      %v5836 = vsel %vm379, %v5833, %v5835
      %v5837 = vrot.slane %v5441, 1
      %v5838 = vrot.slane %v5442, 1
      %v5839 = vsel %vm379, %v5837, %v5838
      %v5840 = vrot.slane %v5443, 1
      %v5841 = vsel %vm379, %v5838, %v5840
      %v5842 = vrot.slane %v5444, 1
      %v5843 = vrot.slane %v5445, 1
      %v5844 = vsel %vm379, %v5842, %v5843
      %v5845 = vrot.slane %v5446, 1
      %v5846 = vsel %vm379, %v5843, %v5845
      %v5847 = vrot.slane %v5447, 1
      %v5848 = vrot.slane %v5448, 1
      %v5849 = vsel %vm379, %v5847, %v5848
      %v5850 = vrot.slane %v5449, 1
      %v5851 = vsel %vm379, %v5848, %v5850
      %s5884 = scalar_lea.vmem %s3, 896
      %v5885 = vld [vmem:[%s5884] sm:$0xff]
      %v5886 = vld [vmem:[%s5884 + $0x8] sm:$0xff]
      %v5887 = vld [vmem:[%s5884 + $0x10] sm:$0xff]
      %v5888 = vld [vmem:[%s5884 + $0x18] sm:$0xff]
      %v5889 = vld [vmem:[%s5884 + $0x20] sm:$0xff]
      %v5890 = vld [vmem:[%s5884 + $0x28] sm:$0xff]
      %v5891 = vld [vmem:[%s5884 + $0x30] sm:$0xff]
      %v5892 = vld [vmem:[%s5884 + $0x38] sm:$0xff]
      %v5893 = vld [vmem:[%s5884 + $0x40] sm:$0xff]
      %v5894 = vld [vmem:[%s5884 + $0x48] sm:$0xff]
      %v5895 = vld [vmem:[%s5884 + $0x50] sm:$0xff]
      %v5896 = vld [vmem:[%s5884 + $0x58] sm:$0xff]
      %v5897 = vld [vmem:[%s5884 + $0x60] sm:$0xff]
      %v5898 = vld [vmem:[%s5884 + $0x68] sm:$0xff]
      %v5899 = vld [vmem:[%s5884 + $0x70] sm:$0xff]
      %v5900 = vld [vmem:[%s5884 + $0x78] sm:$0xff]
      %5901 = vmatprep.subr.mxu0 0.0
      %5902 = vmatpush1.msra.mxu0 %v5885
      %5903 = vmatprep.subr.mxu0 0.0
      %5904 = vmatpush1.msra.mxu0 %v5886
      %5905 = vmatprep.subr.mxu0 0.0
      %5906 = vmatpush1.msra.mxu0 %v5887
      %5907 = vmatprep.subr.mxu0 0.0
      %5908 = vmatpush1.msra.mxu0 %v5888
      %5909 = vmatprep.subr.mxu0 0.0
      %5910 = vmatpush1.msra.mxu0 %v5889
      %5911 = vmatprep.subr.mxu0 0.0
      %5912 = vmatpush1.msra.mxu0 %v5890
      %5913 = vmatprep.subr.mxu0 0.0
      %5914 = vmatpush1.msra.mxu0 %v5891
      %5915 = vmatprep.subr.mxu0 0.0
      %5916 = vmatpush1.msra.mxu0 %v5892
      %5917 = vmatprep.subr.mxu0 0.0
      %5918 = vmatpush1.msra.mxu0 %v5893
      %5919 = vmatprep.subr.mxu0 0.0
      %5920 = vmatpush1.msra.mxu0 %v5894
      %5921 = vmatprep.subr.mxu0 0.0
      %5922 = vmatpush1.msra.mxu0 %v5895
      %5923 = vmatprep.subr.mxu0 0.0
      %5924 = vmatpush1.msra.mxu0 %v5896
      %5925 = vmatprep.subr.mxu0 0.0
      %5926 = vmatpush1.msra.mxu0 %v5897
      %5927 = vmatprep.subr.mxu0 0.0
      %5928 = vmatpush1.msra.mxu0 %v5898
      %5929 = vmatprep.subr.mxu0 0.0
      %5930 = vmatpush1.msra.mxu0 %v5899
      %5931 = vmatprep.subr.mxu0 0.0
      %5932 = vmatpush1.msra.mxu0 %v5900
      %5933 = vmatprep.subr.mxu0 0.0
      %5934 = vmatpush1.msra.mxu0 0.0
      %5935 = vmatprep.subr.mxu0 0.0
      %5936 = vmatpush1.msra.mxu0 0.0
      %5937 = vmatprep.subr.mxu0 0.0
      %5938 = vmatpush1.msra.mxu0 0.0
      %5939 = vmatprep.subr.mxu0 0.0
      %5940 = vmatpush1.msra.mxu0 0.0
      %5941 = vmatprep.subr.mxu0 0.0
      %5942 = vmatpush1.msra.mxu0 0.0
      %5943 = vmatprep.subr.mxu0 0.0
      %5944 = vmatpush1.msra.mxu0 0.0
      %5945 = vmatprep.subr.mxu0 0.0
      %5946 = vmatpush1.msra.mxu0 0.0
      %5947 = vmatprep.subr.mxu0 0.0
      %5948 = vmatpush1.msra.mxu0 0.0
      %5949 = vmatprep.subr.mxu0 0.0
      %5950 = vmatpush1.msra.mxu0 0.0
      %5951 = vmatprep.subr.mxu0 0.0
      %5952 = vmatpush1.msra.mxu0 0.0
      %5953 = vmatprep.subr.mxu0 0.0
      %5954 = vmatpush1.msra.mxu0 0.0
      %5955 = vmatprep.subr.mxu0 0.0
      %5956 = vmatpush1.msra.mxu0 0.0
      %5957 = vmatprep.subr.mxu0 0.0
      %5958 = vmatpush1.msra.mxu0 0.0
      %5959 = vmatprep.subr.mxu0 0.0
      %5960 = vmatpush1.msra.mxu0 0.0
      %5961 = vmatprep.subr.mxu0 0.0
      %5962 = vmatpush1.msra.mxu0 0.0
      %5963 = vmatprep.subr.mxu0 0.0
      %5964 = vmatpush1.msra.mxu0 0.0
      %5965 = vmatprep.mubr.f32.mxu0 0.0
      %5966 = vmatmul.mubr.f32.gmra.mrb[0].mxu0 %v5774
      %v5967 = vpop.f32.mrb[0].mxu0
      %v5968 = vadd.f32 0.0, %v5967
      %v5969 = vpop.f32.mrb[0].mxu0
      %5970 = vmatprep.mubr.f32.mxu0 0.0
      %5971 = vmatmul.mubr.f32.gmra.mrb[0].mxu0 %v5776
      %v5972 = vpop.f32.mrb[0].mxu0
      %v5973 = vadd.f32 0.0, %v5972
      %v5974 = vpop.f32.mrb[0].mxu0
      %5975 = vmatprep.mubr.f32.mxu0 0.0
      %5976 = vmatmul.mubr.f32.gmra.mrb[0].mxu0 %v5779
      %v5977 = vpop.f32.mrb[0].mxu0
      %v5978 = vadd.f32 0.0, %v5977
      %v5979 = vpop.f32.mrb[0].mxu0
      %5980 = vmatprep.mubr.f32.mxu0 0.0
      %5981 = vmatmul.mubr.f32.gmra.mrb[0].mxu0 %v5781
      %v5982 = vpop.f32.mrb[0].mxu0
      %v5983 = vadd.f32 0.0, %v5982
      %v5984 = vpop.f32.mrb[0].mxu0
      %5985 = vmatprep.mubr.f32.mxu0 0.0
      %5986 = vmatmul.mubr.f32.gmra.mrb[0].mxu0 %v5784
      %v5987 = vpop.f32.mrb[0].mxu0
      %v5988 = vadd.f32 0.0, %v5987
      %v5989 = vpop.f32.mrb[0].mxu0
      %5990 = vmatprep.mubr.f32.mxu0 0.0
      %5991 = vmatmul.mubr.f32.gmra.mrb[0].mxu0 %v5786
      %v5992 = vpop.f32.mrb[0].mxu0
      %v5993 = vadd.f32 0.0, %v5992
      %v5994 = vpop.f32.mrb[0].mxu0
      %5995 = vmatprep.mubr.f32.mxu0 0.0
      %5996 = vmatmul.mubr.f32.gmra.mrb[0].mxu0 %v5789
      %v5997 = vpop.f32.mrb[0].mxu0
      %v5998 = vadd.f32 0.0, %v5997
      %v5999 = vpop.f32.mrb[0].mxu0
      %6000 = vmatprep.mubr.f32.mxu0 0.0
      %6001 = vmatmul.mubr.f32.gmra.mrb[0].mxu0 %v5791
      %v6002 = vpop.f32.mrb[0].mxu0
      %v6003 = vadd.f32 0.0, %v6002
      %v6004 = vpop.f32.mrb[0].mxu0
      %6005 = vmatprep.mubr.f32.mxu0 0.0
      %6006 = vmatmul.mubr.f32.gmra.mrb[0].mxu0 %v5794
      %v6007 = vpop.f32.mrb[0].mxu0
      %v6008 = vadd.f32 0.0, %v6007
      %v6009 = vpop.f32.mrb[0].mxu0
      %6010 = vmatprep.mubr.f32.mxu0 0.0
      %6011 = vmatmul.mubr.f32.gmra.mrb[0].mxu0 %v5796
      %v6012 = vpop.f32.mrb[0].mxu0
      %v6013 = vadd.f32 0.0, %v6012
      %v6014 = vpop.f32.mrb[0].mxu0
      %6015 = vmatprep.mubr.f32.mxu0 0.0
      %6016 = vmatmul.mubr.f32.gmra.mrb[0].mxu0 %v5799
      %v6017 = vpop.f32.mrb[0].mxu0
      %v6018 = vadd.f32 0.0, %v6017
      %v6019 = vpop.f32.mrb[0].mxu0
      %6020 = vmatprep.mubr.f32.mxu0 0.0
      %6021 = vmatmul.mubr.f32.gmra.mrb[0].mxu0 %v5801
      %v6022 = vpop.f32.mrb[0].mxu0
      %v6023 = vadd.f32 0.0, %v6022
      %v6024 = vpop.f32.mrb[0].mxu0
      %6025 = vmatprep.mubr.f32.mxu0 0.0
      %6026 = vmatmul.mubr.f32.gmra.mrb[0].mxu0 %v5804
      %v6027 = vpop.f32.mrb[0].mxu0
      %v6028 = vadd.f32 0.0, %v6027
      %v6029 = vpop.f32.mrb[0].mxu0
      %6030 = vmatprep.mubr.f32.mxu0 0.0
      %6031 = vmatmul.mubr.f32.gmra.mrb[0].mxu0 %v5806
      %v6032 = vpop.f32.mrb[0].mxu0
      %v6033 = vadd.f32 0.0, %v6032
      %v6034 = vpop.f32.mrb[0].mxu0
      %6035 = vmatprep.mubr.f32.mxu0 0.0
      %6036 = vmatmul.mubr.f32.gmra.mrb[0].mxu0 %v5809
      %v6037 = vpop.f32.mrb[0].mxu0
      %v6038 = vadd.f32 0.0, %v6037
      %v6039 = vpop.f32.mrb[0].mxu0
      %6040 = vmatprep.mubr.f32.mxu0 0.0
      %6041 = vmatmul.mubr.f32.gmra.mrb[0].mxu0 %v5811
      %v6042 = vpop.f32.mrb[0].mxu0
      %v6043 = vadd.f32 0.0, %v6042
      %v6044 = vpop.f32.mrb[0].mxu0
      %6045 = vmatprep.mubr.f32.mxu0 0.0
      %6046 = vmatmul.mubr.f32.gmra.mrb[0].mxu0 %v5814
      %v6047 = vpop.f32.mrb[0].mxu0
      %v6048 = vadd.f32 0.0, %v6047
      %v6049 = vpop.f32.mrb[0].mxu0
      %6050 = vmatprep.mubr.f32.mxu0 0.0
      %6051 = vmatmul.mubr.f32.gmra.mrb[0].mxu0 %v5816
      %v6052 = vpop.f32.mrb[0].mxu0
      %v6053 = vadd.f32 0.0, %v6052
      %v6054 = vpop.f32.mrb[0].mxu0
      %6055 = vmatprep.mubr.f32.mxu0 0.0
      %6056 = vmatmul.mubr.f32.gmra.mrb[0].mxu0 %v5819
      %v6057 = vpop.f32.mrb[0].mxu0
      %v6058 = vadd.f32 0.0, %v6057
      %v6059 = vpop.f32.mrb[0].mxu0
      %6060 = vmatprep.mubr.f32.mxu0 0.0
      %6061 = vmatmul.mubr.f32.gmra.mrb[0].mxu0 %v5821
      %v6062 = vpop.f32.mrb[0].mxu0
      %v6063 = vadd.f32 0.0, %v6062
      %v6064 = vpop.f32.mrb[0].mxu0
      %6065 = vmatprep.mubr.f32.mxu0 0.0
      %6066 = vmatmul.mubr.f32.gmra.mrb[0].mxu0 %v5824
      %v6067 = vpop.f32.mrb[0].mxu0
      %v6068 = vadd.f32 0.0, %v6067
      %v6069 = vpop.f32.mrb[0].mxu0
      %6070 = vmatprep.mubr.f32.mxu0 0.0
      %6071 = vmatmul.mubr.f32.gmra.mrb[0].mxu0 %v5826
      %v6072 = vpop.f32.mrb[0].mxu0
      %v6073 = vadd.f32 0.0, %v6072
      %v6074 = vpop.f32.mrb[0].mxu0
      %6075 = vmatprep.mubr.f32.mxu0 0.0
      %6076 = vmatmul.mubr.f32.gmra.mrb[0].mxu0 %v5829
      %v6077 = vpop.f32.mrb[0].mxu0
      %v6078 = vadd.f32 0.0, %v6077
      %v6079 = vpop.f32.mrb[0].mxu0
      %6080 = vmatprep.mubr.f32.mxu0 0.0
      %6081 = vmatmul.mubr.f32.gmra.mrb[0].mxu0 %v5831
      %v6082 = vpop.f32.mrb[0].mxu0
      %v6083 = vadd.f32 0.0, %v6082
      %v6084 = vpop.f32.mrb[0].mxu0
      %6085 = vmatprep.mubr.f32.mxu0 0.0
      %6086 = vmatmul.mubr.f32.gmra.mrb[0].mxu0 %v5834
      %v6087 = vpop.f32.mrb[0].mxu0
      %v6088 = vadd.f32 0.0, %v6087
      %v6089 = vpop.f32.mrb[0].mxu0
      %6090 = vmatprep.mubr.f32.mxu0 0.0
      %6091 = vmatmul.mubr.f32.gmra.mrb[0].mxu0 %v5836
      %v6092 = vpop.f32.mrb[0].mxu0
      %v6093 = vadd.f32 0.0, %v6092
      %v6094 = vpop.f32.mrb[0].mxu0
      %6095 = vmatprep.mubr.f32.mxu0 0.0
      %6096 = vmatmul.mubr.f32.gmra.mrb[0].mxu0 %v5839
      %v6097 = vpop.f32.mrb[0].mxu0
      %v6098 = vadd.f32 0.0, %v6097
      %v6099 = vpop.f32.mrb[0].mxu0
      %6100 = vmatprep.mubr.f32.mxu0 0.0
      %6101 = vmatmul.mubr.f32.gmra.mrb[0].mxu0 %v5841
      %v6102 = vpop.f32.mrb[0].mxu0
      %v6103 = vadd.f32 0.0, %v6102
      %v6104 = vpop.f32.mrb[0].mxu0
      %6105 = vmatprep.mubr.f32.mxu0 0.0
      %6106 = vmatmul.mubr.f32.gmra.mrb[0].mxu0 %v5844
      %v6107 = vpop.f32.mrb[0].mxu0
      %v6108 = vadd.f32 0.0, %v6107
      %v6109 = vpop.f32.mrb[0].mxu0
      %6110 = vmatprep.mubr.f32.mxu0 0.0
      %6111 = vmatmul.mubr.f32.gmra.mrb[0].mxu0 %v5846
      %v6112 = vpop.f32.mrb[0].mxu0
      %v6113 = vadd.f32 0.0, %v6112
      %v6114 = vpop.f32.mrb[0].mxu0
      %6115 = vmatprep.mubr.f32.mxu0 0.0
      %6116 = vmatmul.mubr.f32.gmra.mrb[0].mxu0 %v5849
      %v6117 = vpop.f32.mrb[0].mxu0
      %v6118 = vadd.f32 0.0, %v6117
      %v6119 = vpop.f32.mrb[0].mxu0
      %6120 = vmatprep.mubr.f32.mxu0 0.0
      %6121 = vmatmul.mubr.f32.gmra.mrb[0].mxu0 %v5851
      %v6122 = vpop.f32.mrb[0].mxu0
      %v6123 = vadd.f32 0.0, %v6122
      %v6124 = vpop.f32.mrb[0].mxu0
      %6125 = vdwg.mxu0
      %v6126 = vadd.f32 %v5692, %v5968
      %v6127 = vadd.f32 %v5693, %v5973
      %v6128 = vadd.f32 %v5694, %v5978
      %v6129 = vadd.f32 %v5695, %v5983
      %v6130 = vadd.f32 %v5696, %v5988
      %v6131 = vadd.f32 %v5697, %v5993
      %v6132 = vadd.f32 %v5698, %v5998
      %v6133 = vadd.f32 %v5699, %v6003
      %v6134 = vadd.f32 %v5700, %v6008
      %v6135 = vadd.f32 %v5701, %v6013
      %v6136 = vadd.f32 %v5702, %v6018
      %v6137 = vadd.f32 %v5703, %v6023
      %v6138 = vadd.f32 %v5704, %v6028
      %v6139 = vadd.f32 %v5705, %v6033
      %v6140 = vadd.f32 %v5706, %v6038
      %v6141 = vadd.f32 %v5707, %v6043
      %v6142 = vadd.f32 %v5708, %v6048
      %v6143 = vadd.f32 %v5709, %v6053
      %v6144 = vadd.f32 %v5710, %v6058
      %v6145 = vadd.f32 %v5711, %v6063
      %v6146 = vadd.f32 %v5712, %v6068
      %v6147 = vadd.f32 %v5713, %v6073
      %v6148 = vadd.f32 %v5714, %v6078
      %v6149 = vadd.f32 %v5715, %v6083
      %v6150 = vadd.f32 %v5716, %v6088
      %v6151 = vadd.f32 %v5717, %v6093
      %v6152 = vadd.f32 %v5718, %v6098
      %v6153 = vadd.f32 %v5719, %v6103
      %v6154 = vadd.f32 %v5720, %v6108
      %v6155 = vadd.f32 %v5721, %v6113
      %v6156 = vadd.f32 %v5722, %v6118
      %v6157 = vadd.f32 %v5723, %v6123
      %v6158 = vrot.slane %v5402, 2
      %v6159 = vrot.slane %v5403, 2
      %v6160 = vsel %vm959, %v6158, %v6159
      %v6161 = vrot.slane %v5404, 2
      %v6162 = vsel %vm959, %v6159, %v6161
      %v6163 = vrot.slane %v5405, 2
      %v6164 = vrot.slane %v5406, 2
      %v6165 = vsel %vm959, %v6163, %v6164
      %v6166 = vrot.slane %v5407, 2
      %v6167 = vsel %vm959, %v6164, %v6166
      %v6168 = vrot.slane %v5408, 2
      %v6169 = vrot.slane %v5409, 2
      %v6170 = vsel %vm959, %v6168, %v6169
      %v6171 = vrot.slane %v5410, 2
      %v6172 = vsel %vm959, %v6169, %v6171
      %v6173 = vrot.slane %v5411, 2
      %v6174 = vrot.slane %v5412, 2
      %v6175 = vsel %vm959, %v6173, %v6174
      %v6176 = vrot.slane %v5413, 2
      %v6177 = vsel %vm959, %v6174, %v6176
      %v6178 = vrot.slane %v5414, 2
      %v6179 = vrot.slane %v5415, 2
      %v6180 = vsel %vm959, %v6178, %v6179
      %v6181 = vrot.slane %v5416, 2
      %v6182 = vsel %vm959, %v6179, %v6181
      %v6183 = vrot.slane %v5417, 2
      %v6184 = vrot.slane %v5418, 2
      %v6185 = vsel %vm959, %v6183, %v6184
      %v6186 = vrot.slane %v5419, 2
      %v6187 = vsel %vm959, %v6184, %v6186
      %v6188 = vrot.slane %v5420, 2
      %v6189 = vrot.slane %v5421, 2
      %v6190 = vsel %vm959, %v6188, %v6189
      %v6191 = vrot.slane %v5422, 2
      %v6192 = vsel %vm959, %v6189, %v6191
      %v6193 = vrot.slane %v5423, 2
      %v6194 = vrot.slane %v5424, 2
      %v6195 = vsel %vm959, %v6193, %v6194
      %v6196 = vrot.slane %v5425, 2
      %v6197 = vsel %vm959, %v6194, %v6196
      %v6198 = vrot.slane %v5426, 2
      %v6199 = vrot.slane %v5427, 2
      %v6200 = vsel %vm959, %v6198, %v6199
      %v6201 = vrot.slane %v5428, 2
      %v6202 = vsel %vm959, %v6199, %v6201
      %v6203 = vrot.slane %v5429, 2
      %v6204 = vrot.slane %v5430, 2
      %v6205 = vsel %vm959, %v6203, %v6204
      %v6206 = vrot.slane %v5431, 2
      %v6207 = vsel %vm959, %v6204, %v6206
      %v6208 = vrot.slane %v5432, 2
      %v6209 = vrot.slane %v5433, 2
      %v6210 = vsel %vm959, %v6208, %v6209
      %v6211 = vrot.slane %v5434, 2
      %v6212 = vsel %vm959, %v6209, %v6211
      %v6213 = vrot.slane %v5435, 2
      %v6214 = vrot.slane %v5436, 2
      %v6215 = vsel %vm959, %v6213, %v6214
      %v6216 = vrot.slane %v5437, 2
      %v6217 = vsel %vm959, %v6214, %v6216
      %v6218 = vrot.slane %v5438, 2
      %v6219 = vrot.slane %v5439, 2
      %v6220 = vsel %vm959, %v6218, %v6219
      %v6221 = vrot.slane %v5440, 2
      %v6222 = vsel %vm959, %v6219, %v6221
      %v6223 = vrot.slane %v5441, 2
      %v6224 = vrot.slane %v5442, 2
      %v6225 = vsel %vm959, %v6223, %v6224
      %v6226 = vrot.slane %v5443, 2
      %v6227 = vsel %vm959, %v6224, %v6226
      %v6228 = vrot.slane %v5444, 2
      %v6229 = vrot.slane %v5445, 2
      %v6230 = vsel %vm959, %v6228, %v6229
      %v6231 = vrot.slane %v5446, 2
      %v6232 = vsel %vm959, %v6229, %v6231
      %v6233 = vrot.slane %v5447, 2
      %v6234 = vrot.slane %v5448, 2
      %v6235 = vsel %vm959, %v6233, %v6234
      %v6236 = vrot.slane %v5449, 2
      %v6237 = vsel %vm959, %v6234, %v6236
      %s6270 = scalar_lea.vmem %s3, 1024
      %v6271 = vld [vmem:[%s6270] sm:$0xff]
      %v6272 = vld [vmem:[%s6270 + $0x8] sm:$0xff]
      %v6273 = vld [vmem:[%s6270 + $0x10] sm:$0xff]
      %v6274 = vld [vmem:[%s6270 + $0x18] sm:$0xff]
      %v6275 = vld [vmem:[%s6270 + $0x20] sm:$0xff]
      %v6276 = vld [vmem:[%s6270 + $0x28] sm:$0xff]
      %v6277 = vld [vmem:[%s6270 + $0x30] sm:$0xff]
      %v6278 = vld [vmem:[%s6270 + $0x38] sm:$0xff]
      %v6279 = vld [vmem:[%s6270 + $0x40] sm:$0xff]
      %v6280 = vld [vmem:[%s6270 + $0x48] sm:$0xff]
      %v6281 = vld [vmem:[%s6270 + $0x50] sm:$0xff]
      %v6282 = vld [vmem:[%s6270 + $0x58] sm:$0xff]
      %v6283 = vld [vmem:[%s6270 + $0x60] sm:$0xff]
      %v6284 = vld [vmem:[%s6270 + $0x68] sm:$0xff]
      %v6285 = vld [vmem:[%s6270 + $0x70] sm:$0xff]
      %v6286 = vld [vmem:[%s6270 + $0x78] sm:$0xff]
      %6287 = vmatprep.subr.mxu0 0.0
      %6288 = vmatpush1.msra.mxu0 %v6271
      %6289 = vmatprep.subr.mxu0 0.0
      %6290 = vmatpush1.msra.mxu0 %v6272
      %6291 = vmatprep.subr.mxu0 0.0
      %6292 = vmatpush1.msra.mxu0 %v6273
      %6293 = vmatprep.subr.mxu0 0.0
      %6294 = vmatpush1.msra.mxu0 %v6274
      %6295 = vmatprep.subr.mxu0 0.0
      %6296 = vmatpush1.msra.mxu0 %v6275
      %6297 = vmatprep.subr.mxu0 0.0
      %6298 = vmatpush1.msra.mxu0 %v6276
      %6299 = vmatprep.subr.mxu0 0.0
      %6300 = vmatpush1.msra.mxu0 %v6277
      %6301 = vmatprep.subr.mxu0 0.0
      %6302 = vmatpush1.msra.mxu0 %v6278
      %6303 = vmatprep.subr.mxu0 0.0
      %6304 = vmatpush1.msra.mxu0 %v6279
      %6305 = vmatprep.subr.mxu0 0.0
      %6306 = vmatpush1.msra.mxu0 %v6280
      %6307 = vmatprep.subr.mxu0 0.0
      %6308 = vmatpush1.msra.mxu0 %v6281
      %6309 = vmatprep.subr.mxu0 0.0
      %6310 = vmatpush1.msra.mxu0 %v6282
      %6311 = vmatprep.subr.mxu0 0.0
      %6312 = vmatpush1.msra.mxu0 %v6283
      %6313 = vmatprep.subr.mxu0 0.0
      %6314 = vmatpush1.msra.mxu0 %v6284
      %6315 = vmatprep.subr.mxu0 0.0
      %6316 = vmatpush1.msra.mxu0 %v6285
      %6317 = vmatprep.subr.mxu0 0.0
      %6318 = vmatpush1.msra.mxu0 %v6286
      %6319 = vmatprep.subr.mxu0 0.0
      %6320 = vmatpush1.msra.mxu0 0.0
      %6321 = vmatprep.subr.mxu0 0.0
      %6322 = vmatpush1.msra.mxu0 0.0
      %6323 = vmatprep.subr.mxu0 0.0
      %6324 = vmatpush1.msra.mxu0 0.0
      %6325 = vmatprep.subr.mxu0 0.0
      %6326 = vmatpush1.msra.mxu0 0.0
      %6327 = vmatprep.subr.mxu0 0.0
      %6328 = vmatpush1.msra.mxu0 0.0
      %6329 = vmatprep.subr.mxu0 0.0
      %6330 = vmatpush1.msra.mxu0 0.0
      %6331 = vmatprep.subr.mxu0 0.0
      %6332 = vmatpush1.msra.mxu0 0.0
      %6333 = vmatprep.subr.mxu0 0.0
      %6334 = vmatpush1.msra.mxu0 0.0
      %6335 = vmatprep.subr.mxu0 0.0
      %6336 = vmatpush1.msra.mxu0 0.0
      %6337 = vmatprep.subr.mxu0 0.0
      %6338 = vmatpush1.msra.mxu0 0.0
      %6339 = vmatprep.subr.mxu0 0.0
      %6340 = vmatpush1.msra.mxu0 0.0
      %6341 = vmatprep.subr.mxu0 0.0
      %6342 = vmatpush1.msra.mxu0 0.0
      %6343 = vmatprep.subr.mxu0 0.0
      %6344 = vmatpush1.msra.mxu0 0.0
      %6345 = vmatprep.subr.mxu0 0.0
      %6346 = vmatpush1.msra.mxu0 0.0
      %6347 = vmatprep.subr.mxu0 0.0
      %6348 = vmatpush1.msra.mxu0 0.0
      %6349 = vmatprep.subr.mxu0 0.0
      %6350 = vmatpush1.msra.mxu0 0.0
      %6351 = vmatprep.mubr.f32.mxu0 0.0
      %6352 = vmatmul.mubr.f32.gmra.mrb[0].mxu0 %v6160
      %v6353 = vpop.f32.mrb[0].mxu0
      %v6354 = vadd.f32 0.0, %v6353
      %v6355 = vpop.f32.mrb[0].mxu0
      %6356 = vmatprep.mubr.f32.mxu0 0.0
      %6357 = vmatmul.mubr.f32.gmra.mrb[0].mxu0 %v6162
      %v6358 = vpop.f32.mrb[0].mxu0
      %v6359 = vadd.f32 0.0, %v6358
      %v6360 = vpop.f32.mrb[0].mxu0
      %6361 = vmatprep.mubr.f32.mxu0 0.0
      %6362 = vmatmul.mubr.f32.gmra.mrb[0].mxu0 %v6165
      %v6363 = vpop.f32.mrb[0].mxu0
      %v6364 = vadd.f32 0.0, %v6363
      %v6365 = vpop.f32.mrb[0].mxu0
      %6366 = vmatprep.mubr.f32.mxu0 0.0
      %6367 = vmatmul.mubr.f32.gmra.mrb[0].mxu0 %v6167
      %v6368 = vpop.f32.mrb[0].mxu0
      %v6369 = vadd.f32 0.0, %v6368
      %v6370 = vpop.f32.mrb[0].mxu0
      %6371 = vmatprep.mubr.f32.mxu0 0.0
      %6372 = vmatmul.mubr.f32.gmra.mrb[0].mxu0 %v6170
      %v6373 = vpop.f32.mrb[0].mxu0
      %v6374 = vadd.f32 0.0, %v6373
      %v6375 = vpop.f32.mrb[0].mxu0
      %6376 = vmatprep.mubr.f32.mxu0 0.0
      %6377 = vmatmul.mubr.f32.gmra.mrb[0].mxu0 %v6172
      %v6378 = vpop.f32.mrb[0].mxu0
      %v6379 = vadd.f32 0.0, %v6378
      %v6380 = vpop.f32.mrb[0].mxu0
      %6381 = vmatprep.mubr.f32.mxu0 0.0
      %6382 = vmatmul.mubr.f32.gmra.mrb[0].mxu0 %v6175
      %v6383 = vpop.f32.mrb[0].mxu0
      %v6384 = vadd.f32 0.0, %v6383
      %v6385 = vpop.f32.mrb[0].mxu0
      %6386 = vmatprep.mubr.f32.mxu0 0.0
      %6387 = vmatmul.mubr.f32.gmra.mrb[0].mxu0 %v6177
      %v6388 = vpop.f32.mrb[0].mxu0
      %v6389 = vadd.f32 0.0, %v6388
      %v6390 = vpop.f32.mrb[0].mxu0
      %6391 = vmatprep.mubr.f32.mxu0 0.0
      %6392 = vmatmul.mubr.f32.gmra.mrb[0].mxu0 %v6180
      %v6393 = vpop.f32.mrb[0].mxu0
      %v6394 = vadd.f32 0.0, %v6393
      %v6395 = vpop.f32.mrb[0].mxu0
      %6396 = vmatprep.mubr.f32.mxu0 0.0
      %6397 = vmatmul.mubr.f32.gmra.mrb[0].mxu0 %v6182
      %v6398 = vpop.f32.mrb[0].mxu0
      %v6399 = vadd.f32 0.0, %v6398
      %v6400 = vpop.f32.mrb[0].mxu0
      %6401 = vmatprep.mubr.f32.mxu0 0.0
      %6402 = vmatmul.mubr.f32.gmra.mrb[0].mxu0 %v6185
      %v6403 = vpop.f32.mrb[0].mxu0
      %v6404 = vadd.f32 0.0, %v6403
      %v6405 = vpop.f32.mrb[0].mxu0
      %6406 = vmatprep.mubr.f32.mxu0 0.0
      %6407 = vmatmul.mubr.f32.gmra.mrb[0].mxu0 %v6187
      %v6408 = vpop.f32.mrb[0].mxu0
      %v6409 = vadd.f32 0.0, %v6408
      %v6410 = vpop.f32.mrb[0].mxu0
      %6411 = vmatprep.mubr.f32.mxu0 0.0
      %6412 = vmatmul.mubr.f32.gmra.mrb[0].mxu0 %v6190
      %v6413 = vpop.f32.mrb[0].mxu0
      %v6414 = vadd.f32 0.0, %v6413
      %v6415 = vpop.f32.mrb[0].mxu0
      %6416 = vmatprep.mubr.f32.mxu0 0.0
      %6417 = vmatmul.mubr.f32.gmra.mrb[0].mxu0 %v6192
      %v6418 = vpop.f32.mrb[0].mxu0
      %v6419 = vadd.f32 0.0, %v6418
      %v6420 = vpop.f32.mrb[0].mxu0
      %6421 = vmatprep.mubr.f32.mxu0 0.0
      %6422 = vmatmul.mubr.f32.gmra.mrb[0].mxu0 %v6195
      %v6423 = vpop.f32.mrb[0].mxu0
      %v6424 = vadd.f32 0.0, %v6423
      %v6425 = vpop.f32.mrb[0].mxu0
      %6426 = vmatprep.mubr.f32.mxu0 0.0
      %6427 = vmatmul.mubr.f32.gmra.mrb[0].mxu0 %v6197
      %v6428 = vpop.f32.mrb[0].mxu0
      %v6429 = vadd.f32 0.0, %v6428
      %v6430 = vpop.f32.mrb[0].mxu0
      %6431 = vmatprep.mubr.f32.mxu0 0.0
      %6432 = vmatmul.mubr.f32.gmra.mrb[0].mxu0 %v6200
      %v6433 = vpop.f32.mrb[0].mxu0
      %v6434 = vadd.f32 0.0, %v6433
      %v6435 = vpop.f32.mrb[0].mxu0
      %6436 = vmatprep.mubr.f32.mxu0 0.0
      %6437 = vmatmul.mubr.f32.gmra.mrb[0].mxu0 %v6202
      %v6438 = vpop.f32.mrb[0].mxu0
      %v6439 = vadd.f32 0.0, %v6438
      %v6440 = vpop.f32.mrb[0].mxu0
      %6441 = vmatprep.mubr.f32.mxu0 0.0
      %6442 = vmatmul.mubr.f32.gmra.mrb[0].mxu0 %v6205
      %v6443 = vpop.f32.mrb[0].mxu0
      %v6444 = vadd.f32 0.0, %v6443
      %v6445 = vpop.f32.mrb[0].mxu0
      %6446 = vmatprep.mubr.f32.mxu0 0.0
      %6447 = vmatmul.mubr.f32.gmra.mrb[0].mxu0 %v6207
      %v6448 = vpop.f32.mrb[0].mxu0
      %v6449 = vadd.f32 0.0, %v6448
      %v6450 = vpop.f32.mrb[0].mxu0
      %6451 = vmatprep.mubr.f32.mxu0 0.0
      %6452 = vmatmul.mubr.f32.gmra.mrb[0].mxu0 %v6210
      %v6453 = vpop.f32.mrb[0].mxu0
      %v6454 = vadd.f32 0.0, %v6453
      %v6455 = vpop.f32.mrb[0].mxu0
      %6456 = vmatprep.mubr.f32.mxu0 0.0
      %6457 = vmatmul.mubr.f32.gmra.mrb[0].mxu0 %v6212
      %v6458 = vpop.f32.mrb[0].mxu0
      %v6459 = vadd.f32 0.0, %v6458
      %v6460 = vpop.f32.mrb[0].mxu0
      %6461 = vmatprep.mubr.f32.mxu0 0.0
      %6462 = vmatmul.mubr.f32.gmra.mrb[0].mxu0 %v6215
      %v6463 = vpop.f32.mrb[0].mxu0
      %v6464 = vadd.f32 0.0, %v6463
      %v6465 = vpop.f32.mrb[0].mxu0
      %6466 = vmatprep.mubr.f32.mxu0 0.0
      %6467 = vmatmul.mubr.f32.gmra.mrb[0].mxu0 %v6217
      %v6468 = vpop.f32.mrb[0].mxu0
      %v6469 = vadd.f32 0.0, %v6468
      %v6470 = vpop.f32.mrb[0].mxu0
      %6471 = vmatprep.mubr.f32.mxu0 0.0
      %6472 = vmatmul.mubr.f32.gmra.mrb[0].mxu0 %v6220
      %v6473 = vpop.f32.mrb[0].mxu0
      %v6474 = vadd.f32 0.0, %v6473
      %v6475 = vpop.f32.mrb[0].mxu0
      %6476 = vmatprep.mubr.f32.mxu0 0.0
      %6477 = vmatmul.mubr.f32.gmra.mrb[0].mxu0 %v6222
      %v6478 = vpop.f32.mrb[0].mxu0
      %v6479 = vadd.f32 0.0, %v6478
      %v6480 = vpop.f32.mrb[0].mxu0
      %6481 = vmatprep.mubr.f32.mxu0 0.0
      %6482 = vmatmul.mubr.f32.gmra.mrb[0].mxu0 %v6225
      %v6483 = vpop.f32.mrb[0].mxu0
      %v6484 = vadd.f32 0.0, %v6483
      %v6485 = vpop.f32.mrb[0].mxu0
      %6486 = vmatprep.mubr.f32.mxu0 0.0
      %6487 = vmatmul.mubr.f32.gmra.mrb[0].mxu0 %v6227
      %v6488 = vpop.f32.mrb[0].mxu0
      %v6489 = vadd.f32 0.0, %v6488
      %v6490 = vpop.f32.mrb[0].mxu0
      %6491 = vmatprep.mubr.f32.mxu0 0.0
      %6492 = vmatmul.mubr.f32.gmra.mrb[0].mxu0 %v6230
      %v6493 = vpop.f32.mrb[0].mxu0
      %v6494 = vadd.f32 0.0, %v6493
      %v6495 = vpop.f32.mrb[0].mxu0
      %6496 = vmatprep.mubr.f32.mxu0 0.0
      %6497 = vmatmul.mubr.f32.gmra.mrb[0].mxu0 %v6232
      %v6498 = vpop.f32.mrb[0].mxu0
      %v6499 = vadd.f32 0.0, %v6498
      %v6500 = vpop.f32.mrb[0].mxu0
      %6501 = vmatprep.mubr.f32.mxu0 0.0
      %6502 = vmatmul.mubr.f32.gmra.mrb[0].mxu0 %v6235
      %v6503 = vpop.f32.mrb[0].mxu0
      %v6504 = vadd.f32 0.0, %v6503
      %v6505 = vpop.f32.mrb[0].mxu0
      %6506 = vmatprep.mubr.f32.mxu0 0.0
      %6507 = vmatmul.mubr.f32.gmra.mrb[0].mxu0 %v6237
      %v6508 = vpop.f32.mrb[0].mxu0
      %v6509 = vadd.f32 0.0, %v6508
      %v6510 = vpop.f32.mrb[0].mxu0
      %6511 = vdwg.mxu0
      %v6512 = vadd.f32 %v6126, %v6354
      %v6513 = vadd.f32 %v6127, %v6359
      %v6514 = vadd.f32 %v6128, %v6364
      %v6515 = vadd.f32 %v6129, %v6369
      %v6516 = vadd.f32 %v6130, %v6374
      %v6517 = vadd.f32 %v6131, %v6379
      %v6518 = vadd.f32 %v6132, %v6384
      %v6519 = vadd.f32 %v6133, %v6389
      %v6520 = vadd.f32 %v6134, %v6394
      %v6521 = vadd.f32 %v6135, %v6399
      %v6522 = vadd.f32 %v6136, %v6404
      %v6523 = vadd.f32 %v6137, %v6409
      %v6524 = vadd.f32 %v6138, %v6414
      %v6525 = vadd.f32 %v6139, %v6419
      %v6526 = vadd.f32 %v6140, %v6424
      %v6527 = vadd.f32 %v6141, %v6429
      %v6528 = vadd.f32 %v6142, %v6434
      %v6529 = vadd.f32 %v6143, %v6439
      %v6530 = vadd.f32 %v6144, %v6444
      %v6531 = vadd.f32 %v6145, %v6449
      %v6532 = vadd.f32 %v6146, %v6454
      %v6533 = vadd.f32 %v6147, %v6459
      %v6534 = vadd.f32 %v6148, %v6464
      %v6535 = vadd.f32 %v6149, %v6469
      %v6536 = vadd.f32 %v6150, %v6474
      %v6537 = vadd.f32 %v6151, %v6479
      %v6538 = vadd.f32 %v6152, %v6484
      %v6539 = vadd.f32 %v6153, %v6489
      %v6540 = vadd.f32 %v6154, %v6494
      %v6541 = vadd.f32 %v6155, %v6499
      %v6542 = vadd.f32 %v6156, %v6504
      %v6543 = vadd.f32 %v6157, %v6509
      %s6544 = scalar_lea.vmem %s251, 24
      %v6545 = vld [vmem:[%s6544 + $0x1] sm:$0xff]
      %v6546 = vld [vmem:[%s6544 + $0x9] sm:$0xff]
      %v6547 = vld [vmem:[%s6544 + $0x19] sm:$0xff]
      %v6548 = vld [vmem:[%s6544 + $0x21] sm:$0xff]
      %v6549 = vld [vmem:[%s6544 + $0x31] sm:$0xff]
      %v6550 = vld [vmem:[%s6544 + $0x39] sm:$0xff]
      %v6551 = vld [vmem:[%s6544 + $0x49] sm:$0xff]
      %v6552 = vld [vmem:[%s6544 + $0x51] sm:$0xff]
      %v6553 = vld [vmem:[%s6544 + $0x61] sm:$0xff]
      %v6554 = vld [vmem:[%s6544 + $0x69] sm:$0xff]
      %v6555 = vld [vmem:[%s6544 + $0x79] sm:$0xff]
      %v6556 = vld [vmem:[%s6544 + $0x81] sm:$0xff]
      %v6557 = vld [vmem:[%s6544 + $0x91] sm:$0xff]
      %v6558 = vld [vmem:[%s6544 + $0x99] sm:$0xff]
      %v6559 = vld [vmem:[%s6544 + $0xa9] sm:$0xff]
      %v6560 = vld [vmem:[%s6544 + $0xb1] sm:$0xff]
      %v6561 = vld [vmem:[%s6544 + $0xc1] sm:$0xff]
      %v6562 = vld [vmem:[%s6544 + $0xc9] sm:$0xff]
      %v6563 = vld [vmem:[%s6544 + $0xd9] sm:$0xff]
      %v6564 = vld [vmem:[%s6544 + $0xe1] sm:$0xff]
      %v6565 = vld [vmem:[%s6544 + $0xf1] sm:$0xff]
      %v6566 = vld [vmem:[%s6544 + $0xf9] sm:$0xff]
      %v6567 = vld [vmem:[%s6544 + $0x109] sm:$0xff]
      %v6568 = vld [vmem:[%s6544 + $0x111] sm:$0xff]
      %v6569 = vld [vmem:[%s6544 + $0x121] sm:$0xff]
      %v6570 = vld [vmem:[%s6544 + $0x129] sm:$0xff]
      %v6571 = vld [vmem:[%s6544 + $0x139] sm:$0xff]
      %v6572 = vld [vmem:[%s6544 + $0x141] sm:$0xff]
      %v6573 = vld [vmem:[%s6544 + $0x151] sm:$0xff]
      %v6574 = vld [vmem:[%s6544 + $0x159] sm:$0xff]
      %v6575 = vld [vmem:[%s6544 + $0x169] sm:$0xff]
      %v6576 = vld [vmem:[%s6544 + $0x171] sm:$0xff]
      %v6577 = vld [vmem:[%s4] sm:$0x1]
      %v6579 = vlaneseq
      %v6580 = vshrl.u32 %v6579, 7
      %v6581 = vsub.s32 0, %v6580
      %v6582 = vrot.slane %v6577, %v6581
      %v6584 = vadd.f32 %v6512, %v6582
      %v6585 = vadd.f32 %v6513, %v6582
      %v6586 = vadd.f32 %v6514, %v6582
      %v6587 = vadd.f32 %v6515, %v6582
      %v6588 = vadd.f32 %v6516, %v6582
      %v6589 = vadd.f32 %v6517, %v6582
      %v6590 = vadd.f32 %v6518, %v6582
      %v6591 = vadd.f32 %v6519, %v6582
      %v6592 = vadd.f32 %v6520, %v6582
      %v6593 = vadd.f32 %v6521, %v6582
      %v6594 = vadd.f32 %v6522, %v6582
      %v6595 = vadd.f32 %v6523, %v6582
      %v6596 = vadd.f32 %v6524, %v6582
      %v6597 = vadd.f32 %v6525, %v6582
      %v6598 = vadd.f32 %v6526, %v6582
      %v6599 = vadd.f32 %v6527, %v6582
      %v6600 = vadd.f32 %v6528, %v6582
      %v6601 = vadd.f32 %v6529, %v6582
      %v6602 = vadd.f32 %v6530, %v6582
      %v6603 = vadd.f32 %v6531, %v6582
      %v6604 = vadd.f32 %v6532, %v6582
      %v6605 = vadd.f32 %v6533, %v6582
      %v6606 = vadd.f32 %v6534, %v6582
      %v6607 = vadd.f32 %v6535, %v6582
      %v6608 = vadd.f32 %v6536, %v6582
      %v6609 = vadd.f32 %v6537, %v6582
      %v6610 = vadd.f32 %v6538, %v6582
      %v6611 = vadd.f32 %v6539, %v6582
      %v6612 = vadd.f32 %v6540, %v6582
      %v6613 = vadd.f32 %v6541, %v6582
      %v6614 = vadd.f32 %v6542, %v6582
      %v6615 = vadd.f32 %v6543, %v6582
      %v6616 = vadd.f32 %v6584, %v6545
      %v6617 = vadd.f32 %v6585, %v6546
      %v6618 = vadd.f32 %v6586, %v6547
      %v6619 = vadd.f32 %v6587, %v6548
      %v6620 = vadd.f32 %v6588, %v6549
      %v6621 = vadd.f32 %v6589, %v6550
      %v6622 = vadd.f32 %v6590, %v6551
      %v6623 = vadd.f32 %v6591, %v6552
      %v6624 = vadd.f32 %v6592, %v6553
      %v6625 = vadd.f32 %v6593, %v6554
      %v6626 = vadd.f32 %v6594, %v6555
      %v6627 = vadd.f32 %v6595, %v6556
      %v6628 = vadd.f32 %v6596, %v6557
      %v6629 = vadd.f32 %v6597, %v6558
      %v6630 = vadd.f32 %v6598, %v6559
      %v6631 = vadd.f32 %v6599, %v6560
      %v6632 = vadd.f32 %v6600, %v6561
      %v6633 = vadd.f32 %v6601, %v6562
      %v6634 = vadd.f32 %v6602, %v6563
      %v6635 = vadd.f32 %v6603, %v6564
      %v6636 = vadd.f32 %v6604, %v6565
      %v6637 = vadd.f32 %v6605, %v6566
      %v6638 = vadd.f32 %v6606, %v6567
      %v6639 = vadd.f32 %v6607, %v6568
      %v6640 = vadd.f32 %v6608, %v6569
      %v6641 = vadd.f32 %v6609, %v6570
      %v6642 = vadd.f32 %v6610, %v6571
      %v6643 = vadd.f32 %v6611, %v6572
      %v6644 = vadd.f32 %v6612, %v6573
      %v6645 = vadd.f32 %v6613, %v6574
      %v6646 = vadd.f32 %v6614, %v6575
      %v6647 = vadd.f32 %v6615, %v6576
      %v6648 = vmax.f32 %v6616, 0.0
      %v6649 = vmax.f32 %v6617, 0.0
      %v6650 = vmax.f32 %v6618, 0.0
      %v6651 = vmax.f32 %v6619, 0.0
      %v6652 = vmax.f32 %v6620, 0.0
      %v6653 = vmax.f32 %v6621, 0.0
      %v6654 = vmax.f32 %v6622, 0.0
      %v6655 = vmax.f32 %v6623, 0.0
      %v6656 = vmax.f32 %v6624, 0.0
      %v6657 = vmax.f32 %v6625, 0.0
      %v6658 = vmax.f32 %v6626, 0.0
      %v6659 = vmax.f32 %v6627, 0.0
      %v6660 = vmax.f32 %v6628, 0.0
      %v6661 = vmax.f32 %v6629, 0.0
      %v6662 = vmax.f32 %v6630, 0.0
      %v6663 = vmax.f32 %v6631, 0.0
      %v6664 = vmax.f32 %v6632, 0.0
      %v6665 = vmax.f32 %v6633, 0.0
      %v6666 = vmax.f32 %v6634, 0.0
      %v6667 = vmax.f32 %v6635, 0.0
      %v6668 = vmax.f32 %v6636, 0.0
      %v6669 = vmax.f32 %v6637, 0.0
      %v6670 = vmax.f32 %v6638, 0.0
      %v6671 = vmax.f32 %v6639, 0.0
      %v6672 = vmax.f32 %v6640, 0.0
      %v6673 = vmax.f32 %v6641, 0.0
      %v6674 = vmax.f32 %v6642, 0.0
      %v6675 = vmax.f32 %v6643, 0.0
      %v6676 = vmax.f32 %v6644, 0.0
      %v6677 = vmax.f32 %v6645, 0.0
      %v6678 = vmax.f32 %v6646, 0.0
      %v6679 = vmax.f32 %v6647, 0.0
      %6680 = vst [vmem:[%s260] sm:$0xff] %v6648
      %6681 = vst [vmem:[%s260 + $0x8] sm:$0xff] %v6649
      %6682 = vst [vmem:[%s260 + $0x10] sm:$0xff] %v6650
      %6683 = vst [vmem:[%s260 + $0x18] sm:$0xff] %v6651
      %6684 = vst [vmem:[%s260 + $0x20] sm:$0xff] %v6652
      %6685 = vst [vmem:[%s260 + $0x28] sm:$0xff] %v6653
      %6686 = vst [vmem:[%s260 + $0x30] sm:$0xff] %v6654
      %6687 = vst [vmem:[%s260 + $0x38] sm:$0xff] %v6655
      %6688 = vst [vmem:[%s260 + $0x40] sm:$0xff] %v6656
      %6689 = vst [vmem:[%s260 + $0x48] sm:$0xff] %v6657
      %6690 = vst [vmem:[%s260 + $0x50] sm:$0xff] %v6658
      %6691 = vst [vmem:[%s260 + $0x58] sm:$0xff] %v6659
      %6692 = vst [vmem:[%s260 + $0x60] sm:$0xff] %v6660
      %6693 = vst [vmem:[%s260 + $0x68] sm:$0xff] %v6661
      %6694 = vst [vmem:[%s260 + $0x70] sm:$0xff] %v6662
      %6695 = vst [vmem:[%s260 + $0x78] sm:$0xff] %v6663
      %6696 = vst [vmem:[%s260 + $0x80] sm:$0xff] %v6664
      %6697 = vst [vmem:[%s260 + $0x88] sm:$0xff] %v6665
      %6698 = vst [vmem:[%s260 + $0x90] sm:$0xff] %v6666
      %6699 = vst [vmem:[%s260 + $0x98] sm:$0xff] %v6667
      %6700 = vst [vmem:[%s260 + $0xa0] sm:$0xff] %v6668
      %6701 = vst [vmem:[%s260 + $0xa8] sm:$0xff] %v6669
      %6702 = vst [vmem:[%s260 + $0xb0] sm:$0xff] %v6670
      %6703 = vst [vmem:[%s260 + $0xb8] sm:$0xff] %v6671
      %6704 = vst [vmem:[%s260 + $0xc0] sm:$0xff] %v6672
      %6705 = vst [vmem:[%s260 + $0xc8] sm:$0xff] %v6673
      %6706 = vst [vmem:[%s260 + $0xd0] sm:$0xff] %v6674
      %6707 = vst [vmem:[%s260 + $0xd8] sm:$0xff] %v6675
      %6708 = vst [vmem:[%s260 + $0xe0] sm:$0xff] %v6676
      %6709 = vst [vmem:[%s260 + $0xe8] sm:$0xff] %v6677
      %6710 = vst [vmem:[%s260 + $0xf0] sm:$0xff] %v6678
      %6711 = vst [vmem:[%s260 + $0xf8] sm:$0xff] %v6679
      %p6712 = scmp.lt.s32.totalorder %s20, 1
      %s6713 = scalar_select %p6712, %s20, 1
      %p6714 = scmp.lt.s32.totalorder %s21, 0
      %s6715 = scalar_select %p6714, %s21, 0
      %s6716 = smul.addr %s6715, 32
      %s6717 = smul.addr %s6713, 32
      %s6718 = sadd.s32 %s6716, %s6717
      %s6719 = smul.addr %s6718, 8
      %s6720 = scalar_lea.vmem %s5, %s6719
      // Predicated region
      $region41: #{basic_block.1} parent=39 // pred_check
        %p6721 = pneg %p160
      $region42: #{basic_block.1} parent=39 // pred_check_branch
        %6723 = sbr.rel (%p6721) target = $region44
      $region43: #{basic_block.1} parent=39 // pred_region
        _
      $region44: #{basic_block.1} parent=39 // pred_fallthru
        _
    $region40: #{basic_block.1} parent=5 // pred_fallthru
      _
    %p6724 = scmp.le.s32.totalorder 2, %s11
    // Predicated region
    $region45: #{basic_block.1} parent=5 // pred_check
      %p6725 = pneg %p6724
    $region46: #{basic_block.1} parent=5 // pred_check_branch
      %6727 = sbr.rel (%p6725) target = $region48
    $region47: #{basic_block.1} parent=5 // pred_region
      %s6728 = ssub.s32 %s11, 2
      // Predicated region
      $region49: #{basic_block.1} parent=47 // pred_check
        %p6729 = pneg %p166
      $region50: #{basic_block.1} parent=47 // pred_check_branch
        %6731 = sbr.rel (%p6729) target = $region52
      $region51: #{basic_block.1} parent=47 // pred_region
        %p6732 = scmp.lt.s32.totalorder %s22, 1
        %s6733 = scalar_select %p6732, %s22, 1
        %p6734 = scmp.lt.s32.totalorder %s23, 0
        %s6735 = scalar_select %p6734, %s23, 0
        %s6736 = smul.addr %s6735, 32
        %s6737 = smul.addr %s6733, 32
        %s6738 = sadd.s32 %s6736, %s6737
        %s6739 = smul.addr %s6738, 8
        %s6740 = scalar_lea.vmem %s5, %s6739
      $region52: #{basic_block.1} parent=47 // pred_fallthru
        _
    $region48: #{basic_block.1} parent=5 // pred_fallthru
      _
  $region6: #{basic_block.1} parent=0 // loop_footer
    %s15 = sadd.s32 1, %s11
  $region7: #{basic_block.1} parent=0 // loop_footer_branch
    %10 = sbr.rel target = $region3
  $region8: #{basic_block.1} parent=0 // loop_exit
    _

</llo_original>
